<compile_context>
chip_gen: v7x
topology: tpu7x:2x2x1
jax: 0.10.0
libtpu: 0.0.40
codegen_flags: <defaults>
</compile_context>

<pallas_src>
import functools

import numpy as np

import jax
import jax.numpy as jnp
from jax import lax
from jax.experimental import pallas as pl
from jax.experimental.pallas import tpu as pltpu


_FC2_NPAD = 128          # lane-dense padded output width for the 10-way head
_PARALLEL = pltpu.CompilerParams(dimension_semantics=("parallel",))


# --------------------------- offline weight prep ----------------------------

def _conv_band_weights(w_oihw, w_in, *, k=5, pad=2):
    """Torch (Cout,Cin,k,k) conv weight -> (2*k, Wp*Cin, W2*Cout) bf16 bands.

    band[pw*k + kh][wp*Cin + ci, ow2*Cout + co] = w[co, ci, kh, kw]
      with kw = wp - (2*ow2 + pw), zero outside 0 <= kw < k.
    So for pool-column position pw and kernel row kh:
      conv_out[2*oh2+ph, 2*ow2+pw, co] =
          sum_kh  x_padded_row[2*oh2+ph+kh, :] @ band[pw*k+kh]
    """
    cout, cin, _, _ = w_oihw.shape
    wp_ = w_in + 2 * pad
    w2 = w_in // 2
    w_np = np.asarray(w_oihw, dtype=np.float32)
    band = np.zeros((2, k, wp_ * cin, w2 * cout), np.float32)
    for pw in range(2):
        for kh in range(k):
            for ow2 in range(w2):
                for kw in range(k):
                    col = 2 * ow2 + pw + kw            # padded input pixel col
                    band[pw, kh, col * cin:(col + 1) * cin,
                         ow2 * cout:(ow2 + 1) * cout] = w_np[:, :, kh, kw].T
    return jnp.asarray(band.reshape(2 * k, wp_ * cin, w2 * cout),
                       dtype=jnp.bfloat16)


def _row_selectors(h_in, *, k=5, pad=2):
    """(k+1, H2, Hp) 0/1 matrices; sel[s] picks padded rows s, s+2, ..."""
    hp = h_in + 2 * pad
    h2 = h_in // 2
    sel = np.zeros((k + 1, h2, hp), np.float32)
    for s in range(k + 1):
        for oh2 in range(h2):
            sel[s, oh2, 2 * oh2 + s] = 1.0
    return jnp.asarray(sel, dtype=jnp.bfloat16)


def init_params(key):
    """Weights in torch layout: conv (Cout,Cin,k,k); linear stored as (in,out)."""
    ks = jax.random.split(key, 8)
    s = 0.05
    return {
        "w_conv1": s * jax.random.normal(ks[0], (16, 1, 5, 5), jnp.float32),
        "b_conv1": s * jax.random.normal(ks[1], (16,), jnp.float32),
        "w_conv2": s * jax.random.normal(ks[2], (32, 16, 5, 5), jnp.float32),
        "b_conv2": s * jax.random.normal(ks[3], (32,), jnp.float32),
        "w_fc1":   s * jax.random.normal(ks[4], (32 * 7 * 7, 256), jnp.float32),
        "b_fc1":   s * jax.random.normal(ks[5], (256,), jnp.float32),
        "w_fc2":   s * jax.random.normal(ks[6], (256, 10), jnp.float32),
        "b_fc2":   s * jax.random.normal(ks[7], (10,), jnp.float32),
    }


def prepare_params(tp):
    """One-time offline massaging: band matrices, row selectors, bf16 casts,
    tiled (1,N) f32 biases, fc1 NHWC row permutation, fc2 lane padding."""
    out = {
        "rsel1":  _row_selectors(28),                       # (6, 14, 32)
        "wband1": _conv_band_weights(tp["w_conv1"], 28),    # (10, 32, 224)
        "bias1":  jnp.tile(tp["b_conv1"].astype(jnp.float32), 14).reshape(1, 224),
        "rsel2":  _row_selectors(14),                       # (6, 7, 18)
        "wband2": _conv_band_weights(tp["w_conv2"], 14),    # (10, 288, 224)
        "bias2":  jnp.tile(tp["b_conv2"].astype(jnp.float32), 7).reshape(1, 224),
    }
    # fc1 rows permuted from torch NCHW-flatten (c,h,w) to the NHWC-flatten
    # (h,w,c) order produced by the conv2 kernel's (B,7,224) output.
    w1 = (tp["w_fc1"].reshape(32, 7, 7, 256)
          .transpose(1, 2, 0, 3).reshape(7 * 7 * 32, 256))
    out["w_fc1"] = w1.astype(jnp.bfloat16)
    out["b_fc1"] = tp["b_fc1"].astype(jnp.float32).reshape(1, 256)
    out["w_fc2"] = jnp.pad(tp["w_fc2"],
                           ((0, 0), (0, _FC2_NPAD - 10))).astype(jnp.bfloat16)
    out["b_fc2"] = jnp.pad(tp["b_fc2"],
                           ((0, _FC2_NPAD - 10),)).astype(jnp.float32).reshape(1, _FC2_NPAD)
    return out


# ------------------------------ Pallas kernels ------------------------------

def _conv_pool_kernel(x_ref, rsel_ref, wband_ref, bias_ref, o_ref, *, n_img):
    """Fused conv5x5 + bias + ReLU + 2x2 maxpool, built entirely in-kernel.

    x_ref    : (n_img, Hp, Wp*Cin)  bf16  zero-padded input rows (lanes = w,c)
    rsel_ref : (6, H2, Hp)          bf16  pool/row selection matrices
    wband_ref: (10, Wp*Cin, W2*Cout)bf16  banded conv weights (pw, kh)
    bias_ref : (1, W2*Cout)         f32   channel bias tiled over ow2
    o_ref    : (n_img, H2, W2*Cout) bf16  pooled output (lane-dense, 224 lanes)

    relu(max_{ph,pw}(conv) + b) == maxpool(relu(conv + b)) since b is shared
    and relu/max commute.
    """
    bias = bias_ref[...]
    for i in range(n_img):
        x = x_ref[i]                                            # (Hp, WpC)
        # rows[s] = padded rows s, s+2, ... (H2 of them); shared across (ph,kh).
        rows = [
            jnp.dot(rsel_ref[s], x,
                    preferred_element_type=jnp.float32).astype(jnp.bfloat16)
            for s in range(rsel_ref.shape[0])
        ]
        best = None
        for pw in range(2):
            for ph in range(2):
                acc = None
                for kh in range(5):
                    d = jnp.dot(rows[ph + kh], wband_ref[pw * 5 + kh],
                                preferred_element_type=jnp.float32)
                    acc = d if acc is None else acc + d          # (H2, W2*Cout)
                best = acc if best is None else jnp.maximum(best, acc)
        o_ref[i] = jnp.maximum(best + bias, 0.0).astype(o_ref.dtype)


def _mlp_kernel(x_ref, w1_ref, b1_ref, w2_ref, b2_ref, o_ref):
    """Fused fc1(+ReLU)+fc2: both weights resident in VMEM, one HBM round trip."""
    h = jnp.dot(x_ref[...], w1_ref[...], preferred_element_type=jnp.float32)
    h = jnp.maximum(h + b1_ref[...], 0.0).astype(jnp.bfloat16)
    out = jnp.dot(h, w2_ref[...], preferred_element_type=jnp.float32) + b2_ref[...]
    o_ref[...] = out.astype(o_ref.dtype)


# ------------------------------ call wrappers -------------------------------

def _batch_tile(b):
    """Images per conv grid step; keeps >=2 grid steps (v7x megacore) when possible."""
    for d in (4, 2):
        if b % d == 0 and (b // d) >= 2:
            return d
    return 1


def _fc_row_tile(m):
    if m <= 16:
        return m                       # tiny batch: single full block
    half = (m + 1) // 2                # >=2 grid steps for v7x
    return min(512, ((half + 7) // 8) * 8)


def _conv_relu_pool(xp, rsel, wband, bias):
    """xp: (B, Hp, Wp*Cin) padded bf16 -> (B, H2, W2*Cout) pooled bf16."""
    B, Hp, WpC = xp.shape
    n_sel, H2, _ = rsel.shape
    W2C = wband.shape[-1]
    bt = _batch_tile(B)
    kern = functools.partial(_conv_pool_kernel, n_img=bt)
    return pl.pallas_call(
        kern,
        out_shape=jax.ShapeDtypeStruct((B, H2, W2C), jnp.bfloat16),
        grid=(B // bt,),
        in_specs=[
            pl.BlockSpec((bt, Hp, WpC), lambda i: (i, 0, 0)),
            pl.BlockSpec((n_sel, H2, Hp), lambda i: (0, 0, 0)),
            pl.BlockSpec(wband.shape, lambda i: (0, 0, 0)),
            pl.BlockSpec((1, W2C), lambda i: (0, 0)),
        ],
        out_specs=pl.BlockSpec((bt, H2, W2C), lambda i: (i, 0, 0)),
        compiler_params=_PARALLEL,
    )(xp, rsel, wband, bias)


def _mlp_head(x, w1, b1, w2, b2):
    """x: (M, 1568) bf16 -> (M, 128) f32 (fc2 head padded to 128 lanes)."""
    M, K = x.shape
    N1 = w1.shape[1]
    N2 = w2.shape[1]
    tm = _fc_row_tile(M)
    return pl.pallas_call(
        _mlp_kernel,
        out_shape=jax.ShapeDtypeStruct((M, N2), jnp.float32),
        grid=(pl.cdiv(M, tm),),
        in_specs=[
            pl.BlockSpec((tm, K), lambda i: (i, 0)),
            pl.BlockSpec((K, N1), lambda i: (0, 0)),
            pl.BlockSpec((1, N1), lambda i: (0, 0)),
            pl.BlockSpec((N1, N2), lambda i: (0, 0)),
            pl.BlockSpec((1, N2), lambda i: (0, 0)),
        ],
        out_specs=pl.BlockSpec((tm, N2), lambda i: (i, 0)),
        compiler_params=_PARALLEL,
    )(x, w1, b1, w2, b2)


# --------------------------------- model ------------------------------------

@jax.jit
def cnn_forward(x_nchw, kp):
    """x_nchw: (B, 1, 28, 28) -> logits (B, 10). Mirrors CNN.forward.

    `kp` must come from prepare_params(init_params(...)).
    """
    B = x_nchw.shape[0]
    # conv1 input: (B,28,28) zero-padded by 2 -> (B,32,32) bf16 (Cin=1).
    x = x_nchw.reshape(B, 28, 28).astype(jnp.bfloat16)
    xp1 = jnp.pad(x, ((0, 0), (2, 2), (2, 2)))
    a1 = _conv_relu_pool(xp1, kp["rsel1"], kp["wband1"], kp["bias1"])  # (B,14,224)

    # conv2 input: pad 2 pixels (=32 lanes of 16 channels) on each side.
    xp2 = jnp.pad(a1, ((0, 0), (2, 2), (32, 32)))                      # (B,18,288)
    a2 = _conv_relu_pool(xp2, kp["rsel2"], kp["wband2"], kp["bias2"])  # (B,7,224)

    flat = a2.reshape(B, 7 * 224)          # NHWC flatten; w_fc1 rows pre-permuted
    logits = _mlp_head(flat, kp["w_fc1"], kp["b_fc1"],
                       kp["w_fc2"], kp["b_fc2"])                       # (B,128)
    return logits[:, :10]


# ------------------------------ f32 reference --------------------------------

def _reference_forward(x_nchw, tp):
    x = x_nchw.astype(jnp.float32)

    def conv(x, w, b):
        y = lax.conv_general_dilated(x, w, window_strides=(1, 1),
                                     padding=((2, 2), (2, 2)),
                                     dimension_numbers=("NCHW", "OIHW", "NCHW"))
        return jax.nn.relu(y + b[None, :, None, None])

    def pool(x):
        return lax.reduce_window(x, -jnp.inf, lax.max,
                                 (1, 1, 2, 2), (1, 1, 2, 2), "VALID")

    x = pool(conv(x, tp["w_conv1"], tp["b_conv1"]))
    x = pool(conv(x, tp["w_conv2"], tp["b_conv2"]))
    x = x.reshape(x.shape[0], -1)
    h = jax.nn.relu(x @ tp["w_fc1"] + tp["b_fc1"])
    return h @ tp["w_fc2"] + tp["b_fc2"]


if __name__ == "__main__":
    key = jax.random.PRNGKey(0)
    k_x, k_p = jax.random.split(key)
    # Spatial size must be 28x28 (the module hard-codes the 7*7*32 flatten).
    x = jax.random.normal(k_x, (2, 1, 28, 28), dtype=jnp.float32)
    torch_params = init_params(k_p)
    kparams = prepare_params(torch_params)

    logits = cnn_forward(x, kparams)
    jax.block_until_ready(logits)
    assert logits.shape == (2, 10) and logits.dtype == jnp.float32

    ref = _reference_forward(x, torch_params)
    err = float(jnp.max(jnp.abs(logits - ref)))
    assert err < 5e-2, f"max |logit diff| vs f32 reference = {err}"
    print("KERNEL_OK")
</pallas_src>

<mosaic_0001>
module attributes {stable_mosaic.version = 11 : i64} {
  func.func @_conv_pool_kernel(%arg0: i32, %arg1: memref<1x32x32xbf16, #tpu.memory_space<vmem>>, %arg2: memref<6x14x32xbf16, #tpu.memory_space<vmem>>, %arg3: memref<10x32x224xbf16, #tpu.memory_space<vmem>>, %arg4: memref<1x224xf32, #tpu.memory_space<vmem>>, %arg5: memref<1x14x224xbf16, #tpu.memory_space<vmem>>) attributes {dimension_semantics = [#tpu.dimension_semantics<parallel>], iteration_bounds = array<i64: 2>, scalar_prefetch = 0 : i64, scratch_operands = 0 : i64, tpu.core_type = #tpu.core_type<tc>, window_params = [{transform_indices = @transform_0, window_bounds = array<i64: 1, 32, 32>}, {pipeline_mode = #tpu.pipeline_mode<synchronous>, transform_indices = @transform_1, window_bounds = array<i64: 6, 14, 32>}, {pipeline_mode = #tpu.pipeline_mode<synchronous>, transform_indices = @transform_2, window_bounds = array<i64: 10, 32, 224>}, {pipeline_mode = #tpu.pipeline_mode<synchronous>, transform_indices = @transform_3, window_bounds = array<i64: 1, 224>}, {transform_indices = @transform_4, window_bounds = array<i64: 1, 14, 224>}]} {
    %c0 = arith.constant 0 : index
    %c0_0 = arith.constant 0 : index
    %0 = vector.load %arg4[%c0, %c0_0] : memref<1x224xf32, #tpu.memory_space<vmem>>, vector<1x224xf32>
    %c0_1 = arith.constant 0 : index
    %c0_2 = arith.constant 0 : index
    %c0_3 = arith.constant 0 : index
    %1 = vector.load %arg1[%c0_1, %c0_2, %c0_3] : memref<1x32x32xbf16, #tpu.memory_space<vmem>>, vector<1x32x32xbf16>
    %2 = vector.shape_cast %1 : vector<1x32x32xbf16> to vector<32x32xbf16>
    %c0_4 = arith.constant 0 : index
    %c0_5 = arith.constant 0 : index
    %c0_6 = arith.constant 0 : index
    %3 = vector.load %arg2[%c0_4, %c0_5, %c0_6] : memref<6x14x32xbf16, #tpu.memory_space<vmem>>, vector<1x14x32xbf16>
    %4 = vector.shape_cast %3 : vector<1x14x32xbf16> to vector<14x32xbf16>
    %cst = arith.constant dense<0.000000e+00> : vector<14x32xf32>
    %5 = tpu.matmul %4, %2, %cst {dimension_numbers = #tpu.dot_dimension_numbers<[1], [0], [0], [1], [0, 0, 1, 1], [], []>} : vector<14x32xbf16>, vector<32x32xbf16>, vector<14x32xf32> -> vector<14x32xf32>
    %6 = arith.truncf %5 : vector<14x32xf32> to vector<14x32xbf16>
    %c1 = arith.constant 1 : index
    %c0_7 = arith.constant 0 : index
    %c0_8 = arith.constant 0 : index
    %7 = vector.load %arg2[%c1, %c0_7, %c0_8] : memref<6x14x32xbf16, #tpu.memory_space<vmem>>, vector<1x14x32xbf16>
    %8 = vector.shape_cast %7 : vector<1x14x32xbf16> to vector<14x32xbf16>
    %cst_9 = arith.constant dense<0.000000e+00> : vector<14x32xf32>
    %9 = tpu.matmul %8, %2, %cst_9 {dimension_numbers = #tpu.dot_dimension_numbers<[1], [0], [0], [1], [0, 0, 1, 1], [], []>} : vector<14x32xbf16>, vector<32x32xbf16>, vector<14x32xf32> -> vector<14x32xf32>
    %10 = arith.truncf %9 : vector<14x32xf32> to vector<14x32xbf16>
    %c2 = arith.constant 2 : index
    %c0_10 = arith.constant 0 : index
    %c0_11 = arith.constant 0 : index
    %11 = vector.load %arg2[%c2, %c0_10, %c0_11] : memref<6x14x32xbf16, #tpu.memory_space<vmem>>, vector<1x14x32xbf16>
    %12 = vector.shape_cast %11 : vector<1x14x32xbf16> to vector<14x32xbf16>
    %cst_12 = arith.constant dense<0.000000e+00> : vector<14x32xf32>
    %13 = tpu.matmul %12, %2, %cst_12 {dimension_numbers = #tpu.dot_dimension_numbers<[1], [0], [0], [1], [0, 0, 1, 1], [], []>} : vector<14x32xbf16>, vector<32x32xbf16>, vector<14x32xf32> -> vector<14x32xf32>
    %14 = arith.truncf %13 : vector<14x32xf32> to vector<14x32xbf16>
    %c3 = arith.constant 3 : index
    %c0_13 = arith.constant 0 : index
    %c0_14 = arith.constant 0 : index
    %15 = vector.load %arg2[%c3, %c0_13, %c0_14] : memref<6x14x32xbf16, #tpu.memory_space<vmem>>, vector<1x14x32xbf16>
    %16 = vector.shape_cast %15 : vector<1x14x32xbf16> to vector<14x32xbf16>
    %cst_15 = arith.constant dense<0.000000e+00> : vector<14x32xf32>
    %17 = tpu.matmul %16, %2, %cst_15 {dimension_numbers = #tpu.dot_dimension_numbers<[1], [0], [0], [1], [0, 0, 1, 1], [], []>} : vector<14x32xbf16>, vector<32x32xbf16>, vector<14x32xf32> -> vector<14x32xf32>
    %18 = arith.truncf %17 : vector<14x32xf32> to vector<14x32xbf16>
    %c4 = arith.constant 4 : index
    %c0_16 = arith.constant 0 : index
    %c0_17 = arith.constant 0 : index
    %19 = vector.load %arg2[%c4, %c0_16, %c0_17] : memref<6x14x32xbf16, #tpu.memory_space<vmem>>, vector<1x14x32xbf16>
    %20 = vector.shape_cast %19 : vector<1x14x32xbf16> to vector<14x32xbf16>
    %cst_18 = arith.constant dense<0.000000e+00> : vector<14x32xf32>
    %21 = tpu.matmul %20, %2, %cst_18 {dimension_numbers = #tpu.dot_dimension_numbers<[1], [0], [0], [1], [0, 0, 1, 1], [], []>} : vector<14x32xbf16>, vector<32x32xbf16>, vector<14x32xf32> -> vector<14x32xf32>
    %22 = arith.truncf %21 : vector<14x32xf32> to vector<14x32xbf16>
    %c5 = arith.constant 5 : index
    %c0_19 = arith.constant 0 : index
    %c0_20 = arith.constant 0 : index
    %23 = vector.load %arg2[%c5, %c0_19, %c0_20] : memref<6x14x32xbf16, #tpu.memory_space<vmem>>, vector<1x14x32xbf16>
    %24 = vector.shape_cast %23 : vector<1x14x32xbf16> to vector<14x32xbf16>
    %cst_21 = arith.constant dense<0.000000e+00> : vector<14x32xf32>
    %25 = tpu.matmul %24, %2, %cst_21 {dimension_numbers = #tpu.dot_dimension_numbers<[1], [0], [0], [1], [0, 0, 1, 1], [], []>} : vector<14x32xbf16>, vector<32x32xbf16>, vector<14x32xf32> -> vector<14x32xf32>
    %26 = arith.truncf %25 : vector<14x32xf32> to vector<14x32xbf16>
    %c0_22 = arith.constant 0 : index
    %c0_23 = arith.constant 0 : index
    %c0_24 = arith.constant 0 : index
    %27 = vector.load %arg3[%c0_22, %c0_23, %c0_24] : memref<10x32x224xbf16, #tpu.memory_space<vmem>>, vector<1x32x224xbf16>
    %28 = vector.shape_cast %27 : vector<1x32x224xbf16> to vector<32x224xbf16>
    %cst_25 = arith.constant dense<0.000000e+00> : vector<14x224xf32>
    %29 = tpu.matmul %6, %28, %cst_25 {dimension_numbers = #tpu.dot_dimension_numbers<[1], [0], [0], [1], [0, 0, 1, 1], [], []>} : vector<14x32xbf16>, vector<32x224xbf16>, vector<14x224xf32> -> vector<14x224xf32>
    %c1_26 = arith.constant 1 : index
    %c0_27 = arith.constant 0 : index
    %c0_28 = arith.constant 0 : index
    %30 = vector.load %arg3[%c1_26, %c0_27, %c0_28] : memref<10x32x224xbf16, #tpu.memory_space<vmem>>, vector<1x32x224xbf16>
    %31 = vector.shape_cast %30 : vector<1x32x224xbf16> to vector<32x224xbf16>
    %cst_29 = arith.constant dense<0.000000e+00> : vector<14x224xf32>
    %32 = tpu.matmul %10, %31, %cst_29 {dimension_numbers = #tpu.dot_dimension_numbers<[1], [0], [0], [1], [0, 0, 1, 1], [], []>} : vector<14x32xbf16>, vector<32x224xbf16>, vector<14x224xf32> -> vector<14x224xf32>
    %33 = arith.addf %29, %32 : vector<14x224xf32>
    %c2_30 = arith.constant 2 : index
    %c0_31 = arith.constant 0 : index
    %c0_32 = arith.constant 0 : index
    %34 = vector.load %arg3[%c2_30, %c0_31, %c0_32] : memref<10x32x224xbf16, #tpu.memory_space<vmem>>, vector<1x32x224xbf16>
    %35 = vector.shape_cast %34 : vector<1x32x224xbf16> to vector<32x224xbf16>
    %cst_33 = arith.constant dense<0.000000e+00> : vector<14x224xf32>
    %36 = tpu.matmul %14, %35, %cst_33 {dimension_numbers = #tpu.dot_dimension_numbers<[1], [0], [0], [1], [0, 0, 1, 1], [], []>} : vector<14x32xbf16>, vector<32x224xbf16>, vector<14x224xf32> -> vector<14x224xf32>
    %37 = arith.addf %33, %36 : vector<14x224xf32>
    %c3_34 = arith.constant 3 : index
    %c0_35 = arith.constant 0 : index
    %c0_36 = arith.constant 0 : index
    %38 = vector.load %arg3[%c3_34, %c0_35, %c0_36] : memref<10x32x224xbf16, #tpu.memory_space<vmem>>, vector<1x32x224xbf16>
    %39 = vector.shape_cast %38 : vector<1x32x224xbf16> to vector<32x224xbf16>
    %cst_37 = arith.constant dense<0.000000e+00> : vector<14x224xf32>
    %40 = tpu.matmul %18, %39, %cst_37 {dimension_numbers = #tpu.dot_dimension_numbers<[1], [0], [0], [1], [0, 0, 1, 1], [], []>} : vector<14x32xbf16>, vector<32x224xbf16>, vector<14x224xf32> -> vector<14x224xf32>
    %41 = arith.addf %37, %40 : vector<14x224xf32>
    %c4_38 = arith.constant 4 : index
    %c0_39 = arith.constant 0 : index
    %c0_40 = arith.constant 0 : index
    %42 = vector.load %arg3[%c4_38, %c0_39, %c0_40] : memref<10x32x224xbf16, #tpu.memory_space<vmem>>, vector<1x32x224xbf16>
    %43 = vector.shape_cast %42 : vector<1x32x224xbf16> to vector<32x224xbf16>
    %cst_41 = arith.constant dense<0.000000e+00> : vector<14x224xf32>
    %44 = tpu.matmul %22, %43, %cst_41 {dimension_numbers = #tpu.dot_dimension_numbers<[1], [0], [0], [1], [0, 0, 1, 1], [], []>} : vector<14x32xbf16>, vector<32x224xbf16>, vector<14x224xf32> -> vector<14x224xf32>
    %45 = arith.addf %41, %44 : vector<14x224xf32>
    %c0_42 = arith.constant 0 : index
    %c0_43 = arith.constant 0 : index
    %c0_44 = arith.constant 0 : index
    %46 = vector.load %arg3[%c0_42, %c0_43, %c0_44] : memref<10x32x224xbf16, #tpu.memory_space<vmem>>, vector<1x32x224xbf16>
    %47 = vector.shape_cast %46 : vector<1x32x224xbf16> to vector<32x224xbf16>
    %cst_45 = arith.constant dense<0.000000e+00> : vector<14x224xf32>
    %48 = tpu.matmul %10, %47, %cst_45 {dimension_numbers = #tpu.dot_dimension_numbers<[1], [0], [0], [1], [0, 0, 1, 1], [], []>} : vector<14x32xbf16>, vector<32x224xbf16>, vector<14x224xf32> -> vector<14x224xf32>
    %c1_46 = arith.constant 1 : index
    %c0_47 = arith.constant 0 : index
    %c0_48 = arith.constant 0 : index
    %49 = vector.load %arg3[%c1_46, %c0_47, %c0_48] : memref<10x32x224xbf16, #tpu.memory_space<vmem>>, vector<1x32x224xbf16>
    %50 = vector.shape_cast %49 : vector<1x32x224xbf16> to vector<32x224xbf16>
    %cst_49 = arith.constant dense<0.000000e+00> : vector<14x224xf32>
    %51 = tpu.matmul %14, %50, %cst_49 {dimension_numbers = #tpu.dot_dimension_numbers<[1], [0], [0], [1], [0, 0, 1, 1], [], []>} : vector<14x32xbf16>, vector<32x224xbf16>, vector<14x224xf32> -> vector<14x224xf32>
    %52 = arith.addf %48, %51 : vector<14x224xf32>
    %c2_50 = arith.constant 2 : index
    %c0_51 = arith.constant 0 : index
    %c0_52 = arith.constant 0 : index
    %53 = vector.load %arg3[%c2_50, %c0_51, %c0_52] : memref<10x32x224xbf16, #tpu.memory_space<vmem>>, vector<1x32x224xbf16>
    %54 = vector.shape_cast %53 : vector<1x32x224xbf16> to vector<32x224xbf16>
    %cst_53 = arith.constant dense<0.000000e+00> : vector<14x224xf32>
    %55 = tpu.matmul %18, %54, %cst_53 {dimension_numbers = #tpu.dot_dimension_numbers<[1], [0], [0], [1], [0, 0, 1, 1], [], []>} : vector<14x32xbf16>, vector<32x224xbf16>, vector<14x224xf32> -> vector<14x224xf32>
    %56 = arith.addf %52, %55 : vector<14x224xf32>
    %c3_54 = arith.constant 3 : index
    %c0_55 = arith.constant 0 : index
    %c0_56 = arith.constant 0 : index
    %57 = vector.load %arg3[%c3_54, %c0_55, %c0_56] : memref<10x32x224xbf16, #tpu.memory_space<vmem>>, vector<1x32x224xbf16>
    %58 = vector.shape_cast %57 : vector<1x32x224xbf16> to vector<32x224xbf16>
    %cst_57 = arith.constant dense<0.000000e+00> : vector<14x224xf32>
    %59 = tpu.matmul %22, %58, %cst_57 {dimension_numbers = #tpu.dot_dimension_numbers<[1], [0], [0], [1], [0, 0, 1, 1], [], []>} : vector<14x32xbf16>, vector<32x224xbf16>, vector<14x224xf32> -> vector<14x224xf32>
    %60 = arith.addf %56, %59 : vector<14x224xf32>
    %c4_58 = arith.constant 4 : index
    %c0_59 = arith.constant 0 : index
    %c0_60 = arith.constant 0 : index
    %61 = vector.load %arg3[%c4_58, %c0_59, %c0_60] : memref<10x32x224xbf16, #tpu.memory_space<vmem>>, vector<1x32x224xbf16>
    %62 = vector.shape_cast %61 : vector<1x32x224xbf16> to vector<32x224xbf16>
    %cst_61 = arith.constant dense<0.000000e+00> : vector<14x224xf32>
    %63 = tpu.matmul %26, %62, %cst_61 {dimension_numbers = #tpu.dot_dimension_numbers<[1], [0], [0], [1], [0, 0, 1, 1], [], []>} : vector<14x32xbf16>, vector<32x224xbf16>, vector<14x224xf32> -> vector<14x224xf32>
    %64 = arith.addf %60, %63 : vector<14x224xf32>
    %65 = arith.maximumf %45, %64 : vector<14x224xf32>
    %c5_62 = arith.constant 5 : index
    %c0_63 = arith.constant 0 : index
    %c0_64 = arith.constant 0 : index
    %66 = vector.load %arg3[%c5_62, %c0_63, %c0_64] : memref<10x32x224xbf16, #tpu.memory_space<vmem>>, vector<1x32x224xbf16>
    %67 = vector.shape_cast %66 : vector<1x32x224xbf16> to vector<32x224xbf16>
    %cst_65 = arith.constant dense<0.000000e+00> : vector<14x224xf32>
    %68 = tpu.matmul %6, %67, %cst_65 {dimension_numbers = #tpu.dot_dimension_numbers<[1], [0], [0], [1], [0, 0, 1, 1], [], []>} : vector<14x32xbf16>, vector<32x224xbf16>, vector<14x224xf32> -> vector<14x224xf32>
    %c6 = arith.constant 6 : index
    %c0_66 = arith.constant 0 : index
    %c0_67 = arith.constant 0 : index
    %69 = vector.load %arg3[%c6, %c0_66, %c0_67] : memref<10x32x224xbf16, #tpu.memory_space<vmem>>, vector<1x32x224xbf16>
    %70 = vector.shape_cast %69 : vector<1x32x224xbf16> to vector<32x224xbf16>
    %cst_68 = arith.constant dense<0.000000e+00> : vector<14x224xf32>
    %71 = tpu.matmul %10, %70, %cst_68 {dimension_numbers = #tpu.dot_dimension_numbers<[1], [0], [0], [1], [0, 0, 1, 1], [], []>} : vector<14x32xbf16>, vector<32x224xbf16>, vector<14x224xf32> -> vector<14x224xf32>
    %72 = arith.addf %68, %71 : vector<14x224xf32>
    %c7 = arith.constant 7 : index
    %c0_69 = arith.constant 0 : index
    %c0_70 = arith.constant 0 : index
    %73 = vector.load %arg3[%c7, %c0_69, %c0_70] : memref<10x32x224xbf16, #tpu.memory_space<vmem>>, vector<1x32x224xbf16>
    %74 = vector.shape_cast %73 : vector<1x32x224xbf16> to vector<32x224xbf16>
    %cst_71 = arith.constant dense<0.000000e+00> : vector<14x224xf32>
    %75 = tpu.matmul %14, %74, %cst_71 {dimension_numbers = #tpu.dot_dimension_numbers<[1], [0], [0], [1], [0, 0, 1, 1], [], []>} : vector<14x32xbf16>, vector<32x224xbf16>, vector<14x224xf32> -> vector<14x224xf32>
    %76 = arith.addf %72, %75 : vector<14x224xf32>
    %c8 = arith.constant 8 : index
    %c0_72 = arith.constant 0 : index
    %c0_73 = arith.constant 0 : index
    %77 = vector.load %arg3[%c8, %c0_72, %c0_73] : memref<10x32x224xbf16, #tpu.memory_space<vmem>>, vector<1x32x224xbf16>
    %78 = vector.shape_cast %77 : vector<1x32x224xbf16> to vector<32x224xbf16>
    %cst_74 = arith.constant dense<0.000000e+00> : vector<14x224xf32>
    %79 = tpu.matmul %18, %78, %cst_74 {dimension_numbers = #tpu.dot_dimension_numbers<[1], [0], [0], [1], [0, 0, 1, 1], [], []>} : vector<14x32xbf16>, vector<32x224xbf16>, vector<14x224xf32> -> vector<14x224xf32>
    %80 = arith.addf %76, %79 : vector<14x224xf32>
    %c9 = arith.constant 9 : index
    %c0_75 = arith.constant 0 : index
    %c0_76 = arith.constant 0 : index
    %81 = vector.load %arg3[%c9, %c0_75, %c0_76] : memref<10x32x224xbf16, #tpu.memory_space<vmem>>, vector<1x32x224xbf16>
    %82 = vector.shape_cast %81 : vector<1x32x224xbf16> to vector<32x224xbf16>
    %cst_77 = arith.constant dense<0.000000e+00> : vector<14x224xf32>
    %83 = tpu.matmul %22, %82, %cst_77 {dimension_numbers = #tpu.dot_dimension_numbers<[1], [0], [0], [1], [0, 0, 1, 1], [], []>} : vector<14x32xbf16>, vector<32x224xbf16>, vector<14x224xf32> -> vector<14x224xf32>
    %84 = arith.addf %80, %83 : vector<14x224xf32>
    %85 = arith.maximumf %65, %84 : vector<14x224xf32>
    %c5_78 = arith.constant 5 : index
    %c0_79 = arith.constant 0 : index
    %c0_80 = arith.constant 0 : index
    %86 = vector.load %arg3[%c5_78, %c0_79, %c0_80] : memref<10x32x224xbf16, #tpu.memory_space<vmem>>, vector<1x32x224xbf16>
    %87 = vector.shape_cast %86 : vector<1x32x224xbf16> to vector<32x224xbf16>
    %cst_81 = arith.constant dense<0.000000e+00> : vector<14x224xf32>
    %88 = tpu.matmul %10, %87, %cst_81 {dimension_numbers = #tpu.dot_dimension_numbers<[1], [0], [0], [1], [0, 0, 1, 1], [], []>} : vector<14x32xbf16>, vector<32x224xbf16>, vector<14x224xf32> -> vector<14x224xf32>
    %c6_82 = arith.constant 6 : index
    %c0_83 = arith.constant 0 : index
    %c0_84 = arith.constant 0 : index
    %89 = vector.load %arg3[%c6_82, %c0_83, %c0_84] : memref<10x32x224xbf16, #tpu.memory_space<vmem>>, vector<1x32x224xbf16>
    %90 = vector.shape_cast %89 : vector<1x32x224xbf16> to vector<32x224xbf16>
    %cst_85 = arith.constant dense<0.000000e+00> : vector<14x224xf32>
    %91 = tpu.matmul %14, %90, %cst_85 {dimension_numbers = #tpu.dot_dimension_numbers<[1], [0], [0], [1], [0, 0, 1, 1], [], []>} : vector<14x32xbf16>, vector<32x224xbf16>, vector<14x224xf32> -> vector<14x224xf32>
    %92 = arith.addf %88, %91 : vector<14x224xf32>
    %c7_86 = arith.constant 7 : index
    %c0_87 = arith.constant 0 : index
    %c0_88 = arith.constant 0 : index
    %93 = vector.load %arg3[%c7_86, %c0_87, %c0_88] : memref<10x32x224xbf16, #tpu.memory_space<vmem>>, vector<1x32x224xbf16>
    %94 = vector.shape_cast %93 : vector<1x32x224xbf16> to vector<32x224xbf16>
    %cst_89 = arith.constant dense<0.000000e+00> : vector<14x224xf32>
    %95 = tpu.matmul %18, %94, %cst_89 {dimension_numbers = #tpu.dot_dimension_numbers<[1], [0], [0], [1], [0, 0, 1, 1], [], []>} : vector<14x32xbf16>, vector<32x224xbf16>, vector<14x224xf32> -> vector<14x224xf32>
    %96 = arith.addf %92, %95 : vector<14x224xf32>
    %c8_90 = arith.constant 8 : index
    %c0_91 = arith.constant 0 : index
    %c0_92 = arith.constant 0 : index
    %97 = vector.load %arg3[%c8_90, %c0_91, %c0_92] : memref<10x32x224xbf16, #tpu.memory_space<vmem>>, vector<1x32x224xbf16>
    %98 = vector.shape_cast %97 : vector<1x32x224xbf16> to vector<32x224xbf16>
    %cst_93 = arith.constant dense<0.000000e+00> : vector<14x224xf32>
    %99 = tpu.matmul %22, %98, %cst_93 {dimension_numbers = #tpu.dot_dimension_numbers<[1], [0], [0], [1], [0, 0, 1, 1], [], []>} : vector<14x32xbf16>, vector<32x224xbf16>, vector<14x224xf32> -> vector<14x224xf32>
    %100 = arith.addf %96, %99 : vector<14x224xf32>
    %c9_94 = arith.constant 9 : index
    %c0_95 = arith.constant 0 : index
    %c0_96 = arith.constant 0 : index
    %101 = vector.load %arg3[%c9_94, %c0_95, %c0_96] : memref<10x32x224xbf16, #tpu.memory_space<vmem>>, vector<1x32x224xbf16>
    %102 = vector.shape_cast %101 : vector<1x32x224xbf16> to vector<32x224xbf16>
    %cst_97 = arith.constant dense<0.000000e+00> : vector<14x224xf32>
    %103 = tpu.matmul %26, %102, %cst_97 {dimension_numbers = #tpu.dot_dimension_numbers<[1], [0], [0], [1], [0, 0, 1, 1], [], []>} : vector<14x32xbf16>, vector<32x224xbf16>, vector<14x224xf32> -> vector<14x224xf32>
    %104 = arith.addf %100, %103 : vector<14x224xf32>
    %105 = arith.maximumf %85, %104 : vector<14x224xf32>
    %106 = vector.broadcast %0 : vector<1x224xf32> to vector<14x224xf32>
    %107 = arith.addf %105, %106 : vector<14x224xf32>
    %cst_98 = arith.constant 0.000000e+00 : f32
    %108 = vector.broadcast %cst_98 : f32 to vector<14x224xf32>
    %109 = arith.maximumf %107, %108 : vector<14x224xf32>
    %110 = arith.truncf %109 : vector<14x224xf32> to vector<14x224xbf16>
    %c0_99 = arith.constant 0 : index
    %c0_100 = arith.constant 0 : index
    %c0_101 = arith.constant 0 : index
    %111 = vector.load %arg5[%c0_99, %c0_100, %c0_101] : memref<1x14x224xbf16, #tpu.memory_space<vmem>>, vector<1x14x224xbf16>
    %112 = vector.shape_cast %111 : vector<1x14x224xbf16> to vector<14x224xbf16>
    %113 = vector.shape_cast %110 : vector<14x224xbf16> to vector<1x14x224xbf16>
    tpu.vector_store %arg5[%c0_99, %c0_100, %c0_101], %113 {strides = array<i32>} : memref<1x14x224xbf16, #tpu.memory_space<vmem>>, vector<1x14x224xbf16>,
    return
  }
  func.func @transform_0(%arg0: i32) -> (i32, i32, i32) {
    %c0_i32 = arith.constant 0 : i32
    %c0_i32_0 = arith.constant 0 : i32
    %c0_i32_1 = arith.constant 0 : i32
    return %arg0, %c0_i32, %c0_i32_0 : i32, i32, i32
  }
  func.func @transform_1(%arg0: i32) -> (i32, i32, i32) {
    %c0_i32 = arith.constant 0 : i32
    %c0_i32_0 = arith.constant 0 : i32
    %c0_i32_1 = arith.constant 0 : i32
    %c0_i32_2 = arith.constant 0 : i32
    return %c0_i32, %c0_i32_0, %c0_i32_1 : i32, i32, i32
  }
  func.func @transform_2(%arg0: i32) -> (i32, i32, i32) {
    %c0_i32 = arith.constant 0 : i32
    %c0_i32_0 = arith.constant 0 : i32
    %c0_i32_1 = arith.constant 0 : i32
    %c0_i32_2 = arith.constant 0 : i32
    return %c0_i32, %c0_i32_0, %c0_i32_1 : i32, i32, i32
  }
  func.func @transform_3(%arg0: i32) -> (i32, i32) {
    %c0_i32 = arith.constant 0 : i32
    %c0_i32_0 = arith.constant 0 : i32
    %c0_i32_1 = arith.constant 0 : i32
    return %c0_i32, %c0_i32_0 : i32, i32
  }
  func.func @transform_4(%arg0: i32) -> (i32, i32, i32) {
    %c0_i32 = arith.constant 0 : i32
    %c0_i32_0 = arith.constant 0 : i32
    %c0_i32_1 = arith.constant 0 : i32
    return %arg0, %c0_i32, %c0_i32_0 : i32, i32, i32
  }
}

module attributes {stable_mosaic.version = 11 : i64} {
  func.func @_mlp_kernel(%arg0: i32, %arg1: memref<2x1568xbf16, #tpu.memory_space<vmem>>, %arg2: memref<1568x256xbf16, #tpu.memory_space<vmem>>, %arg3: memref<1x256xf32, #tpu.memory_space<vmem>>, %arg4: memref<256x128xbf16, #tpu.memory_space<vmem>>, %arg5: memref<1x128xf32, #tpu.memory_space<vmem>>, %arg6: memref<2x128xf32, #tpu.memory_space<vmem>>) attributes {dimension_semantics = [#tpu.dimension_semantics<parallel>], iteration_bounds = array<i64: 1>, scalar_prefetch = 0 : i64, scratch_operands = 0 : i64, tpu.core_type = #tpu.core_type<tc>, window_params = [{transform_indices = @transform_0, window_bounds = array<i64: 2, 1568>}, {pipeline_mode = #tpu.pipeline_mode<synchronous>, transform_indices = @transform_1, window_bounds = array<i64: 1568, 256>}, {pipeline_mode = #tpu.pipeline_mode<synchronous>, transform_indices = @transform_2, window_bounds = array<i64: 1, 256>}, {pipeline_mode = #tpu.pipeline_mode<synchronous>, transform_indices = @transform_3, window_bounds = array<i64: 256, 128>}, {pipeline_mode = #tpu.pipeline_mode<synchronous>, transform_indices = @transform_4, window_bounds = array<i64: 1, 128>}, {transform_indices = @transform_5, window_bounds = array<i64: 2, 128>}]} {
    %c0 = arith.constant 0 : index
    %c0_0 = arith.constant 0 : index
    %0 = vector.load %arg1[%c0, %c0_0] : memref<2x1568xbf16, #tpu.memory_space<vmem>>, vector<2x1568xbf16>
    %c0_1 = arith.constant 0 : index
    %c0_2 = arith.constant 0 : index
    %1 = vector.load %arg2[%c0_1, %c0_2] : memref<1568x256xbf16, #tpu.memory_space<vmem>>, vector<1568x256xbf16>
    %cst = arith.constant dense<0.000000e+00> : vector<2x256xf32>
    %2 = tpu.matmul %0, %1, %cst {dimension_numbers = #tpu.dot_dimension_numbers<[1], [0], [0], [1], [0, 0, 1, 1], [], []>} : vector<2x1568xbf16>, vector<1568x256xbf16>, vector<2x256xf32> -> vector<2x256xf32>
    %c0_3 = arith.constant 0 : index
    %c0_4 = arith.constant 0 : index
    %3 = vector.load %arg3[%c0_3, %c0_4] : memref<1x256xf32, #tpu.memory_space<vmem>>, vector<1x256xf32>
    %4 = vector.broadcast %3 : vector<1x256xf32> to vector<2x256xf32>
    %5 = arith.addf %2, %4 : vector<2x256xf32>
    %cst_5 = arith.constant 0.000000e+00 : f32
    %6 = vector.broadcast %cst_5 : f32 to vector<2x256xf32>
    %7 = arith.maximumf %5, %6 : vector<2x256xf32>
    %8 = arith.truncf %7 : vector<2x256xf32> to vector<2x256xbf16>
    %c0_6 = arith.constant 0 : index
    %c0_7 = arith.constant 0 : index
    %9 = vector.load %arg4[%c0_6, %c0_7] : memref<256x128xbf16, #tpu.memory_space<vmem>>, vector<256x128xbf16>
    %cst_8 = arith.constant dense<0.000000e+00> : vector<2x128xf32>
    %10 = tpu.matmul %8, %9, %cst_8 {dimension_numbers = #tpu.dot_dimension_numbers<[1], [0], [0], [1], [0, 0, 1, 1], [], []>} : vector<2x256xbf16>, vector<256x128xbf16>, vector<2x128xf32> -> vector<2x128xf32>
    %c0_9 = arith.constant 0 : index
    %c0_10 = arith.constant 0 : index
    %11 = vector.load %arg5[%c0_9, %c0_10] : memref<1x128xf32, #tpu.memory_space<vmem>>, vector<1x128xf32>
    %12 = vector.broadcast %11 : vector<1x128xf32> to vector<2x128xf32>
    %13 = arith.addf %10, %12 : vector<2x128xf32>
    %c0_11 = arith.constant 0 : index
    %c0_12 = arith.constant 0 : index
    %14 = vector.load %arg6[%c0_11, %c0_12] : memref<2x128xf32, #tpu.memory_space<vmem>>, vector<2x128xf32>
    tpu.vector_store %arg6[%c0_11, %c0_12], %13 {strides = array<i32>} : memref<2x128xf32, #tpu.memory_space<vmem>>, vector<2x128xf32>,
    return
  }
  func.func @transform_0(%arg0: i32) -> (i32, i32) {
    %c0_i32 = arith.constant 0 : i32
    %c0_i32_0 = arith.constant 0 : i32
    return %arg0, %c0_i32 : i32, i32
  }
  func.func @transform_1(%arg0: i32) -> (i32, i32) {
    %c0_i32 = arith.constant 0 : i32
    %c0_i32_0 = arith.constant 0 : i32
    %c0_i32_1 = arith.constant 0 : i32
    return %c0_i32, %c0_i32_0 : i32, i32
  }
  func.func @transform_2(%arg0: i32) -> (i32, i32) {
    %c0_i32 = arith.constant 0 : i32
    %c0_i32_0 = arith.constant 0 : i32
    %c0_i32_1 = arith.constant 0 : i32
    return %c0_i32, %c0_i32_0 : i32, i32
  }
  func.func @transform_3(%arg0: i32) -> (i32, i32) {
    %c0_i32 = arith.constant 0 : i32
    %c0_i32_0 = arith.constant 0 : i32
    %c0_i32_1 = arith.constant 0 : i32
    return %c0_i32, %c0_i32_0 : i32, i32
  }
  func.func @transform_4(%arg0: i32) -> (i32, i32) {
    %c0_i32 = arith.constant 0 : i32
    %c0_i32_0 = arith.constant 0 : i32
    %c0_i32_1 = arith.constant 0 : i32
    return %c0_i32, %c0_i32_0 : i32, i32
  }
  func.func @transform_5(%arg0: i32) -> (i32, i32) {
    %c0_i32 = arith.constant 0 : i32
    %c0_i32_0 = arith.constant 0 : i32
    return %arg0, %c0_i32 : i32, i32
  }
}

module attributes {stable_mosaic.version = 11 : i64} {
  func.func @_conv_pool_kernel(%arg0: i32, %arg1: memref<1x18x288xbf16, #tpu.memory_space<vmem>>, %arg2: memref<6x7x18xbf16, #tpu.memory_space<vmem>>, %arg3: memref<10x288x224xbf16, #tpu.memory_space<vmem>>, %arg4: memref<1x224xf32, #tpu.memory_space<vmem>>, %arg5: memref<1x7x224xbf16, #tpu.memory_space<vmem>>) attributes {dimension_semantics = [#tpu.dimension_semantics<parallel>], iteration_bounds = array<i64: 2>, scalar_prefetch = 0 : i64, scratch_operands = 0 : i64, tpu.core_type = #tpu.core_type<tc>, window_params = [{transform_indices = @transform_0, window_bounds = array<i64: 1, 18, 288>}, {pipeline_mode = #tpu.pipeline_mode<synchronous>, transform_indices = @transform_1, window_bounds = array<i64: 6, 7, 18>}, {pipeline_mode = #tpu.pipeline_mode<synchronous>, transform_indices = @transform_2, window_bounds = array<i64: 10, 288, 224>}, {pipeline_mode = #tpu.pipeline_mode<synchronous>, transform_indices = @transform_3, window_bounds = array<i64: 1, 224>}, {transform_indices = @transform_4, window_bounds = array<i64: 1, 7, 224>}]} {
    %c0 = arith.constant 0 : index
    %c0_0 = arith.constant 0 : index
    %0 = vector.load %arg4[%c0, %c0_0] : memref<1x224xf32, #tpu.memory_space<vmem>>, vector<1x224xf32>
    %c0_1 = arith.constant 0 : index
    %c0_2 = arith.constant 0 : index
    %c0_3 = arith.constant 0 : index
    %1 = vector.load %arg1[%c0_1, %c0_2, %c0_3] : memref<1x18x288xbf16, #tpu.memory_space<vmem>>, vector<1x18x288xbf16>
    %2 = vector.shape_cast %1 : vector<1x18x288xbf16> to vector<18x288xbf16>
    %c0_4 = arith.constant 0 : index
    %c0_5 = arith.constant 0 : index
    %c0_6 = arith.constant 0 : index
    %3 = vector.load %arg2[%c0_4, %c0_5, %c0_6] : memref<6x7x18xbf16, #tpu.memory_space<vmem>>, vector<1x7x18xbf16>
    %4 = vector.shape_cast %3 : vector<1x7x18xbf16> to vector<7x18xbf16>
    %cst = arith.constant dense<0.000000e+00> : vector<7x288xf32>
    %5 = tpu.matmul %4, %2, %cst {dimension_numbers = #tpu.dot_dimension_numbers<[1], [0], [0], [1], [0, 0, 1, 1], [], []>} : vector<7x18xbf16>, vector<18x288xbf16>, vector<7x288xf32> -> vector<7x288xf32>
    %6 = arith.truncf %5 : vector<7x288xf32> to vector<7x288xbf16>
    %c1 = arith.constant 1 : index
    %c0_7 = arith.constant 0 : index
    %c0_8 = arith.constant 0 : index
    %7 = vector.load %arg2[%c1, %c0_7, %c0_8] : memref<6x7x18xbf16, #tpu.memory_space<vmem>>, vector<1x7x18xbf16>
    %8 = vector.shape_cast %7 : vector<1x7x18xbf16> to vector<7x18xbf16>
    %cst_9 = arith.constant dense<0.000000e+00> : vector<7x288xf32>
    %9 = tpu.matmul %8, %2, %cst_9 {dimension_numbers = #tpu.dot_dimension_numbers<[1], [0], [0], [1], [0, 0, 1, 1], [], []>} : vector<7x18xbf16>, vector<18x288xbf16>, vector<7x288xf32> -> vector<7x288xf32>
    %10 = arith.truncf %9 : vector<7x288xf32> to vector<7x288xbf16>
    %c2 = arith.constant 2 : index
    %c0_10 = arith.constant 0 : index
    %c0_11 = arith.constant 0 : index
    %11 = vector.load %arg2[%c2, %c0_10, %c0_11] : memref<6x7x18xbf16, #tpu.memory_space<vmem>>, vector<1x7x18xbf16>
    %12 = vector.shape_cast %11 : vector<1x7x18xbf16> to vector<7x18xbf16>
    %cst_12 = arith.constant dense<0.000000e+00> : vector<7x288xf32>
    %13 = tpu.matmul %12, %2, %cst_12 {dimension_numbers = #tpu.dot_dimension_numbers<[1], [0], [0], [1], [0, 0, 1, 1], [], []>} : vector<7x18xbf16>, vector<18x288xbf16>, vector<7x288xf32> -> vector<7x288xf32>
    %14 = arith.truncf %13 : vector<7x288xf32> to vector<7x288xbf16>
    %c3 = arith.constant 3 : index
    %c0_13 = arith.constant 0 : index
    %c0_14 = arith.constant 0 : index
    %15 = vector.load %arg2[%c3, %c0_13, %c0_14] : memref<6x7x18xbf16, #tpu.memory_space<vmem>>, vector<1x7x18xbf16>
    %16 = vector.shape_cast %15 : vector<1x7x18xbf16> to vector<7x18xbf16>
    %cst_15 = arith.constant dense<0.000000e+00> : vector<7x288xf32>
    %17 = tpu.matmul %16, %2, %cst_15 {dimension_numbers = #tpu.dot_dimension_numbers<[1], [0], [0], [1], [0, 0, 1, 1], [], []>} : vector<7x18xbf16>, vector<18x288xbf16>, vector<7x288xf32> -> vector<7x288xf32>
    %18 = arith.truncf %17 : vector<7x288xf32> to vector<7x288xbf16>
    %c4 = arith.constant 4 : index
    %c0_16 = arith.constant 0 : index
    %c0_17 = arith.constant 0 : index
    %19 = vector.load %arg2[%c4, %c0_16, %c0_17] : memref<6x7x18xbf16, #tpu.memory_space<vmem>>, vector<1x7x18xbf16>
    %20 = vector.shape_cast %19 : vector<1x7x18xbf16> to vector<7x18xbf16>
    %cst_18 = arith.constant dense<0.000000e+00> : vector<7x288xf32>
    %21 = tpu.matmul %20, %2, %cst_18 {dimension_numbers = #tpu.dot_dimension_numbers<[1], [0], [0], [1], [0, 0, 1, 1], [], []>} : vector<7x18xbf16>, vector<18x288xbf16>, vector<7x288xf32> -> vector<7x288xf32>
    %22 = arith.truncf %21 : vector<7x288xf32> to vector<7x288xbf16>
    %c5 = arith.constant 5 : index
    %c0_19 = arith.constant 0 : index
    %c0_20 = arith.constant 0 : index
    %23 = vector.load %arg2[%c5, %c0_19, %c0_20] : memref<6x7x18xbf16, #tpu.memory_space<vmem>>, vector<1x7x18xbf16>
    %24 = vector.shape_cast %23 : vector<1x7x18xbf16> to vector<7x18xbf16>
    %cst_21 = arith.constant dense<0.000000e+00> : vector<7x288xf32>
    %25 = tpu.matmul %24, %2, %cst_21 {dimension_numbers = #tpu.dot_dimension_numbers<[1], [0], [0], [1], [0, 0, 1, 1], [], []>} : vector<7x18xbf16>, vector<18x288xbf16>, vector<7x288xf32> -> vector<7x288xf32>
    %26 = arith.truncf %25 : vector<7x288xf32> to vector<7x288xbf16>
    %c0_22 = arith.constant 0 : index
    %c0_23 = arith.constant 0 : index
    %c0_24 = arith.constant 0 : index
    %27 = vector.load %arg3[%c0_22, %c0_23, %c0_24] : memref<10x288x224xbf16, #tpu.memory_space<vmem>>, vector<1x288x224xbf16>
    %28 = vector.shape_cast %27 : vector<1x288x224xbf16> to vector<288x224xbf16>
    %cst_25 = arith.constant dense<0.000000e+00> : vector<7x224xf32>
    %29 = tpu.matmul %6, %28, %cst_25 {dimension_numbers = #tpu.dot_dimension_numbers<[1], [0], [0], [1], [0, 0, 1, 1], [], []>} : vector<7x288xbf16>, vector<288x224xbf16>, vector<7x224xf32> -> vector<7x224xf32>
    %c1_26 = arith.constant 1 : index
    %c0_27 = arith.constant 0 : index
    %c0_28 = arith.constant 0 : index
    %30 = vector.load %arg3[%c1_26, %c0_27, %c0_28] : memref<10x288x224xbf16, #tpu.memory_space<vmem>>, vector<1x288x224xbf16>
    %31 = vector.shape_cast %30 : vector<1x288x224xbf16> to vector<288x224xbf16>
    %cst_29 = arith.constant dense<0.000000e+00> : vector<7x224xf32>
    %32 = tpu.matmul %10, %31, %cst_29 {dimension_numbers = #tpu.dot_dimension_numbers<[1], [0], [0], [1], [0, 0, 1, 1], [], []>} : vector<7x288xbf16>, vector<288x224xbf16>, vector<7x224xf32> -> vector<7x224xf32>
    %33 = arith.addf %29, %32 : vector<7x224xf32>
    %c2_30 = arith.constant 2 : index
    %c0_31 = arith.constant 0 : index
    %c0_32 = arith.constant 0 : index
    %34 = vector.load %arg3[%c2_30, %c0_31, %c0_32] : memref<10x288x224xbf16, #tpu.memory_space<vmem>>, vector<1x288x224xbf16>
    %35 = vector.shape_cast %34 : vector<1x288x224xbf16> to vector<288x224xbf16>
    %cst_33 = arith.constant dense<0.000000e+00> : vector<7x224xf32>
    %36 = tpu.matmul %14, %35, %cst_33 {dimension_numbers = #tpu.dot_dimension_numbers<[1], [0], [0], [1], [0, 0, 1, 1], [], []>} : vector<7x288xbf16>, vector<288x224xbf16>, vector<7x224xf32> -> vector<7x224xf32>
    %37 = arith.addf %33, %36 : vector<7x224xf32>
    %c3_34 = arith.constant 3 : index
    %c0_35 = arith.constant 0 : index
    %c0_36 = arith.constant 0 : index
    %38 = vector.load %arg3[%c3_34, %c0_35, %c0_36] : memref<10x288x224xbf16, #tpu.memory_space<vmem>>, vector<1x288x224xbf16>
    %39 = vector.shape_cast %38 : vector<1x288x224xbf16> to vector<288x224xbf16>
    %cst_37 = arith.constant dense<0.000000e+00> : vector<7x224xf32>
    %40 = tpu.matmul %18, %39, %cst_37 {dimension_numbers = #tpu.dot_dimension_numbers<[1], [0], [0], [1], [0, 0, 1, 1], [], []>} : vector<7x288xbf16>, vector<288x224xbf16>, vector<7x224xf32> -> vector<7x224xf32>
    %41 = arith.addf %37, %40 : vector<7x224xf32>
    %c4_38 = arith.constant 4 : index
    %c0_39 = arith.constant 0 : index
    %c0_40 = arith.constant 0 : index
    %42 = vector.load %arg3[%c4_38, %c0_39, %c0_40] : memref<10x288x224xbf16, #tpu.memory_space<vmem>>, vector<1x288x224xbf16>
    %43 = vector.shape_cast %42 : vector<1x288x224xbf16> to vector<288x224xbf16>
    %cst_41 = arith.constant dense<0.000000e+00> : vector<7x224xf32>
    %44 = tpu.matmul %22, %43, %cst_41 {dimension_numbers = #tpu.dot_dimension_numbers<[1], [0], [0], [1], [0, 0, 1, 1], [], []>} : vector<7x288xbf16>, vector<288x224xbf16>, vector<7x224xf32> -> vector<7x224xf32>
    %45 = arith.addf %41, %44 : vector<7x224xf32>
    %c0_42 = arith.constant 0 : index
    %c0_43 = arith.constant 0 : index
    %c0_44 = arith.constant 0 : index
    %46 = vector.load %arg3[%c0_42, %c0_43, %c0_44] : memref<10x288x224xbf16, #tpu.memory_space<vmem>>, vector<1x288x224xbf16>
    %47 = vector.shape_cast %46 : vector<1x288x224xbf16> to vector<288x224xbf16>
    %cst_45 = arith.constant dense<0.000000e+00> : vector<7x224xf32>
    %48 = tpu.matmul %10, %47, %cst_45 {dimension_numbers = #tpu.dot_dimension_numbers<[1], [0], [0], [1], [0, 0, 1, 1], [], []>} : vector<7x288xbf16>, vector<288x224xbf16>, vector<7x224xf32> -> vector<7x224xf32>
    %c1_46 = arith.constant 1 : index
    %c0_47 = arith.constant 0 : index
    %c0_48 = arith.constant 0 : index
    %49 = vector.load %arg3[%c1_46, %c0_47, %c0_48] : memref<10x288x224xbf16, #tpu.memory_space<vmem>>, vector<1x288x224xbf16>
    %50 = vector.shape_cast %49 : vector<1x288x224xbf16> to vector<288x224xbf16>
    %cst_49 = arith.constant dense<0.000000e+00> : vector<7x224xf32>
    %51 = tpu.matmul %14, %50, %cst_49 {dimension_numbers = #tpu.dot_dimension_numbers<[1], [0], [0], [1], [0, 0, 1, 1], [], []>} : vector<7x288xbf16>, vector<288x224xbf16>, vector<7x224xf32> -> vector<7x224xf32>
    %52 = arith.addf %48, %51 : vector<7x224xf32>
    %c2_50 = arith.constant 2 : index
    %c0_51 = arith.constant 0 : index
    %c0_52 = arith.constant 0 : index
    %53 = vector.load %arg3[%c2_50, %c0_51, %c0_52] : memref<10x288x224xbf16, #tpu.memory_space<vmem>>, vector<1x288x224xbf16>
    %54 = vector.shape_cast %53 : vector<1x288x224xbf16> to vector<288x224xbf16>
    %cst_53 = arith.constant dense<0.000000e+00> : vector<7x224xf32>
    %55 = tpu.matmul %18, %54, %cst_53 {dimension_numbers = #tpu.dot_dimension_numbers<[1], [0], [0], [1], [0, 0, 1, 1], [], []>} : vector<7x288xbf16>, vector<288x224xbf16>, vector<7x224xf32> -> vector<7x224xf32>
    %56 = arith.addf %52, %55 : vector<7x224xf32>
    %c3_54 = arith.constant 3 : index
    %c0_55 = arith.constant 0 : index
    %c0_56 = arith.constant 0 : index
    %57 = vector.load %arg3[%c3_54, %c0_55, %c0_56] : memref<10x288x224xbf16, #tpu.memory_space<vmem>>, vector<1x288x224xbf16>
    %58 = vector.shape_cast %57 : vector<1x288x224xbf16> to vector<288x224xbf16>
    %cst_57 = arith.constant dense<0.000000e+00> : vector<7x224xf32>
    %59 = tpu.matmul %22, %58, %cst_57 {dimension_numbers = #tpu.dot_dimension_numbers<[1], [0], [0], [1], [0, 0, 1, 1], [], []>} : vector<7x288xbf16>, vector<288x224xbf16>, vector<7x224xf32> -> vector<7x224xf32>
    %60 = arith.addf %56, %59 : vector<7x224xf32>
    %c4_58 = arith.constant 4 : index
    %c0_59 = arith.constant 0 : index
    %c0_60 = arith.constant 0 : index
    %61 = vector.load %arg3[%c4_58, %c0_59, %c0_60] : memref<10x288x224xbf16, #tpu.memory_space<vmem>>, vector<1x288x224xbf16>
    %62 = vector.shape_cast %61 : vector<1x288x224xbf16> to vector<288x224xbf16>
    %cst_61 = arith.constant dense<0.000000e+00> : vector<7x224xf32>
    %63 = tpu.matmul %26, %62, %cst_61 {dimension_numbers = #tpu.dot_dimension_numbers<[1], [0], [0], [1], [0, 0, 1, 1], [], []>} : vector<7x288xbf16>, vector<288x224xbf16>, vector<7x224xf32> -> vector<7x224xf32>
    %64 = arith.addf %60, %63 : vector<7x224xf32>
    %65 = arith.maximumf %45, %64 : vector<7x224xf32>
    %c5_62 = arith.constant 5 : index
    %c0_63 = arith.constant 0 : index
    %c0_64 = arith.constant 0 : index
    %66 = vector.load %arg3[%c5_62, %c0_63, %c0_64] : memref<10x288x224xbf16, #tpu.memory_space<vmem>>, vector<1x288x224xbf16>
    %67 = vector.shape_cast %66 : vector<1x288x224xbf16> to vector<288x224xbf16>
    %cst_65 = arith.constant dense<0.000000e+00> : vector<7x224xf32>
    %68 = tpu.matmul %6, %67, %cst_65 {dimension_numbers = #tpu.dot_dimension_numbers<[1], [0], [0], [1], [0, 0, 1, 1], [], []>} : vector<7x288xbf16>, vector<288x224xbf16>, vector<7x224xf32> -> vector<7x224xf32>
    %c6 = arith.constant 6 : index
    %c0_66 = arith.constant 0 : index
    %c0_67 = arith.constant 0 : index
    %69 = vector.load %arg3[%c6, %c0_66, %c0_67] : memref<10x288x224xbf16, #tpu.memory_space<vmem>>, vector<1x288x224xbf16>
    %70 = vector.shape_cast %69 : vector<1x288x224xbf16> to vector<288x224xbf16>
    %cst_68 = arith.constant dense<0.000000e+00> : vector<7x224xf32>
    %71 = tpu.matmul %10, %70, %cst_68 {dimension_numbers = #tpu.dot_dimension_numbers<[1], [0], [0], [1], [0, 0, 1, 1], [], []>} : vector<7x288xbf16>, vector<288x224xbf16>, vector<7x224xf32> -> vector<7x224xf32>
    %72 = arith.addf %68, %71 : vector<7x224xf32>
    %c7 = arith.constant 7 : index
    %c0_69 = arith.constant 0 : index
    %c0_70 = arith.constant 0 : index
    %73 = vector.load %arg3[%c7, %c0_69, %c0_70] : memref<10x288x224xbf16, #tpu.memory_space<vmem>>, vector<1x288x224xbf16>
    %74 = vector.shape_cast %73 : vector<1x288x224xbf16> to vector<288x224xbf16>
    %cst_71 = arith.constant dense<0.000000e+00> : vector<7x224xf32>
    %75 = tpu.matmul %14, %74, %cst_71 {dimension_numbers = #tpu.dot_dimension_numbers<[1], [0], [0], [1], [0, 0, 1, 1], [], []>} : vector<7x288xbf16>, vector<288x224xbf16>, vector<7x224xf32> -> vector<7x224xf32>
    %76 = arith.addf %72, %75 : vector<7x224xf32>
    %c8 = arith.constant 8 : index
    %c0_72 = arith.constant 0 : index
    %c0_73 = arith.constant 0 : index
    %77 = vector.load %arg3[%c8, %c0_72, %c0_73] : memref<10x288x224xbf16, #tpu.memory_space<vmem>>, vector<1x288x224xbf16>
    %78 = vector.shape_cast %77 : vector<1x288x224xbf16> to vector<288x224xbf16>
    %cst_74 = arith.constant dense<0.000000e+00> : vector<7x224xf32>
    %79 = tpu.matmul %18, %78, %cst_74 {dimension_numbers = #tpu.dot_dimension_numbers<[1], [0], [0], [1], [0, 0, 1, 1], [], []>} : vector<7x288xbf16>, vector<288x224xbf16>, vector<7x224xf32> -> vector<7x224xf32>
    %80 = arith.addf %76, %79 : vector<7x224xf32>
    %c9 = arith.constant 9 : index
    %c0_75 = arith.constant 0 : index
    %c0_76 = arith.constant 0 : index
    %81 = vector.load %arg3[%c9, %c0_75, %c0_76] : memref<10x288x224xbf16, #tpu.memory_space<vmem>>, vector<1x288x224xbf16>
    %82 = vector.shape_cast %81 : vector<1x288x224xbf16> to vector<288x224xbf16>
    %cst_77 = arith.constant dense<0.000000e+00> : vector<7x224xf32>
    %83 = tpu.matmul %22, %82, %cst_77 {dimension_numbers = #tpu.dot_dimension_numbers<[1], [0], [0], [1], [0, 0, 1, 1], [], []>} : vector<7x288xbf16>, vector<288x224xbf16>, vector<7x224xf32> -> vector<7x224xf32>
    %84 = arith.addf %80, %83 : vector<7x224xf32>
    %85 = arith.maximumf %65, %84 : vector<7x224xf32>
    %c5_78 = arith.constant 5 : index
    %c0_79 = arith.constant 0 : index
    %c0_80 = arith.constant 0 : index
    %86 = vector.load %arg3[%c5_78, %c0_79, %c0_80] : memref<10x288x224xbf16, #tpu.memory_space<vmem>>, vector<1x288x224xbf16>
    %87 = vector.shape_cast %86 : vector<1x288x224xbf16> to vector<288x224xbf16>
    %cst_81 = arith.constant dense<0.000000e+00> : vector<7x224xf32>
    %88 = tpu.matmul %10, %87, %cst_81 {dimension_numbers = #tpu.dot_dimension_numbers<[1], [0], [0], [1], [0, 0, 1, 1], [], []>} : vector<7x288xbf16>, vector<288x224xbf16>, vector<7x224xf32> -> vector<7x224xf32>
    %c6_82 = arith.constant 6 : index
    %c0_83 = arith.constant 0 : index
    %c0_84 = arith.constant 0 : index
    %89 = vector.load %arg3[%c6_82, %c0_83, %c0_84] : memref<10x288x224xbf16, #tpu.memory_space<vmem>>, vector<1x288x224xbf16>
    %90 = vector.shape_cast %89 : vector<1x288x224xbf16> to vector<288x224xbf16>
    %cst_85 = arith.constant dense<0.000000e+00> : vector<7x224xf32>
    %91 = tpu.matmul %14, %90, %cst_85 {dimension_numbers = #tpu.dot_dimension_numbers<[1], [0], [0], [1], [0, 0, 1, 1], [], []>} : vector<7x288xbf16>, vector<288x224xbf16>, vector<7x224xf32> -> vector<7x224xf32>
    %92 = arith.addf %88, %91 : vector<7x224xf32>
    %c7_86 = arith.constant 7 : index
    %c0_87 = arith.constant 0 : index
    %c0_88 = arith.constant 0 : index
    %93 = vector.load %arg3[%c7_86, %c0_87, %c0_88] : memref<10x288x224xbf16, #tpu.memory_space<vmem>>, vector<1x288x224xbf16>
    %94 = vector.shape_cast %93 : vector<1x288x224xbf16> to vector<288x224xbf16>
    %cst_89 = arith.constant dense<0.000000e+00> : vector<7x224xf32>
    %95 = tpu.matmul %18, %94, %cst_89 {dimension_numbers = #tpu.dot_dimension_numbers<[1], [0], [0], [1], [0, 0, 1, 1], [], []>} : vector<7x288xbf16>, vector<288x224xbf16>, vector<7x224xf32> -> vector<7x224xf32>
    %96 = arith.addf %92, %95 : vector<7x224xf32>
    %c8_90 = arith.constant 8 : index
    %c0_91 = arith.constant 0 : index
    %c0_92 = arith.constant 0 : index
    %97 = vector.load %arg3[%c8_90, %c0_91, %c0_92] : memref<10x288x224xbf16, #tpu.memory_space<vmem>>, vector<1x288x224xbf16>
    %98 = vector.shape_cast %97 : vector<1x288x224xbf16> to vector<288x224xbf16>
    %cst_93 = arith.constant dense<0.000000e+00> : vector<7x224xf32>
    %99 = tpu.matmul %22, %98, %cst_93 {dimension_numbers = #tpu.dot_dimension_numbers<[1], [0], [0], [1], [0, 0, 1, 1], [], []>} : vector<7x288xbf16>, vector<288x224xbf16>, vector<7x224xf32> -> vector<7x224xf32>
    %100 = arith.addf %96, %99 : vector<7x224xf32>
    %c9_94 = arith.constant 9 : index
    %c0_95 = arith.constant 0 : index
    %c0_96 = arith.constant 0 : index
    %101 = vector.load %arg3[%c9_94, %c0_95, %c0_96] : memref<10x288x224xbf16, #tpu.memory_space<vmem>>, vector<1x288x224xbf16>
    %102 = vector.shape_cast %101 : vector<1x288x224xbf16> to vector<288x224xbf16>
    %cst_97 = arith.constant dense<0.000000e+00> : vector<7x224xf32>
    %103 = tpu.matmul %26, %102, %cst_97 {dimension_numbers = #tpu.dot_dimension_numbers<[1], [0], [0], [1], [0, 0, 1, 1], [], []>} : vector<7x288xbf16>, vector<288x224xbf16>, vector<7x224xf32> -> vector<7x224xf32>
    %104 = arith.addf %100, %103 : vector<7x224xf32>
    %105 = arith.maximumf %85, %104 : vector<7x224xf32>
    %106 = vector.broadcast %0 : vector<1x224xf32> to vector<7x224xf32>
    %107 = arith.addf %105, %106 : vector<7x224xf32>
    %cst_98 = arith.constant 0.000000e+00 : f32
    %108 = vector.broadcast %cst_98 : f32 to vector<7x224xf32>
    %109 = arith.maximumf %107, %108 : vector<7x224xf32>
    %110 = arith.truncf %109 : vector<7x224xf32> to vector<7x224xbf16>
    %c0_99 = arith.constant 0 : index
    %c0_100 = arith.constant 0 : index
    %c0_101 = arith.constant 0 : index
    %111 = vector.load %arg5[%c0_99, %c0_100, %c0_101] : memref<1x7x224xbf16, #tpu.memory_space<vmem>>, vector<1x7x224xbf16>
    %112 = vector.shape_cast %111 : vector<1x7x224xbf16> to vector<7x224xbf16>
    %113 = vector.shape_cast %110 : vector<7x224xbf16> to vector<1x7x224xbf16>
    tpu.vector_store %arg5[%c0_99, %c0_100, %c0_101], %113 {strides = array<i32>} : memref<1x7x224xbf16, #tpu.memory_space<vmem>>, vector<1x7x224xbf16>,
    return
  }
  func.func @transform_0(%arg0: i32) -> (i32, i32, i32) {
    %c0_i32 = arith.constant 0 : i32
    %c0_i32_0 = arith.constant 0 : i32
    %c0_i32_1 = arith.constant 0 : i32
    return %arg0, %c0_i32, %c0_i32_0 : i32, i32, i32
  }
  func.func @transform_1(%arg0: i32) -> (i32, i32, i32) {
    %c0_i32 = arith.constant 0 : i32
    %c0_i32_0 = arith.constant 0 : i32
    %c0_i32_1 = arith.constant 0 : i32
    %c0_i32_2 = arith.constant 0 : i32
    return %c0_i32, %c0_i32_0, %c0_i32_1 : i32, i32, i32
  }
  func.func @transform_2(%arg0: i32) -> (i32, i32, i32) {
    %c0_i32 = arith.constant 0 : i32
    %c0_i32_0 = arith.constant 0 : i32
    %c0_i32_1 = arith.constant 0 : i32
    %c0_i32_2 = arith.constant 0 : i32
    return %c0_i32, %c0_i32_0, %c0_i32_1 : i32, i32, i32
  }
  func.func @transform_3(%arg0: i32) -> (i32, i32) {
    %c0_i32 = arith.constant 0 : i32
    %c0_i32_0 = arith.constant 0 : i32
    %c0_i32_1 = arith.constant 0 : i32
    return %c0_i32, %c0_i32_0 : i32, i32
  }
  func.func @transform_4(%arg0: i32) -> (i32, i32, i32) {
    %c0_i32 = arith.constant 0 : i32
    %c0_i32_0 = arith.constant 0 : i32
    %c0_i32_1 = arith.constant 0 : i32
    return %arg0, %c0_i32, %c0_i32_0 : i32, i32, i32
  }
}

</mosaic_0001>

<llo_original>
// kernel: cnn_forward.3
$region0: #{cnn_forward.3}
  #allocation0 [shape = 'u32[]', space=smem, size = 0x4, offset = 0x4, fixed_abs, tag = 'smem constant byte address 0x4 - core index']
  #allocation1 [shape = 'u32[144,128]{1,0:T(1,128)}', space=vmem, size = 0x12000, scoped, tag = 'internal scratch']
  %s0 = inlined_call_operand.vmem [shape: bf16[2,32,32], index: 0, kind: input, shape index: {}]
  %s1 = inlined_call_operand.hbm [shape: bf16[6,14,32], index: 1, kind: input, shape index: {}]
  %s2 = inlined_call_operand.hbm [shape: bf16[10,32,224], index: 2, kind: input, shape index: {}]
  %s3 = inlined_call_operand.hbm [shape: f32[1,224], index: 3, kind: input, shape index: {}]
  %s4 = inlined_call_operand.vmem [shape: bf16[2,14,224], index: 4, kind: output, shape index: {}]
  %s5 = sld [smem:[#allocation0]]
  $region61: #{cnn_forward.3} parent=0
    _
  %s7 = ssub.s32 1, %s5
  %s8 = scalar_select 0, %s7, %s5
  $region1: #{cnn_forward.3} parent=0
    #allocation2 [shape = 'u8[24576]{0}', space=vmem, size = 0x6000, scoped, tag = 'input window, operand 1, single buffered']
    #allocation3 [shape = 's32[2]{0}', space=sflag, size = 0x8, scoped, tag = 'scoped memory for cnn_forward.3']
    #allocation4 [shape = 'u8[163840]{0}', space=vmem, size = 0x28000, scoped, tag = 'input window, operand 2, single buffered']
    #allocation5 [shape = 's32[1]{0}', space=sflag, size = 0x4, scoped, tag = 'scoped memory for cnn_forward.3']
    #allocation6 [shape = 'u8[1024]{0}', space=vmem, size = 0x400, scoped, tag = 'input window, operand 3, single buffered']
    %9 = vsyncpa [#allocation3], 0
    %10 = vsyncpa [#allocation5], 0
    loop: start=0, step=1, limit=4
    $region2: #{cnn_forward.3} parent=1 // loop_pre_header
      _
    $region3: #{cnn_forward.3} parent=1 // loop_header
      %s12 = sphi 0, %s16
      %p13 = scmp.ge.s32.totalorder %s12, 4
      %s22 = sphi 0, %s24
      %s25 = sphi 0, %s22
      %s26 = sphi 0, %s25
      %s42 = sphi 0, %s26
      %s46 = sphi 0, %s46
      %s48 = sphi 0, %s46
      %s49 = sphi 0, %s48
      %s63 = sphi 0, %s49
      %s67 = sphi 0, %s67
      %s69 = sphi 0, %s67
      %s70 = sphi 0, %s69
      %s84 = sphi 0, %s70
      %s88 = sphi 0, %s88
      %s90 = sphi 0, %s88
      %s91 = sphi 0, %s90
      %s105 = sphi 0, %s91
      %s111 = sphi 0, %s113
      %s114 = sphi 0, %s111
      %s115 = sphi 0, %s114
      %s131 = sphi 0, %s115
    $region4: #{cnn_forward.3} parent=1 // loop_header_branch
      %15 = sbr.rel (%p13) target = $region8
    $region5: #{cnn_forward.3} parent=1 // loop_body
      %s17 = ssub.s32 %s12, 1
      %s18 = ssub.s32 %s12, 2
      %s19 = sadd.s32 %s12, 1
      %s20 = ssub.s32 %s12, %s19
      %p21 = scmp.eq.s32.totalorder %s20, 0
      %s23 = sadd.s32 %s22, 1
      %s24 = scalar_select %p21, %s22, %s23
      %p27 = pneg %p21
      %p28 = scmp.eq.s32.totalorder %s12, 1
      %p29 = por %p27, %p28
      %p30 = scmp.ne.s32.totalorder %s22, %s25
      %p31 = scmp.eq.s32.totalorder %s12, 0
      %p32 = por %p30, %p31
      %p33 = scmp.ne.s32.totalorder %s22, %s25
      %p34 = scmp.eq.s32.totalorder %s17, 1
      %p35 = por %p33, %p34
      %p36 = scmp.ne.s32.totalorder %s25, %s26
      %p37 = scmp.eq.s32.totalorder %s17, 0
      %p38 = por %p36, %p37
      %p39 = scmp.ne.s32.totalorder %s25, %s26
      %p40 = scmp.eq.s32.totalorder %s18, 1
      %p41 = por %p39, %p40
      %p43 = scmp.ne.s32.totalorder %s26, %s42
      %p44 = scmp.eq.s32.totalorder %s18, 0
      %p45 = por %p43, %p44
      %s47 = sadd.s32 %s46, 1
      %p50 = scmp.eq.s32.totalorder %s12, 1
      %p51 = scmp.ne.s32.totalorder %s46, %s48
      %p52 = scmp.eq.s32.totalorder %s12, 0
      %p53 = por %p51, %p52
      %p54 = scmp.ne.s32.totalorder %s46, %s48
      %p55 = scmp.eq.s32.totalorder %s17, 1
      %p56 = por %p54, %p55
      %p57 = scmp.ne.s32.totalorder %s48, %s49
      %p58 = scmp.eq.s32.totalorder %s17, 0
      %p59 = por %p57, %p58
      %p60 = scmp.ne.s32.totalorder %s48, %s49
      %p61 = scmp.eq.s32.totalorder %s18, 1
      %p62 = por %p60, %p61
      %p64 = scmp.ne.s32.totalorder %s49, %s63
      %p65 = scmp.eq.s32.totalorder %s18, 0
      %p66 = por %p64, %p65
      %s68 = sadd.s32 %s67, 1
      %p71 = scmp.eq.s32.totalorder %s12, 1
      %p72 = scmp.ne.s32.totalorder %s67, %s69
      %p73 = scmp.eq.s32.totalorder %s12, 0
      %p74 = por %p72, %p73
      %p75 = scmp.ne.s32.totalorder %s67, %s69
      %p76 = scmp.eq.s32.totalorder %s17, 1
      %p77 = por %p75, %p76
      %p78 = scmp.ne.s32.totalorder %s69, %s70
      %p79 = scmp.eq.s32.totalorder %s17, 0
      %p80 = por %p78, %p79
      %p81 = scmp.ne.s32.totalorder %s69, %s70
      %p82 = scmp.eq.s32.totalorder %s18, 1
      %p83 = por %p81, %p82
      %p85 = scmp.ne.s32.totalorder %s70, %s84
      %p86 = scmp.eq.s32.totalorder %s18, 0
      %p87 = por %p85, %p86
      %s89 = sadd.s32 %s88, 1
      %p92 = scmp.eq.s32.totalorder %s12, 1
      %p93 = scmp.ne.s32.totalorder %s88, %s90
      %p94 = scmp.eq.s32.totalorder %s12, 0
      %p95 = por %p93, %p94
      %p96 = scmp.ne.s32.totalorder %s88, %s90
      %p97 = scmp.eq.s32.totalorder %s17, 1
      %p98 = por %p96, %p97
      %p99 = scmp.ne.s32.totalorder %s90, %s91
      %p100 = scmp.eq.s32.totalorder %s17, 0
      %p101 = por %p99, %p100
      %p102 = scmp.ne.s32.totalorder %s90, %s91
      %p103 = scmp.eq.s32.totalorder %s18, 1
      %p104 = por %p102, %p103
      %p106 = scmp.ne.s32.totalorder %s91, %s105
      %p107 = scmp.eq.s32.totalorder %s18, 0
      %p108 = por %p106, %p107
      %s109 = ssub.s32 %s12, %s19
      %p110 = scmp.eq.s32.totalorder %s109, 0
      %s112 = sadd.s32 %s111, 1
      %s113 = scalar_select %p110, %s111, %s112
      %p116 = pneg %p110
      %p117 = scmp.eq.s32.totalorder %s12, 1
      %p118 = por %p116, %p117
      %p119 = scmp.ne.s32.totalorder %s111, %s114
      %p120 = scmp.eq.s32.totalorder %s12, 0
      %p121 = por %p119, %p120
      %p122 = scmp.ne.s32.totalorder %s111, %s114
      %p123 = scmp.eq.s32.totalorder %s17, 1
      %p124 = por %p122, %p123
      %p125 = scmp.ne.s32.totalorder %s114, %s115
      %p126 = scmp.eq.s32.totalorder %s17, 0
      %p127 = por %p125, %p126
      %p128 = scmp.ne.s32.totalorder %s114, %s115
      %p129 = scmp.eq.s32.totalorder %s18, 1
      %p130 = por %p128, %p129
      %p132 = scmp.ne.s32.totalorder %s115, %s131
      %p133 = scmp.eq.s32.totalorder %s18, 0
      %p134 = por %p132, %p133
      %p135 = scmp.le.s32.totalorder 1, %s12
      %p136 = scmp.lt.s32.totalorder %s12, 3
      %p137 = pnand %p135, %p136
      %p138 = pneg %p137
      // Predicated region
      $region9: #{cnn_forward.3} parent=5 // pred_check
        _
      $region10: #{cnn_forward.3} parent=5 // pred_check_branch
        %140 = sbr.rel (%p137) target = $region12
      $region11: #{cnn_forward.3} parent=5 // pred_region
        %s141 = ssub.s32 %s12, 1
        // Predicated region
        $region13: #{cnn_forward.3} parent=11 // pred_check
          %p142 = pneg %p59
        $region14: #{cnn_forward.3} parent=11 // pred_check_branch
          %144 = sbr.rel (%p142) target = $region16
        $region15: #{cnn_forward.3} parent=11 // pred_region
          %s146 = ssub.s32 768, 768
          %147 = vsyncadd [#allocation3], %s146
          %s148 = sshll.u32 [#allocation2], 4
          %s149 = int_to_ptr.vmem [resolvable:$true] %s148
          %154 = dma.hbm_to_vmem [thread:$0]  %s1, 768, %s149, [#allocation3], 64, 64, 4
        $region16: #{cnn_forward.3} parent=11 // pred_fallthru
          _
        // Predicated region
        $region17: #{cnn_forward.3} parent=11 // pred_check
          %p155 = pneg %p80
        $region18: #{cnn_forward.3} parent=11 // pred_check_branch
          %157 = sbr.rel (%p155) target = $region20
        $region19: #{cnn_forward.3} parent=11 // pred_region
          %s159 = ssub.s32 5120, 5120
          %160 = vsyncadd [#allocation5], %s159
          %s161 = sshll.u32 [#allocation4], 4
          %s162 = int_to_ptr.vmem [resolvable:$true] %s161
          %167 = dma.hbm_to_vmem [thread:$0]  %s2, 5120, %s162, [#allocation5], 128, 128, 8
        $region20: #{cnn_forward.3} parent=11 // pred_fallthru
          _
        // Predicated region
        $region21: #{cnn_forward.3} parent=11 // pred_check
          %p168 = pneg %p101
        $region22: #{cnn_forward.3} parent=11 // pred_check_branch
          %170 = sbr.rel (%p168) target = $region24
        $region23: #{cnn_forward.3} parent=11 // pred_region
          %s172 = ssub.s32 32, 32
          %173 = vsyncadd [#allocation5], %s172
          %s175 = sshll.u32 [#allocation6], 4
          %s176 = int_to_ptr.vmem [resolvable:$true] %s175
          %178 = dma.hbm_to_vmem [thread:$0]  %s3, 32, %s176, [#allocation5]
        $region24: #{cnn_forward.3} parent=11 // pred_fallthru
          _
      $region12: #{cnn_forward.3} parent=5 // pred_fallthru
        _
      %p179 = scmp.lt.s32.totalorder %s12, 2
      // Predicated region
      $region25: #{cnn_forward.3} parent=5 // pred_check
        %p180 = pneg %p179
      $region26: #{cnn_forward.3} parent=5 // pred_check_branch
        %182 = sbr.rel (%p180) target = $region28
      $region27: #{cnn_forward.3} parent=5 // pred_region
        // Predicated region
        $region29: #{cnn_forward.3} parent=27 // pred_check
          %p183 = pneg %p32
        $region30: #{cnn_forward.3} parent=27 // pred_check_branch
          %185 = sbr.rel (%p183) target = $region32
        $region31: #{cnn_forward.3} parent=27 // pred_region
          %p186 = scmp.lt.s32.totalorder %s12, 1
          %s187 = scalar_select %p186, %s12, 1
          %s188 = smul.addr %s187, 4
          %s189 = smul.addr %s188, 4
          %s190 = scalar_lea.vmem %s0, %s189
        $region32: #{cnn_forward.3} parent=27 // pred_fallthru
          _
      $region28: #{cnn_forward.3} parent=5 // pred_fallthru
        _
      %p191 = scmp.le.s32.totalorder 1, %s12
      %p192 = scmp.lt.s32.totalorder %s12, 3
      %p193 = pnand %p191, %p192
      %p194 = pneg %p193
      // Predicated region
      $region33: #{cnn_forward.3} parent=5 // pred_check
        _
      $region34: #{cnn_forward.3} parent=5 // pred_check_branch
        %196 = sbr.rel (%p193) target = $region36
      $region35: #{cnn_forward.3} parent=5 // pred_region
        %s197 = ssub.s32 %s12, 1
        // Predicated region
        $region37: #{cnn_forward.3} parent=35 // pred_check
          %p198 = pneg %p59
        $region38: #{cnn_forward.3} parent=35 // pred_check_branch
          %200 = sbr.rel (%p198) target = $region40
        $region39: #{cnn_forward.3} parent=35 // pred_region
          %201 = dma.done [#allocation3], 768
        $region40: #{cnn_forward.3} parent=35 // pred_fallthru
          _
        // Predicated region
        $region41: #{cnn_forward.3} parent=35 // pred_check
          %p202 = pneg %p80
        $region42: #{cnn_forward.3} parent=35 // pred_check_branch
          %204 = sbr.rel (%p202) target = $region44
        $region43: #{cnn_forward.3} parent=35 // pred_region
          %205 = dma.done [#allocation5], 5120
        $region44: #{cnn_forward.3} parent=35 // pred_fallthru
          _
        // Predicated region
        $region45: #{cnn_forward.3} parent=35 // pred_check
          %p206 = pneg %p101
        $region46: #{cnn_forward.3} parent=35 // pred_check_branch
          %208 = sbr.rel (%p206) target = $region48
        $region47: #{cnn_forward.3} parent=35 // pred_region
          %209 = dma.done [#allocation5], 32
        $region48: #{cnn_forward.3} parent=35 // pred_fallthru
          _
        %p210 = scmp.lt.s32.totalorder %s17, 1
        %s211 = scalar_select %p210, %s17, 1
        %s212 = smul.addr %s211, 4
        %s213 = smul.addr %s212, 4
        %s214 = scalar_lea.vmem %s0, %s213
        %p215 = pneg %p38
        %p216 = pneg %p35
        %p217 = pneg %p59
        %p218 = pneg %p56
        %p219 = pneg %p80
        %p220 = pneg %p77
        %p221 = pneg %p101
        %p222 = pneg %p98
        %p223 = pneg %p127
        %p224 = pneg %p124
        %p225 = scmp.lt.s32.totalorder %s17, 1
        %s226 = scalar_select %p225, %s17, 1
        %s227 = smul.addr %s226, 4
        %s228 = smul.addr %s227, 4
        %s229 = scalar_lea.vmem %s4, %s228
        %p230 = scmp.lt.s32.totalorder %s17, 1
        %s231 = scalar_select %p230, %s17, 1
        %s232 = smul.addr %s231, 4
        %s233 = smul.addr %s232, 4
        %s234 = scalar_lea.vmem %s0, %s233
        %p235 = scmp.lt.s32.totalorder %s17, 1
        %s236 = scalar_select %p235, %s17, 1
        %s237 = smul.addr %s236, 4
        %s238 = smul.addr %s237, 4
        %s239 = scalar_lea.vmem %s4, %s238
        %v241 = vld [vmem:[#allocation6] sm:$0x3]
        %v242 = vld [vmem:[%s234] sm:$0xf]
        %v243 = vld [vmem:[%s234 + $0x4] sm:$0xf]
        %v244 = vld [vmem:[%s234 + $0x8] sm:$0xf]
        %v245 = vld [vmem:[%s234 + $0xc] sm:$0xf]
        %v246 = vld [vmem:[#allocation2] sm:$0xf]
        %v247 = vld [vmem:[#allocation2 + $0x4] sm:$0x7]
        %v250 = vunpack.c.l.b16 %v246
        %v251 = vunpack.c.l.b16 %v247
        %v252 = vpack.c.b16 %v251, %v250
        %v257 = vunpack.c.l.b16 %v242
        %v258 = vunpack.c.l.b16 %v243
        %v259 = vunpack.c.l.b16 %v244
        %v260 = vunpack.c.l.b16 %v245
        %v261 = vpack.c.b16 %v258, %v257
        %v262 = vpack.c.b16 %v260, %v259
        %vm265 = vcmask 261120
        %v267 = vsel %vm265, %v252, 0
        %269 = vmatprep.subr.bf16.mxu0 0
        %270 = vmatpush1.bf16.msra.mxu0 %v261
        %271 = vmatprep.subr.bf16.mxu0 0
        %272 = vmatpush1.bf16.msra.mxu0 %v262
        %273 = vmatprep.subr.bf16.mxu0 0
        %274 = vmatpush1.bf16.msra.mxu0 0
        %275 = vmatprep.subr.bf16.mxu0 0
        %276 = vmatpush1.bf16.msra.mxu0 0
        %277 = vmatprep.subr.bf16.mxu0 0
        %278 = vmatpush1.bf16.msra.mxu0 0
        %279 = vmatprep.subr.bf16.mxu0 0
        %280 = vmatpush1.bf16.msra.mxu0 0
        %281 = vmatprep.subr.bf16.mxu0 0
        %282 = vmatpush1.bf16.msra.mxu0 0
        %283 = vmatprep.subr.bf16.mxu0 0
        %284 = vmatpush1.bf16.msra.mxu0 0
        %285 = vmatprep.subr.bf16.mxu0 0
        %286 = vmatpush1.bf16.msra.mxu0 0
        %287 = vmatprep.subr.bf16.mxu0 0
        %288 = vmatpush1.bf16.msra.mxu0 0
        %289 = vmatprep.subr.bf16.mxu0 0
        %290 = vmatpush1.bf16.msra.mxu0 0
        %291 = vmatprep.subr.bf16.mxu0 0
        %292 = vmatpush1.bf16.msra.mxu0 0
        %293 = vmatprep.subr.bf16.mxu0 0
        %294 = vmatpush1.bf16.msra.mxu0 0
        %295 = vmatprep.subr.bf16.mxu0 0
        %296 = vmatpush1.bf16.msra.mxu0 0
        %297 = vmatprep.subr.bf16.mxu0 0
        %298 = vmatpush1.bf16.msra.mxu0 0
        %299 = vmatprep.subr.bf16.mxu0 0
        %300 = vmatpush1.bf16.msra.mxu0 0
        %301 = vmatprep.mubr.bf16.mxu0 0
        %302 = vmatmul.mubr.bf16.gmra.mrb[0].mxu0 %v267
        %v303 = vpop.f32.mrb[0].mxu0
        %v304 = vadd.f32 0.0, %v303
        %v305 = vpop.f32.mrb[0].mxu0
        %v306 = vpop.f32.mrb[0].mxu0
        %v307 = vadd.f32 0.0, %v306
        %v308 = vpop.f32.mrb[0].mxu0
        %309 = vdwg.mxu0
        %v310 = vpack.c.bf16 %v307, %v304
        %s311 = scalar_lea.vmem [#allocation2], 8
        %v312 = vld [vmem:[%s311] sm:$0xf]
        %v313 = vld [vmem:[%s311 + $0x4] sm:$0x7]
        %v316 = vunpack.c.l.b16 %v312
        %v317 = vunpack.c.l.b16 %v313
        %v318 = vpack.c.b16 %v317, %v316
        %v320 = vsel %vm265, %v318, 0
        %322 = vmatprep.subr.bf16.mxu0 0
        %323 = vmatpush1.bf16.msra.mxu0 %v261
        %324 = vmatprep.subr.bf16.mxu0 0
        %325 = vmatpush1.bf16.msra.mxu0 %v262
        %326 = vmatprep.subr.bf16.mxu0 0
        %327 = vmatpush1.bf16.msra.mxu0 0
        %328 = vmatprep.subr.bf16.mxu0 0
        %329 = vmatpush1.bf16.msra.mxu0 0
        %330 = vmatprep.subr.bf16.mxu0 0
        %331 = vmatpush1.bf16.msra.mxu0 0
        %332 = vmatprep.subr.bf16.mxu0 0
        %333 = vmatpush1.bf16.msra.mxu0 0
        %334 = vmatprep.subr.bf16.mxu0 0
        %335 = vmatpush1.bf16.msra.mxu0 0
        %336 = vmatprep.subr.bf16.mxu0 0
        %337 = vmatpush1.bf16.msra.mxu0 0
        %338 = vmatprep.subr.bf16.mxu0 0
        %339 = vmatpush1.bf16.msra.mxu0 0
        %340 = vmatprep.subr.bf16.mxu0 0
        %341 = vmatpush1.bf16.msra.mxu0 0
        %342 = vmatprep.subr.bf16.mxu0 0
        %343 = vmatpush1.bf16.msra.mxu0 0
        %344 = vmatprep.subr.bf16.mxu0 0
        %345 = vmatpush1.bf16.msra.mxu0 0
        %346 = vmatprep.subr.bf16.mxu0 0
        %347 = vmatpush1.bf16.msra.mxu0 0
        %348 = vmatprep.subr.bf16.mxu0 0
        %349 = vmatpush1.bf16.msra.mxu0 0
        %350 = vmatprep.subr.bf16.mxu0 0
        %351 = vmatpush1.bf16.msra.mxu0 0
        %352 = vmatprep.subr.bf16.mxu0 0
        %353 = vmatpush1.bf16.msra.mxu0 0
        %354 = vmatprep.mubr.bf16.mxu0 0
        %355 = vmatmul.mubr.bf16.gmra.mrb[0].mxu0 %v320
        %v356 = vpop.f32.mrb[0].mxu0
        %v357 = vadd.f32 0.0, %v356
        %v358 = vpop.f32.mrb[0].mxu0
        %v359 = vpop.f32.mrb[0].mxu0
        %v360 = vadd.f32 0.0, %v359
        %v361 = vpop.f32.mrb[0].mxu0
        %362 = vdwg.mxu0
        %v363 = vpack.c.bf16 %v360, %v357
        %s364 = scalar_lea.vmem [#allocation2], 16
        %v365 = vld [vmem:[%s364] sm:$0xf]
        %v366 = vld [vmem:[%s364 + $0x4] sm:$0x7]
        %v369 = vunpack.c.l.b16 %v365
        %v370 = vunpack.c.l.b16 %v366
        %v371 = vpack.c.b16 %v370, %v369
        %v373 = vsel %vm265, %v371, 0
        %375 = vmatprep.subr.bf16.mxu0 0
        %376 = vmatpush1.bf16.msra.mxu0 %v261
        %377 = vmatprep.subr.bf16.mxu0 0
        %378 = vmatpush1.bf16.msra.mxu0 %v262
        %379 = vmatprep.subr.bf16.mxu0 0
        %380 = vmatpush1.bf16.msra.mxu0 0
        %381 = vmatprep.subr.bf16.mxu0 0
        %382 = vmatpush1.bf16.msra.mxu0 0
        %383 = vmatprep.subr.bf16.mxu0 0
        %384 = vmatpush1.bf16.msra.mxu0 0
        %385 = vmatprep.subr.bf16.mxu0 0
        %386 = vmatpush1.bf16.msra.mxu0 0
        %387 = vmatprep.subr.bf16.mxu0 0
        %388 = vmatpush1.bf16.msra.mxu0 0
        %389 = vmatprep.subr.bf16.mxu0 0
        %390 = vmatpush1.bf16.msra.mxu0 0
        %391 = vmatprep.subr.bf16.mxu0 0
        %392 = vmatpush1.bf16.msra.mxu0 0
        %393 = vmatprep.subr.bf16.mxu0 0
        %394 = vmatpush1.bf16.msra.mxu0 0
        %395 = vmatprep.subr.bf16.mxu0 0
        %396 = vmatpush1.bf16.msra.mxu0 0
        %397 = vmatprep.subr.bf16.mxu0 0
        %398 = vmatpush1.bf16.msra.mxu0 0
        %399 = vmatprep.subr.bf16.mxu0 0
        %400 = vmatpush1.bf16.msra.mxu0 0
        %401 = vmatprep.subr.bf16.mxu0 0
        %402 = vmatpush1.bf16.msra.mxu0 0
        %403 = vmatprep.subr.bf16.mxu0 0
        %404 = vmatpush1.bf16.msra.mxu0 0
        %405 = vmatprep.subr.bf16.mxu0 0
        %406 = vmatpush1.bf16.msra.mxu0 0
        %407 = vmatprep.mubr.bf16.mxu0 0
        %408 = vmatmul.mubr.bf16.gmra.mrb[0].mxu0 %v373
        %v409 = vpop.f32.mrb[0].mxu0
        %v410 = vadd.f32 0.0, %v409
        %v411 = vpop.f32.mrb[0].mxu0
        %v412 = vpop.f32.mrb[0].mxu0
        %v413 = vadd.f32 0.0, %v412
        %v414 = vpop.f32.mrb[0].mxu0
        %415 = vdwg.mxu0
        %v416 = vpack.c.bf16 %v413, %v410
        %s417 = scalar_lea.vmem [#allocation2], 24
        %v418 = vld [vmem:[%s417] sm:$0xf]
        %v419 = vld [vmem:[%s417 + $0x4] sm:$0x7]
        %v422 = vunpack.c.l.b16 %v418
        %v423 = vunpack.c.l.b16 %v419
        %v424 = vpack.c.b16 %v423, %v422
        %v426 = vsel %vm265, %v424, 0
        %428 = vmatprep.subr.bf16.mxu0 0
        %429 = vmatpush1.bf16.msra.mxu0 %v261
        %430 = vmatprep.subr.bf16.mxu0 0
        %431 = vmatpush1.bf16.msra.mxu0 %v262
        %432 = vmatprep.subr.bf16.mxu0 0
        %433 = vmatpush1.bf16.msra.mxu0 0
        %434 = vmatprep.subr.bf16.mxu0 0
        %435 = vmatpush1.bf16.msra.mxu0 0
        %436 = vmatprep.subr.bf16.mxu0 0
        %437 = vmatpush1.bf16.msra.mxu0 0
        %438 = vmatprep.subr.bf16.mxu0 0
        %439 = vmatpush1.bf16.msra.mxu0 0
        %440 = vmatprep.subr.bf16.mxu0 0
        %441 = vmatpush1.bf16.msra.mxu0 0
        %442 = vmatprep.subr.bf16.mxu0 0
        %443 = vmatpush1.bf16.msra.mxu0 0
        %444 = vmatprep.subr.bf16.mxu0 0
        %445 = vmatpush1.bf16.msra.mxu0 0
        %446 = vmatprep.subr.bf16.mxu0 0
        %447 = vmatpush1.bf16.msra.mxu0 0
        %448 = vmatprep.subr.bf16.mxu0 0
        %449 = vmatpush1.bf16.msra.mxu0 0
        %450 = vmatprep.subr.bf16.mxu0 0
        %451 = vmatpush1.bf16.msra.mxu0 0
        %452 = vmatprep.subr.bf16.mxu0 0
        %453 = vmatpush1.bf16.msra.mxu0 0
        %454 = vmatprep.subr.bf16.mxu0 0
        %455 = vmatpush1.bf16.msra.mxu0 0
        %456 = vmatprep.subr.bf16.mxu0 0
        %457 = vmatpush1.bf16.msra.mxu0 0
        %458 = vmatprep.subr.bf16.mxu0 0
        %459 = vmatpush1.bf16.msra.mxu0 0
        %460 = vmatprep.mubr.bf16.mxu0 0
        %461 = vmatmul.mubr.bf16.gmra.mrb[0].mxu0 %v426
        %v462 = vpop.f32.mrb[0].mxu0
        %v463 = vadd.f32 0.0, %v462
        %v464 = vpop.f32.mrb[0].mxu0
        %v465 = vpop.f32.mrb[0].mxu0
        %v466 = vadd.f32 0.0, %v465
        %v467 = vpop.f32.mrb[0].mxu0
        %468 = vdwg.mxu0
        %v469 = vpack.c.bf16 %v466, %v463
        %s470 = scalar_lea.vmem [#allocation2], 32
        %v471 = vld [vmem:[%s470] sm:$0xf]
        %v472 = vld [vmem:[%s470 + $0x4] sm:$0x7]
        %v475 = vunpack.c.l.b16 %v471
        %v476 = vunpack.c.l.b16 %v472
        %v477 = vpack.c.b16 %v476, %v475
        %v479 = vsel %vm265, %v477, 0
        %481 = vmatprep.subr.bf16.mxu0 0
        %482 = vmatpush1.bf16.msra.mxu0 %v261
        %483 = vmatprep.subr.bf16.mxu0 0
        %484 = vmatpush1.bf16.msra.mxu0 %v262
        %485 = vmatprep.subr.bf16.mxu0 0
        %486 = vmatpush1.bf16.msra.mxu0 0
        %487 = vmatprep.subr.bf16.mxu0 0
        %488 = vmatpush1.bf16.msra.mxu0 0
        %489 = vmatprep.subr.bf16.mxu0 0
        %490 = vmatpush1.bf16.msra.mxu0 0
        %491 = vmatprep.subr.bf16.mxu0 0
        %492 = vmatpush1.bf16.msra.mxu0 0
        %493 = vmatprep.subr.bf16.mxu0 0
        %494 = vmatpush1.bf16.msra.mxu0 0
        %495 = vmatprep.subr.bf16.mxu0 0
        %496 = vmatpush1.bf16.msra.mxu0 0
        %497 = vmatprep.subr.bf16.mxu0 0
        %498 = vmatpush1.bf16.msra.mxu0 0
        %499 = vmatprep.subr.bf16.mxu0 0
        %500 = vmatpush1.bf16.msra.mxu0 0
        %501 = vmatprep.subr.bf16.mxu0 0
        %502 = vmatpush1.bf16.msra.mxu0 0
        %503 = vmatprep.subr.bf16.mxu0 0
        %504 = vmatpush1.bf16.msra.mxu0 0
        %505 = vmatprep.subr.bf16.mxu0 0
        %506 = vmatpush1.bf16.msra.mxu0 0
        %507 = vmatprep.subr.bf16.mxu0 0
        %508 = vmatpush1.bf16.msra.mxu0 0
        %509 = vmatprep.subr.bf16.mxu0 0
        %510 = vmatpush1.bf16.msra.mxu0 0
        %511 = vmatprep.subr.bf16.mxu0 0
        %512 = vmatpush1.bf16.msra.mxu0 0
        %513 = vmatprep.mubr.bf16.mxu0 0
        %514 = vmatmul.mubr.bf16.gmra.mrb[0].mxu0 %v479
        %v515 = vpop.f32.mrb[0].mxu0
        %v516 = vadd.f32 0.0, %v515
        %v517 = vpop.f32.mrb[0].mxu0
        %v518 = vpop.f32.mrb[0].mxu0
        %v519 = vadd.f32 0.0, %v518
        %v520 = vpop.f32.mrb[0].mxu0
        %521 = vdwg.mxu0
        %v522 = vpack.c.bf16 %v519, %v516
        %s523 = scalar_lea.vmem [#allocation2], 40
        %v524 = vld [vmem:[%s523] sm:$0xf]
        %v525 = vld [vmem:[%s523 + $0x4] sm:$0x7]
        %v528 = vunpack.c.l.b16 %v524
        %v529 = vunpack.c.l.b16 %v525
        %v530 = vpack.c.b16 %v529, %v528
        %v532 = vsel %vm265, %v530, 0
        %534 = vmatprep.subr.bf16.mxu0 0
        %535 = vmatpush1.bf16.msra.mxu0 %v261
        %536 = vmatprep.subr.bf16.mxu0 0
        %537 = vmatpush1.bf16.msra.mxu0 %v262
        %538 = vmatprep.subr.bf16.mxu0 0
        %539 = vmatpush1.bf16.msra.mxu0 0
        %540 = vmatprep.subr.bf16.mxu0 0
        %541 = vmatpush1.bf16.msra.mxu0 0
        %542 = vmatprep.subr.bf16.mxu0 0
        %543 = vmatpush1.bf16.msra.mxu0 0
        %544 = vmatprep.subr.bf16.mxu0 0
        %545 = vmatpush1.bf16.msra.mxu0 0
        %546 = vmatprep.subr.bf16.mxu0 0
        %547 = vmatpush1.bf16.msra.mxu0 0
        %548 = vmatprep.subr.bf16.mxu0 0
        %549 = vmatpush1.bf16.msra.mxu0 0
        %550 = vmatprep.subr.bf16.mxu0 0
        %551 = vmatpush1.bf16.msra.mxu0 0
        %552 = vmatprep.subr.bf16.mxu0 0
        %553 = vmatpush1.bf16.msra.mxu0 0
        %554 = vmatprep.subr.bf16.mxu0 0
        %555 = vmatpush1.bf16.msra.mxu0 0
        %556 = vmatprep.subr.bf16.mxu0 0
        %557 = vmatpush1.bf16.msra.mxu0 0
        %558 = vmatprep.subr.bf16.mxu0 0
        %559 = vmatpush1.bf16.msra.mxu0 0
        %560 = vmatprep.subr.bf16.mxu0 0
        %561 = vmatpush1.bf16.msra.mxu0 0
        %562 = vmatprep.subr.bf16.mxu0 0
        %563 = vmatpush1.bf16.msra.mxu0 0
        %564 = vmatprep.subr.bf16.mxu0 0
        %565 = vmatpush1.bf16.msra.mxu0 0
        %566 = vmatprep.mubr.bf16.mxu0 0
        %567 = vmatmul.mubr.bf16.gmra.mrb[0].mxu0 %v532
        %v568 = vpop.f32.mrb[0].mxu0
        %v569 = vadd.f32 0.0, %v568
        %v570 = vpop.f32.mrb[0].mxu0
        %v571 = vpop.f32.mrb[0].mxu0
        %v572 = vadd.f32 0.0, %v571
        %v573 = vpop.f32.mrb[0].mxu0
        %574 = vdwg.mxu0
        %v575 = vpack.c.bf16 %v572, %v569
        %v576 = vld [vmem:[#allocation4] sm:$0xff]
        %v577 = vld [vmem:[#allocation4 + $0x8] sm:$0xff]
        %v578 = vld [vmem:[#allocation4 + $0x10] sm:$0xff]
        %v579 = vld [vmem:[#allocation4 + $0x18] sm:$0xff]
        %s580 = scalar_lea.vmem [#allocation4], 32
        %v581 = vld [vmem:[%s580] sm:$0xff]
        %v582 = vld [vmem:[%s580 + $0x8] sm:$0xff]
        %v583 = vld [vmem:[%s580 + $0x10] sm:$0xff]
        %v584 = vld [vmem:[%s580 + $0x18] sm:$0xff]
        %v589 = vunpack.c.l.b16 %v581
        %v590 = vunpack.c.h.b16 %v581
        %v591 = vunpack.c.l.b16 %v582
        %v592 = vunpack.c.h.b16 %v582
        %v593 = vunpack.c.l.b16 %v583
        %v594 = vunpack.c.h.b16 %v583
        %v595 = vunpack.c.l.b16 %v584
        %v596 = vunpack.c.h.b16 %v584
        %v597 = vpack.c.b16 %v591, %v589
        %v598 = vpack.c.b16 %v592, %v590
        %v599 = vpack.c.b16 %v595, %v593
        %v600 = vpack.c.b16 %v596, %v594
        %v606 = vsel %vm265, %v363, 0
        %608 = vmatprep.subr.bf16.mxu0 %v598
        %609 = vmatpush1.bf16.msra.mxu0 %v597
        %610 = vmatprep.subr.bf16.mxu0 %v600
        %611 = vmatpush1.bf16.msra.mxu0 %v599
        %612 = vmatprep.subr.bf16.mxu0 0
        %613 = vmatpush1.bf16.msra.mxu0 0
        %614 = vmatprep.subr.bf16.mxu0 0
        %615 = vmatpush1.bf16.msra.mxu0 0
        %616 = vmatprep.subr.bf16.mxu0 0
        %617 = vmatpush1.bf16.msra.mxu0 0
        %618 = vmatprep.subr.bf16.mxu0 0
        %619 = vmatpush1.bf16.msra.mxu0 0
        %620 = vmatprep.subr.bf16.mxu0 0
        %621 = vmatpush1.bf16.msra.mxu0 0
        %622 = vmatprep.subr.bf16.mxu0 0
        %623 = vmatpush1.bf16.msra.mxu0 0
        %624 = vmatprep.subr.bf16.mxu0 0
        %625 = vmatpush1.bf16.msra.mxu0 0
        %626 = vmatprep.subr.bf16.mxu0 0
        %627 = vmatpush1.bf16.msra.mxu0 0
        %628 = vmatprep.subr.bf16.mxu0 0
        %629 = vmatpush1.bf16.msra.mxu0 0
        %630 = vmatprep.subr.bf16.mxu0 0
        %631 = vmatpush1.bf16.msra.mxu0 0
        %632 = vmatprep.subr.bf16.mxu0 0
        %633 = vmatpush1.bf16.msra.mxu0 0
        %634 = vmatprep.subr.bf16.mxu0 0
        %635 = vmatpush1.bf16.msra.mxu0 0
        %636 = vmatprep.subr.bf16.mxu0 0
        %637 = vmatpush1.bf16.msra.mxu0 0
        %638 = vmatprep.subr.bf16.mxu0 0
        %639 = vmatpush1.bf16.msra.mxu0 0
        %640 = vmatprep.mubr.bf16.mxu0 0
        %641 = vmatmul.mubr.bf16.gmra.mrb[0].mxu0 %v606
        %v642 = vpop.f32.mrb[0].mxu0
        %v643 = vadd.f32 0.0, %v642
        %v644 = vpop.f32.mrb[0].mxu0
        %v645 = vadd.f32 0.0, %v644
        %v646 = vpop.f32.mrb[0].mxu0
        %v647 = vadd.f32 0.0, %v646
        %v648 = vpop.f32.mrb[0].mxu0
        %v649 = vadd.f32 0.0, %v648
        %650 = vdwg.mxu0
        %v655 = vunpack.c.l.b16 %v576
        %v656 = vunpack.c.h.b16 %v576
        %v657 = vunpack.c.l.b16 %v577
        %v658 = vunpack.c.h.b16 %v577
        %v659 = vunpack.c.l.b16 %v578
        %v660 = vunpack.c.h.b16 %v578
        %v661 = vunpack.c.l.b16 %v579
        %v662 = vunpack.c.h.b16 %v579
        %v663 = vpack.c.b16 %v657, %v655
        %v664 = vpack.c.b16 %v658, %v656
        %v665 = vpack.c.b16 %v661, %v659
        %v666 = vpack.c.b16 %v662, %v660
        %v672 = vsel %vm265, %v310, 0
        %674 = vmatprep.subr.bf16.mxu0 %v664
        %675 = vmatpush1.bf16.msra.mxu0 %v663
        %676 = vmatprep.subr.bf16.mxu0 %v666
        %677 = vmatpush1.bf16.msra.mxu0 %v665
        %678 = vmatprep.subr.bf16.mxu0 0
        %679 = vmatpush1.bf16.msra.mxu0 0
        %680 = vmatprep.subr.bf16.mxu0 0
        %681 = vmatpush1.bf16.msra.mxu0 0
        %682 = vmatprep.subr.bf16.mxu0 0
        %683 = vmatpush1.bf16.msra.mxu0 0
        %684 = vmatprep.subr.bf16.mxu0 0
        %685 = vmatpush1.bf16.msra.mxu0 0
        %686 = vmatprep.subr.bf16.mxu0 0
        %687 = vmatpush1.bf16.msra.mxu0 0
        %688 = vmatprep.subr.bf16.mxu0 0
        %689 = vmatpush1.bf16.msra.mxu0 0
        %690 = vmatprep.subr.bf16.mxu0 0
        %691 = vmatpush1.bf16.msra.mxu0 0
        %692 = vmatprep.subr.bf16.mxu0 0
        %693 = vmatpush1.bf16.msra.mxu0 0
        %694 = vmatprep.subr.bf16.mxu0 0
        %695 = vmatpush1.bf16.msra.mxu0 0
        %696 = vmatprep.subr.bf16.mxu0 0
        %697 = vmatpush1.bf16.msra.mxu0 0
        %698 = vmatprep.subr.bf16.mxu0 0
        %699 = vmatpush1.bf16.msra.mxu0 0
        %700 = vmatprep.subr.bf16.mxu0 0
        %701 = vmatpush1.bf16.msra.mxu0 0
        %702 = vmatprep.subr.bf16.mxu0 0
        %703 = vmatpush1.bf16.msra.mxu0 0
        %704 = vmatprep.subr.bf16.mxu0 0
        %705 = vmatpush1.bf16.msra.mxu0 0
        %706 = vmatprep.mubr.bf16.mxu0 0
        %707 = vmatmul.mubr.bf16.gmra.mrb[0].mxu0 %v672
        %v708 = vpop.f32.mrb[0].mxu0
        %v709 = vadd.f32 %v643, %v708
        %v710 = vpop.f32.mrb[0].mxu0
        %v711 = vadd.f32 %v645, %v710
        %v712 = vpop.f32.mrb[0].mxu0
        %v713 = vadd.f32 %v647, %v712
        %v714 = vpop.f32.mrb[0].mxu0
        %v715 = vadd.f32 %v649, %v714
        %716 = vdwg.mxu0
        %s717 = scalar_lea.vmem [#allocation4], 64
        %v718 = vld [vmem:[%s717] sm:$0xff]
        %v719 = vld [vmem:[%s717 + $0x8] sm:$0xff]
        %v720 = vld [vmem:[%s717 + $0x10] sm:$0xff]
        %v721 = vld [vmem:[%s717 + $0x18] sm:$0xff]
        %v726 = vunpack.c.l.b16 %v718
        %v727 = vunpack.c.h.b16 %v718
        %v728 = vunpack.c.l.b16 %v719
        %v729 = vunpack.c.h.b16 %v719
        %v730 = vunpack.c.l.b16 %v720
        %v731 = vunpack.c.h.b16 %v720
        %v732 = vunpack.c.l.b16 %v721
        %v733 = vunpack.c.h.b16 %v721
        %v734 = vpack.c.b16 %v728, %v726
        %v735 = vpack.c.b16 %v729, %v727
        %v736 = vpack.c.b16 %v732, %v730
        %v737 = vpack.c.b16 %v733, %v731
        %v743 = vsel %vm265, %v416, 0
        %745 = vmatprep.subr.bf16.mxu0 %v735
        %746 = vmatpush1.bf16.msra.mxu0 %v734
        %747 = vmatprep.subr.bf16.mxu0 %v737
        %748 = vmatpush1.bf16.msra.mxu0 %v736
        %749 = vmatprep.subr.bf16.mxu0 0
        %750 = vmatpush1.bf16.msra.mxu0 0
        %751 = vmatprep.subr.bf16.mxu0 0
        %752 = vmatpush1.bf16.msra.mxu0 0
        %753 = vmatprep.subr.bf16.mxu0 0
        %754 = vmatpush1.bf16.msra.mxu0 0
        %755 = vmatprep.subr.bf16.mxu0 0
        %756 = vmatpush1.bf16.msra.mxu0 0
        %757 = vmatprep.subr.bf16.mxu0 0
        %758 = vmatpush1.bf16.msra.mxu0 0
        %759 = vmatprep.subr.bf16.mxu0 0
        %760 = vmatpush1.bf16.msra.mxu0 0
        %761 = vmatprep.subr.bf16.mxu0 0
        %762 = vmatpush1.bf16.msra.mxu0 0
        %763 = vmatprep.subr.bf16.mxu0 0
        %764 = vmatpush1.bf16.msra.mxu0 0
        %765 = vmatprep.subr.bf16.mxu0 0
        %766 = vmatpush1.bf16.msra.mxu0 0
        %767 = vmatprep.subr.bf16.mxu0 0
        %768 = vmatpush1.bf16.msra.mxu0 0
        %769 = vmatprep.subr.bf16.mxu0 0
        %770 = vmatpush1.bf16.msra.mxu0 0
        %771 = vmatprep.subr.bf16.mxu0 0
        %772 = vmatpush1.bf16.msra.mxu0 0
        %773 = vmatprep.subr.bf16.mxu0 0
        %774 = vmatpush1.bf16.msra.mxu0 0
        %775 = vmatprep.subr.bf16.mxu0 0
        %776 = vmatpush1.bf16.msra.mxu0 0
        %777 = vmatprep.mubr.bf16.mxu0 0
        %778 = vmatmul.mubr.bf16.gmra.mrb[0].mxu0 %v743
        %v779 = vpop.f32.mrb[0].mxu0
        %v780 = vadd.f32 0.0, %v779
        %v781 = vpop.f32.mrb[0].mxu0
        %v782 = vadd.f32 0.0, %v781
        %v783 = vpop.f32.mrb[0].mxu0
        %v784 = vadd.f32 0.0, %v783
        %v785 = vpop.f32.mrb[0].mxu0
        %v786 = vadd.f32 0.0, %v785
        %787 = vdwg.mxu0
        %v788 = vadd.f32 %v709, %v780
        %v789 = vadd.f32 %v711, %v782
        %v790 = vadd.f32 %v713, %v784
        %v791 = vadd.f32 %v715, %v786
        %s792 = scalar_lea.vmem [#allocation4], 96
        %v793 = vld [vmem:[%s792] sm:$0xff]
        %v794 = vld [vmem:[%s792 + $0x8] sm:$0xff]
        %v795 = vld [vmem:[%s792 + $0x10] sm:$0xff]
        %v796 = vld [vmem:[%s792 + $0x18] sm:$0xff]
        %v801 = vunpack.c.l.b16 %v793
        %v802 = vunpack.c.h.b16 %v793
        %v803 = vunpack.c.l.b16 %v794
        %v804 = vunpack.c.h.b16 %v794
        %v805 = vunpack.c.l.b16 %v795
        %v806 = vunpack.c.h.b16 %v795
        %v807 = vunpack.c.l.b16 %v796
        %v808 = vunpack.c.h.b16 %v796
        %v809 = vpack.c.b16 %v803, %v801
        %v810 = vpack.c.b16 %v804, %v802
        %v811 = vpack.c.b16 %v807, %v805
        %v812 = vpack.c.b16 %v808, %v806
        %v818 = vsel %vm265, %v469, 0
        %820 = vmatprep.subr.bf16.mxu0 %v810
        %821 = vmatpush1.bf16.msra.mxu0 %v809
        %822 = vmatprep.subr.bf16.mxu0 %v812
        %823 = vmatpush1.bf16.msra.mxu0 %v811
        %824 = vmatprep.subr.bf16.mxu0 0
        %825 = vmatpush1.bf16.msra.mxu0 0
        %826 = vmatprep.subr.bf16.mxu0 0
        %827 = vmatpush1.bf16.msra.mxu0 0
        %828 = vmatprep.subr.bf16.mxu0 0
        %829 = vmatpush1.bf16.msra.mxu0 0
        %830 = vmatprep.subr.bf16.mxu0 0
        %831 = vmatpush1.bf16.msra.mxu0 0
        %832 = vmatprep.subr.bf16.mxu0 0
        %833 = vmatpush1.bf16.msra.mxu0 0
        %834 = vmatprep.subr.bf16.mxu0 0
        %835 = vmatpush1.bf16.msra.mxu0 0
        %836 = vmatprep.subr.bf16.mxu0 0
        %837 = vmatpush1.bf16.msra.mxu0 0
        %838 = vmatprep.subr.bf16.mxu0 0
        %839 = vmatpush1.bf16.msra.mxu0 0
        %840 = vmatprep.subr.bf16.mxu0 0
        %841 = vmatpush1.bf16.msra.mxu0 0
        %842 = vmatprep.subr.bf16.mxu0 0
        %843 = vmatpush1.bf16.msra.mxu0 0
        %844 = vmatprep.subr.bf16.mxu0 0
        %845 = vmatpush1.bf16.msra.mxu0 0
        %846 = vmatprep.subr.bf16.mxu0 0
        %847 = vmatpush1.bf16.msra.mxu0 0
        %848 = vmatprep.subr.bf16.mxu0 0
        %849 = vmatpush1.bf16.msra.mxu0 0
        %850 = vmatprep.subr.bf16.mxu0 0
        %851 = vmatpush1.bf16.msra.mxu0 0
        %852 = vmatprep.mubr.bf16.mxu0 0
        %853 = vmatmul.mubr.bf16.gmra.mrb[0].mxu0 %v818
        %v854 = vpop.f32.mrb[0].mxu0
        %v855 = vadd.f32 0.0, %v854
        %v856 = vpop.f32.mrb[0].mxu0
        %v857 = vadd.f32 0.0, %v856
        %v858 = vpop.f32.mrb[0].mxu0
        %v859 = vadd.f32 0.0, %v858
        %v860 = vpop.f32.mrb[0].mxu0
        %v861 = vadd.f32 0.0, %v860
        %862 = vdwg.mxu0
        %v863 = vadd.f32 %v788, %v855
        %v864 = vadd.f32 %v789, %v857
        %v865 = vadd.f32 %v790, %v859
        %v866 = vadd.f32 %v791, %v861
        %s867 = scalar_lea.vmem [#allocation4], 128
        %v868 = vld [vmem:[%s867] sm:$0xff]
        %v869 = vld [vmem:[%s867 + $0x8] sm:$0xff]
        %v870 = vld [vmem:[%s867 + $0x10] sm:$0xff]
        %v871 = vld [vmem:[%s867 + $0x18] sm:$0xff]
        %v876 = vunpack.c.l.b16 %v868
        %v877 = vunpack.c.h.b16 %v868
        %v878 = vunpack.c.l.b16 %v869
        %v879 = vunpack.c.h.b16 %v869
        %v880 = vunpack.c.l.b16 %v870
        %v881 = vunpack.c.h.b16 %v870
        %v882 = vunpack.c.l.b16 %v871
        %v883 = vunpack.c.h.b16 %v871
        %v884 = vpack.c.b16 %v878, %v876
        %v885 = vpack.c.b16 %v879, %v877
        %v886 = vpack.c.b16 %v882, %v880
        %v887 = vpack.c.b16 %v883, %v881
        %v893 = vsel %vm265, %v522, 0
        %895 = vmatprep.subr.bf16.mxu0 %v885
        %896 = vmatpush1.bf16.msra.mxu0 %v884
        %897 = vmatprep.subr.bf16.mxu0 %v887
        %898 = vmatpush1.bf16.msra.mxu0 %v886
        %899 = vmatprep.subr.bf16.mxu0 0
        %900 = vmatpush1.bf16.msra.mxu0 0
        %901 = vmatprep.subr.bf16.mxu0 0
        %902 = vmatpush1.bf16.msra.mxu0 0
        %903 = vmatprep.subr.bf16.mxu0 0
        %904 = vmatpush1.bf16.msra.mxu0 0
        %905 = vmatprep.subr.bf16.mxu0 0
        %906 = vmatpush1.bf16.msra.mxu0 0
        %907 = vmatprep.subr.bf16.mxu0 0
        %908 = vmatpush1.bf16.msra.mxu0 0
        %909 = vmatprep.subr.bf16.mxu0 0
        %910 = vmatpush1.bf16.msra.mxu0 0
        %911 = vmatprep.subr.bf16.mxu0 0
        %912 = vmatpush1.bf16.msra.mxu0 0
        %913 = vmatprep.subr.bf16.mxu0 0
        %914 = vmatpush1.bf16.msra.mxu0 0
        %915 = vmatprep.subr.bf16.mxu0 0
        %916 = vmatpush1.bf16.msra.mxu0 0
        %917 = vmatprep.subr.bf16.mxu0 0
        %918 = vmatpush1.bf16.msra.mxu0 0
        %919 = vmatprep.subr.bf16.mxu0 0
        %920 = vmatpush1.bf16.msra.mxu0 0
        %921 = vmatprep.subr.bf16.mxu0 0
        %922 = vmatpush1.bf16.msra.mxu0 0
        %923 = vmatprep.subr.bf16.mxu0 0
        %924 = vmatpush1.bf16.msra.mxu0 0
        %925 = vmatprep.subr.bf16.mxu0 0
        %926 = vmatpush1.bf16.msra.mxu0 0
        %927 = vmatprep.mubr.bf16.mxu0 0
        %928 = vmatmul.mubr.bf16.gmra.mrb[0].mxu0 %v893
        %v929 = vpop.f32.mrb[0].mxu0
        %v930 = vadd.f32 0.0, %v929
        %v931 = vpop.f32.mrb[0].mxu0
        %v932 = vadd.f32 0.0, %v931
        %v933 = vpop.f32.mrb[0].mxu0
        %v934 = vadd.f32 0.0, %v933
        %v935 = vpop.f32.mrb[0].mxu0
        %v936 = vadd.f32 0.0, %v935
        %937 = vdwg.mxu0
        %v938 = vadd.f32 %v863, %v930
        %v939 = vadd.f32 %v864, %v932
        %v940 = vadd.f32 %v865, %v934
        %v941 = vadd.f32 %v866, %v936
        %942 = vmatprep.subr.bf16.mxu0 %v598
        %943 = vmatpush1.bf16.msra.mxu0 %v597
        %944 = vmatprep.subr.bf16.mxu0 %v600
        %945 = vmatpush1.bf16.msra.mxu0 %v599
        %946 = vmatprep.subr.bf16.mxu0 0
        %947 = vmatpush1.bf16.msra.mxu0 0
        %948 = vmatprep.subr.bf16.mxu0 0
        %949 = vmatpush1.bf16.msra.mxu0 0
        %950 = vmatprep.subr.bf16.mxu0 0
        %951 = vmatpush1.bf16.msra.mxu0 0
        %952 = vmatprep.subr.bf16.mxu0 0
        %953 = vmatpush1.bf16.msra.mxu0 0
        %954 = vmatprep.subr.bf16.mxu0 0
        %955 = vmatpush1.bf16.msra.mxu0 0
        %956 = vmatprep.subr.bf16.mxu0 0
        %957 = vmatpush1.bf16.msra.mxu0 0
        %958 = vmatprep.subr.bf16.mxu0 0
        %959 = vmatpush1.bf16.msra.mxu0 0
        %960 = vmatprep.subr.bf16.mxu0 0
        %961 = vmatpush1.bf16.msra.mxu0 0
        %962 = vmatprep.subr.bf16.mxu0 0
        %963 = vmatpush1.bf16.msra.mxu0 0
        %964 = vmatprep.subr.bf16.mxu0 0
        %965 = vmatpush1.bf16.msra.mxu0 0
        %966 = vmatprep.subr.bf16.mxu0 0
        %967 = vmatpush1.bf16.msra.mxu0 0
        %968 = vmatprep.subr.bf16.mxu0 0
        %969 = vmatpush1.bf16.msra.mxu0 0
        %970 = vmatprep.subr.bf16.mxu0 0
        %971 = vmatpush1.bf16.msra.mxu0 0
        %972 = vmatprep.subr.bf16.mxu0 0
        %973 = vmatpush1.bf16.msra.mxu0 0
        %974 = vmatprep.mubr.bf16.mxu0 0
        %975 = vmatmul.mubr.bf16.gmra.mrb[0].mxu0 %v743
        %v976 = vpop.f32.mrb[0].mxu0
        %v977 = vadd.f32 0.0, %v976
        %v978 = vpop.f32.mrb[0].mxu0
        %v979 = vadd.f32 0.0, %v978
        %v980 = vpop.f32.mrb[0].mxu0
        %v981 = vadd.f32 0.0, %v980
        %v982 = vpop.f32.mrb[0].mxu0
        %v983 = vadd.f32 0.0, %v982
        %984 = vdwg.mxu0
        %985 = vmatprep.subr.bf16.mxu0 %v664
        %986 = vmatpush1.bf16.msra.mxu0 %v663
        %987 = vmatprep.subr.bf16.mxu0 %v666
        %988 = vmatpush1.bf16.msra.mxu0 %v665
        %989 = vmatprep.subr.bf16.mxu0 0
        %990 = vmatpush1.bf16.msra.mxu0 0
        %991 = vmatprep.subr.bf16.mxu0 0
        %992 = vmatpush1.bf16.msra.mxu0 0
        %993 = vmatprep.subr.bf16.mxu0 0
        %994 = vmatpush1.bf16.msra.mxu0 0
        %995 = vmatprep.subr.bf16.mxu0 0
        %996 = vmatpush1.bf16.msra.mxu0 0
        %997 = vmatprep.subr.bf16.mxu0 0
        %998 = vmatpush1.bf16.msra.mxu0 0
        %999 = vmatprep.subr.bf16.mxu0 0
        %1000 = vmatpush1.bf16.msra.mxu0 0
        %1001 = vmatprep.subr.bf16.mxu0 0
        %1002 = vmatpush1.bf16.msra.mxu0 0
        %1003 = vmatprep.subr.bf16.mxu0 0
        %1004 = vmatpush1.bf16.msra.mxu0 0
        %1005 = vmatprep.subr.bf16.mxu0 0
        %1006 = vmatpush1.bf16.msra.mxu0 0
        %1007 = vmatprep.subr.bf16.mxu0 0
        %1008 = vmatpush1.bf16.msra.mxu0 0
        %1009 = vmatprep.subr.bf16.mxu0 0
        %1010 = vmatpush1.bf16.msra.mxu0 0
        %1011 = vmatprep.subr.bf16.mxu0 0
        %1012 = vmatpush1.bf16.msra.mxu0 0
        %1013 = vmatprep.subr.bf16.mxu0 0
        %1014 = vmatpush1.bf16.msra.mxu0 0
        %1015 = vmatprep.subr.bf16.mxu0 0
        %1016 = vmatpush1.bf16.msra.mxu0 0
        %1017 = vmatprep.mubr.bf16.mxu0 0
        %1018 = vmatmul.mubr.bf16.gmra.mrb[0].mxu0 %v606
        %v1019 = vpop.f32.mrb[0].mxu0
        %v1020 = vadd.f32 %v977, %v1019
        %v1021 = vpop.f32.mrb[0].mxu0
        %v1022 = vadd.f32 %v979, %v1021
        %v1023 = vpop.f32.mrb[0].mxu0
        %v1024 = vadd.f32 %v981, %v1023
        %v1025 = vpop.f32.mrb[0].mxu0
        %v1026 = vadd.f32 %v983, %v1025
        %1027 = vdwg.mxu0
        %1028 = vmatprep.subr.bf16.mxu0 %v735
        %1029 = vmatpush1.bf16.msra.mxu0 %v734
        %1030 = vmatprep.subr.bf16.mxu0 %v737
        %1031 = vmatpush1.bf16.msra.mxu0 %v736
        %1032 = vmatprep.subr.bf16.mxu0 0
        %1033 = vmatpush1.bf16.msra.mxu0 0
        %1034 = vmatprep.subr.bf16.mxu0 0
        %1035 = vmatpush1.bf16.msra.mxu0 0
        %1036 = vmatprep.subr.bf16.mxu0 0
        %1037 = vmatpush1.bf16.msra.mxu0 0
        %1038 = vmatprep.subr.bf16.mxu0 0
        %1039 = vmatpush1.bf16.msra.mxu0 0
        %1040 = vmatprep.subr.bf16.mxu0 0
        %1041 = vmatpush1.bf16.msra.mxu0 0
        %1042 = vmatprep.subr.bf16.mxu0 0
        %1043 = vmatpush1.bf16.msra.mxu0 0
        %1044 = vmatprep.subr.bf16.mxu0 0
        %1045 = vmatpush1.bf16.msra.mxu0 0
        %1046 = vmatprep.subr.bf16.mxu0 0
        %1047 = vmatpush1.bf16.msra.mxu0 0
        %1048 = vmatprep.subr.bf16.mxu0 0
        %1049 = vmatpush1.bf16.msra.mxu0 0
        %1050 = vmatprep.subr.bf16.mxu0 0
        %1051 = vmatpush1.bf16.msra.mxu0 0
        %1052 = vmatprep.subr.bf16.mxu0 0
        %1053 = vmatpush1.bf16.msra.mxu0 0
        %1054 = vmatprep.subr.bf16.mxu0 0
        %1055 = vmatpush1.bf16.msra.mxu0 0
        %1056 = vmatprep.subr.bf16.mxu0 0
        %1057 = vmatpush1.bf16.msra.mxu0 0
        %1058 = vmatprep.subr.bf16.mxu0 0
        %1059 = vmatpush1.bf16.msra.mxu0 0
        %1060 = vmatprep.mubr.bf16.mxu0 0
        %1061 = vmatmul.mubr.bf16.gmra.mrb[0].mxu0 %v818
        %v1062 = vpop.f32.mrb[0].mxu0
        %v1063 = vadd.f32 0.0, %v1062
        %v1064 = vpop.f32.mrb[0].mxu0
        %v1065 = vadd.f32 0.0, %v1064
        %v1066 = vpop.f32.mrb[0].mxu0
        %v1067 = vadd.f32 0.0, %v1066
        %v1068 = vpop.f32.mrb[0].mxu0
        %v1069 = vadd.f32 0.0, %v1068
        %1070 = vdwg.mxu0
        %v1071 = vadd.f32 %v1020, %v1063
        %v1072 = vadd.f32 %v1022, %v1065
        %v1073 = vadd.f32 %v1024, %v1067
        %v1074 = vadd.f32 %v1026, %v1069
        %1075 = vmatprep.subr.bf16.mxu0 %v810
        %1076 = vmatpush1.bf16.msra.mxu0 %v809
        %1077 = vmatprep.subr.bf16.mxu0 %v812
        %1078 = vmatpush1.bf16.msra.mxu0 %v811
        %1079 = vmatprep.subr.bf16.mxu0 0
        %1080 = vmatpush1.bf16.msra.mxu0 0
        %1081 = vmatprep.subr.bf16.mxu0 0
        %1082 = vmatpush1.bf16.msra.mxu0 0
        %1083 = vmatprep.subr.bf16.mxu0 0
        %1084 = vmatpush1.bf16.msra.mxu0 0
        %1085 = vmatprep.subr.bf16.mxu0 0
        %1086 = vmatpush1.bf16.msra.mxu0 0
        %1087 = vmatprep.subr.bf16.mxu0 0
        %1088 = vmatpush1.bf16.msra.mxu0 0
        %1089 = vmatprep.subr.bf16.mxu0 0
        %1090 = vmatpush1.bf16.msra.mxu0 0
        %1091 = vmatprep.subr.bf16.mxu0 0
        %1092 = vmatpush1.bf16.msra.mxu0 0
        %1093 = vmatprep.subr.bf16.mxu0 0
        %1094 = vmatpush1.bf16.msra.mxu0 0
        %1095 = vmatprep.subr.bf16.mxu0 0
        %1096 = vmatpush1.bf16.msra.mxu0 0
        %1097 = vmatprep.subr.bf16.mxu0 0
        %1098 = vmatpush1.bf16.msra.mxu0 0
        %1099 = vmatprep.subr.bf16.mxu0 0
        %1100 = vmatpush1.bf16.msra.mxu0 0
        %1101 = vmatprep.subr.bf16.mxu0 0
        %1102 = vmatpush1.bf16.msra.mxu0 0
        %1103 = vmatprep.subr.bf16.mxu0 0
        %1104 = vmatpush1.bf16.msra.mxu0 0
        %1105 = vmatprep.subr.bf16.mxu0 0
        %1106 = vmatpush1.bf16.msra.mxu0 0
        %1107 = vmatprep.mubr.bf16.mxu0 0
        %1108 = vmatmul.mubr.bf16.gmra.mrb[0].mxu0 %v893
        %v1109 = vpop.f32.mrb[0].mxu0
        %v1110 = vadd.f32 0.0, %v1109
        %v1111 = vpop.f32.mrb[0].mxu0
        %v1112 = vadd.f32 0.0, %v1111
        %v1113 = vpop.f32.mrb[0].mxu0
        %v1114 = vadd.f32 0.0, %v1113
        %v1115 = vpop.f32.mrb[0].mxu0
        %v1116 = vadd.f32 0.0, %v1115
        %1117 = vdwg.mxu0
        %v1118 = vadd.f32 %v1071, %v1110
        %v1119 = vadd.f32 %v1072, %v1112
        %v1120 = vadd.f32 %v1073, %v1114
        %v1121 = vadd.f32 %v1074, %v1116
        %v1123 = vsel %vm265, %v575, 0
        %1125 = vmatprep.subr.bf16.mxu0 %v885
        %1126 = vmatpush1.bf16.msra.mxu0 %v884
        %1127 = vmatprep.subr.bf16.mxu0 %v887
        %1128 = vmatpush1.bf16.msra.mxu0 %v886
        %1129 = vmatprep.subr.bf16.mxu0 0
        %1130 = vmatpush1.bf16.msra.mxu0 0
        %1131 = vmatprep.subr.bf16.mxu0 0
        %1132 = vmatpush1.bf16.msra.mxu0 0
        %1133 = vmatprep.subr.bf16.mxu0 0
        %1134 = vmatpush1.bf16.msra.mxu0 0
        %1135 = vmatprep.subr.bf16.mxu0 0
        %1136 = vmatpush1.bf16.msra.mxu0 0
        %1137 = vmatprep.subr.bf16.mxu0 0
        %1138 = vmatpush1.bf16.msra.mxu0 0
        %1139 = vmatprep.subr.bf16.mxu0 0
        %1140 = vmatpush1.bf16.msra.mxu0 0
        %1141 = vmatprep.subr.bf16.mxu0 0
        %1142 = vmatpush1.bf16.msra.mxu0 0
        %1143 = vmatprep.subr.bf16.mxu0 0
        %1144 = vmatpush1.bf16.msra.mxu0 0
        %1145 = vmatprep.subr.bf16.mxu0 0
        %1146 = vmatpush1.bf16.msra.mxu0 0
        %1147 = vmatprep.subr.bf16.mxu0 0
        %1148 = vmatpush1.bf16.msra.mxu0 0
        %1149 = vmatprep.subr.bf16.mxu0 0
        %1150 = vmatpush1.bf16.msra.mxu0 0
        %1151 = vmatprep.subr.bf16.mxu0 0
        %1152 = vmatpush1.bf16.msra.mxu0 0
        %1153 = vmatprep.subr.bf16.mxu0 0
        %1154 = vmatpush1.bf16.msra.mxu0 0
        %1155 = vmatprep.subr.bf16.mxu0 0
        %1156 = vmatpush1.bf16.msra.mxu0 0
        %1157 = vmatprep.mubr.bf16.mxu0 0
        %1158 = vmatmul.mubr.bf16.gmra.mrb[0].mxu0 %v1123
        %v1159 = vpop.f32.mrb[0].mxu0
        %v1160 = vadd.f32 0.0, %v1159
        %v1161 = vpop.f32.mrb[0].mxu0
        %v1162 = vadd.f32 0.0, %v1161
        %v1163 = vpop.f32.mrb[0].mxu0
        %v1164 = vadd.f32 0.0, %v1163
        %v1165 = vpop.f32.mrb[0].mxu0
        %v1166 = vadd.f32 0.0, %v1165
        %1167 = vdwg.mxu0
        %v1168 = vadd.f32 %v1118, %v1160
        %v1169 = vadd.f32 %v1119, %v1162
        %v1170 = vadd.f32 %v1120, %v1164
        %v1171 = vadd.f32 %v1121, %v1166
        %v1172 = vmax.f32 %v938, %v1168
        %v1173 = vmax.f32 %v939, %v1169
        %v1174 = vmax.f32 %v940, %v1170
        %v1175 = vmax.f32 %v941, %v1171
        %s1176 = scalar_lea.vmem [#allocation4], 160
        %v1177 = vld [vmem:[%s1176] sm:$0xff]
        %v1178 = vld [vmem:[%s1176 + $0x8] sm:$0xff]
        %v1179 = vld [vmem:[%s1176 + $0x10] sm:$0xff]
        %v1180 = vld [vmem:[%s1176 + $0x18] sm:$0xff]
        %s1181 = scalar_lea.vmem [#allocation4], 192
        %v1182 = vld [vmem:[%s1181] sm:$0xff]
        %v1183 = vld [vmem:[%s1181 + $0x8] sm:$0xff]
        %v1184 = vld [vmem:[%s1181 + $0x10] sm:$0xff]
        %v1185 = vld [vmem:[%s1181 + $0x18] sm:$0xff]
        %v1190 = vunpack.c.l.b16 %v1182
        %v1191 = vunpack.c.h.b16 %v1182
        %v1192 = vunpack.c.l.b16 %v1183
        %v1193 = vunpack.c.h.b16 %v1183
        %v1194 = vunpack.c.l.b16 %v1184
        %v1195 = vunpack.c.h.b16 %v1184
        %v1196 = vunpack.c.l.b16 %v1185
        %v1197 = vunpack.c.h.b16 %v1185
        %v1198 = vpack.c.b16 %v1192, %v1190
        %v1199 = vpack.c.b16 %v1193, %v1191
        %v1200 = vpack.c.b16 %v1196, %v1194
        %v1201 = vpack.c.b16 %v1197, %v1195
        %1206 = vmatprep.subr.bf16.mxu0 %v1199
        %1207 = vmatpush1.bf16.msra.mxu0 %v1198
        %1208 = vmatprep.subr.bf16.mxu0 %v1201
        %1209 = vmatpush1.bf16.msra.mxu0 %v1200
        %1210 = vmatprep.subr.bf16.mxu0 0
        %1211 = vmatpush1.bf16.msra.mxu0 0
        %1212 = vmatprep.subr.bf16.mxu0 0
        %1213 = vmatpush1.bf16.msra.mxu0 0
        %1214 = vmatprep.subr.bf16.mxu0 0
        %1215 = vmatpush1.bf16.msra.mxu0 0
        %1216 = vmatprep.subr.bf16.mxu0 0
        %1217 = vmatpush1.bf16.msra.mxu0 0
        %1218 = vmatprep.subr.bf16.mxu0 0
        %1219 = vmatpush1.bf16.msra.mxu0 0
        %1220 = vmatprep.subr.bf16.mxu0 0
        %1221 = vmatpush1.bf16.msra.mxu0 0
        %1222 = vmatprep.subr.bf16.mxu0 0
        %1223 = vmatpush1.bf16.msra.mxu0 0
        %1224 = vmatprep.subr.bf16.mxu0 0
        %1225 = vmatpush1.bf16.msra.mxu0 0
        %1226 = vmatprep.subr.bf16.mxu0 0
        %1227 = vmatpush1.bf16.msra.mxu0 0
        %1228 = vmatprep.subr.bf16.mxu0 0
        %1229 = vmatpush1.bf16.msra.mxu0 0
        %1230 = vmatprep.subr.bf16.mxu0 0
        %1231 = vmatpush1.bf16.msra.mxu0 0
        %1232 = vmatprep.subr.bf16.mxu0 0
        %1233 = vmatpush1.bf16.msra.mxu0 0
        %1234 = vmatprep.subr.bf16.mxu0 0
        %1235 = vmatpush1.bf16.msra.mxu0 0
        %1236 = vmatprep.subr.bf16.mxu0 0
        %1237 = vmatpush1.bf16.msra.mxu0 0
        %1238 = vmatprep.mubr.bf16.mxu0 0
        %1239 = vmatmul.mubr.bf16.gmra.mrb[0].mxu0 %v606
        %v1240 = vpop.f32.mrb[0].mxu0
        %v1241 = vadd.f32 0.0, %v1240
        %v1242 = vpop.f32.mrb[0].mxu0
        %v1243 = vadd.f32 0.0, %v1242
        %v1244 = vpop.f32.mrb[0].mxu0
        %v1245 = vadd.f32 0.0, %v1244
        %v1246 = vpop.f32.mrb[0].mxu0
        %v1247 = vadd.f32 0.0, %v1246
        %1248 = vdwg.mxu0
        %v1253 = vunpack.c.l.b16 %v1177
        %v1254 = vunpack.c.h.b16 %v1177
        %v1255 = vunpack.c.l.b16 %v1178
        %v1256 = vunpack.c.h.b16 %v1178
        %v1257 = vunpack.c.l.b16 %v1179
        %v1258 = vunpack.c.h.b16 %v1179
        %v1259 = vunpack.c.l.b16 %v1180
        %v1260 = vunpack.c.h.b16 %v1180
        %v1261 = vpack.c.b16 %v1255, %v1253
        %v1262 = vpack.c.b16 %v1256, %v1254
        %v1263 = vpack.c.b16 %v1259, %v1257
        %v1264 = vpack.c.b16 %v1260, %v1258
        %1269 = vmatprep.subr.bf16.mxu0 %v1262
        %1270 = vmatpush1.bf16.msra.mxu0 %v1261
        %1271 = vmatprep.subr.bf16.mxu0 %v1264
        %1272 = vmatpush1.bf16.msra.mxu0 %v1263
        %1273 = vmatprep.subr.bf16.mxu0 0
        %1274 = vmatpush1.bf16.msra.mxu0 0
        %1275 = vmatprep.subr.bf16.mxu0 0
        %1276 = vmatpush1.bf16.msra.mxu0 0
        %1277 = vmatprep.subr.bf16.mxu0 0
        %1278 = vmatpush1.bf16.msra.mxu0 0
        %1279 = vmatprep.subr.bf16.mxu0 0
        %1280 = vmatpush1.bf16.msra.mxu0 0
        %1281 = vmatprep.subr.bf16.mxu0 0
        %1282 = vmatpush1.bf16.msra.mxu0 0
        %1283 = vmatprep.subr.bf16.mxu0 0
        %1284 = vmatpush1.bf16.msra.mxu0 0
        %1285 = vmatprep.subr.bf16.mxu0 0
        %1286 = vmatpush1.bf16.msra.mxu0 0
        %1287 = vmatprep.subr.bf16.mxu0 0
        %1288 = vmatpush1.bf16.msra.mxu0 0
        %1289 = vmatprep.subr.bf16.mxu0 0
        %1290 = vmatpush1.bf16.msra.mxu0 0
        %1291 = vmatprep.subr.bf16.mxu0 0
        %1292 = vmatpush1.bf16.msra.mxu0 0
        %1293 = vmatprep.subr.bf16.mxu0 0
        %1294 = vmatpush1.bf16.msra.mxu0 0
        %1295 = vmatprep.subr.bf16.mxu0 0
        %1296 = vmatpush1.bf16.msra.mxu0 0
        %1297 = vmatprep.subr.bf16.mxu0 0
        %1298 = vmatpush1.bf16.msra.mxu0 0
        %1299 = vmatprep.subr.bf16.mxu0 0
        %1300 = vmatpush1.bf16.msra.mxu0 0
        %1301 = vmatprep.mubr.bf16.mxu0 0
        %1302 = vmatmul.mubr.bf16.gmra.mrb[0].mxu0 %v672
        %v1303 = vpop.f32.mrb[0].mxu0
        %v1304 = vadd.f32 %v1241, %v1303
        %v1305 = vpop.f32.mrb[0].mxu0
        %v1306 = vadd.f32 %v1243, %v1305
        %v1307 = vpop.f32.mrb[0].mxu0
        %v1308 = vadd.f32 %v1245, %v1307
        %v1309 = vpop.f32.mrb[0].mxu0
        %v1310 = vadd.f32 %v1247, %v1309
        %1311 = vdwg.mxu0
        %s1312 = scalar_lea.vmem [#allocation4], 224
        %v1313 = vld [vmem:[%s1312] sm:$0xff]
        %v1314 = vld [vmem:[%s1312 + $0x8] sm:$0xff]
        %v1315 = vld [vmem:[%s1312 + $0x10] sm:$0xff]
        %v1316 = vld [vmem:[%s1312 + $0x18] sm:$0xff]
        %v1321 = vunpack.c.l.b16 %v1313
        %v1322 = vunpack.c.h.b16 %v1313
        %v1323 = vunpack.c.l.b16 %v1314
        %v1324 = vunpack.c.h.b16 %v1314
        %v1325 = vunpack.c.l.b16 %v1315
        %v1326 = vunpack.c.h.b16 %v1315
        %v1327 = vunpack.c.l.b16 %v1316
        %v1328 = vunpack.c.h.b16 %v1316
        %v1329 = vpack.c.b16 %v1323, %v1321
        %v1330 = vpack.c.b16 %v1324, %v1322
        %v1331 = vpack.c.b16 %v1327, %v1325
        %v1332 = vpack.c.b16 %v1328, %v1326
        %1337 = vmatprep.subr.bf16.mxu0 %v1330
        %1338 = vmatpush1.bf16.msra.mxu0 %v1329
        %1339 = vmatprep.subr.bf16.mxu0 %v1332
        %1340 = vmatpush1.bf16.msra.mxu0 %v1331
        %1341 = vmatprep.subr.bf16.mxu0 0
        %1342 = vmatpush1.bf16.msra.mxu0 0
        %1343 = vmatprep.subr.bf16.mxu0 0
        %1344 = vmatpush1.bf16.msra.mxu0 0
        %1345 = vmatprep.subr.bf16.mxu0 0
        %1346 = vmatpush1.bf16.msra.mxu0 0
        %1347 = vmatprep.subr.bf16.mxu0 0
        %1348 = vmatpush1.bf16.msra.mxu0 0
        %1349 = vmatprep.subr.bf16.mxu0 0
        %1350 = vmatpush1.bf16.msra.mxu0 0
        %1351 = vmatprep.subr.bf16.mxu0 0
        %1352 = vmatpush1.bf16.msra.mxu0 0
        %1353 = vmatprep.subr.bf16.mxu0 0
        %1354 = vmatpush1.bf16.msra.mxu0 0
        %1355 = vmatprep.subr.bf16.mxu0 0
        %1356 = vmatpush1.bf16.msra.mxu0 0
        %1357 = vmatprep.subr.bf16.mxu0 0
        %1358 = vmatpush1.bf16.msra.mxu0 0
        %1359 = vmatprep.subr.bf16.mxu0 0
        %1360 = vmatpush1.bf16.msra.mxu0 0
        %1361 = vmatprep.subr.bf16.mxu0 0
        %1362 = vmatpush1.bf16.msra.mxu0 0
        %1363 = vmatprep.subr.bf16.mxu0 0
        %1364 = vmatpush1.bf16.msra.mxu0 0
        %1365 = vmatprep.subr.bf16.mxu0 0
        %1366 = vmatpush1.bf16.msra.mxu0 0
        %1367 = vmatprep.subr.bf16.mxu0 0
        %1368 = vmatpush1.bf16.msra.mxu0 0
        %1369 = vmatprep.mubr.bf16.mxu0 0
        %1370 = vmatmul.mubr.bf16.gmra.mrb[0].mxu0 %v743
        %v1371 = vpop.f32.mrb[0].mxu0
        %v1372 = vadd.f32 0.0, %v1371
        %v1373 = vpop.f32.mrb[0].mxu0
        %v1374 = vadd.f32 0.0, %v1373
        %v1375 = vpop.f32.mrb[0].mxu0
        %v1376 = vadd.f32 0.0, %v1375
        %v1377 = vpop.f32.mrb[0].mxu0
        %v1378 = vadd.f32 0.0, %v1377
        %1379 = vdwg.mxu0
        %v1380 = vadd.f32 %v1304, %v1372
        %v1381 = vadd.f32 %v1306, %v1374
        %v1382 = vadd.f32 %v1308, %v1376
        %v1383 = vadd.f32 %v1310, %v1378
        %s1384 = scalar_lea.vmem [#allocation4], 256
        %v1385 = vld [vmem:[%s1384] sm:$0xff]
        %v1386 = vld [vmem:[%s1384 + $0x8] sm:$0xff]
        %v1387 = vld [vmem:[%s1384 + $0x10] sm:$0xff]
        %v1388 = vld [vmem:[%s1384 + $0x18] sm:$0xff]
        %v1393 = vunpack.c.l.b16 %v1385
        %v1394 = vunpack.c.h.b16 %v1385
        %v1395 = vunpack.c.l.b16 %v1386
        %v1396 = vunpack.c.h.b16 %v1386
        %v1397 = vunpack.c.l.b16 %v1387
        %v1398 = vunpack.c.h.b16 %v1387
        %v1399 = vunpack.c.l.b16 %v1388
        %v1400 = vunpack.c.h.b16 %v1388
        %v1401 = vpack.c.b16 %v1395, %v1393
        %v1402 = vpack.c.b16 %v1396, %v1394
        %v1403 = vpack.c.b16 %v1399, %v1397
        %v1404 = vpack.c.b16 %v1400, %v1398
        %1409 = vmatprep.subr.bf16.mxu0 %v1402
        %1410 = vmatpush1.bf16.msra.mxu0 %v1401
        %1411 = vmatprep.subr.bf16.mxu0 %v1404
        %1412 = vmatpush1.bf16.msra.mxu0 %v1403
        %1413 = vmatprep.subr.bf16.mxu0 0
        %1414 = vmatpush1.bf16.msra.mxu0 0
        %1415 = vmatprep.subr.bf16.mxu0 0
        %1416 = vmatpush1.bf16.msra.mxu0 0
        %1417 = vmatprep.subr.bf16.mxu0 0
        %1418 = vmatpush1.bf16.msra.mxu0 0
        %1419 = vmatprep.subr.bf16.mxu0 0
        %1420 = vmatpush1.bf16.msra.mxu0 0
        %1421 = vmatprep.subr.bf16.mxu0 0
        %1422 = vmatpush1.bf16.msra.mxu0 0
        %1423 = vmatprep.subr.bf16.mxu0 0
        %1424 = vmatpush1.bf16.msra.mxu0 0
        %1425 = vmatprep.subr.bf16.mxu0 0
        %1426 = vmatpush1.bf16.msra.mxu0 0
        %1427 = vmatprep.subr.bf16.mxu0 0
        %1428 = vmatpush1.bf16.msra.mxu0 0
        %1429 = vmatprep.subr.bf16.mxu0 0
        %1430 = vmatpush1.bf16.msra.mxu0 0
        %1431 = vmatprep.subr.bf16.mxu0 0
        %1432 = vmatpush1.bf16.msra.mxu0 0
        %1433 = vmatprep.subr.bf16.mxu0 0
        %1434 = vmatpush1.bf16.msra.mxu0 0
        %1435 = vmatprep.subr.bf16.mxu0 0
        %1436 = vmatpush1.bf16.msra.mxu0 0
        %1437 = vmatprep.subr.bf16.mxu0 0
        %1438 = vmatpush1.bf16.msra.mxu0 0
        %1439 = vmatprep.subr.bf16.mxu0 0
        %1440 = vmatpush1.bf16.msra.mxu0 0
        %1441 = vmatprep.mubr.bf16.mxu0 0
        %1442 = vmatmul.mubr.bf16.gmra.mrb[0].mxu0 %v818
        %v1443 = vpop.f32.mrb[0].mxu0
        %v1444 = vadd.f32 0.0, %v1443
        %v1445 = vpop.f32.mrb[0].mxu0
        %v1446 = vadd.f32 0.0, %v1445
        %v1447 = vpop.f32.mrb[0].mxu0
        %v1448 = vadd.f32 0.0, %v1447
        %v1449 = vpop.f32.mrb[0].mxu0
        %v1450 = vadd.f32 0.0, %v1449
        %1451 = vdwg.mxu0
        %v1452 = vadd.f32 %v1380, %v1444
        %v1453 = vadd.f32 %v1381, %v1446
        %v1454 = vadd.f32 %v1382, %v1448
        %v1455 = vadd.f32 %v1383, %v1450
        %s1456 = scalar_lea.vmem [#allocation4], 288
        %v1457 = vld [vmem:[%s1456] sm:$0xff]
        %v1458 = vld [vmem:[%s1456 + $0x8] sm:$0xff]
        %v1459 = vld [vmem:[%s1456 + $0x10] sm:$0xff]
        %v1460 = vld [vmem:[%s1456 + $0x18] sm:$0xff]
        %v1465 = vunpack.c.l.b16 %v1457
        %v1466 = vunpack.c.h.b16 %v1457
        %v1467 = vunpack.c.l.b16 %v1458
        %v1468 = vunpack.c.h.b16 %v1458
        %v1469 = vunpack.c.l.b16 %v1459
        %v1470 = vunpack.c.h.b16 %v1459
        %v1471 = vunpack.c.l.b16 %v1460
        %v1472 = vunpack.c.h.b16 %v1460
        %v1473 = vpack.c.b16 %v1467, %v1465
        %v1474 = vpack.c.b16 %v1468, %v1466
        %v1475 = vpack.c.b16 %v1471, %v1469
        %v1476 = vpack.c.b16 %v1472, %v1470
        %1481 = vmatprep.subr.bf16.mxu0 %v1474
        %1482 = vmatpush1.bf16.msra.mxu0 %v1473
        %1483 = vmatprep.subr.bf16.mxu0 %v1476
        %1484 = vmatpush1.bf16.msra.mxu0 %v1475
        %1485 = vmatprep.subr.bf16.mxu0 0
        %1486 = vmatpush1.bf16.msra.mxu0 0
        %1487 = vmatprep.subr.bf16.mxu0 0
        %1488 = vmatpush1.bf16.msra.mxu0 0
        %1489 = vmatprep.subr.bf16.mxu0 0
        %1490 = vmatpush1.bf16.msra.mxu0 0
        %1491 = vmatprep.subr.bf16.mxu0 0
        %1492 = vmatpush1.bf16.msra.mxu0 0
        %1493 = vmatprep.subr.bf16.mxu0 0
        %1494 = vmatpush1.bf16.msra.mxu0 0
        %1495 = vmatprep.subr.bf16.mxu0 0
        %1496 = vmatpush1.bf16.msra.mxu0 0
        %1497 = vmatprep.subr.bf16.mxu0 0
        %1498 = vmatpush1.bf16.msra.mxu0 0
        %1499 = vmatprep.subr.bf16.mxu0 0
        %1500 = vmatpush1.bf16.msra.mxu0 0
        %1501 = vmatprep.subr.bf16.mxu0 0
        %1502 = vmatpush1.bf16.msra.mxu0 0
        %1503 = vmatprep.subr.bf16.mxu0 0
        %1504 = vmatpush1.bf16.msra.mxu0 0
        %1505 = vmatprep.subr.bf16.mxu0 0
        %1506 = vmatpush1.bf16.msra.mxu0 0
        %1507 = vmatprep.subr.bf16.mxu0 0
        %1508 = vmatpush1.bf16.msra.mxu0 0
        %1509 = vmatprep.subr.bf16.mxu0 0
        %1510 = vmatpush1.bf16.msra.mxu0 0
        %1511 = vmatprep.subr.bf16.mxu0 0
        %1512 = vmatpush1.bf16.msra.mxu0 0
        %1513 = vmatprep.mubr.bf16.mxu0 0
        %1514 = vmatmul.mubr.bf16.gmra.mrb[0].mxu0 %v893
        %v1515 = vpop.f32.mrb[0].mxu0
        %v1516 = vadd.f32 0.0, %v1515
        %v1517 = vpop.f32.mrb[0].mxu0
        %v1518 = vadd.f32 0.0, %v1517
        %v1519 = vpop.f32.mrb[0].mxu0
        %v1520 = vadd.f32 0.0, %v1519
        %v1521 = vpop.f32.mrb[0].mxu0
        %v1522 = vadd.f32 0.0, %v1521
        %1523 = vdwg.mxu0
        %v1524 = vadd.f32 %v1452, %v1516
        %v1525 = vadd.f32 %v1453, %v1518
        %v1526 = vadd.f32 %v1454, %v1520
        %v1527 = vadd.f32 %v1455, %v1522
        %v1528 = vmax.f32 %v1172, %v1524
        %v1529 = vmax.f32 %v1173, %v1525
        %v1530 = vmax.f32 %v1174, %v1526
        %v1531 = vmax.f32 %v1175, %v1527
        %1532 = vmatprep.subr.bf16.mxu0 %v1199
        %1533 = vmatpush1.bf16.msra.mxu0 %v1198
        %1534 = vmatprep.subr.bf16.mxu0 %v1201
        %1535 = vmatpush1.bf16.msra.mxu0 %v1200
        %1536 = vmatprep.subr.bf16.mxu0 0
        %1537 = vmatpush1.bf16.msra.mxu0 0
        %1538 = vmatprep.subr.bf16.mxu0 0
        %1539 = vmatpush1.bf16.msra.mxu0 0
        %1540 = vmatprep.subr.bf16.mxu0 0
        %1541 = vmatpush1.bf16.msra.mxu0 0
        %1542 = vmatprep.subr.bf16.mxu0 0
        %1543 = vmatpush1.bf16.msra.mxu0 0
        %1544 = vmatprep.subr.bf16.mxu0 0
        %1545 = vmatpush1.bf16.msra.mxu0 0
        %1546 = vmatprep.subr.bf16.mxu0 0
        %1547 = vmatpush1.bf16.msra.mxu0 0
        %1548 = vmatprep.subr.bf16.mxu0 0
        %1549 = vmatpush1.bf16.msra.mxu0 0
        %1550 = vmatprep.subr.bf16.mxu0 0
        %1551 = vmatpush1.bf16.msra.mxu0 0
        %1552 = vmatprep.subr.bf16.mxu0 0
        %1553 = vmatpush1.bf16.msra.mxu0 0
        %1554 = vmatprep.subr.bf16.mxu0 0
        %1555 = vmatpush1.bf16.msra.mxu0 0
        %1556 = vmatprep.subr.bf16.mxu0 0
        %1557 = vmatpush1.bf16.msra.mxu0 0
        %1558 = vmatprep.subr.bf16.mxu0 0
        %1559 = vmatpush1.bf16.msra.mxu0 0
        %1560 = vmatprep.subr.bf16.mxu0 0
        %1561 = vmatpush1.bf16.msra.mxu0 0
        %1562 = vmatprep.subr.bf16.mxu0 0
        %1563 = vmatpush1.bf16.msra.mxu0 0
        %1564 = vmatprep.mubr.bf16.mxu0 0
        %1565 = vmatmul.mubr.bf16.gmra.mrb[0].mxu0 %v743
        %v1566 = vpop.f32.mrb[0].mxu0
        %v1567 = vadd.f32 0.0, %v1566
        %v1568 = vpop.f32.mrb[0].mxu0
        %v1569 = vadd.f32 0.0, %v1568
        %v1570 = vpop.f32.mrb[0].mxu0
        %v1571 = vadd.f32 0.0, %v1570
        %v1572 = vpop.f32.mrb[0].mxu0
        %v1573 = vadd.f32 0.0, %v1572
        %1574 = vdwg.mxu0
        %1575 = vmatprep.subr.bf16.mxu0 %v1262
        %1576 = vmatpush1.bf16.msra.mxu0 %v1261
        %1577 = vmatprep.subr.bf16.mxu0 %v1264
        %1578 = vmatpush1.bf16.msra.mxu0 %v1263
        %1579 = vmatprep.subr.bf16.mxu0 0
        %1580 = vmatpush1.bf16.msra.mxu0 0
        %1581 = vmatprep.subr.bf16.mxu0 0
        %1582 = vmatpush1.bf16.msra.mxu0 0
        %1583 = vmatprep.subr.bf16.mxu0 0
        %1584 = vmatpush1.bf16.msra.mxu0 0
        %1585 = vmatprep.subr.bf16.mxu0 0
        %1586 = vmatpush1.bf16.msra.mxu0 0
        %1587 = vmatprep.subr.bf16.mxu0 0
        %1588 = vmatpush1.bf16.msra.mxu0 0
        %1589 = vmatprep.subr.bf16.mxu0 0
        %1590 = vmatpush1.bf16.msra.mxu0 0
        %1591 = vmatprep.subr.bf16.mxu0 0
        %1592 = vmatpush1.bf16.msra.mxu0 0
        %1593 = vmatprep.subr.bf16.mxu0 0
        %1594 = vmatpush1.bf16.msra.mxu0 0
        %1595 = vmatprep.subr.bf16.mxu0 0
        %1596 = vmatpush1.bf16.msra.mxu0 0
        %1597 = vmatprep.subr.bf16.mxu0 0
        %1598 = vmatpush1.bf16.msra.mxu0 0
        %1599 = vmatprep.subr.bf16.mxu0 0
        %1600 = vmatpush1.bf16.msra.mxu0 0
        %1601 = vmatprep.subr.bf16.mxu0 0
        %1602 = vmatpush1.bf16.msra.mxu0 0
        %1603 = vmatprep.subr.bf16.mxu0 0
        %1604 = vmatpush1.bf16.msra.mxu0 0
        %1605 = vmatprep.subr.bf16.mxu0 0
        %1606 = vmatpush1.bf16.msra.mxu0 0
        %1607 = vmatprep.mubr.bf16.mxu0 0
        %1608 = vmatmul.mubr.bf16.gmra.mrb[0].mxu0 %v606
        %v1609 = vpop.f32.mrb[0].mxu0
        %v1610 = vadd.f32 %v1567, %v1609
        %v1611 = vpop.f32.mrb[0].mxu0
        %v1612 = vadd.f32 %v1569, %v1611
        %v1613 = vpop.f32.mrb[0].mxu0
        %v1614 = vadd.f32 %v1571, %v1613
        %v1615 = vpop.f32.mrb[0].mxu0
        %v1616 = vadd.f32 %v1573, %v1615
        %1617 = vdwg.mxu0
        %1618 = vmatprep.subr.bf16.mxu0 %v1330
        %1619 = vmatpush1.bf16.msra.mxu0 %v1329
        %1620 = vmatprep.subr.bf16.mxu0 %v1332
        %1621 = vmatpush1.bf16.msra.mxu0 %v1331
        %1622 = vmatprep.subr.bf16.mxu0 0
        %1623 = vmatpush1.bf16.msra.mxu0 0
        %1624 = vmatprep.subr.bf16.mxu0 0
        %1625 = vmatpush1.bf16.msra.mxu0 0
        %1626 = vmatprep.subr.bf16.mxu0 0
        %1627 = vmatpush1.bf16.msra.mxu0 0
        %1628 = vmatprep.subr.bf16.mxu0 0
        %1629 = vmatpush1.bf16.msra.mxu0 0
        %1630 = vmatprep.subr.bf16.mxu0 0
        %1631 = vmatpush1.bf16.msra.mxu0 0
        %1632 = vmatprep.subr.bf16.mxu0 0
        %1633 = vmatpush1.bf16.msra.mxu0 0
        %1634 = vmatprep.subr.bf16.mxu0 0
        %1635 = vmatpush1.bf16.msra.mxu0 0
        %1636 = vmatprep.subr.bf16.mxu0 0
        %1637 = vmatpush1.bf16.msra.mxu0 0
        %1638 = vmatprep.subr.bf16.mxu0 0
        %1639 = vmatpush1.bf16.msra.mxu0 0
        %1640 = vmatprep.subr.bf16.mxu0 0
        %1641 = vmatpush1.bf16.msra.mxu0 0
        %1642 = vmatprep.subr.bf16.mxu0 0
        %1643 = vmatpush1.bf16.msra.mxu0 0
        %1644 = vmatprep.subr.bf16.mxu0 0
        %1645 = vmatpush1.bf16.msra.mxu0 0
        %1646 = vmatprep.subr.bf16.mxu0 0
        %1647 = vmatpush1.bf16.msra.mxu0 0
        %1648 = vmatprep.subr.bf16.mxu0 0
        %1649 = vmatpush1.bf16.msra.mxu0 0
        %1650 = vmatprep.mubr.bf16.mxu0 0
        %1651 = vmatmul.mubr.bf16.gmra.mrb[0].mxu0 %v818
        %v1652 = vpop.f32.mrb[0].mxu0
        %v1653 = vadd.f32 0.0, %v1652
        %v1654 = vpop.f32.mrb[0].mxu0
        %v1655 = vadd.f32 0.0, %v1654
        %v1656 = vpop.f32.mrb[0].mxu0
        %v1657 = vadd.f32 0.0, %v1656
        %v1658 = vpop.f32.mrb[0].mxu0
        %v1659 = vadd.f32 0.0, %v1658
        %1660 = vdwg.mxu0
        %v1661 = vadd.f32 %v1610, %v1653
        %v1662 = vadd.f32 %v1612, %v1655
        %v1663 = vadd.f32 %v1614, %v1657
        %v1664 = vadd.f32 %v1616, %v1659
        %1665 = vmatprep.subr.bf16.mxu0 %v1402
        %1666 = vmatpush1.bf16.msra.mxu0 %v1401
        %1667 = vmatprep.subr.bf16.mxu0 %v1404
        %1668 = vmatpush1.bf16.msra.mxu0 %v1403
        %1669 = vmatprep.subr.bf16.mxu0 0
        %1670 = vmatpush1.bf16.msra.mxu0 0
        %1671 = vmatprep.subr.bf16.mxu0 0
        %1672 = vmatpush1.bf16.msra.mxu0 0
        %1673 = vmatprep.subr.bf16.mxu0 0
        %1674 = vmatpush1.bf16.msra.mxu0 0
        %1675 = vmatprep.subr.bf16.mxu0 0
        %1676 = vmatpush1.bf16.msra.mxu0 0
        %1677 = vmatprep.subr.bf16.mxu0 0
        %1678 = vmatpush1.bf16.msra.mxu0 0
        %1679 = vmatprep.subr.bf16.mxu0 0
        %1680 = vmatpush1.bf16.msra.mxu0 0
        %1681 = vmatprep.subr.bf16.mxu0 0
        %1682 = vmatpush1.bf16.msra.mxu0 0
        %1683 = vmatprep.subr.bf16.mxu0 0
        %1684 = vmatpush1.bf16.msra.mxu0 0
        %1685 = vmatprep.subr.bf16.mxu0 0
        %1686 = vmatpush1.bf16.msra.mxu0 0
        %1687 = vmatprep.subr.bf16.mxu0 0
        %1688 = vmatpush1.bf16.msra.mxu0 0
        %1689 = vmatprep.subr.bf16.mxu0 0
        %1690 = vmatpush1.bf16.msra.mxu0 0
        %1691 = vmatprep.subr.bf16.mxu0 0
        %1692 = vmatpush1.bf16.msra.mxu0 0
        %1693 = vmatprep.subr.bf16.mxu0 0
        %1694 = vmatpush1.bf16.msra.mxu0 0
        %1695 = vmatprep.subr.bf16.mxu0 0
        %1696 = vmatpush1.bf16.msra.mxu0 0
        %1697 = vmatprep.mubr.bf16.mxu0 0
        %1698 = vmatmul.mubr.bf16.gmra.mrb[0].mxu0 %v893
        %v1699 = vpop.f32.mrb[0].mxu0
        %v1700 = vadd.f32 0.0, %v1699
        %v1701 = vpop.f32.mrb[0].mxu0
        %v1702 = vadd.f32 0.0, %v1701
        %v1703 = vpop.f32.mrb[0].mxu0
        %v1704 = vadd.f32 0.0, %v1703
        %v1705 = vpop.f32.mrb[0].mxu0
        %v1706 = vadd.f32 0.0, %v1705
        %1707 = vdwg.mxu0
        %v1708 = vadd.f32 %v1661, %v1700
        %v1709 = vadd.f32 %v1662, %v1702
        %v1710 = vadd.f32 %v1663, %v1704
        %v1711 = vadd.f32 %v1664, %v1706
        %1712 = vmatprep.subr.bf16.mxu0 %v1474
        %1713 = vmatpush1.bf16.msra.mxu0 %v1473
        %1714 = vmatprep.subr.bf16.mxu0 %v1476
        %1715 = vmatpush1.bf16.msra.mxu0 %v1475
        %1716 = vmatprep.subr.bf16.mxu0 0
        %1717 = vmatpush1.bf16.msra.mxu0 0
        %1718 = vmatprep.subr.bf16.mxu0 0
        %1719 = vmatpush1.bf16.msra.mxu0 0
        %1720 = vmatprep.subr.bf16.mxu0 0
        %1721 = vmatpush1.bf16.msra.mxu0 0
        %1722 = vmatprep.subr.bf16.mxu0 0
        %1723 = vmatpush1.bf16.msra.mxu0 0
        %1724 = vmatprep.subr.bf16.mxu0 0
        %1725 = vmatpush1.bf16.msra.mxu0 0
        %1726 = vmatprep.subr.bf16.mxu0 0
        %1727 = vmatpush1.bf16.msra.mxu0 0
        %1728 = vmatprep.subr.bf16.mxu0 0
        %1729 = vmatpush1.bf16.msra.mxu0 0
        %1730 = vmatprep.subr.bf16.mxu0 0
        %1731 = vmatpush1.bf16.msra.mxu0 0
        %1732 = vmatprep.subr.bf16.mxu0 0
        %1733 = vmatpush1.bf16.msra.mxu0 0
        %1734 = vmatprep.subr.bf16.mxu0 0
        %1735 = vmatpush1.bf16.msra.mxu0 0
        %1736 = vmatprep.subr.bf16.mxu0 0
        %1737 = vmatpush1.bf16.msra.mxu0 0
        %1738 = vmatprep.subr.bf16.mxu0 0
        %1739 = vmatpush1.bf16.msra.mxu0 0
        %1740 = vmatprep.subr.bf16.mxu0 0
        %1741 = vmatpush1.bf16.msra.mxu0 0
        %1742 = vmatprep.subr.bf16.mxu0 0
        %1743 = vmatpush1.bf16.msra.mxu0 0
        %1744 = vmatprep.mubr.bf16.mxu0 0
        %1745 = vmatmul.mubr.bf16.gmra.mrb[0].mxu0 %v1123
        %v1746 = vpop.f32.mrb[0].mxu0
        %v1747 = vadd.f32 0.0, %v1746
        %v1748 = vpop.f32.mrb[0].mxu0
        %v1749 = vadd.f32 0.0, %v1748
        %v1750 = vpop.f32.mrb[0].mxu0
        %v1751 = vadd.f32 0.0, %v1750
        %v1752 = vpop.f32.mrb[0].mxu0
        %v1753 = vadd.f32 0.0, %v1752
        %1754 = vdwg.mxu0
        %v1755 = vadd.f32 %v1708, %v1747
        %v1756 = vadd.f32 %v1709, %v1749
        %v1757 = vadd.f32 %v1710, %v1751
        %v1758 = vadd.f32 %v1711, %v1753
        %v1759 = vmax.f32 %v1528, %v1755
        %v1760 = vmax.f32 %v1529, %v1756
        %v1761 = vmax.f32 %v1530, %v1757
        %v1762 = vmax.f32 %v1531, %v1758
        %v1764 = vlaneseq
        %v1765 = vshrl.u32 %v1764, 7
        %v1766 = vsub.s32 0, %v1765
        %v1767 = vrot.slane %v241, %v1766
        %v1768 = vlaneseq
        %v1769 = vshrl.u32 %v1768, 7
        %v1770 = vsub.s32 1, %v1769
        %v1771 = vrot.slane %v241, %v1770
        %v1774 = vadd.f32 %v1759, %v1767
        %v1775 = vadd.f32 %v1760, %v1771
        %v1776 = vadd.f32 %v1761, %v1767
        %v1777 = vadd.f32 %v1762, %v1771
        %v1778 = vmax.f32 %v1774, 0.0
        %v1779 = vmax.f32 %v1775, 0.0
        %v1780 = vmax.f32 %v1776, 0.0
        %v1781 = vmax.f32 %v1777, 0.0
        %v1782 = vpack.c.bf16 %v1780, %v1778
        %v1783 = vpack.c.bf16 %v1781, %v1779
        %v1786 = vunpack.c.l.b16 %v1782
        %v1787 = vunpack.c.l.b16 %v1783
        %v1788 = vunpack.c.h.b16 %v1782
        %v1789 = vunpack.c.h.b16 %v1783
        %v1790 = vpack.c.b16 %v1787, %v1786
        %v1791 = vpack.c.b16 %v1789, %v1788
        %vm1794 = vcmask 1043456
        %vm1795 = vcmask 785412
        %vm1796 = vmor %vm1795, %vm1794
        %1797 = vst.msk [vmem:[%s239] sm:$0xff] %vm1796, %v1790
        %vm1798 = vcmask 1042432
        %vm1799 = vcmask 784388
        %vm1800 = vmor %vm1799, %vm1798
        %1801 = vst.msk [vmem:[%s239 + $0x8] sm:$0x77] %vm1800, %v1791
        %p1802 = scmp.lt.s32.totalorder %s17, 1
        %s1803 = scalar_select %p1802, %s17, 1
        %s1804 = smul.addr %s1803, 4
        %s1805 = smul.addr %s1804, 4
        %s1806 = scalar_lea.vmem %s4, %s1805
        // Predicated region
        $region49: #{cnn_forward.3} parent=35 // pred_check
          %p1807 = pneg %p124
        $region50: #{cnn_forward.3} parent=35 // pred_check_branch
          %1809 = sbr.rel (%p1807) target = $region52
        $region51: #{cnn_forward.3} parent=35 // pred_region
          _
        $region52: #{cnn_forward.3} parent=35 // pred_fallthru
          _
      $region36: #{cnn_forward.3} parent=5 // pred_fallthru
        _
      %p1810 = scmp.le.s32.totalorder 2, %s12
      // Predicated region
      $region53: #{cnn_forward.3} parent=5 // pred_check
        %p1811 = pneg %p1810
      $region54: #{cnn_forward.3} parent=5 // pred_check_branch
        %1813 = sbr.rel (%p1811) target = $region56
      $region55: #{cnn_forward.3} parent=5 // pred_region
        %s1814 = ssub.s32 %s12, 2
        // Predicated region
        $region57: #{cnn_forward.3} parent=55 // pred_check
          %p1815 = pneg %p130
        $region58: #{cnn_forward.3} parent=55 // pred_check_branch
          %1817 = sbr.rel (%p1815) target = $region60
        $region59: #{cnn_forward.3} parent=55 // pred_region
          %p1818 = scmp.lt.s32.totalorder %s18, 1
          %s1819 = scalar_select %p1818, %s18, 1
          %s1820 = smul.addr %s1819, 4
          %s1821 = smul.addr %s1820, 4
          %s1822 = scalar_lea.vmem %s4, %s1821
        $region60: #{cnn_forward.3} parent=55 // pred_fallthru
          _
      $region56: #{cnn_forward.3} parent=5 // pred_fallthru
        _
    $region6: #{cnn_forward.3} parent=1 // loop_footer
      %s16 = sadd.s32 1, %s12
    $region7: #{cnn_forward.3} parent=1 // loop_footer_branch
      %11 = sbr.rel target = $region3
    $region8: #{cnn_forward.3} parent=1 // loop_exit
      _
    %1823 = vsyncpa [#allocation3], 1
    %s1824 = scalar_lea.sflag [#allocation3], 1
    %1825 = vsyncpa %s1824, 1
    %1826 = vsyncpa [#allocation5], 1

// kernel: cnn_forward.5
$region0: #{cnn_forward.5}
  #allocation0 [shape = 'u32[]', space=smem, size = 0x4, offset = 0x4, fixed_abs, tag = 'smem constant byte address 0x4 - core index']
  #allocation1 [shape = 'u32[144,128]{1,0:T(1,128)}', space=vmem, size = 0x12000, scoped, tag = 'internal scratch']
  %s0 = inlined_call_operand.vmem [shape: bf16[2,1568], index: 0, kind: input, shape index: {}]
  %s1 = inlined_call_operand.vmem [shape: bf16[1568,256], index: 1, kind: input, shape index: {}]
  %s2 = inlined_call_operand.vmem [shape: f32[1,256], index: 2, kind: input, shape index: {}]
  %s3 = inlined_call_operand.vmem [shape: bf16[256,128], index: 3, kind: input, shape index: {}]
  %s4 = inlined_call_operand.vmem [shape: f32[1,128], index: 4, kind: input, shape index: {}]
  %s5 = inlined_call_operand.hbm [shape: f32[2,128], index: 5, kind: output, shape index: {}]
  %s6 = sld [smem:[#allocation0]]
  $region30: #{cnn_forward.5} parent=0
    _
  %s8 = ssub.s32 1, %s6
  %s9 = scalar_select 0, %s8, %s6
  $region1: #{cnn_forward.5} parent=0
    #allocation2 [shape = 'u8[1024]{0}', space=vmem, size = 0x400, scoped, tag = 'output window, operand 0, single buffered']
    #allocation3 [shape = 's32[1]{0}', space=sflag, size = 0x4, scoped, tag = 'scoped memory for cnn_forward.5']
    %10 = vsyncpa [#allocation3], 0
    // Predicated region
    $region2: #{cnn_forward.5} parent=1 // pred_check
      _
    $region3: #{cnn_forward.5} parent=1 // pred_check_branch
      %12 = sbr.rel (0) target = $region5
    $region4: #{cnn_forward.5} parent=1 // pred_region
      _
    $region5: #{cnn_forward.5} parent=1 // pred_fallthru
      _
    // Predicated region
    $region6: #{cnn_forward.5} parent=1 // pred_check
      _
    $region7: #{cnn_forward.5} parent=1 // pred_check_branch
      %14 = sbr.rel (0) target = $region9
    $region8: #{cnn_forward.5} parent=1 // pred_region
      _
    $region9: #{cnn_forward.5} parent=1 // pred_fallthru
      _
    // Predicated region
    $region10: #{cnn_forward.5} parent=1 // pred_check
      _
    $region11: #{cnn_forward.5} parent=1 // pred_check_branch
      %16 = sbr.rel (0) target = $region13
    $region12: #{cnn_forward.5} parent=1 // pred_region
      _
    $region13: #{cnn_forward.5} parent=1 // pred_fallthru
      _
    // Predicated region
    $region14: #{cnn_forward.5} parent=1 // pred_check
      _
    $region15: #{cnn_forward.5} parent=1 // pred_check_branch
      %18 = sbr.rel (0) target = $region17
    $region16: #{cnn_forward.5} parent=1 // pred_region
      _
    $region17: #{cnn_forward.5} parent=1 // pred_fallthru
      _
    // Predicated region
    $region18: #{cnn_forward.5} parent=1 // pred_check
      _
    $region19: #{cnn_forward.5} parent=1 // pred_check_branch
      %20 = sbr.rel (0) target = $region21
    $region20: #{cnn_forward.5} parent=1 // pred_region
      _
    $region21: #{cnn_forward.5} parent=1 // pred_fallthru
      _
    %v22 = vld [vmem:[%s0] sm:$0xff]
    %v23 = vld [vmem:[%s0 + $0x8] sm:$0x1f]
    %v24 = vld [vmem:[%s1] sm:$0xff]
    %v25 = vld [vmem:[%s1 + $0x8] sm:$0xff]
    %v26 = vld [vmem:[%s1 + $0x10] sm:$0xff]
    %v27 = vld [vmem:[%s1 + $0x18] sm:$0xff]
    %v28 = vld [vmem:[%s1 + $0x20] sm:$0xff]
    %v29 = vld [vmem:[%s1 + $0x28] sm:$0xff]
    %v30 = vld [vmem:[%s1 + $0x30] sm:$0xff]
    %v31 = vld [vmem:[%s1 + $0x38] sm:$0xff]
    %v32 = vld [vmem:[%s1 + $0x40] sm:$0xff]
    %v33 = vld [vmem:[%s1 + $0x48] sm:$0xff]
    %v34 = vld [vmem:[%s1 + $0x50] sm:$0xff]
    %v35 = vld [vmem:[%s1 + $0x58] sm:$0xff]
    %v36 = vld [vmem:[%s1 + $0x60] sm:$0xff]
    %v37 = vld [vmem:[%s1 + $0x68] sm:$0xff]
    %v38 = vld [vmem:[%s1 + $0x70] sm:$0xff]
    %v39 = vld [vmem:[%s1 + $0x78] sm:$0xff]
    %v40 = vld [vmem:[%s1 + $0x80] sm:$0xff]
    %v41 = vld [vmem:[%s1 + $0x88] sm:$0xff]
    %v42 = vld [vmem:[%s1 + $0x90] sm:$0xff]
    %v43 = vld [vmem:[%s1 + $0x98] sm:$0xff]
    %v44 = vld [vmem:[%s1 + $0xa0] sm:$0xff]
    %v45 = vld [vmem:[%s1 + $0xa8] sm:$0xff]
    %v46 = vld [vmem:[%s1 + $0xb0] sm:$0xff]
    %v47 = vld [vmem:[%s1 + $0xb8] sm:$0xff]
    %v48 = vld [vmem:[%s1 + $0xc0] sm:$0xff]
    %v49 = vld [vmem:[%s1 + $0xc8] sm:$0xff]
    %v50 = vld [vmem:[%s1 + $0xd0] sm:$0xff]
    %v51 = vld [vmem:[%s1 + $0xd8] sm:$0xff]
    %v52 = vld [vmem:[%s1 + $0xe0] sm:$0xff]
    %v53 = vld [vmem:[%s1 + $0xe8] sm:$0xff]
    %v54 = vld [vmem:[%s1 + $0xf0] sm:$0xff]
    %v55 = vld [vmem:[%s1 + $0xf8] sm:$0xff]
    %v56 = vld [vmem:[%s1 + $0x100] sm:$0xff]
    %v57 = vld [vmem:[%s1 + $0x108] sm:$0xff]
    %v58 = vld [vmem:[%s1 + $0x110] sm:$0xff]
    %v59 = vld [vmem:[%s1 + $0x118] sm:$0xff]
    %v60 = vld [vmem:[%s1 + $0x120] sm:$0xff]
    %v61 = vld [vmem:[%s1 + $0x128] sm:$0xff]
    %v62 = vld [vmem:[%s1 + $0x130] sm:$0xff]
    %v63 = vld [vmem:[%s1 + $0x138] sm:$0xff]
    %v64 = vld [vmem:[%s1 + $0x140] sm:$0xff]
    %v65 = vld [vmem:[%s1 + $0x148] sm:$0xff]
    %v66 = vld [vmem:[%s1 + $0x150] sm:$0xff]
    %v67 = vld [vmem:[%s1 + $0x158] sm:$0xff]
    %v68 = vld [vmem:[%s1 + $0x160] sm:$0xff]
    %v69 = vld [vmem:[%s1 + $0x168] sm:$0xff]
    %v70 = vld [vmem:[%s1 + $0x170] sm:$0xff]
    %v71 = vld [vmem:[%s1 + $0x178] sm:$0xff]
    %v72 = vld [vmem:[%s1 + $0x180] sm:$0xff]
    %v73 = vld [vmem:[%s1 + $0x188] sm:$0xff]
    %v74 = vld [vmem:[%s1 + $0x190] sm:$0xff]
    %v75 = vld [vmem:[%s1 + $0x198] sm:$0xff]
    %v76 = vld [vmem:[%s1 + $0x1a0] sm:$0xff]
    %v77 = vld [vmem:[%s1 + $0x1a8] sm:$0xff]
    %v78 = vld [vmem:[%s1 + $0x1b0] sm:$0xff]
    %v79 = vld [vmem:[%s1 + $0x1b8] sm:$0xff]
    %v80 = vld [vmem:[%s1 + $0x1c0] sm:$0xff]
    %v81 = vld [vmem:[%s1 + $0x1c8] sm:$0xff]
    %v82 = vld [vmem:[%s1 + $0x1d0] sm:$0xff]
    %v83 = vld [vmem:[%s1 + $0x1d8] sm:$0xff]
    %v84 = vld [vmem:[%s1 + $0x1e0] sm:$0xff]
    %v85 = vld [vmem:[%s1 + $0x1e8] sm:$0xff]
    %v86 = vld [vmem:[%s1 + $0x1f0] sm:$0xff]
    %v87 = vld [vmem:[%s1 + $0x1f8] sm:$0xff]
    %v88 = vld [vmem:[%s1 + $0x200] sm:$0xff]
    %v89 = vld [vmem:[%s1 + $0x208] sm:$0xff]
    %v90 = vld [vmem:[%s1 + $0x210] sm:$0xff]
    %v91 = vld [vmem:[%s1 + $0x218] sm:$0xff]
    %v92 = vld [vmem:[%s1 + $0x220] sm:$0xff]
    %v93 = vld [vmem:[%s1 + $0x228] sm:$0xff]
    %v94 = vld [vmem:[%s1 + $0x230] sm:$0xff]
    %v95 = vld [vmem:[%s1 + $0x238] sm:$0xff]
    %v96 = vld [vmem:[%s1 + $0x240] sm:$0xff]
    %v97 = vld [vmem:[%s1 + $0x248] sm:$0xff]
    %v98 = vld [vmem:[%s1 + $0x250] sm:$0xff]
    %v99 = vld [vmem:[%s1 + $0x258] sm:$0xff]
    %v100 = vld [vmem:[%s1 + $0x260] sm:$0xff]
    %v101 = vld [vmem:[%s1 + $0x268] sm:$0xff]
    %v102 = vld [vmem:[%s1 + $0x270] sm:$0xff]
    %v103 = vld [vmem:[%s1 + $0x278] sm:$0xff]
    %v104 = vld [vmem:[%s1 + $0x280] sm:$0xff]
    %v105 = vld [vmem:[%s1 + $0x288] sm:$0xff]
    %v106 = vld [vmem:[%s1 + $0x290] sm:$0xff]
    %v107 = vld [vmem:[%s1 + $0x298] sm:$0xff]
    %v108 = vld [vmem:[%s1 + $0x2a0] sm:$0xff]
    %v109 = vld [vmem:[%s1 + $0x2a8] sm:$0xff]
    %v110 = vld [vmem:[%s1 + $0x2b0] sm:$0xff]
    %v111 = vld [vmem:[%s1 + $0x2b8] sm:$0xff]
    %v112 = vld [vmem:[%s1 + $0x2c0] sm:$0xff]
    %v113 = vld [vmem:[%s1 + $0x2c8] sm:$0xff]
    %v114 = vld [vmem:[%s1 + $0x2d0] sm:$0xff]
    %v115 = vld [vmem:[%s1 + $0x2d8] sm:$0xff]
    %v116 = vld [vmem:[%s1 + $0x2e0] sm:$0xff]
    %v117 = vld [vmem:[%s1 + $0x2e8] sm:$0xff]
    %v118 = vld [vmem:[%s1 + $0x2f0] sm:$0xff]
    %v119 = vld [vmem:[%s1 + $0x2f8] sm:$0xff]
    %v120 = vld [vmem:[%s1 + $0x300] sm:$0xff]
    %v121 = vld [vmem:[%s1 + $0x308] sm:$0xff]
    %v122 = vld [vmem:[%s1 + $0x310] sm:$0xff]
    %v123 = vld [vmem:[%s1 + $0x318] sm:$0xff]
    %v124 = vld [vmem:[%s1 + $0x320] sm:$0xff]
    %v125 = vld [vmem:[%s1 + $0x328] sm:$0xff]
    %v126 = vld [vmem:[%s1 + $0x330] sm:$0xff]
    %v127 = vld [vmem:[%s1 + $0x338] sm:$0xff]
    %v128 = vld [vmem:[%s1 + $0x340] sm:$0xff]
    %v129 = vld [vmem:[%s1 + $0x348] sm:$0xff]
    %v130 = vld [vmem:[%s1 + $0x350] sm:$0xff]
    %v131 = vld [vmem:[%s1 + $0x358] sm:$0xff]
    %v132 = vld [vmem:[%s1 + $0x360] sm:$0xff]
    %v133 = vld [vmem:[%s1 + $0x368] sm:$0xff]
    %v134 = vld [vmem:[%s1 + $0x370] sm:$0xff]
    %v135 = vld [vmem:[%s1 + $0x378] sm:$0xff]
    %v136 = vld [vmem:[%s1 + $0x380] sm:$0xff]
    %v137 = vld [vmem:[%s1 + $0x388] sm:$0xff]
    %v138 = vld [vmem:[%s1 + $0x390] sm:$0xff]
    %v139 = vld [vmem:[%s1 + $0x398] sm:$0xff]
    %v140 = vld [vmem:[%s1 + $0x3a0] sm:$0xff]
    %v141 = vld [vmem:[%s1 + $0x3a8] sm:$0xff]
    %v142 = vld [vmem:[%s1 + $0x3b0] sm:$0xff]
    %v143 = vld [vmem:[%s1 + $0x3b8] sm:$0xff]
    %v144 = vld [vmem:[%s1 + $0x3c0] sm:$0xff]
    %v145 = vld [vmem:[%s1 + $0x3c8] sm:$0xff]
    %v146 = vld [vmem:[%s1 + $0x3d0] sm:$0xff]
    %v147 = vld [vmem:[%s1 + $0x3d8] sm:$0xff]
    %v148 = vld [vmem:[%s1 + $0x3e0] sm:$0xff]
    %v149 = vld [vmem:[%s1 + $0x3e8] sm:$0xff]
    %v150 = vld [vmem:[%s1 + $0x3f0] sm:$0xff]
    %v151 = vld [vmem:[%s1 + $0x3f8] sm:$0xff]
    %v152 = vld [vmem:[%s1 + $0x400] sm:$0xff]
    %v153 = vld [vmem:[%s1 + $0x408] sm:$0xff]
    %v154 = vld [vmem:[%s1 + $0x410] sm:$0xff]
    %v155 = vld [vmem:[%s1 + $0x418] sm:$0xff]
    %v156 = vld [vmem:[%s1 + $0x420] sm:$0xff]
    %v157 = vld [vmem:[%s1 + $0x428] sm:$0xff]
    %v158 = vld [vmem:[%s1 + $0x430] sm:$0xff]
    %v159 = vld [vmem:[%s1 + $0x438] sm:$0xff]
    %v160 = vld [vmem:[%s1 + $0x440] sm:$0xff]
    %v161 = vld [vmem:[%s1 + $0x448] sm:$0xff]
    %v162 = vld [vmem:[%s1 + $0x450] sm:$0xff]
    %v163 = vld [vmem:[%s1 + $0x458] sm:$0xff]
    %v164 = vld [vmem:[%s1 + $0x460] sm:$0xff]
    %v165 = vld [vmem:[%s1 + $0x468] sm:$0xff]
    %v166 = vld [vmem:[%s1 + $0x470] sm:$0xff]
    %v167 = vld [vmem:[%s1 + $0x478] sm:$0xff]
    %v168 = vld [vmem:[%s1 + $0x480] sm:$0xff]
    %v169 = vld [vmem:[%s1 + $0x488] sm:$0xff]
    %v170 = vld [vmem:[%s1 + $0x490] sm:$0xff]
    %v171 = vld [vmem:[%s1 + $0x498] sm:$0xff]
    %v172 = vld [vmem:[%s1 + $0x4a0] sm:$0xff]
    %v173 = vld [vmem:[%s1 + $0x4a8] sm:$0xff]
    %v174 = vld [vmem:[%s1 + $0x4b0] sm:$0xff]
    %v175 = vld [vmem:[%s1 + $0x4b8] sm:$0xff]
    %v176 = vld [vmem:[%s1 + $0x4c0] sm:$0xff]
    %v177 = vld [vmem:[%s1 + $0x4c8] sm:$0xff]
    %v178 = vld [vmem:[%s1 + $0x4d0] sm:$0xff]
    %v179 = vld [vmem:[%s1 + $0x4d8] sm:$0xff]
    %v180 = vld [vmem:[%s1 + $0x4e0] sm:$0xff]
    %v181 = vld [vmem:[%s1 + $0x4e8] sm:$0xff]
    %v182 = vld [vmem:[%s1 + $0x4f0] sm:$0xff]
    %v183 = vld [vmem:[%s1 + $0x4f8] sm:$0xff]
    %v184 = vld [vmem:[%s1 + $0x500] sm:$0xff]
    %v185 = vld [vmem:[%s1 + $0x508] sm:$0xff]
    %v186 = vld [vmem:[%s1 + $0x510] sm:$0xff]
    %v187 = vld [vmem:[%s1 + $0x518] sm:$0xff]
    %v188 = vld [vmem:[%s1 + $0x520] sm:$0xff]
    %v189 = vld [vmem:[%s1 + $0x528] sm:$0xff]
    %v190 = vld [vmem:[%s1 + $0x530] sm:$0xff]
    %v191 = vld [vmem:[%s1 + $0x538] sm:$0xff]
    %v192 = vld [vmem:[%s1 + $0x540] sm:$0xff]
    %v193 = vld [vmem:[%s1 + $0x548] sm:$0xff]
    %v194 = vld [vmem:[%s1 + $0x550] sm:$0xff]
    %v195 = vld [vmem:[%s1 + $0x558] sm:$0xff]
    %v196 = vld [vmem:[%s1 + $0x560] sm:$0xff]
    %v197 = vld [vmem:[%s1 + $0x568] sm:$0xff]
    %v198 = vld [vmem:[%s1 + $0x570] sm:$0xff]
    %v199 = vld [vmem:[%s1 + $0x578] sm:$0xff]
    %v200 = vld [vmem:[%s1 + $0x580] sm:$0xff]
    %v201 = vld [vmem:[%s1 + $0x588] sm:$0xff]
    %v202 = vld [vmem:[%s1 + $0x590] sm:$0xff]
    %v203 = vld [vmem:[%s1 + $0x598] sm:$0xff]
    %v204 = vld [vmem:[%s1 + $0x5a0] sm:$0xff]
    %v205 = vld [vmem:[%s1 + $0x5a8] sm:$0xff]
    %v206 = vld [vmem:[%s1 + $0x5b0] sm:$0xff]
    %v207 = vld [vmem:[%s1 + $0x5b8] sm:$0xff]
    %v208 = vld [vmem:[%s1 + $0x5c0] sm:$0xff]
    %v209 = vld [vmem:[%s1 + $0x5c8] sm:$0xff]
    %v210 = vld [vmem:[%s1 + $0x5d0] sm:$0xff]
    %v211 = vld [vmem:[%s1 + $0x5d8] sm:$0xff]
    %v212 = vld [vmem:[%s1 + $0x5e0] sm:$0xff]
    %v213 = vld [vmem:[%s1 + $0x5e8] sm:$0xff]
    %v214 = vld [vmem:[%s1 + $0x5f0] sm:$0xff]
    %v215 = vld [vmem:[%s1 + $0x5f8] sm:$0xff]
    %v216 = vld [vmem:[%s1 + $0x600] sm:$0xff]
    %v217 = vld [vmem:[%s1 + $0x608] sm:$0xff]
    %v218 = vld [vmem:[%s1 + $0x610] sm:$0xff]
    %v219 = vld [vmem:[%s1 + $0x618] sm:$0xff]
    %v220 = vld [vmem:[%s2] sm:$0x3]
    %v222 = vlaneseq
    %v223 = vshrl.u32 %v222, 7
    %v224 = vsub.s32 0, %v223
    %v225 = vrot.slane %v220, %v224
    %v226 = vlaneseq
    %v227 = vshrl.u32 %v226, 7
    %v228 = vsub.s32 1, %v227
    %v229 = vrot.slane %v220, %v228
    %v234 = vcombine.high %v22, %v22
    %v236 = vunpack.c.l.s4 1966171168
    %v237 = vunpack.c.0.s8 %v236
    %v238 = vlaneseq
    %v239 = vshrl.u32 %v238, 7
    %v240 = vsub.s32 %v237, %v239
    %v241 = vrot.slane %v22, %v240
    %v243 = vunpack.c.l.s4 1966171168
    %v244 = vunpack.c.0.s8 %v243
    %v245 = vlaneseq
    %v246 = vshrl.u32 %v245, 7
    %v247 = vsub.s32 %v244, %v246
    %v248 = vrot.slane %v234, %v247
    %v249 = vcombine.high %v241, %v241
    %v250 = vcombine.high %v248, %v248
    %v252 = vunpack.c.l.s4 1966171168
    %v253 = vunpack.c.0.s8 %v252
    %v254 = vlaneseq
    %v255 = vshrl.u32 %v254, 7
    %v256 = vsub.s32 %v253, %v255
    %v257 = vrot.slane %v241, %v256
    %v259 = vunpack.c.l.s4 1966171168
    %v260 = vunpack.c.0.s8 %v259
    %v261 = vlaneseq
    %v262 = vshrl.u32 %v261, 7
    %v263 = vsub.s32 %v260, %v262
    %v264 = vrot.slane %v248, %v263
    %v266 = vunpack.c.l.s4 1966171168
    %v267 = vunpack.c.0.s8 %v266
    %v268 = vlaneseq
    %v269 = vshrl.u32 %v268, 7
    %v270 = vsub.s32 %v267, %v269
    %v271 = vrot.slane %v249, %v270
    %v273 = vunpack.c.l.s4 1966171168
    %v274 = vunpack.c.0.s8 %v273
    %v275 = vlaneseq
    %v276 = vshrl.u32 %v275, 7
    %v277 = vsub.s32 %v274, %v276
    %v278 = vrot.slane %v250, %v277
    %v279 = vcombine.high %v257, %v257
    %v280 = vcombine.high %v264, %v264
    %v281 = vcombine.high %v271, %v271
    %v282 = vcombine.high %v278, %v278
    %v283 = vcombine.high %v23, %v23
    %v285 = vunpack.c.l.s4 1966171168
    %v286 = vunpack.c.0.s8 %v285
    %v287 = vlaneseq
    %v288 = vshrl.u32 %v287, 7
    %v289 = vsub.s32 %v286, %v288
    %v290 = vrot.slane %v23, %v289
    %v292 = vunpack.c.l.s4 1966171168
    %v293 = vunpack.c.0.s8 %v292
    %v294 = vlaneseq
    %v295 = vshrl.u32 %v294, 7
    %v296 = vsub.s32 %v293, %v295
    %v297 = vrot.slane %v283, %v296
    %v298 = vcombine.high %v290, %v290
    %v300 = vunpack.c.l.s4 1966171168
    %v301 = vunpack.c.0.s8 %v300
    %v302 = vlaneseq
    %v303 = vshrl.u32 %v302, 7
    %v304 = vsub.s32 %v301, %v303
    %v305 = vrot.slane %v290, %v304
    %v307 = vunpack.c.l.s4 1966171168
    %v308 = vunpack.c.0.s8 %v307
    %v309 = vlaneseq
    %v310 = vshrl.u32 %v309, 7
    %v311 = vsub.s32 %v308, %v310
    %v312 = vrot.slane %v297, %v311
    %v314 = vunpack.c.l.s4 1966171168
    %v315 = vunpack.c.0.s8 %v314
    %v316 = vlaneseq
    %v317 = vshrl.u32 %v316, 7
    %v318 = vsub.s32 %v315, %v317
    %v319 = vrot.slane %v298, %v318
    %v320 = vcombine.high %v305, %v305
    %v321 = vcombine.high %v319, %v319
    %v530 = vunpack.c.l.b16 %v24
    %v531 = vunpack.c.h.b16 %v24
    %v532 = vunpack.c.l.b16 %v25
    %v533 = vunpack.c.h.b16 %v25
    %v534 = vunpack.c.l.b16 %v26
    %v535 = vunpack.c.h.b16 %v26
    %v536 = vunpack.c.l.b16 %v27
    %v537 = vunpack.c.h.b16 %v27
    %v538 = vunpack.c.l.b16 %v28
    %v539 = vunpack.c.h.b16 %v28
    %v540 = vunpack.c.l.b16 %v29
    %v541 = vunpack.c.h.b16 %v29
    %v542 = vunpack.c.l.b16 %v30
    %v543 = vunpack.c.h.b16 %v30
    %v544 = vunpack.c.l.b16 %v31
    %v545 = vunpack.c.h.b16 %v31
    %v546 = vunpack.c.l.b16 %v32
    %v547 = vunpack.c.h.b16 %v32
    %v548 = vunpack.c.l.b16 %v33
    %v549 = vunpack.c.h.b16 %v33
    %v550 = vunpack.c.l.b16 %v34
    %v551 = vunpack.c.h.b16 %v34
    %v552 = vunpack.c.l.b16 %v35
    %v553 = vunpack.c.h.b16 %v35
    %v554 = vunpack.c.l.b16 %v36
    %v555 = vunpack.c.h.b16 %v36
    %v556 = vunpack.c.l.b16 %v37
    %v557 = vunpack.c.h.b16 %v37
    %v558 = vunpack.c.l.b16 %v38
    %v559 = vunpack.c.h.b16 %v38
    %v560 = vunpack.c.l.b16 %v39
    %v561 = vunpack.c.h.b16 %v39
    %v562 = vunpack.c.l.b16 %v40
    %v563 = vunpack.c.h.b16 %v40
    %v564 = vunpack.c.l.b16 %v41
    %v565 = vunpack.c.h.b16 %v41
    %v566 = vunpack.c.l.b16 %v42
    %v567 = vunpack.c.h.b16 %v42
    %v568 = vunpack.c.l.b16 %v43
    %v569 = vunpack.c.h.b16 %v43
    %v570 = vunpack.c.l.b16 %v44
    %v571 = vunpack.c.h.b16 %v44
    %v572 = vunpack.c.l.b16 %v45
    %v573 = vunpack.c.h.b16 %v45
    %v574 = vunpack.c.l.b16 %v46
    %v575 = vunpack.c.h.b16 %v46
    %v576 = vunpack.c.l.b16 %v47
    %v577 = vunpack.c.h.b16 %v47
    %v578 = vunpack.c.l.b16 %v48
    %v579 = vunpack.c.h.b16 %v48
    %v580 = vunpack.c.l.b16 %v49
    %v581 = vunpack.c.h.b16 %v49
    %v582 = vunpack.c.l.b16 %v50
    %v583 = vunpack.c.h.b16 %v50
    %v584 = vunpack.c.l.b16 %v51
    %v585 = vunpack.c.h.b16 %v51
    %v586 = vunpack.c.l.b16 %v52
    %v587 = vunpack.c.h.b16 %v52
    %v588 = vunpack.c.l.b16 %v53
    %v589 = vunpack.c.h.b16 %v53
    %v590 = vunpack.c.l.b16 %v54
    %v591 = vunpack.c.h.b16 %v54
    %v592 = vunpack.c.l.b16 %v55
    %v593 = vunpack.c.h.b16 %v55
    %v594 = vunpack.c.l.b16 %v56
    %v595 = vunpack.c.h.b16 %v56
    %v596 = vunpack.c.l.b16 %v57
    %v597 = vunpack.c.h.b16 %v57
    %v598 = vunpack.c.l.b16 %v58
    %v599 = vunpack.c.h.b16 %v58
    %v600 = vunpack.c.l.b16 %v59
    %v601 = vunpack.c.h.b16 %v59
    %v602 = vunpack.c.l.b16 %v60
    %v603 = vunpack.c.h.b16 %v60
    %v604 = vunpack.c.l.b16 %v61
    %v605 = vunpack.c.h.b16 %v61
    %v606 = vunpack.c.l.b16 %v62
    %v607 = vunpack.c.h.b16 %v62
    %v608 = vunpack.c.l.b16 %v63
    %v609 = vunpack.c.h.b16 %v63
    %v610 = vunpack.c.l.b16 %v64
    %v611 = vunpack.c.h.b16 %v64
    %v612 = vunpack.c.l.b16 %v65
    %v613 = vunpack.c.h.b16 %v65
    %v614 = vunpack.c.l.b16 %v66
    %v615 = vunpack.c.h.b16 %v66
    %v616 = vunpack.c.l.b16 %v67
    %v617 = vunpack.c.h.b16 %v67
    %v618 = vunpack.c.l.b16 %v68
    %v619 = vunpack.c.h.b16 %v68
    %v620 = vunpack.c.l.b16 %v69
    %v621 = vunpack.c.h.b16 %v69
    %v622 = vunpack.c.l.b16 %v70
    %v623 = vunpack.c.h.b16 %v70
    %v624 = vunpack.c.l.b16 %v71
    %v625 = vunpack.c.h.b16 %v71
    %v626 = vunpack.c.l.b16 %v72
    %v627 = vunpack.c.h.b16 %v72
    %v628 = vunpack.c.l.b16 %v73
    %v629 = vunpack.c.h.b16 %v73
    %v630 = vunpack.c.l.b16 %v74
    %v631 = vunpack.c.h.b16 %v74
    %v632 = vunpack.c.l.b16 %v75
    %v633 = vunpack.c.h.b16 %v75
    %v634 = vunpack.c.l.b16 %v76
    %v635 = vunpack.c.h.b16 %v76
    %v636 = vunpack.c.l.b16 %v77
    %v637 = vunpack.c.h.b16 %v77
    %v638 = vunpack.c.l.b16 %v78
    %v639 = vunpack.c.h.b16 %v78
    %v640 = vunpack.c.l.b16 %v79
    %v641 = vunpack.c.h.b16 %v79
    %v642 = vunpack.c.l.b16 %v80
    %v643 = vunpack.c.h.b16 %v80
    %v644 = vunpack.c.l.b16 %v81
    %v645 = vunpack.c.h.b16 %v81
    %v646 = vunpack.c.l.b16 %v82
    %v647 = vunpack.c.h.b16 %v82
    %v648 = vunpack.c.l.b16 %v83
    %v649 = vunpack.c.h.b16 %v83
    %v650 = vunpack.c.l.b16 %v84
    %v651 = vunpack.c.h.b16 %v84
    %v652 = vunpack.c.l.b16 %v85
    %v653 = vunpack.c.h.b16 %v85
    %v654 = vunpack.c.l.b16 %v86
    %v655 = vunpack.c.h.b16 %v86
    %v656 = vunpack.c.l.b16 %v87
    %v657 = vunpack.c.h.b16 %v87
    %v658 = vunpack.c.l.b16 %v88
    %v659 = vunpack.c.h.b16 %v88
    %v660 = vunpack.c.l.b16 %v89
    %v661 = vunpack.c.h.b16 %v89
    %v662 = vunpack.c.l.b16 %v90
    %v663 = vunpack.c.h.b16 %v90
    %v664 = vunpack.c.l.b16 %v91
    %v665 = vunpack.c.h.b16 %v91
    %v666 = vunpack.c.l.b16 %v92
    %v667 = vunpack.c.h.b16 %v92
    %v668 = vunpack.c.l.b16 %v93
    %v669 = vunpack.c.h.b16 %v93
    %v670 = vunpack.c.l.b16 %v94
    %v671 = vunpack.c.h.b16 %v94
    %v672 = vunpack.c.l.b16 %v95
    %v673 = vunpack.c.h.b16 %v95
    %v674 = vunpack.c.l.b16 %v96
    %v675 = vunpack.c.h.b16 %v96
    %v676 = vunpack.c.l.b16 %v97
    %v677 = vunpack.c.h.b16 %v97
    %v678 = vunpack.c.l.b16 %v98
    %v679 = vunpack.c.h.b16 %v98
    %v680 = vunpack.c.l.b16 %v99
    %v681 = vunpack.c.h.b16 %v99
    %v682 = vunpack.c.l.b16 %v100
    %v683 = vunpack.c.h.b16 %v100
    %v684 = vunpack.c.l.b16 %v101
    %v685 = vunpack.c.h.b16 %v101
    %v686 = vunpack.c.l.b16 %v102
    %v687 = vunpack.c.h.b16 %v102
    %v688 = vunpack.c.l.b16 %v103
    %v689 = vunpack.c.h.b16 %v103
    %v690 = vunpack.c.l.b16 %v104
    %v691 = vunpack.c.h.b16 %v104
    %v692 = vunpack.c.l.b16 %v105
    %v693 = vunpack.c.h.b16 %v105
    %v694 = vunpack.c.l.b16 %v106
    %v695 = vunpack.c.h.b16 %v106
    %v696 = vunpack.c.l.b16 %v107
    %v697 = vunpack.c.h.b16 %v107
    %v698 = vunpack.c.l.b16 %v108
    %v699 = vunpack.c.h.b16 %v108
    %v700 = vunpack.c.l.b16 %v109
    %v701 = vunpack.c.h.b16 %v109
    %v702 = vunpack.c.l.b16 %v110
    %v703 = vunpack.c.h.b16 %v110
    %v704 = vunpack.c.l.b16 %v111
    %v705 = vunpack.c.h.b16 %v111
    %v706 = vunpack.c.l.b16 %v112
    %v707 = vunpack.c.h.b16 %v112
    %v708 = vunpack.c.l.b16 %v113
    %v709 = vunpack.c.h.b16 %v113
    %v710 = vunpack.c.l.b16 %v114
    %v711 = vunpack.c.h.b16 %v114
    %v712 = vunpack.c.l.b16 %v115
    %v713 = vunpack.c.h.b16 %v115
    %v714 = vunpack.c.l.b16 %v116
    %v715 = vunpack.c.h.b16 %v116
    %v716 = vunpack.c.l.b16 %v117
    %v717 = vunpack.c.h.b16 %v117
    %v718 = vunpack.c.l.b16 %v118
    %v719 = vunpack.c.h.b16 %v118
    %v720 = vunpack.c.l.b16 %v119
    %v721 = vunpack.c.h.b16 %v119
    %v722 = vunpack.c.l.b16 %v120
    %v723 = vunpack.c.h.b16 %v120
    %v724 = vunpack.c.l.b16 %v121
    %v725 = vunpack.c.h.b16 %v121
    %v726 = vunpack.c.l.b16 %v122
    %v727 = vunpack.c.h.b16 %v122
    %v728 = vunpack.c.l.b16 %v123
    %v729 = vunpack.c.h.b16 %v123
    %v730 = vunpack.c.l.b16 %v124
    %v731 = vunpack.c.h.b16 %v124
    %v732 = vunpack.c.l.b16 %v125
    %v733 = vunpack.c.h.b16 %v125
    %v734 = vunpack.c.l.b16 %v126
    %v735 = vunpack.c.h.b16 %v126
    %v736 = vunpack.c.l.b16 %v127
    %v737 = vunpack.c.h.b16 %v127
    %v738 = vunpack.c.l.b16 %v128
    %v739 = vunpack.c.h.b16 %v128
    %v740 = vunpack.c.l.b16 %v129
    %v741 = vunpack.c.h.b16 %v129
    %v742 = vunpack.c.l.b16 %v130
    %v743 = vunpack.c.h.b16 %v130
    %v744 = vunpack.c.l.b16 %v131
    %v745 = vunpack.c.h.b16 %v131
    %v746 = vunpack.c.l.b16 %v132
    %v747 = vunpack.c.h.b16 %v132
    %v748 = vunpack.c.l.b16 %v133
    %v749 = vunpack.c.h.b16 %v133
    %v750 = vunpack.c.l.b16 %v134
    %v751 = vunpack.c.h.b16 %v134
    %v752 = vunpack.c.l.b16 %v135
    %v753 = vunpack.c.h.b16 %v135
    %v754 = vunpack.c.l.b16 %v136
    %v755 = vunpack.c.h.b16 %v136
    %v756 = vunpack.c.l.b16 %v137
    %v757 = vunpack.c.h.b16 %v137
    %v758 = vunpack.c.l.b16 %v138
    %v759 = vunpack.c.h.b16 %v138
    %v760 = vunpack.c.l.b16 %v139
    %v761 = vunpack.c.h.b16 %v139
    %v762 = vunpack.c.l.b16 %v140
    %v763 = vunpack.c.h.b16 %v140
    %v764 = vunpack.c.l.b16 %v141
    %v765 = vunpack.c.h.b16 %v141
    %v766 = vunpack.c.l.b16 %v142
    %v767 = vunpack.c.h.b16 %v142
    %v768 = vunpack.c.l.b16 %v143
    %v769 = vunpack.c.h.b16 %v143
    %v770 = vunpack.c.l.b16 %v144
    %v771 = vunpack.c.h.b16 %v144
    %v772 = vunpack.c.l.b16 %v145
    %v773 = vunpack.c.h.b16 %v145
    %v774 = vunpack.c.l.b16 %v146
    %v775 = vunpack.c.h.b16 %v146
    %v776 = vunpack.c.l.b16 %v147
    %v777 = vunpack.c.h.b16 %v147
    %v778 = vunpack.c.l.b16 %v148
    %v779 = vunpack.c.h.b16 %v148
    %v780 = vunpack.c.l.b16 %v149
    %v781 = vunpack.c.h.b16 %v149
    %v782 = vunpack.c.l.b16 %v150
    %v783 = vunpack.c.h.b16 %v150
    %v784 = vunpack.c.l.b16 %v151
    %v785 = vunpack.c.h.b16 %v151
    %v786 = vunpack.c.l.b16 %v152
    %v787 = vunpack.c.h.b16 %v152
    %v788 = vunpack.c.l.b16 %v153
    %v789 = vunpack.c.h.b16 %v153
    %v790 = vunpack.c.l.b16 %v154
    %v791 = vunpack.c.h.b16 %v154
    %v792 = vunpack.c.l.b16 %v155
    %v793 = vunpack.c.h.b16 %v155
    %v794 = vunpack.c.l.b16 %v156
    %v795 = vunpack.c.h.b16 %v156
    %v796 = vunpack.c.l.b16 %v157
    %v797 = vunpack.c.h.b16 %v157
    %v798 = vunpack.c.l.b16 %v158
    %v799 = vunpack.c.h.b16 %v158
    %v800 = vunpack.c.l.b16 %v159
    %v801 = vunpack.c.h.b16 %v159
    %v802 = vunpack.c.l.b16 %v160
    %v803 = vunpack.c.h.b16 %v160
    %v804 = vunpack.c.l.b16 %v161
    %v805 = vunpack.c.h.b16 %v161
    %v806 = vunpack.c.l.b16 %v162
    %v807 = vunpack.c.h.b16 %v162
    %v808 = vunpack.c.l.b16 %v163
    %v809 = vunpack.c.h.b16 %v163
    %v810 = vunpack.c.l.b16 %v164
    %v811 = vunpack.c.h.b16 %v164
    %v812 = vunpack.c.l.b16 %v165
    %v813 = vunpack.c.h.b16 %v165
    %v814 = vunpack.c.l.b16 %v166
    %v815 = vunpack.c.h.b16 %v166
    %v816 = vunpack.c.l.b16 %v167
    %v817 = vunpack.c.h.b16 %v167
    %v818 = vunpack.c.l.b16 %v168
    %v819 = vunpack.c.h.b16 %v168
    %v820 = vunpack.c.l.b16 %v169
    %v821 = vunpack.c.h.b16 %v169
    %v822 = vunpack.c.l.b16 %v170
    %v823 = vunpack.c.h.b16 %v170
    %v824 = vunpack.c.l.b16 %v171
    %v825 = vunpack.c.h.b16 %v171
    %v826 = vunpack.c.l.b16 %v172
    %v827 = vunpack.c.h.b16 %v172
    %v828 = vunpack.c.l.b16 %v173
    %v829 = vunpack.c.h.b16 %v173
    %v830 = vunpack.c.l.b16 %v174
    %v831 = vunpack.c.h.b16 %v174
    %v832 = vunpack.c.l.b16 %v175
    %v833 = vunpack.c.h.b16 %v175
    %v834 = vunpack.c.l.b16 %v176
    %v835 = vunpack.c.h.b16 %v176
    %v836 = vunpack.c.l.b16 %v177
    %v837 = vunpack.c.h.b16 %v177
    %v838 = vunpack.c.l.b16 %v178
    %v839 = vunpack.c.h.b16 %v178
    %v840 = vunpack.c.l.b16 %v179
    %v841 = vunpack.c.h.b16 %v179
    %v842 = vunpack.c.l.b16 %v180
    %v843 = vunpack.c.h.b16 %v180
    %v844 = vunpack.c.l.b16 %v181
    %v845 = vunpack.c.h.b16 %v181
    %v846 = vunpack.c.l.b16 %v182
    %v847 = vunpack.c.h.b16 %v182
    %v848 = vunpack.c.l.b16 %v183
    %v849 = vunpack.c.h.b16 %v183
    %v850 = vunpack.c.l.b16 %v184
    %v851 = vunpack.c.h.b16 %v184
    %v852 = vunpack.c.l.b16 %v185
    %v853 = vunpack.c.h.b16 %v185
    %v854 = vunpack.c.l.b16 %v186
    %v855 = vunpack.c.h.b16 %v186
    %v856 = vunpack.c.l.b16 %v187
    %v857 = vunpack.c.h.b16 %v187
    %v858 = vunpack.c.l.b16 %v188
    %v859 = vunpack.c.h.b16 %v188
    %v860 = vunpack.c.l.b16 %v189
    %v861 = vunpack.c.h.b16 %v189
    %v862 = vunpack.c.l.b16 %v190
    %v863 = vunpack.c.h.b16 %v190
    %v864 = vunpack.c.l.b16 %v191
    %v865 = vunpack.c.h.b16 %v191
    %v866 = vunpack.c.l.b16 %v192
    %v867 = vunpack.c.h.b16 %v192
    %v868 = vunpack.c.l.b16 %v193
    %v869 = vunpack.c.h.b16 %v193
    %v870 = vunpack.c.l.b16 %v194
    %v871 = vunpack.c.h.b16 %v194
    %v872 = vunpack.c.l.b16 %v195
    %v873 = vunpack.c.h.b16 %v195
    %v874 = vunpack.c.l.b16 %v196
    %v875 = vunpack.c.h.b16 %v196
    %v876 = vunpack.c.l.b16 %v197
    %v877 = vunpack.c.h.b16 %v197
    %v878 = vunpack.c.l.b16 %v198
    %v879 = vunpack.c.h.b16 %v198
    %v880 = vunpack.c.l.b16 %v199
    %v881 = vunpack.c.h.b16 %v199
    %v882 = vunpack.c.l.b16 %v200
    %v883 = vunpack.c.h.b16 %v200
    %v884 = vunpack.c.l.b16 %v201
    %v885 = vunpack.c.h.b16 %v201
    %v886 = vunpack.c.l.b16 %v202
    %v887 = vunpack.c.h.b16 %v202
    %v888 = vunpack.c.l.b16 %v203
    %v889 = vunpack.c.h.b16 %v203
    %v890 = vunpack.c.l.b16 %v204
    %v891 = vunpack.c.h.b16 %v204
    %v892 = vunpack.c.l.b16 %v205
    %v893 = vunpack.c.h.b16 %v205
    %v894 = vunpack.c.l.b16 %v206
    %v895 = vunpack.c.h.b16 %v206
    %v896 = vunpack.c.l.b16 %v207
    %v897 = vunpack.c.h.b16 %v207
    %v898 = vunpack.c.l.b16 %v208
    %v899 = vunpack.c.h.b16 %v208
    %v900 = vunpack.c.l.b16 %v209
    %v901 = vunpack.c.h.b16 %v209
    %v902 = vunpack.c.l.b16 %v210
    %v903 = vunpack.c.h.b16 %v210
    %v904 = vunpack.c.l.b16 %v211
    %v905 = vunpack.c.h.b16 %v211
    %v906 = vunpack.c.l.b16 %v212
    %v907 = vunpack.c.h.b16 %v212
    %v908 = vunpack.c.l.b16 %v213
    %v909 = vunpack.c.h.b16 %v213
    %v910 = vunpack.c.l.b16 %v214
    %v911 = vunpack.c.h.b16 %v214
    %v912 = vunpack.c.l.b16 %v215
    %v913 = vunpack.c.h.b16 %v215
    %v914 = vunpack.c.l.b16 %v216
    %v915 = vunpack.c.h.b16 %v216
    %v916 = vunpack.c.l.b16 %v217
    %v917 = vunpack.c.h.b16 %v217
    %v918 = vunpack.c.l.b16 %v218
    %v919 = vunpack.c.h.b16 %v218
    %v920 = vunpack.c.l.b16 %v219
    %v921 = vunpack.c.h.b16 %v219
    %v922 = vpack.c.b16 %v532, %v530
    %v923 = vpack.c.b16 %v533, %v531
    %v924 = vpack.c.b16 %v536, %v534
    %v925 = vpack.c.b16 %v537, %v535
    %v926 = vpack.c.b16 %v540, %v538
    %v927 = vpack.c.b16 %v541, %v539
    %v928 = vpack.c.b16 %v544, %v542
    %v929 = vpack.c.b16 %v545, %v543
    %v930 = vpack.c.b16 %v548, %v546
    %v931 = vpack.c.b16 %v549, %v547
    %v932 = vpack.c.b16 %v552, %v550
    %v933 = vpack.c.b16 %v553, %v551
    %v934 = vpack.c.b16 %v556, %v554
    %v935 = vpack.c.b16 %v557, %v555
    %v936 = vpack.c.b16 %v560, %v558
    %v937 = vpack.c.b16 %v561, %v559
    %v938 = vpack.c.b16 %v564, %v562
    %v939 = vpack.c.b16 %v565, %v563
    %v940 = vpack.c.b16 %v568, %v566
    %v941 = vpack.c.b16 %v569, %v567
    %v942 = vpack.c.b16 %v572, %v570
    %v943 = vpack.c.b16 %v573, %v571
    %v944 = vpack.c.b16 %v576, %v574
    %v945 = vpack.c.b16 %v577, %v575
    %v946 = vpack.c.b16 %v580, %v578
    %v947 = vpack.c.b16 %v581, %v579
    %v948 = vpack.c.b16 %v584, %v582
    %v949 = vpack.c.b16 %v585, %v583
    %v950 = vpack.c.b16 %v588, %v586
    %v951 = vpack.c.b16 %v589, %v587
    %v952 = vpack.c.b16 %v592, %v590
    %v953 = vpack.c.b16 %v593, %v591
    %v954 = vpack.c.b16 %v596, %v594
    %v955 = vpack.c.b16 %v597, %v595
    %v956 = vpack.c.b16 %v600, %v598
    %v957 = vpack.c.b16 %v601, %v599
    %v958 = vpack.c.b16 %v604, %v602
    %v959 = vpack.c.b16 %v605, %v603
    %v960 = vpack.c.b16 %v608, %v606
    %v961 = vpack.c.b16 %v609, %v607
    %v962 = vpack.c.b16 %v612, %v610
    %v963 = vpack.c.b16 %v613, %v611
    %v964 = vpack.c.b16 %v616, %v614
    %v965 = vpack.c.b16 %v617, %v615
    %v966 = vpack.c.b16 %v620, %v618
    %v967 = vpack.c.b16 %v621, %v619
    %v968 = vpack.c.b16 %v624, %v622
    %v969 = vpack.c.b16 %v625, %v623
    %v970 = vpack.c.b16 %v628, %v626
    %v971 = vpack.c.b16 %v629, %v627
    %v972 = vpack.c.b16 %v632, %v630
    %v973 = vpack.c.b16 %v633, %v631
    %v974 = vpack.c.b16 %v636, %v634
    %v975 = vpack.c.b16 %v637, %v635
    %v976 = vpack.c.b16 %v640, %v638
    %v977 = vpack.c.b16 %v641, %v639
    %v978 = vpack.c.b16 %v644, %v642
    %v979 = vpack.c.b16 %v645, %v643
    %v980 = vpack.c.b16 %v648, %v646
    %v981 = vpack.c.b16 %v649, %v647
    %v982 = vpack.c.b16 %v652, %v650
    %v983 = vpack.c.b16 %v653, %v651
    %v984 = vpack.c.b16 %v656, %v654
    %v985 = vpack.c.b16 %v657, %v655
    %v986 = vpack.c.b16 %v660, %v658
    %v987 = vpack.c.b16 %v661, %v659
    %v988 = vpack.c.b16 %v664, %v662
    %v989 = vpack.c.b16 %v665, %v663
    %v990 = vpack.c.b16 %v668, %v666
    %v991 = vpack.c.b16 %v669, %v667
    %v992 = vpack.c.b16 %v672, %v670
    %v993 = vpack.c.b16 %v673, %v671
    %v994 = vpack.c.b16 %v676, %v674
    %v995 = vpack.c.b16 %v677, %v675
    %v996 = vpack.c.b16 %v680, %v678
    %v997 = vpack.c.b16 %v681, %v679
    %v998 = vpack.c.b16 %v684, %v682
    %v999 = vpack.c.b16 %v685, %v683
    %v1000 = vpack.c.b16 %v688, %v686
    %v1001 = vpack.c.b16 %v689, %v687
    %v1002 = vpack.c.b16 %v692, %v690
    %v1003 = vpack.c.b16 %v693, %v691
    %v1004 = vpack.c.b16 %v696, %v694
    %v1005 = vpack.c.b16 %v697, %v695
    %v1006 = vpack.c.b16 %v700, %v698
    %v1007 = vpack.c.b16 %v701, %v699
    %v1008 = vpack.c.b16 %v704, %v702
    %v1009 = vpack.c.b16 %v705, %v703
    %v1010 = vpack.c.b16 %v708, %v706
    %v1011 = vpack.c.b16 %v709, %v707
    %v1012 = vpack.c.b16 %v712, %v710
    %v1013 = vpack.c.b16 %v713, %v711
    %v1014 = vpack.c.b16 %v716, %v714
    %v1015 = vpack.c.b16 %v717, %v715
    %v1016 = vpack.c.b16 %v720, %v718
    %v1017 = vpack.c.b16 %v721, %v719
    %v1018 = vpack.c.b16 %v724, %v722
    %v1019 = vpack.c.b16 %v725, %v723
    %v1020 = vpack.c.b16 %v728, %v726
    %v1021 = vpack.c.b16 %v729, %v727
    %v1022 = vpack.c.b16 %v732, %v730
    %v1023 = vpack.c.b16 %v733, %v731
    %v1024 = vpack.c.b16 %v736, %v734
    %v1025 = vpack.c.b16 %v737, %v735
    %v1026 = vpack.c.b16 %v740, %v738
    %v1027 = vpack.c.b16 %v741, %v739
    %v1028 = vpack.c.b16 %v744, %v742
    %v1029 = vpack.c.b16 %v745, %v743
    %v1030 = vpack.c.b16 %v748, %v746
    %v1031 = vpack.c.b16 %v749, %v747
    %v1032 = vpack.c.b16 %v752, %v750
    %v1033 = vpack.c.b16 %v753, %v751
    %v1034 = vpack.c.b16 %v756, %v754
    %v1035 = vpack.c.b16 %v757, %v755
    %v1036 = vpack.c.b16 %v760, %v758
    %v1037 = vpack.c.b16 %v761, %v759
    %v1038 = vpack.c.b16 %v764, %v762
    %v1039 = vpack.c.b16 %v765, %v763
    %v1040 = vpack.c.b16 %v768, %v766
    %v1041 = vpack.c.b16 %v769, %v767
    %v1042 = vpack.c.b16 %v772, %v770
    %v1043 = vpack.c.b16 %v773, %v771
    %v1044 = vpack.c.b16 %v776, %v774
    %v1045 = vpack.c.b16 %v777, %v775
    %v1046 = vpack.c.b16 %v780, %v778
    %v1047 = vpack.c.b16 %v781, %v779
    %v1048 = vpack.c.b16 %v784, %v782
    %v1049 = vpack.c.b16 %v785, %v783
    %v1050 = vpack.c.b16 %v788, %v786
    %v1051 = vpack.c.b16 %v789, %v787
    %v1052 = vpack.c.b16 %v792, %v790
    %v1053 = vpack.c.b16 %v793, %v791
    %v1054 = vpack.c.b16 %v796, %v794
    %v1055 = vpack.c.b16 %v797, %v795
    %v1056 = vpack.c.b16 %v800, %v798
    %v1057 = vpack.c.b16 %v801, %v799
    %v1058 = vpack.c.b16 %v804, %v802
    %v1059 = vpack.c.b16 %v805, %v803
    %v1060 = vpack.c.b16 %v808, %v806
    %v1061 = vpack.c.b16 %v809, %v807
    %v1062 = vpack.c.b16 %v812, %v810
    %v1063 = vpack.c.b16 %v813, %v811
    %v1064 = vpack.c.b16 %v816, %v814
    %v1065 = vpack.c.b16 %v817, %v815
    %v1066 = vpack.c.b16 %v820, %v818
    %v1067 = vpack.c.b16 %v821, %v819
    %v1068 = vpack.c.b16 %v824, %v822
    %v1069 = vpack.c.b16 %v825, %v823
    %v1070 = vpack.c.b16 %v828, %v826
    %v1071 = vpack.c.b16 %v829, %v827
    %v1072 = vpack.c.b16 %v832, %v830
    %v1073 = vpack.c.b16 %v833, %v831
    %v1074 = vpack.c.b16 %v836, %v834
    %v1075 = vpack.c.b16 %v837, %v835
    %v1076 = vpack.c.b16 %v840, %v838
    %v1077 = vpack.c.b16 %v841, %v839
    %v1078 = vpack.c.b16 %v844, %v842
    %v1079 = vpack.c.b16 %v845, %v843
    %v1080 = vpack.c.b16 %v848, %v846
    %v1081 = vpack.c.b16 %v849, %v847
    %v1082 = vpack.c.b16 %v852, %v850
    %v1083 = vpack.c.b16 %v853, %v851
    %v1084 = vpack.c.b16 %v856, %v854
    %v1085 = vpack.c.b16 %v857, %v855
    %v1086 = vpack.c.b16 %v860, %v858
    %v1087 = vpack.c.b16 %v861, %v859
    %v1088 = vpack.c.b16 %v864, %v862
    %v1089 = vpack.c.b16 %v865, %v863
    %v1090 = vpack.c.b16 %v868, %v866
    %v1091 = vpack.c.b16 %v869, %v867
    %v1092 = vpack.c.b16 %v872, %v870
    %v1093 = vpack.c.b16 %v873, %v871
    %v1094 = vpack.c.b16 %v876, %v874
    %v1095 = vpack.c.b16 %v877, %v875
    %v1096 = vpack.c.b16 %v880, %v878
    %v1097 = vpack.c.b16 %v881, %v879
    %v1098 = vpack.c.b16 %v884, %v882
    %v1099 = vpack.c.b16 %v885, %v883
    %v1100 = vpack.c.b16 %v888, %v886
    %v1101 = vpack.c.b16 %v889, %v887
    %v1102 = vpack.c.b16 %v892, %v890
    %v1103 = vpack.c.b16 %v893, %v891
    %v1104 = vpack.c.b16 %v896, %v894
    %v1105 = vpack.c.b16 %v897, %v895
    %v1106 = vpack.c.b16 %v900, %v898
    %v1107 = vpack.c.b16 %v901, %v899
    %v1108 = vpack.c.b16 %v904, %v902
    %v1109 = vpack.c.b16 %v905, %v903
    %v1110 = vpack.c.b16 %v908, %v906
    %v1111 = vpack.c.b16 %v909, %v907
    %v1112 = vpack.c.b16 %v912, %v910
    %v1113 = vpack.c.b16 %v913, %v911
    %v1114 = vpack.c.b16 %v916, %v914
    %v1115 = vpack.c.b16 %v917, %v915
    %v1116 = vpack.c.b16 %v920, %v918
    %v1117 = vpack.c.b16 %v921, %v919
    %vm1314 = vcmask 261120
    %v1316 = vsel %vm1314, %v312, 0
    %1318 = vmatprep.subr.bf16.mxu0 %v923
    %1319 = vmatpush1.bf16.msra.mxu0 %v922
    %1320 = vmatprep.subr.bf16.mxu0 %v925
    %1321 = vmatpush1.bf16.msra.mxu0 %v924
    %1322 = vmatprep.subr.bf16.mxu0 %v927
    %1323 = vmatpush1.bf16.msra.mxu0 %v926
    %1324 = vmatprep.subr.bf16.mxu0 %v929
    %1325 = vmatpush1.bf16.msra.mxu0 %v928
    %1326 = vmatprep.subr.bf16.mxu0 %v931
    %1327 = vmatpush1.bf16.msra.mxu0 %v930
    %1328 = vmatprep.subr.bf16.mxu0 %v933
    %1329 = vmatpush1.bf16.msra.mxu0 %v932
    %1330 = vmatprep.subr.bf16.mxu0 %v935
    %1331 = vmatpush1.bf16.msra.mxu0 %v934
    %1332 = vmatprep.subr.bf16.mxu0 %v937
    %1333 = vmatpush1.bf16.msra.mxu0 %v936
    %1334 = vmatprep.subr.bf16.mxu0 %v939
    %1335 = vmatpush1.bf16.msra.mxu0 %v938
    %1336 = vmatprep.subr.bf16.mxu0 %v941
    %1337 = vmatpush1.bf16.msra.mxu0 %v940
    %1338 = vmatprep.subr.bf16.mxu0 %v943
    %1339 = vmatpush1.bf16.msra.mxu0 %v942
    %1340 = vmatprep.subr.bf16.mxu0 %v945
    %1341 = vmatpush1.bf16.msra.mxu0 %v944
    %1342 = vmatprep.subr.bf16.mxu0 %v947
    %1343 = vmatpush1.bf16.msra.mxu0 %v946
    %1344 = vmatprep.subr.bf16.mxu0 %v949
    %1345 = vmatpush1.bf16.msra.mxu0 %v948
    %1346 = vmatprep.subr.bf16.mxu0 %v951
    %1347 = vmatpush1.bf16.msra.mxu0 %v950
    %1348 = vmatprep.subr.bf16.mxu0 %v953
    %1349 = vmatpush1.bf16.msra.mxu0 %v952
    %1350 = vmatprep.mubr.bf16.mxu0 %v271
    %1351 = vmatmul.mubr.bf16.gmra.mrb[0].mxu0 %v257
    %v1352 = vpop.f32.mrb[0].mxu0
    %v1353 = vadd.f32 %v225, %v1352
    %v1354 = vpop.f32.mrb[0].mxu0
    %v1355 = vadd.f32 %v229, %v1354
    %v1356 = vpop.f32.mrb[0].mxu0
    %v1357 = vpop.f32.mrb[0].mxu0
    %1358 = vdwg.mxu0
    %1359 = vmatprep.subr.bf16.mxu0 %v955
    %1360 = vmatpush1.bf16.msra.mxu0 %v954
    %1361 = vmatprep.subr.bf16.mxu0 %v957
    %1362 = vmatpush1.bf16.msra.mxu0 %v956
    %1363 = vmatprep.subr.bf16.mxu0 %v959
    %1364 = vmatpush1.bf16.msra.mxu0 %v958
    %1365 = vmatprep.subr.bf16.mxu0 %v961
    %1366 = vmatpush1.bf16.msra.mxu0 %v960
    %1367 = vmatprep.subr.bf16.mxu0 %v963
    %1368 = vmatpush1.bf16.msra.mxu0 %v962
    %1369 = vmatprep.subr.bf16.mxu0 %v965
    %1370 = vmatpush1.bf16.msra.mxu0 %v964
    %1371 = vmatprep.subr.bf16.mxu0 %v967
    %1372 = vmatpush1.bf16.msra.mxu0 %v966
    %1373 = vmatprep.subr.bf16.mxu0 %v969
    %1374 = vmatpush1.bf16.msra.mxu0 %v968
    %1375 = vmatprep.subr.bf16.mxu0 %v971
    %1376 = vmatpush1.bf16.msra.mxu0 %v970
    %1377 = vmatprep.subr.bf16.mxu0 %v973
    %1378 = vmatpush1.bf16.msra.mxu0 %v972
    %1379 = vmatprep.subr.bf16.mxu0 %v975
    %1380 = vmatpush1.bf16.msra.mxu0 %v974
    %1381 = vmatprep.subr.bf16.mxu0 %v977
    %1382 = vmatpush1.bf16.msra.mxu0 %v976
    %1383 = vmatprep.subr.bf16.mxu0 %v979
    %1384 = vmatpush1.bf16.msra.mxu0 %v978
    %1385 = vmatprep.subr.bf16.mxu0 %v981
    %1386 = vmatpush1.bf16.msra.mxu0 %v980
    %1387 = vmatprep.subr.bf16.mxu0 %v983
    %1388 = vmatpush1.bf16.msra.mxu0 %v982
    %1389 = vmatprep.subr.bf16.mxu0 %v985
    %1390 = vmatpush1.bf16.msra.mxu0 %v984
    %1391 = vmatprep.mubr.bf16.mxu0 %v281
    %1392 = vmatmul.mubr.bf16.gmra.mrb[0].mxu0 %v279
    %v1393 = vpop.f32.mrb[0].mxu0
    %v1394 = vadd.f32 %v1353, %v1393
    %v1395 = vpop.f32.mrb[0].mxu0
    %v1396 = vadd.f32 %v1355, %v1395
    %v1397 = vpop.f32.mrb[0].mxu0
    %v1398 = vpop.f32.mrb[0].mxu0
    %1399 = vdwg.mxu0
    %1400 = vmatprep.subr.bf16.mxu0 %v987
    %1401 = vmatpush1.bf16.msra.mxu0 %v986
    %1402 = vmatprep.subr.bf16.mxu0 %v989
    %1403 = vmatpush1.bf16.msra.mxu0 %v988
    %1404 = vmatprep.subr.bf16.mxu0 %v991
    %1405 = vmatpush1.bf16.msra.mxu0 %v990
    %1406 = vmatprep.subr.bf16.mxu0 %v993
    %1407 = vmatpush1.bf16.msra.mxu0 %v992
    %1408 = vmatprep.subr.bf16.mxu0 %v995
    %1409 = vmatpush1.bf16.msra.mxu0 %v994
    %1410 = vmatprep.subr.bf16.mxu0 %v997
    %1411 = vmatpush1.bf16.msra.mxu0 %v996
    %1412 = vmatprep.subr.bf16.mxu0 %v999
    %1413 = vmatpush1.bf16.msra.mxu0 %v998
    %1414 = vmatprep.subr.bf16.mxu0 %v1001
    %1415 = vmatpush1.bf16.msra.mxu0 %v1000
    %1416 = vmatprep.subr.bf16.mxu0 %v1003
    %1417 = vmatpush1.bf16.msra.mxu0 %v1002
    %1418 = vmatprep.subr.bf16.mxu0 %v1005
    %1419 = vmatpush1.bf16.msra.mxu0 %v1004
    %1420 = vmatprep.subr.bf16.mxu0 %v1007
    %1421 = vmatpush1.bf16.msra.mxu0 %v1006
    %1422 = vmatprep.subr.bf16.mxu0 %v1009
    %1423 = vmatpush1.bf16.msra.mxu0 %v1008
    %1424 = vmatprep.subr.bf16.mxu0 %v1011
    %1425 = vmatpush1.bf16.msra.mxu0 %v1010
    %1426 = vmatprep.subr.bf16.mxu0 %v1013
    %1427 = vmatpush1.bf16.msra.mxu0 %v1012
    %1428 = vmatprep.subr.bf16.mxu0 %v1015
    %1429 = vmatpush1.bf16.msra.mxu0 %v1014
    %1430 = vmatprep.subr.bf16.mxu0 %v1017
    %1431 = vmatpush1.bf16.msra.mxu0 %v1016
    %1432 = vmatprep.mubr.bf16.mxu0 %v278
    %1433 = vmatmul.mubr.bf16.gmra.mrb[0].mxu0 %v264
    %v1434 = vpop.f32.mrb[0].mxu0
    %v1435 = vadd.f32 %v1394, %v1434
    %v1436 = vpop.f32.mrb[0].mxu0
    %v1437 = vadd.f32 %v1396, %v1436
    %v1438 = vpop.f32.mrb[0].mxu0
    %v1439 = vpop.f32.mrb[0].mxu0
    %1440 = vdwg.mxu0
    %1441 = vmatprep.subr.bf16.mxu0 %v1019
    %1442 = vmatpush1.bf16.msra.mxu0 %v1018
    %1443 = vmatprep.subr.bf16.mxu0 %v1021
    %1444 = vmatpush1.bf16.msra.mxu0 %v1020
    %1445 = vmatprep.subr.bf16.mxu0 %v1023
    %1446 = vmatpush1.bf16.msra.mxu0 %v1022
    %1447 = vmatprep.subr.bf16.mxu0 %v1025
    %1448 = vmatpush1.bf16.msra.mxu0 %v1024
    %1449 = vmatprep.subr.bf16.mxu0 %v1027
    %1450 = vmatpush1.bf16.msra.mxu0 %v1026
    %1451 = vmatprep.subr.bf16.mxu0 %v1029
    %1452 = vmatpush1.bf16.msra.mxu0 %v1028
    %1453 = vmatprep.subr.bf16.mxu0 %v1031
    %1454 = vmatpush1.bf16.msra.mxu0 %v1030
    %1455 = vmatprep.subr.bf16.mxu0 %v1033
    %1456 = vmatpush1.bf16.msra.mxu0 %v1032
    %1457 = vmatprep.subr.bf16.mxu0 %v1035
    %1458 = vmatpush1.bf16.msra.mxu0 %v1034
    %1459 = vmatprep.subr.bf16.mxu0 %v1037
    %1460 = vmatpush1.bf16.msra.mxu0 %v1036
    %1461 = vmatprep.subr.bf16.mxu0 %v1039
    %1462 = vmatpush1.bf16.msra.mxu0 %v1038
    %1463 = vmatprep.subr.bf16.mxu0 %v1041
    %1464 = vmatpush1.bf16.msra.mxu0 %v1040
    %1465 = vmatprep.subr.bf16.mxu0 %v1043
    %1466 = vmatpush1.bf16.msra.mxu0 %v1042
    %1467 = vmatprep.subr.bf16.mxu0 %v1045
    %1468 = vmatpush1.bf16.msra.mxu0 %v1044
    %1469 = vmatprep.subr.bf16.mxu0 %v1047
    %1470 = vmatpush1.bf16.msra.mxu0 %v1046
    %1471 = vmatprep.subr.bf16.mxu0 %v1049
    %1472 = vmatpush1.bf16.msra.mxu0 %v1048
    %1473 = vmatprep.mubr.bf16.mxu0 %v282
    %1474 = vmatmul.mubr.bf16.gmra.mrb[0].mxu0 %v280
    %v1475 = vpop.f32.mrb[0].mxu0
    %v1476 = vadd.f32 %v1435, %v1475
    %v1477 = vpop.f32.mrb[0].mxu0
    %v1478 = vadd.f32 %v1437, %v1477
    %v1479 = vpop.f32.mrb[0].mxu0
    %v1480 = vpop.f32.mrb[0].mxu0
    %1481 = vdwg.mxu0
    %1482 = vmatprep.subr.bf16.mxu0 %v1051
    %1483 = vmatpush1.bf16.msra.mxu0 %v1050
    %1484 = vmatprep.subr.bf16.mxu0 %v1053
    %1485 = vmatpush1.bf16.msra.mxu0 %v1052
    %1486 = vmatprep.subr.bf16.mxu0 %v1055
    %1487 = vmatpush1.bf16.msra.mxu0 %v1054
    %1488 = vmatprep.subr.bf16.mxu0 %v1057
    %1489 = vmatpush1.bf16.msra.mxu0 %v1056
    %1490 = vmatprep.subr.bf16.mxu0 %v1059
    %1491 = vmatpush1.bf16.msra.mxu0 %v1058
    %1492 = vmatprep.subr.bf16.mxu0 %v1061
    %1493 = vmatpush1.bf16.msra.mxu0 %v1060
    %1494 = vmatprep.subr.bf16.mxu0 %v1063
    %1495 = vmatpush1.bf16.msra.mxu0 %v1062
    %1496 = vmatprep.subr.bf16.mxu0 %v1065
    %1497 = vmatpush1.bf16.msra.mxu0 %v1064
    %1498 = vmatprep.subr.bf16.mxu0 %v1067
    %1499 = vmatpush1.bf16.msra.mxu0 %v1066
    %1500 = vmatprep.subr.bf16.mxu0 %v1069
    %1501 = vmatpush1.bf16.msra.mxu0 %v1068
    %1502 = vmatprep.subr.bf16.mxu0 %v1071
    %1503 = vmatpush1.bf16.msra.mxu0 %v1070
    %1504 = vmatprep.subr.bf16.mxu0 %v1073
    %1505 = vmatpush1.bf16.msra.mxu0 %v1072
    %1506 = vmatprep.subr.bf16.mxu0 %v1075
    %1507 = vmatpush1.bf16.msra.mxu0 %v1074
    %1508 = vmatprep.subr.bf16.mxu0 %v1077
    %1509 = vmatpush1.bf16.msra.mxu0 %v1076
    %1510 = vmatprep.subr.bf16.mxu0 %v1079
    %1511 = vmatpush1.bf16.msra.mxu0 %v1078
    %1512 = vmatprep.subr.bf16.mxu0 %v1081
    %1513 = vmatpush1.bf16.msra.mxu0 %v1080
    %1514 = vmatprep.mubr.bf16.mxu0 %v319
    %1515 = vmatmul.mubr.bf16.gmra.mrb[0].mxu0 %v305
    %v1516 = vpop.f32.mrb[0].mxu0
    %v1517 = vadd.f32 %v1476, %v1516
    %v1518 = vpop.f32.mrb[0].mxu0
    %v1519 = vadd.f32 %v1478, %v1518
    %v1520 = vpop.f32.mrb[0].mxu0
    %v1521 = vpop.f32.mrb[0].mxu0
    %1522 = vdwg.mxu0
    %1523 = vmatprep.subr.bf16.mxu0 %v1083
    %1524 = vmatpush1.bf16.msra.mxu0 %v1082
    %1525 = vmatprep.subr.bf16.mxu0 %v1085
    %1526 = vmatpush1.bf16.msra.mxu0 %v1084
    %1527 = vmatprep.subr.bf16.mxu0 %v1087
    %1528 = vmatpush1.bf16.msra.mxu0 %v1086
    %1529 = vmatprep.subr.bf16.mxu0 %v1089
    %1530 = vmatpush1.bf16.msra.mxu0 %v1088
    %1531 = vmatprep.subr.bf16.mxu0 %v1091
    %1532 = vmatpush1.bf16.msra.mxu0 %v1090
    %1533 = vmatprep.subr.bf16.mxu0 %v1093
    %1534 = vmatpush1.bf16.msra.mxu0 %v1092
    %1535 = vmatprep.subr.bf16.mxu0 %v1095
    %1536 = vmatpush1.bf16.msra.mxu0 %v1094
    %1537 = vmatprep.subr.bf16.mxu0 %v1097
    %1538 = vmatpush1.bf16.msra.mxu0 %v1096
    %1539 = vmatprep.subr.bf16.mxu0 %v1099
    %1540 = vmatpush1.bf16.msra.mxu0 %v1098
    %1541 = vmatprep.subr.bf16.mxu0 %v1101
    %1542 = vmatpush1.bf16.msra.mxu0 %v1100
    %1543 = vmatprep.subr.bf16.mxu0 %v1103
    %1544 = vmatpush1.bf16.msra.mxu0 %v1102
    %1545 = vmatprep.subr.bf16.mxu0 %v1105
    %1546 = vmatpush1.bf16.msra.mxu0 %v1104
    %1547 = vmatprep.subr.bf16.mxu0 %v1107
    %1548 = vmatpush1.bf16.msra.mxu0 %v1106
    %1549 = vmatprep.subr.bf16.mxu0 %v1109
    %1550 = vmatpush1.bf16.msra.mxu0 %v1108
    %1551 = vmatprep.subr.bf16.mxu0 %v1111
    %1552 = vmatpush1.bf16.msra.mxu0 %v1110
    %1553 = vmatprep.subr.bf16.mxu0 %v1113
    %1554 = vmatpush1.bf16.msra.mxu0 %v1112
    %1555 = vmatprep.mubr.bf16.mxu0 %v321
    %1556 = vmatmul.mubr.bf16.gmra.mrb[0].mxu0 %v320
    %v1557 = vpop.f32.mrb[0].mxu0
    %v1558 = vadd.f32 %v1517, %v1557
    %v1559 = vpop.f32.mrb[0].mxu0
    %v1560 = vadd.f32 %v1519, %v1559
    %v1561 = vpop.f32.mrb[0].mxu0
    %v1562 = vpop.f32.mrb[0].mxu0
    %1563 = vdwg.mxu0
    %1564 = vmatprep.subr.bf16.mxu0 %v1115
    %1565 = vmatpush1.bf16.msra.mxu0 %v1114
    %1566 = vmatprep.subr.bf16.mxu0 %v1117
    %1567 = vmatpush1.bf16.msra.mxu0 %v1116
    %1568 = vmatprep.subr.bf16.mxu0 0
    %1569 = vmatpush1.bf16.msra.mxu0 0
    %1570 = vmatprep.subr.bf16.mxu0 0
    %1571 = vmatpush1.bf16.msra.mxu0 0
    %1572 = vmatprep.subr.bf16.mxu0 0
    %1573 = vmatpush1.bf16.msra.mxu0 0
    %1574 = vmatprep.subr.bf16.mxu0 0
    %1575 = vmatpush1.bf16.msra.mxu0 0
    %1576 = vmatprep.subr.bf16.mxu0 0
    %1577 = vmatpush1.bf16.msra.mxu0 0
    %1578 = vmatprep.subr.bf16.mxu0 0
    %1579 = vmatpush1.bf16.msra.mxu0 0
    %1580 = vmatprep.subr.bf16.mxu0 0
    %1581 = vmatpush1.bf16.msra.mxu0 0
    %1582 = vmatprep.subr.bf16.mxu0 0
    %1583 = vmatpush1.bf16.msra.mxu0 0
    %1584 = vmatprep.subr.bf16.mxu0 0
    %1585 = vmatpush1.bf16.msra.mxu0 0
    %1586 = vmatprep.subr.bf16.mxu0 0
    %1587 = vmatpush1.bf16.msra.mxu0 0
    %1588 = vmatprep.subr.bf16.mxu0 0
    %1589 = vmatpush1.bf16.msra.mxu0 0
    %1590 = vmatprep.subr.bf16.mxu0 0
    %1591 = vmatpush1.bf16.msra.mxu0 0
    %1592 = vmatprep.subr.bf16.mxu0 0
    %1593 = vmatpush1.bf16.msra.mxu0 0
    %1594 = vmatprep.subr.bf16.mxu0 0
    %1595 = vmatpush1.bf16.msra.mxu0 0
    %1596 = vmatprep.mubr.bf16.mxu0 0
    %1597 = vmatmul.mubr.bf16.gmra.mrb[0].mxu0 %v1316
    %v1598 = vpop.f32.mrb[0].mxu0
    %v1599 = vadd.f32 %v1558, %v1598
    %v1600 = vpop.f32.mrb[0].mxu0
    %v1601 = vadd.f32 %v1560, %v1600
    %v1602 = vpop.f32.mrb[0].mxu0
    %v1603 = vpop.f32.mrb[0].mxu0
    %1604 = vdwg.mxu0
    %v1605 = vmax.f32 %v1599, 0.0
    %v1606 = vmax.f32 %v1601, 0.0
    %v1607 = vpack.c.bf16 %v1605, %v1605
    %v1608 = vpack.c.bf16 %v1606, %v1606
    %v1609 = vld [vmem:[%s3] sm:$0xf]
    %v1610 = vld [vmem:[%s3 + $0x4] sm:$0xf]
    %v1611 = vld [vmem:[%s3 + $0x8] sm:$0xf]
    %v1612 = vld [vmem:[%s3 + $0xc] sm:$0xf]
    %v1613 = vld [vmem:[%s3 + $0x10] sm:$0xf]
    %v1614 = vld [vmem:[%s3 + $0x14] sm:$0xf]
    %v1615 = vld [vmem:[%s3 + $0x18] sm:$0xf]
    %v1616 = vld [vmem:[%s3 + $0x1c] sm:$0xf]
    %v1617 = vld [vmem:[%s3 + $0x20] sm:$0xf]
    %v1618 = vld [vmem:[%s3 + $0x24] sm:$0xf]
    %v1619 = vld [vmem:[%s3 + $0x28] sm:$0xf]
    %v1620 = vld [vmem:[%s3 + $0x2c] sm:$0xf]
    %v1621 = vld [vmem:[%s3 + $0x30] sm:$0xf]
    %v1622 = vld [vmem:[%s3 + $0x34] sm:$0xf]
    %v1623 = vld [vmem:[%s3 + $0x38] sm:$0xf]
    %v1624 = vld [vmem:[%s3 + $0x3c] sm:$0xf]
    %v1625 = vld [vmem:[%s3 + $0x40] sm:$0xf]
    %v1626 = vld [vmem:[%s3 + $0x44] sm:$0xf]
    %v1627 = vld [vmem:[%s3 + $0x48] sm:$0xf]
    %v1628 = vld [vmem:[%s3 + $0x4c] sm:$0xf]
    %v1629 = vld [vmem:[%s3 + $0x50] sm:$0xf]
    %v1630 = vld [vmem:[%s3 + $0x54] sm:$0xf]
    %v1631 = vld [vmem:[%s3 + $0x58] sm:$0xf]
    %v1632 = vld [vmem:[%s3 + $0x5c] sm:$0xf]
    %v1633 = vld [vmem:[%s3 + $0x60] sm:$0xf]
    %v1634 = vld [vmem:[%s3 + $0x64] sm:$0xf]
    %v1635 = vld [vmem:[%s3 + $0x68] sm:$0xf]
    %v1636 = vld [vmem:[%s3 + $0x6c] sm:$0xf]
    %v1637 = vld [vmem:[%s3 + $0x70] sm:$0xf]
    %v1638 = vld [vmem:[%s3 + $0x74] sm:$0xf]
    %v1639 = vld [vmem:[%s3 + $0x78] sm:$0xf]
    %v1640 = vld [vmem:[%s3 + $0x7c] sm:$0xf]
    %v1641 = vld [vmem:[%s4] sm:$0x1]
    %v1643 = vlaneseq
    %v1644 = vshrl.u32 %v1643, 7
    %v1645 = vsub.s32 0, %v1644
    %v1646 = vrot.slane %v1641, %v1645
    %v1680 = vunpack.c.l.b16 %v1609
    %v1681 = vunpack.c.l.b16 %v1610
    %v1682 = vunpack.c.l.b16 %v1611
    %v1683 = vunpack.c.l.b16 %v1612
    %v1684 = vunpack.c.l.b16 %v1613
    %v1685 = vunpack.c.l.b16 %v1614
    %v1686 = vunpack.c.l.b16 %v1615
    %v1687 = vunpack.c.l.b16 %v1616
    %v1688 = vunpack.c.l.b16 %v1617
    %v1689 = vunpack.c.l.b16 %v1618
    %v1690 = vunpack.c.l.b16 %v1619
    %v1691 = vunpack.c.l.b16 %v1620
    %v1692 = vunpack.c.l.b16 %v1621
    %v1693 = vunpack.c.l.b16 %v1622
    %v1694 = vunpack.c.l.b16 %v1623
    %v1695 = vunpack.c.l.b16 %v1624
    %v1696 = vunpack.c.l.b16 %v1625
    %v1697 = vunpack.c.l.b16 %v1626
    %v1698 = vunpack.c.l.b16 %v1627
    %v1699 = vunpack.c.l.b16 %v1628
    %v1700 = vunpack.c.l.b16 %v1629
    %v1701 = vunpack.c.l.b16 %v1630
    %v1702 = vunpack.c.l.b16 %v1631
    %v1703 = vunpack.c.l.b16 %v1632
    %v1704 = vunpack.c.l.b16 %v1633
    %v1705 = vunpack.c.l.b16 %v1634
    %v1706 = vunpack.c.l.b16 %v1635
    %v1707 = vunpack.c.l.b16 %v1636
    %v1708 = vunpack.c.l.b16 %v1637
    %v1709 = vunpack.c.l.b16 %v1638
    %v1710 = vunpack.c.l.b16 %v1639
    %v1711 = vunpack.c.l.b16 %v1640
    %v1712 = vpack.c.b16 %v1681, %v1680
    %v1713 = vpack.c.b16 %v1683, %v1682
    %v1714 = vpack.c.b16 %v1685, %v1684
    %v1715 = vpack.c.b16 %v1687, %v1686
    %v1716 = vpack.c.b16 %v1689, %v1688
    %v1717 = vpack.c.b16 %v1691, %v1690
    %v1718 = vpack.c.b16 %v1693, %v1692
    %v1719 = vpack.c.b16 %v1695, %v1694
    %v1720 = vpack.c.b16 %v1697, %v1696
    %v1721 = vpack.c.b16 %v1699, %v1698
    %v1722 = vpack.c.b16 %v1701, %v1700
    %v1723 = vpack.c.b16 %v1703, %v1702
    %v1724 = vpack.c.b16 %v1705, %v1704
    %v1725 = vpack.c.b16 %v1707, %v1706
    %v1726 = vpack.c.b16 %v1709, %v1708
    %v1727 = vpack.c.b16 %v1711, %v1710
    %1744 = vmatprep.subr.bf16.mxu0 0
    %1745 = vmatpush1.bf16.msra.mxu0 %v1712
    %1746 = vmatprep.subr.bf16.mxu0 0
    %1747 = vmatpush1.bf16.msra.mxu0 %v1713
    %1748 = vmatprep.subr.bf16.mxu0 0
    %1749 = vmatpush1.bf16.msra.mxu0 %v1714
    %1750 = vmatprep.subr.bf16.mxu0 0
    %1751 = vmatpush1.bf16.msra.mxu0 %v1715
    %1752 = vmatprep.subr.bf16.mxu0 0
    %1753 = vmatpush1.bf16.msra.mxu0 %v1716
    %1754 = vmatprep.subr.bf16.mxu0 0
    %1755 = vmatpush1.bf16.msra.mxu0 %v1717
    %1756 = vmatprep.subr.bf16.mxu0 0
    %1757 = vmatpush1.bf16.msra.mxu0 %v1718
    %1758 = vmatprep.subr.bf16.mxu0 0
    %1759 = vmatpush1.bf16.msra.mxu0 %v1719
    %1760 = vmatprep.subr.bf16.mxu0 0
    %1761 = vmatpush1.bf16.msra.mxu0 %v1720
    %1762 = vmatprep.subr.bf16.mxu0 0
    %1763 = vmatpush1.bf16.msra.mxu0 %v1721
    %1764 = vmatprep.subr.bf16.mxu0 0
    %1765 = vmatpush1.bf16.msra.mxu0 %v1722
    %1766 = vmatprep.subr.bf16.mxu0 0
    %1767 = vmatpush1.bf16.msra.mxu0 %v1723
    %1768 = vmatprep.subr.bf16.mxu0 0
    %1769 = vmatpush1.bf16.msra.mxu0 %v1724
    %1770 = vmatprep.subr.bf16.mxu0 0
    %1771 = vmatpush1.bf16.msra.mxu0 %v1725
    %1772 = vmatprep.subr.bf16.mxu0 0
    %1773 = vmatpush1.bf16.msra.mxu0 %v1726
    %1774 = vmatprep.subr.bf16.mxu0 0
    %1775 = vmatpush1.bf16.msra.mxu0 %v1727
    %1776 = vmatprep.mubr.bf16.mxu0 %v1608
    %1777 = vmatmul.mubr.bf16.gmra.mrb[0].mxu0 %v1607
    %v1778 = vpop.f32.mrb[0].mxu0
    %v1779 = vadd.f32 %v1646, %v1778
    %v1780 = vpop.f32.mrb[0].mxu0
    %v1781 = vpop.f32.mrb[0].mxu0
    %v1782 = vpop.f32.mrb[0].mxu0
    %1783 = vdwg.mxu0
    %1784 = vst [vmem:[#allocation2] sm:$0x3] %v1779
    // Predicated region
    $region22: #{cnn_forward.5} parent=1 // pred_check
      _
    $region23: #{cnn_forward.5} parent=1 // pred_check_branch
      %1786 = sbr.rel (0) target = $region25
    $region24: #{cnn_forward.5} parent=1 // pred_region
      %s1788 = ssub.s32 32, 32
      %1789 = vsyncadd [#allocation3], %s1788
      %s1791 = sshll.u32 [#allocation2], 4
      %s1792 = int_to_ptr.vmem [resolvable:$true] %s1791
      %1794 = dma.vmem_to_hbm [thread:$0]  %s1792, 32, %s5, [#allocation3]
    $region25: #{cnn_forward.5} parent=1 // pred_fallthru
      _
    // Predicated region
    $region26: #{cnn_forward.5} parent=1 // pred_check
      _
    $region27: #{cnn_forward.5} parent=1 // pred_check_branch
      %1796 = sbr.rel (0) target = $region29
    $region28: #{cnn_forward.5} parent=1 // pred_region
      %1797 = dma.done [#allocation3], 32
    $region29: #{cnn_forward.5} parent=1 // pred_fallthru
      _
    %1798 = vsyncpa [#allocation3], 1

// kernel: cnn_forward.4
$region0: #{cnn_forward.4}
  #allocation0 [shape = 'u32[]', space=smem, size = 0x4, offset = 0x4, fixed_abs, tag = 'smem constant byte address 0x4 - core index']
  #allocation1 [shape = 'u32[144,128]{1,0:T(1,128)}', space=vmem, size = 0x12000, scoped, tag = 'internal scratch']
  %s0 = inlined_call_operand.vmem [shape: bf16[2,18,288], index: 0, kind: input, shape index: {}]
  %s1 = inlined_call_operand.hbm [shape: bf16[6,7,18], index: 1, kind: input, shape index: {}]
  %s2 = inlined_call_operand.hbm [shape: bf16[10,288,224], index: 2, kind: input, shape index: {}]
  %s3 = inlined_call_operand.hbm [shape: f32[1,224], index: 3, kind: input, shape index: {}]
  %s4 = inlined_call_operand.vmem [shape: bf16[2,7,224], index: 4, kind: output, shape index: {}]
  %s5 = sld [smem:[#allocation0]]
  $region61: #{cnn_forward.4} parent=0
    _
  %s7 = ssub.s32 1, %s5
  %s8 = scalar_select 0, %s7, %s5
  $region1: #{cnn_forward.4} parent=0
    #allocation2 [shape = 'u8[12288]{0}', space=vmem, size = 0x3000, scoped, tag = 'input window, operand 1, single buffered']
    #allocation3 [shape = 's32[2]{0}', space=sflag, size = 0x8, scoped, tag = 'scoped memory for cnn_forward.4']
    #allocation4 [shape = 'u8[1474560]{0}', space=vmem, size = 0x168000, scoped, tag = 'input window, operand 2, single buffered']
    #allocation5 [shape = 's32[1]{0}', space=sflag, size = 0x4, scoped, tag = 'scoped memory for cnn_forward.4']
    #allocation6 [shape = 'u8[1024]{0}', space=vmem, size = 0x400, scoped, tag = 'input window, operand 3, single buffered']
    %9 = vsyncpa [#allocation3], 0
    %10 = vsyncpa [#allocation5], 0
    loop: start=0, step=1, limit=4
    $region2: #{cnn_forward.4} parent=1 // loop_pre_header
      _
    $region3: #{cnn_forward.4} parent=1 // loop_header
      %s12 = sphi 0, %s16
      %p13 = scmp.ge.s32.totalorder %s12, 4
      %s22 = sphi 0, %s24
      %s25 = sphi 0, %s22
      %s26 = sphi 0, %s25
      %s42 = sphi 0, %s26
      %s46 = sphi 0, %s46
      %s48 = sphi 0, %s46
      %s49 = sphi 0, %s48
      %s63 = sphi 0, %s49
      %s67 = sphi 0, %s67
      %s69 = sphi 0, %s67
      %s70 = sphi 0, %s69
      %s84 = sphi 0, %s70
      %s88 = sphi 0, %s88
      %s90 = sphi 0, %s88
      %s91 = sphi 0, %s90
      %s105 = sphi 0, %s91
      %s111 = sphi 0, %s113
      %s114 = sphi 0, %s111
      %s115 = sphi 0, %s114
      %s131 = sphi 0, %s115
    $region4: #{cnn_forward.4} parent=1 // loop_header_branch
      %15 = sbr.rel (%p13) target = $region8
    $region5: #{cnn_forward.4} parent=1 // loop_body
      %s17 = ssub.s32 %s12, 1
      %s18 = ssub.s32 %s12, 2
      %s19 = sadd.s32 %s12, 1
      %s20 = ssub.s32 %s12, %s19
      %p21 = scmp.eq.s32.totalorder %s20, 0
      %s23 = sadd.s32 %s22, 1
      %s24 = scalar_select %p21, %s22, %s23
      %p27 = pneg %p21
      %p28 = scmp.eq.s32.totalorder %s12, 1
      %p29 = por %p27, %p28
      %p30 = scmp.ne.s32.totalorder %s22, %s25
      %p31 = scmp.eq.s32.totalorder %s12, 0
      %p32 = por %p30, %p31
      %p33 = scmp.ne.s32.totalorder %s22, %s25
      %p34 = scmp.eq.s32.totalorder %s17, 1
      %p35 = por %p33, %p34
      %p36 = scmp.ne.s32.totalorder %s25, %s26
      %p37 = scmp.eq.s32.totalorder %s17, 0
      %p38 = por %p36, %p37
      %p39 = scmp.ne.s32.totalorder %s25, %s26
      %p40 = scmp.eq.s32.totalorder %s18, 1
      %p41 = por %p39, %p40
      %p43 = scmp.ne.s32.totalorder %s26, %s42
      %p44 = scmp.eq.s32.totalorder %s18, 0
      %p45 = por %p43, %p44
      %s47 = sadd.s32 %s46, 1
      %p50 = scmp.eq.s32.totalorder %s12, 1
      %p51 = scmp.ne.s32.totalorder %s46, %s48
      %p52 = scmp.eq.s32.totalorder %s12, 0
      %p53 = por %p51, %p52
      %p54 = scmp.ne.s32.totalorder %s46, %s48
      %p55 = scmp.eq.s32.totalorder %s17, 1
      %p56 = por %p54, %p55
      %p57 = scmp.ne.s32.totalorder %s48, %s49
      %p58 = scmp.eq.s32.totalorder %s17, 0
      %p59 = por %p57, %p58
      %p60 = scmp.ne.s32.totalorder %s48, %s49
      %p61 = scmp.eq.s32.totalorder %s18, 1
      %p62 = por %p60, %p61
      %p64 = scmp.ne.s32.totalorder %s49, %s63
      %p65 = scmp.eq.s32.totalorder %s18, 0
      %p66 = por %p64, %p65
      %s68 = sadd.s32 %s67, 1
      %p71 = scmp.eq.s32.totalorder %s12, 1
      %p72 = scmp.ne.s32.totalorder %s67, %s69
      %p73 = scmp.eq.s32.totalorder %s12, 0
      %p74 = por %p72, %p73
      %p75 = scmp.ne.s32.totalorder %s67, %s69
      %p76 = scmp.eq.s32.totalorder %s17, 1
      %p77 = por %p75, %p76
      %p78 = scmp.ne.s32.totalorder %s69, %s70
      %p79 = scmp.eq.s32.totalorder %s17, 0
      %p80 = por %p78, %p79
      %p81 = scmp.ne.s32.totalorder %s69, %s70
      %p82 = scmp.eq.s32.totalorder %s18, 1
      %p83 = por %p81, %p82
      %p85 = scmp.ne.s32.totalorder %s70, %s84
      %p86 = scmp.eq.s32.totalorder %s18, 0
      %p87 = por %p85, %p86
      %s89 = sadd.s32 %s88, 1
      %p92 = scmp.eq.s32.totalorder %s12, 1
      %p93 = scmp.ne.s32.totalorder %s88, %s90
      %p94 = scmp.eq.s32.totalorder %s12, 0
      %p95 = por %p93, %p94
      %p96 = scmp.ne.s32.totalorder %s88, %s90
      %p97 = scmp.eq.s32.totalorder %s17, 1
      %p98 = por %p96, %p97
      %p99 = scmp.ne.s32.totalorder %s90, %s91
      %p100 = scmp.eq.s32.totalorder %s17, 0
      %p101 = por %p99, %p100
      %p102 = scmp.ne.s32.totalorder %s90, %s91
      %p103 = scmp.eq.s32.totalorder %s18, 1
      %p104 = por %p102, %p103
      %p106 = scmp.ne.s32.totalorder %s91, %s105
      %p107 = scmp.eq.s32.totalorder %s18, 0
      %p108 = por %p106, %p107
      %s109 = ssub.s32 %s12, %s19
      %p110 = scmp.eq.s32.totalorder %s109, 0
      %s112 = sadd.s32 %s111, 1
      %s113 = scalar_select %p110, %s111, %s112
      %p116 = pneg %p110
      %p117 = scmp.eq.s32.totalorder %s12, 1
      %p118 = por %p116, %p117
      %p119 = scmp.ne.s32.totalorder %s111, %s114
      %p120 = scmp.eq.s32.totalorder %s12, 0
      %p121 = por %p119, %p120
      %p122 = scmp.ne.s32.totalorder %s111, %s114
      %p123 = scmp.eq.s32.totalorder %s17, 1
      %p124 = por %p122, %p123
      %p125 = scmp.ne.s32.totalorder %s114, %s115
      %p126 = scmp.eq.s32.totalorder %s17, 0
      %p127 = por %p125, %p126
      %p128 = scmp.ne.s32.totalorder %s114, %s115
      %p129 = scmp.eq.s32.totalorder %s18, 1
      %p130 = por %p128, %p129
      %p132 = scmp.ne.s32.totalorder %s115, %s131
      %p133 = scmp.eq.s32.totalorder %s18, 0
      %p134 = por %p132, %p133
      %p135 = scmp.le.s32.totalorder 1, %s12
      %p136 = scmp.lt.s32.totalorder %s12, 3
      %p137 = pnand %p135, %p136
      %p138 = pneg %p137
      // Predicated region
      $region9: #{cnn_forward.4} parent=5 // pred_check
        _
      $region10: #{cnn_forward.4} parent=5 // pred_check_branch
        %140 = sbr.rel (%p137) target = $region12
      $region11: #{cnn_forward.4} parent=5 // pred_region
        %s141 = ssub.s32 %s12, 1
        // Predicated region
        $region13: #{cnn_forward.4} parent=11 // pred_check
          %p142 = pneg %p59
        $region14: #{cnn_forward.4} parent=11 // pred_check_branch
          %144 = sbr.rel (%p142) target = $region16
        $region15: #{cnn_forward.4} parent=11 // pred_region
          %s146 = ssub.s32 384, 384
          %147 = vsyncadd [#allocation3], %s146
          %s148 = sshll.u32 [#allocation2], 4
          %s149 = int_to_ptr.vmem [resolvable:$true] %s148
          %154 = dma.hbm_to_vmem [thread:$0]  %s1, 384, %s149, [#allocation3], 64, 64, 4
        $region16: #{cnn_forward.4} parent=11 // pred_fallthru
          _
        // Predicated region
        $region17: #{cnn_forward.4} parent=11 // pred_check
          %p155 = pneg %p80
        $region18: #{cnn_forward.4} parent=11 // pred_check_branch
          %157 = sbr.rel (%p155) target = $region20
        $region19: #{cnn_forward.4} parent=11 // pred_region
          %s159 = ssub.s32 46080, 46080
          %160 = vsyncadd [#allocation5], %s159
          %s161 = sshll.u32 [#allocation4], 4
          %s162 = int_to_ptr.vmem [resolvable:$true] %s161
          %167 = dma.hbm_to_vmem [thread:$0]  %s2, 46080, %s162, [#allocation5], 128, 128, 8
        $region20: #{cnn_forward.4} parent=11 // pred_fallthru
          _
        // Predicated region
        $region21: #{cnn_forward.4} parent=11 // pred_check
          %p168 = pneg %p101
        $region22: #{cnn_forward.4} parent=11 // pred_check_branch
          %170 = sbr.rel (%p168) target = $region24
        $region23: #{cnn_forward.4} parent=11 // pred_region
          %s172 = ssub.s32 32, 32
          %173 = vsyncadd [#allocation5], %s172
          %s175 = sshll.u32 [#allocation6], 4
          %s176 = int_to_ptr.vmem [resolvable:$true] %s175
          %178 = dma.hbm_to_vmem [thread:$0]  %s3, 32, %s176, [#allocation5]
        $region24: #{cnn_forward.4} parent=11 // pred_fallthru
          _
      $region12: #{cnn_forward.4} parent=5 // pred_fallthru
        _
      %p179 = scmp.lt.s32.totalorder %s12, 2
      // Predicated region
      $region25: #{cnn_forward.4} parent=5 // pred_check
        %p180 = pneg %p179
      $region26: #{cnn_forward.4} parent=5 // pred_check_branch
        %182 = sbr.rel (%p180) target = $region28
      $region27: #{cnn_forward.4} parent=5 // pred_region
        // Predicated region
        $region29: #{cnn_forward.4} parent=27 // pred_check
          %p183 = pneg %p32
        $region30: #{cnn_forward.4} parent=27 // pred_check_branch
          %185 = sbr.rel (%p183) target = $region32
        $region31: #{cnn_forward.4} parent=27 // pred_region
          %p186 = scmp.lt.s32.totalorder %s12, 1
          %s187 = scalar_select %p186, %s12, 1
          %s188 = smul.addr %s187, 9
          %s189 = smul.addr %s188, 4
          %s190 = scalar_lea.vmem %s0, %s189
        $region32: #{cnn_forward.4} parent=27 // pred_fallthru
          _
      $region28: #{cnn_forward.4} parent=5 // pred_fallthru
        _
      %p191 = scmp.le.s32.totalorder 1, %s12
      %p192 = scmp.lt.s32.totalorder %s12, 3
      %p193 = pnand %p191, %p192
      %p194 = pneg %p193
      // Predicated region
      $region33: #{cnn_forward.4} parent=5 // pred_check
        _
      $region34: #{cnn_forward.4} parent=5 // pred_check_branch
        %196 = sbr.rel (%p193) target = $region36
      $region35: #{cnn_forward.4} parent=5 // pred_region
        %s197 = ssub.s32 %s12, 1
        // Predicated region
        $region37: #{cnn_forward.4} parent=35 // pred_check
          %p198 = pneg %p59
        $region38: #{cnn_forward.4} parent=35 // pred_check_branch
          %200 = sbr.rel (%p198) target = $region40
        $region39: #{cnn_forward.4} parent=35 // pred_region
          %201 = dma.done [#allocation3], 384
        $region40: #{cnn_forward.4} parent=35 // pred_fallthru
          _
        // Predicated region
        $region41: #{cnn_forward.4} parent=35 // pred_check
          %p202 = pneg %p80
        $region42: #{cnn_forward.4} parent=35 // pred_check_branch
          %204 = sbr.rel (%p202) target = $region44
        $region43: #{cnn_forward.4} parent=35 // pred_region
          %205 = dma.done [#allocation5], 46080
        $region44: #{cnn_forward.4} parent=35 // pred_fallthru
          _
        // Predicated region
        $region45: #{cnn_forward.4} parent=35 // pred_check
          %p206 = pneg %p101
        $region46: #{cnn_forward.4} parent=35 // pred_check_branch
          %208 = sbr.rel (%p206) target = $region48
        $region47: #{cnn_forward.4} parent=35 // pred_region
          %209 = dma.done [#allocation5], 32
        $region48: #{cnn_forward.4} parent=35 // pred_fallthru
          _
        %p210 = scmp.lt.s32.totalorder %s17, 1
        %s211 = scalar_select %p210, %s17, 1
        %s212 = smul.addr %s211, 9
        %s213 = smul.addr %s212, 4
        %s214 = scalar_lea.vmem %s0, %s213
        %p215 = pneg %p38
        %p216 = pneg %p35
        %p217 = pneg %p59
        %p218 = pneg %p56
        %p219 = pneg %p80
        %p220 = pneg %p77
        %p221 = pneg %p101
        %p222 = pneg %p98
        %p223 = pneg %p127
        %p224 = pneg %p124
        %p225 = scmp.lt.s32.totalorder %s17, 1
        %s226 = scalar_select %p225, %s17, 1
        %s227 = smul.addr %s226, 2
        %s228 = smul.addr %s227, 4
        %s229 = scalar_lea.vmem %s4, %s228
        %p230 = scmp.lt.s32.totalorder %s17, 1
        %s231 = scalar_select %p230, %s17, 1
        %s232 = smul.addr %s231, 9
        %s233 = smul.addr %s232, 4
        %s234 = scalar_lea.vmem %s0, %s233
        %p235 = scmp.lt.s32.totalorder %s17, 1
        %s236 = scalar_select %p235, %s17, 1
        %s237 = smul.addr %s236, 2
        %s238 = smul.addr %s237, 4
        %s239 = scalar_lea.vmem %s4, %s238
        %v241 = vld [vmem:[#allocation6] sm:$0x3]
        %v242 = vld [vmem:[%s234] sm:$0xff]
        %v243 = vld [vmem:[%s234 + $0x8] sm:$0xf]
        %v244 = vld [vmem:[%s234 + $0xc] sm:$0xff]
        %v245 = vld [vmem:[%s234 + $0x14] sm:$0xf]
        %v246 = vld [vmem:[%s234 + $0x18] sm:$0x11]
        %v247 = vld [vmem:[%s234 + $0x20] sm:$0x1]
        %v248 = vld [vmem:[#allocation2] sm:$0xf]
        %v255 = vunpack.c.l.b16 %v242
        %v256 = vunpack.c.h.b16 %v242
        %v257 = vunpack.c.l.b16 %v243
        %v258 = vunpack.c.l.b16 %v244
        %v259 = vunpack.c.h.b16 %v244
        %v260 = vunpack.c.l.b16 %v245
        %v261 = vunpack.c.l.b16 %v246
        %v262 = vunpack.c.h.b16 %v246
        %v263 = vunpack.c.l.b16 %v247
        %v264 = vpack.c.b16 %v258, %v255
        %v265 = vpack.c.b16 %v259, %v256
        %v266 = vpack.c.b16 %v260, %v257
        %v267 = vpack.c.b16 %v261, %v261
        %v268 = vpack.c.b16 %v262, %v262
        %v269 = vpack.c.b16 %v263, %v263
        %vm273 = vcmask 146432
        %v275 = vsel %vm273, %v248, 0
        %vm277 = vcmask 1040384
        %v279 = vsel %vm277, %v267, 0
        %v282 = vsel %vm277, %v268, 0
        %v285 = vsel %vm277, %v269, 0
        %287 = vmatprep.subr.bf16.mxu0 %v265
        %288 = vmatpush1.bf16.msra.mxu0 %v264
        %289 = vmatprep.subr.bf16.mxu0 %v282
        %290 = vmatpush1.bf16.msra.mxu0 %v279
        %291 = vmatprep.subr.bf16.mxu0 0
        %292 = vmatpush1.bf16.msra.mxu0 0
        %293 = vmatprep.subr.bf16.mxu0 0
        %294 = vmatpush1.bf16.msra.mxu0 0
        %295 = vmatprep.subr.bf16.mxu0 0
        %296 = vmatpush1.bf16.msra.mxu0 0
        %297 = vmatprep.subr.bf16.mxu0 0
        %298 = vmatpush1.bf16.msra.mxu0 0
        %299 = vmatprep.subr.bf16.mxu0 0
        %300 = vmatpush1.bf16.msra.mxu0 0
        %301 = vmatprep.subr.bf16.mxu0 0
        %302 = vmatpush1.bf16.msra.mxu0 0
        %303 = vmatprep.subr.bf16.mxu0 0
        %304 = vmatpush1.bf16.msra.mxu0 0
        %305 = vmatprep.subr.bf16.mxu0 0
        %306 = vmatpush1.bf16.msra.mxu0 0
        %307 = vmatprep.subr.bf16.mxu0 0
        %308 = vmatpush1.bf16.msra.mxu0 0
        %309 = vmatprep.subr.bf16.mxu0 0
        %310 = vmatpush1.bf16.msra.mxu0 0
        %311 = vmatprep.subr.bf16.mxu0 0
        %312 = vmatpush1.bf16.msra.mxu0 0
        %313 = vmatprep.subr.bf16.mxu0 0
        %314 = vmatpush1.bf16.msra.mxu0 0
        %315 = vmatprep.subr.bf16.mxu0 0
        %316 = vmatpush1.bf16.msra.mxu0 0
        %317 = vmatprep.subr.bf16.mxu0 0
        %318 = vmatpush1.bf16.msra.mxu0 0
        %319 = vmatprep.mubr.bf16.mxu0 0
        %320 = vmatmul.mubr.bf16.gmra.mrb[0].mxu0 %v275
        %v321 = vpop.f32.mrb[0].mxu0
        %v322 = vadd.f32 0.0, %v321
        %v323 = vpop.f32.mrb[0].mxu0
        %v324 = vadd.f32 0.0, %v323
        %v325 = vpop.f32.mrb[0].mxu0
        %v326 = vpop.f32.mrb[0].mxu0
        %327 = vdwg.mxu0
        %328 = vmatprep.subr.bf16.mxu0 0
        %329 = vmatpush1.bf16.msra.mxu0 %v266
        %330 = vmatprep.subr.bf16.mxu0 0
        %331 = vmatpush1.bf16.msra.mxu0 %v285
        %332 = vmatprep.subr.bf16.mxu0 0
        %333 = vmatpush1.bf16.msra.mxu0 0
        %334 = vmatprep.subr.bf16.mxu0 0
        %335 = vmatpush1.bf16.msra.mxu0 0
        %336 = vmatprep.subr.bf16.mxu0 0
        %337 = vmatpush1.bf16.msra.mxu0 0
        %338 = vmatprep.subr.bf16.mxu0 0
        %339 = vmatpush1.bf16.msra.mxu0 0
        %340 = vmatprep.subr.bf16.mxu0 0
        %341 = vmatpush1.bf16.msra.mxu0 0
        %342 = vmatprep.subr.bf16.mxu0 0
        %343 = vmatpush1.bf16.msra.mxu0 0
        %344 = vmatprep.subr.bf16.mxu0 0
        %345 = vmatpush1.bf16.msra.mxu0 0
        %346 = vmatprep.subr.bf16.mxu0 0
        %347 = vmatpush1.bf16.msra.mxu0 0
        %348 = vmatprep.subr.bf16.mxu0 0
        %349 = vmatpush1.bf16.msra.mxu0 0
        %350 = vmatprep.subr.bf16.mxu0 0
        %351 = vmatpush1.bf16.msra.mxu0 0
        %352 = vmatprep.subr.bf16.mxu0 0
        %353 = vmatpush1.bf16.msra.mxu0 0
        %354 = vmatprep.subr.bf16.mxu0 0
        %355 = vmatpush1.bf16.msra.mxu0 0
        %356 = vmatprep.subr.bf16.mxu0 0
        %357 = vmatpush1.bf16.msra.mxu0 0
        %358 = vmatprep.subr.bf16.mxu0 0
        %359 = vmatpush1.bf16.msra.mxu0 0
        %360 = vmatprep.mubr.bf16.mxu0 0
        %361 = vmatmul.mubr.bf16.gmra.mrb[0].mxu0 %v275
        %v362 = vpop.f32.mrb[0].mxu0
        %v363 = vadd.f32 0.0, %v362
        %v364 = vpop.f32.mrb[0].mxu0
        %v365 = vpop.f32.mrb[0].mxu0
        %v366 = vpop.f32.mrb[0].mxu0
        %367 = vdwg.mxu0
        %v368 = vpack.c.bf16 %v322, %v322
        %v369 = vpack.c.bf16 %v324, %v324
        %v370 = vpack.c.bf16 %v363, %v363
        %s371 = scalar_lea.vmem [#allocation2], 4
        %v372 = vld [vmem:[%s371] sm:$0xf]
        %v374 = vsel %vm273, %v372, 0
        %376 = vmatprep.subr.bf16.mxu0 %v265
        %377 = vmatpush1.bf16.msra.mxu0 %v264
        %378 = vmatprep.subr.bf16.mxu0 %v282
        %379 = vmatpush1.bf16.msra.mxu0 %v279
        %380 = vmatprep.subr.bf16.mxu0 0
        %381 = vmatpush1.bf16.msra.mxu0 0
        %382 = vmatprep.subr.bf16.mxu0 0
        %383 = vmatpush1.bf16.msra.mxu0 0
        %384 = vmatprep.subr.bf16.mxu0 0
        %385 = vmatpush1.bf16.msra.mxu0 0
        %386 = vmatprep.subr.bf16.mxu0 0
        %387 = vmatpush1.bf16.msra.mxu0 0
        %388 = vmatprep.subr.bf16.mxu0 0
        %389 = vmatpush1.bf16.msra.mxu0 0
        %390 = vmatprep.subr.bf16.mxu0 0
        %391 = vmatpush1.bf16.msra.mxu0 0
        %392 = vmatprep.subr.bf16.mxu0 0
        %393 = vmatpush1.bf16.msra.mxu0 0
        %394 = vmatprep.subr.bf16.mxu0 0
        %395 = vmatpush1.bf16.msra.mxu0 0
        %396 = vmatprep.subr.bf16.mxu0 0
        %397 = vmatpush1.bf16.msra.mxu0 0
        %398 = vmatprep.subr.bf16.mxu0 0
        %399 = vmatpush1.bf16.msra.mxu0 0
        %400 = vmatprep.subr.bf16.mxu0 0
        %401 = vmatpush1.bf16.msra.mxu0 0
        %402 = vmatprep.subr.bf16.mxu0 0
        %403 = vmatpush1.bf16.msra.mxu0 0
        %404 = vmatprep.subr.bf16.mxu0 0
        %405 = vmatpush1.bf16.msra.mxu0 0
        %406 = vmatprep.subr.bf16.mxu0 0
        %407 = vmatpush1.bf16.msra.mxu0 0
        %408 = vmatprep.mubr.bf16.mxu0 0
        %409 = vmatmul.mubr.bf16.gmra.mrb[0].mxu0 %v374
        %v410 = vpop.f32.mrb[0].mxu0
        %v411 = vadd.f32 0.0, %v410
        %v412 = vpop.f32.mrb[0].mxu0
        %v413 = vadd.f32 0.0, %v412
        %v414 = vpop.f32.mrb[0].mxu0
        %v415 = vpop.f32.mrb[0].mxu0
        %416 = vdwg.mxu0
        %417 = vmatprep.subr.bf16.mxu0 0
        %418 = vmatpush1.bf16.msra.mxu0 %v266
        %419 = vmatprep.subr.bf16.mxu0 0
        %420 = vmatpush1.bf16.msra.mxu0 %v285
        %421 = vmatprep.subr.bf16.mxu0 0
        %422 = vmatpush1.bf16.msra.mxu0 0
        %423 = vmatprep.subr.bf16.mxu0 0
        %424 = vmatpush1.bf16.msra.mxu0 0
        %425 = vmatprep.subr.bf16.mxu0 0
        %426 = vmatpush1.bf16.msra.mxu0 0
        %427 = vmatprep.subr.bf16.mxu0 0
        %428 = vmatpush1.bf16.msra.mxu0 0
        %429 = vmatprep.subr.bf16.mxu0 0
        %430 = vmatpush1.bf16.msra.mxu0 0
        %431 = vmatprep.subr.bf16.mxu0 0
        %432 = vmatpush1.bf16.msra.mxu0 0
        %433 = vmatprep.subr.bf16.mxu0 0
        %434 = vmatpush1.bf16.msra.mxu0 0
        %435 = vmatprep.subr.bf16.mxu0 0
        %436 = vmatpush1.bf16.msra.mxu0 0
        %437 = vmatprep.subr.bf16.mxu0 0
        %438 = vmatpush1.bf16.msra.mxu0 0
        %439 = vmatprep.subr.bf16.mxu0 0
        %440 = vmatpush1.bf16.msra.mxu0 0
        %441 = vmatprep.subr.bf16.mxu0 0
        %442 = vmatpush1.bf16.msra.mxu0 0
        %443 = vmatprep.subr.bf16.mxu0 0
        %444 = vmatpush1.bf16.msra.mxu0 0
        %445 = vmatprep.subr.bf16.mxu0 0
        %446 = vmatpush1.bf16.msra.mxu0 0
        %447 = vmatprep.subr.bf16.mxu0 0
        %448 = vmatpush1.bf16.msra.mxu0 0
        %449 = vmatprep.mubr.bf16.mxu0 0
        %450 = vmatmul.mubr.bf16.gmra.mrb[0].mxu0 %v374
        %v451 = vpop.f32.mrb[0].mxu0
        %v452 = vadd.f32 0.0, %v451
        %v453 = vpop.f32.mrb[0].mxu0
        %v454 = vpop.f32.mrb[0].mxu0
        %v455 = vpop.f32.mrb[0].mxu0
        %456 = vdwg.mxu0
        %v457 = vpack.c.bf16 %v411, %v411
        %v458 = vpack.c.bf16 %v413, %v413
        %v459 = vpack.c.bf16 %v452, %v452
        %s460 = scalar_lea.vmem [#allocation2], 8
        %v461 = vld [vmem:[%s460] sm:$0xf]
        %v463 = vsel %vm273, %v461, 0
        %465 = vmatprep.subr.bf16.mxu0 %v265
        %466 = vmatpush1.bf16.msra.mxu0 %v264
        %467 = vmatprep.subr.bf16.mxu0 %v282
        %468 = vmatpush1.bf16.msra.mxu0 %v279
        %469 = vmatprep.subr.bf16.mxu0 0
        %470 = vmatpush1.bf16.msra.mxu0 0
        %471 = vmatprep.subr.bf16.mxu0 0
        %472 = vmatpush1.bf16.msra.mxu0 0
        %473 = vmatprep.subr.bf16.mxu0 0
        %474 = vmatpush1.bf16.msra.mxu0 0
        %475 = vmatprep.subr.bf16.mxu0 0
        %476 = vmatpush1.bf16.msra.mxu0 0
        %477 = vmatprep.subr.bf16.mxu0 0
        %478 = vmatpush1.bf16.msra.mxu0 0
        %479 = vmatprep.subr.bf16.mxu0 0
        %480 = vmatpush1.bf16.msra.mxu0 0
        %481 = vmatprep.subr.bf16.mxu0 0
        %482 = vmatpush1.bf16.msra.mxu0 0
        %483 = vmatprep.subr.bf16.mxu0 0
        %484 = vmatpush1.bf16.msra.mxu0 0
        %485 = vmatprep.subr.bf16.mxu0 0
        %486 = vmatpush1.bf16.msra.mxu0 0
        %487 = vmatprep.subr.bf16.mxu0 0
        %488 = vmatpush1.bf16.msra.mxu0 0
        %489 = vmatprep.subr.bf16.mxu0 0
        %490 = vmatpush1.bf16.msra.mxu0 0
        %491 = vmatprep.subr.bf16.mxu0 0
        %492 = vmatpush1.bf16.msra.mxu0 0
        %493 = vmatprep.subr.bf16.mxu0 0
        %494 = vmatpush1.bf16.msra.mxu0 0
        %495 = vmatprep.subr.bf16.mxu0 0
        %496 = vmatpush1.bf16.msra.mxu0 0
        %497 = vmatprep.mubr.bf16.mxu0 0
        %498 = vmatmul.mubr.bf16.gmra.mrb[0].mxu0 %v463
        %v499 = vpop.f32.mrb[0].mxu0
        %v500 = vadd.f32 0.0, %v499
        %v501 = vpop.f32.mrb[0].mxu0
        %v502 = vadd.f32 0.0, %v501
        %v503 = vpop.f32.mrb[0].mxu0
        %v504 = vpop.f32.mrb[0].mxu0
        %505 = vdwg.mxu0
        %506 = vmatprep.subr.bf16.mxu0 0
        %507 = vmatpush1.bf16.msra.mxu0 %v266
        %508 = vmatprep.subr.bf16.mxu0 0
        %509 = vmatpush1.bf16.msra.mxu0 %v285
        %510 = vmatprep.subr.bf16.mxu0 0
        %511 = vmatpush1.bf16.msra.mxu0 0
        %512 = vmatprep.subr.bf16.mxu0 0
        %513 = vmatpush1.bf16.msra.mxu0 0
        %514 = vmatprep.subr.bf16.mxu0 0
        %515 = vmatpush1.bf16.msra.mxu0 0
        %516 = vmatprep.subr.bf16.mxu0 0
        %517 = vmatpush1.bf16.msra.mxu0 0
        %518 = vmatprep.subr.bf16.mxu0 0
        %519 = vmatpush1.bf16.msra.mxu0 0
        %520 = vmatprep.subr.bf16.mxu0 0
        %521 = vmatpush1.bf16.msra.mxu0 0
        %522 = vmatprep.subr.bf16.mxu0 0
        %523 = vmatpush1.bf16.msra.mxu0 0
        %524 = vmatprep.subr.bf16.mxu0 0
        %525 = vmatpush1.bf16.msra.mxu0 0
        %526 = vmatprep.subr.bf16.mxu0 0
        %527 = vmatpush1.bf16.msra.mxu0 0
        %528 = vmatprep.subr.bf16.mxu0 0
        %529 = vmatpush1.bf16.msra.mxu0 0
        %530 = vmatprep.subr.bf16.mxu0 0
        %531 = vmatpush1.bf16.msra.mxu0 0
        %532 = vmatprep.subr.bf16.mxu0 0
        %533 = vmatpush1.bf16.msra.mxu0 0
        %534 = vmatprep.subr.bf16.mxu0 0
        %535 = vmatpush1.bf16.msra.mxu0 0
        %536 = vmatprep.subr.bf16.mxu0 0
        %537 = vmatpush1.bf16.msra.mxu0 0
        %538 = vmatprep.mubr.bf16.mxu0 0
        %539 = vmatmul.mubr.bf16.gmra.mrb[0].mxu0 %v463
        %v540 = vpop.f32.mrb[0].mxu0
        %v541 = vadd.f32 0.0, %v540
        %v542 = vpop.f32.mrb[0].mxu0
        %v543 = vpop.f32.mrb[0].mxu0
        %v544 = vpop.f32.mrb[0].mxu0
        %545 = vdwg.mxu0
        %v546 = vpack.c.bf16 %v500, %v500
        %v547 = vpack.c.bf16 %v502, %v502
        %v548 = vpack.c.bf16 %v541, %v541
        %s549 = scalar_lea.vmem [#allocation2], 12
        %v550 = vld [vmem:[%s549] sm:$0xf]
        %v552 = vsel %vm273, %v550, 0
        %554 = vmatprep.subr.bf16.mxu0 %v265
        %555 = vmatpush1.bf16.msra.mxu0 %v264
        %556 = vmatprep.subr.bf16.mxu0 %v282
        %557 = vmatpush1.bf16.msra.mxu0 %v279
        %558 = vmatprep.subr.bf16.mxu0 0
        %559 = vmatpush1.bf16.msra.mxu0 0
        %560 = vmatprep.subr.bf16.mxu0 0
        %561 = vmatpush1.bf16.msra.mxu0 0
        %562 = vmatprep.subr.bf16.mxu0 0
        %563 = vmatpush1.bf16.msra.mxu0 0
        %564 = vmatprep.subr.bf16.mxu0 0
        %565 = vmatpush1.bf16.msra.mxu0 0
        %566 = vmatprep.subr.bf16.mxu0 0
        %567 = vmatpush1.bf16.msra.mxu0 0
        %568 = vmatprep.subr.bf16.mxu0 0
        %569 = vmatpush1.bf16.msra.mxu0 0
        %570 = vmatprep.subr.bf16.mxu0 0
        %571 = vmatpush1.bf16.msra.mxu0 0
        %572 = vmatprep.subr.bf16.mxu0 0
        %573 = vmatpush1.bf16.msra.mxu0 0
        %574 = vmatprep.subr.bf16.mxu0 0
        %575 = vmatpush1.bf16.msra.mxu0 0
        %576 = vmatprep.subr.bf16.mxu0 0
        %577 = vmatpush1.bf16.msra.mxu0 0
        %578 = vmatprep.subr.bf16.mxu0 0
        %579 = vmatpush1.bf16.msra.mxu0 0
        %580 = vmatprep.subr.bf16.mxu0 0
        %581 = vmatpush1.bf16.msra.mxu0 0
        %582 = vmatprep.subr.bf16.mxu0 0
        %583 = vmatpush1.bf16.msra.mxu0 0
        %584 = vmatprep.subr.bf16.mxu0 0
        %585 = vmatpush1.bf16.msra.mxu0 0
        %586 = vmatprep.mubr.bf16.mxu0 0
        %587 = vmatmul.mubr.bf16.gmra.mrb[0].mxu0 %v552
        %v588 = vpop.f32.mrb[0].mxu0
        %v589 = vadd.f32 0.0, %v588
        %v590 = vpop.f32.mrb[0].mxu0
        %v591 = vadd.f32 0.0, %v590
        %v592 = vpop.f32.mrb[0].mxu0
        %v593 = vpop.f32.mrb[0].mxu0
        %594 = vdwg.mxu0
        %595 = vmatprep.subr.bf16.mxu0 0
        %596 = vmatpush1.bf16.msra.mxu0 %v266
        %597 = vmatprep.subr.bf16.mxu0 0
        %598 = vmatpush1.bf16.msra.mxu0 %v285
        %599 = vmatprep.subr.bf16.mxu0 0
        %600 = vmatpush1.bf16.msra.mxu0 0
        %601 = vmatprep.subr.bf16.mxu0 0
        %602 = vmatpush1.bf16.msra.mxu0 0
        %603 = vmatprep.subr.bf16.mxu0 0
        %604 = vmatpush1.bf16.msra.mxu0 0
        %605 = vmatprep.subr.bf16.mxu0 0
        %606 = vmatpush1.bf16.msra.mxu0 0
        %607 = vmatprep.subr.bf16.mxu0 0
        %608 = vmatpush1.bf16.msra.mxu0 0
        %609 = vmatprep.subr.bf16.mxu0 0
        %610 = vmatpush1.bf16.msra.mxu0 0
        %611 = vmatprep.subr.bf16.mxu0 0
        %612 = vmatpush1.bf16.msra.mxu0 0
        %613 = vmatprep.subr.bf16.mxu0 0
        %614 = vmatpush1.bf16.msra.mxu0 0
        %615 = vmatprep.subr.bf16.mxu0 0
        %616 = vmatpush1.bf16.msra.mxu0 0
        %617 = vmatprep.subr.bf16.mxu0 0
        %618 = vmatpush1.bf16.msra.mxu0 0
        %619 = vmatprep.subr.bf16.mxu0 0
        %620 = vmatpush1.bf16.msra.mxu0 0
        %621 = vmatprep.subr.bf16.mxu0 0
        %622 = vmatpush1.bf16.msra.mxu0 0
        %623 = vmatprep.subr.bf16.mxu0 0
        %624 = vmatpush1.bf16.msra.mxu0 0
        %625 = vmatprep.subr.bf16.mxu0 0
        %626 = vmatpush1.bf16.msra.mxu0 0
        %627 = vmatprep.mubr.bf16.mxu0 0
        %628 = vmatmul.mubr.bf16.gmra.mrb[0].mxu0 %v552
        %v629 = vpop.f32.mrb[0].mxu0
        %v630 = vadd.f32 0.0, %v629
        %v631 = vpop.f32.mrb[0].mxu0
        %v632 = vpop.f32.mrb[0].mxu0
        %v633 = vpop.f32.mrb[0].mxu0
        %634 = vdwg.mxu0
        %v635 = vpack.c.bf16 %v589, %v589
        %v636 = vpack.c.bf16 %v591, %v591
        %v637 = vpack.c.bf16 %v630, %v630
        %s638 = scalar_lea.vmem [#allocation2], 16
        %v639 = vld [vmem:[%s638] sm:$0xf]
        %v641 = vsel %vm273, %v639, 0
        %643 = vmatprep.subr.bf16.mxu0 %v265
        %644 = vmatpush1.bf16.msra.mxu0 %v264
        %645 = vmatprep.subr.bf16.mxu0 %v282
        %646 = vmatpush1.bf16.msra.mxu0 %v279
        %647 = vmatprep.subr.bf16.mxu0 0
        %648 = vmatpush1.bf16.msra.mxu0 0
        %649 = vmatprep.subr.bf16.mxu0 0
        %650 = vmatpush1.bf16.msra.mxu0 0
        %651 = vmatprep.subr.bf16.mxu0 0
        %652 = vmatpush1.bf16.msra.mxu0 0
        %653 = vmatprep.subr.bf16.mxu0 0
        %654 = vmatpush1.bf16.msra.mxu0 0
        %655 = vmatprep.subr.bf16.mxu0 0
        %656 = vmatpush1.bf16.msra.mxu0 0
        %657 = vmatprep.subr.bf16.mxu0 0
        %658 = vmatpush1.bf16.msra.mxu0 0
        %659 = vmatprep.subr.bf16.mxu0 0
        %660 = vmatpush1.bf16.msra.mxu0 0
        %661 = vmatprep.subr.bf16.mxu0 0
        %662 = vmatpush1.bf16.msra.mxu0 0
        %663 = vmatprep.subr.bf16.mxu0 0
        %664 = vmatpush1.bf16.msra.mxu0 0
        %665 = vmatprep.subr.bf16.mxu0 0
        %666 = vmatpush1.bf16.msra.mxu0 0
        %667 = vmatprep.subr.bf16.mxu0 0
        %668 = vmatpush1.bf16.msra.mxu0 0
        %669 = vmatprep.subr.bf16.mxu0 0
        %670 = vmatpush1.bf16.msra.mxu0 0
        %671 = vmatprep.subr.bf16.mxu0 0
        %672 = vmatpush1.bf16.msra.mxu0 0
        %673 = vmatprep.subr.bf16.mxu0 0
        %674 = vmatpush1.bf16.msra.mxu0 0
        %675 = vmatprep.mubr.bf16.mxu0 0
        %676 = vmatmul.mubr.bf16.gmra.mrb[0].mxu0 %v641
        %v677 = vpop.f32.mrb[0].mxu0
        %v678 = vadd.f32 0.0, %v677
        %v679 = vpop.f32.mrb[0].mxu0
        %v680 = vadd.f32 0.0, %v679
        %v681 = vpop.f32.mrb[0].mxu0
        %v682 = vpop.f32.mrb[0].mxu0
        %683 = vdwg.mxu0
        %684 = vmatprep.subr.bf16.mxu0 0
        %685 = vmatpush1.bf16.msra.mxu0 %v266
        %686 = vmatprep.subr.bf16.mxu0 0
        %687 = vmatpush1.bf16.msra.mxu0 %v285
        %688 = vmatprep.subr.bf16.mxu0 0
        %689 = vmatpush1.bf16.msra.mxu0 0
        %690 = vmatprep.subr.bf16.mxu0 0
        %691 = vmatpush1.bf16.msra.mxu0 0
        %692 = vmatprep.subr.bf16.mxu0 0
        %693 = vmatpush1.bf16.msra.mxu0 0
        %694 = vmatprep.subr.bf16.mxu0 0
        %695 = vmatpush1.bf16.msra.mxu0 0
        %696 = vmatprep.subr.bf16.mxu0 0
        %697 = vmatpush1.bf16.msra.mxu0 0
        %698 = vmatprep.subr.bf16.mxu0 0
        %699 = vmatpush1.bf16.msra.mxu0 0
        %700 = vmatprep.subr.bf16.mxu0 0
        %701 = vmatpush1.bf16.msra.mxu0 0
        %702 = vmatprep.subr.bf16.mxu0 0
        %703 = vmatpush1.bf16.msra.mxu0 0
        %704 = vmatprep.subr.bf16.mxu0 0
        %705 = vmatpush1.bf16.msra.mxu0 0
        %706 = vmatprep.subr.bf16.mxu0 0
        %707 = vmatpush1.bf16.msra.mxu0 0
        %708 = vmatprep.subr.bf16.mxu0 0
        %709 = vmatpush1.bf16.msra.mxu0 0
        %710 = vmatprep.subr.bf16.mxu0 0
        %711 = vmatpush1.bf16.msra.mxu0 0
        %712 = vmatprep.subr.bf16.mxu0 0
        %713 = vmatpush1.bf16.msra.mxu0 0
        %714 = vmatprep.subr.bf16.mxu0 0
        %715 = vmatpush1.bf16.msra.mxu0 0
        %716 = vmatprep.mubr.bf16.mxu0 0
        %717 = vmatmul.mubr.bf16.gmra.mrb[0].mxu0 %v641
        %v718 = vpop.f32.mrb[0].mxu0
        %v719 = vadd.f32 0.0, %v718
        %v720 = vpop.f32.mrb[0].mxu0
        %v721 = vpop.f32.mrb[0].mxu0
        %v722 = vpop.f32.mrb[0].mxu0
        %723 = vdwg.mxu0
        %v724 = vpack.c.bf16 %v678, %v678
        %v725 = vpack.c.bf16 %v680, %v680
        %v726 = vpack.c.bf16 %v719, %v719
        %s727 = scalar_lea.vmem [#allocation2], 20
        %v728 = vld [vmem:[%s727] sm:$0xf]
        %v730 = vsel %vm273, %v728, 0
        %732 = vmatprep.subr.bf16.mxu0 %v265
        %733 = vmatpush1.bf16.msra.mxu0 %v264
        %734 = vmatprep.subr.bf16.mxu0 %v282
        %735 = vmatpush1.bf16.msra.mxu0 %v279
        %736 = vmatprep.subr.bf16.mxu0 0
        %737 = vmatpush1.bf16.msra.mxu0 0
        %738 = vmatprep.subr.bf16.mxu0 0
        %739 = vmatpush1.bf16.msra.mxu0 0
        %740 = vmatprep.subr.bf16.mxu0 0
        %741 = vmatpush1.bf16.msra.mxu0 0
        %742 = vmatprep.subr.bf16.mxu0 0
        %743 = vmatpush1.bf16.msra.mxu0 0
        %744 = vmatprep.subr.bf16.mxu0 0
        %745 = vmatpush1.bf16.msra.mxu0 0
        %746 = vmatprep.subr.bf16.mxu0 0
        %747 = vmatpush1.bf16.msra.mxu0 0
        %748 = vmatprep.subr.bf16.mxu0 0
        %749 = vmatpush1.bf16.msra.mxu0 0
        %750 = vmatprep.subr.bf16.mxu0 0
        %751 = vmatpush1.bf16.msra.mxu0 0
        %752 = vmatprep.subr.bf16.mxu0 0
        %753 = vmatpush1.bf16.msra.mxu0 0
        %754 = vmatprep.subr.bf16.mxu0 0
        %755 = vmatpush1.bf16.msra.mxu0 0
        %756 = vmatprep.subr.bf16.mxu0 0
        %757 = vmatpush1.bf16.msra.mxu0 0
        %758 = vmatprep.subr.bf16.mxu0 0
        %759 = vmatpush1.bf16.msra.mxu0 0
        %760 = vmatprep.subr.bf16.mxu0 0
        %761 = vmatpush1.bf16.msra.mxu0 0
        %762 = vmatprep.subr.bf16.mxu0 0
        %763 = vmatpush1.bf16.msra.mxu0 0
        %764 = vmatprep.mubr.bf16.mxu0 0
        %765 = vmatmul.mubr.bf16.gmra.mrb[0].mxu0 %v730
        %v766 = vpop.f32.mrb[0].mxu0
        %v767 = vadd.f32 0.0, %v766
        %v768 = vpop.f32.mrb[0].mxu0
        %v769 = vadd.f32 0.0, %v768
        %v770 = vpop.f32.mrb[0].mxu0
        %v771 = vpop.f32.mrb[0].mxu0
        %772 = vdwg.mxu0
        %773 = vmatprep.subr.bf16.mxu0 0
        %774 = vmatpush1.bf16.msra.mxu0 %v266
        %775 = vmatprep.subr.bf16.mxu0 0
        %776 = vmatpush1.bf16.msra.mxu0 %v285
        %777 = vmatprep.subr.bf16.mxu0 0
        %778 = vmatpush1.bf16.msra.mxu0 0
        %779 = vmatprep.subr.bf16.mxu0 0
        %780 = vmatpush1.bf16.msra.mxu0 0
        %781 = vmatprep.subr.bf16.mxu0 0
        %782 = vmatpush1.bf16.msra.mxu0 0
        %783 = vmatprep.subr.bf16.mxu0 0
        %784 = vmatpush1.bf16.msra.mxu0 0
        %785 = vmatprep.subr.bf16.mxu0 0
        %786 = vmatpush1.bf16.msra.mxu0 0
        %787 = vmatprep.subr.bf16.mxu0 0
        %788 = vmatpush1.bf16.msra.mxu0 0
        %789 = vmatprep.subr.bf16.mxu0 0
        %790 = vmatpush1.bf16.msra.mxu0 0
        %791 = vmatprep.subr.bf16.mxu0 0
        %792 = vmatpush1.bf16.msra.mxu0 0
        %793 = vmatprep.subr.bf16.mxu0 0
        %794 = vmatpush1.bf16.msra.mxu0 0
        %795 = vmatprep.subr.bf16.mxu0 0
        %796 = vmatpush1.bf16.msra.mxu0 0
        %797 = vmatprep.subr.bf16.mxu0 0
        %798 = vmatpush1.bf16.msra.mxu0 0
        %799 = vmatprep.subr.bf16.mxu0 0
        %800 = vmatpush1.bf16.msra.mxu0 0
        %801 = vmatprep.subr.bf16.mxu0 0
        %802 = vmatpush1.bf16.msra.mxu0 0
        %803 = vmatprep.subr.bf16.mxu0 0
        %804 = vmatpush1.bf16.msra.mxu0 0
        %805 = vmatprep.mubr.bf16.mxu0 0
        %806 = vmatmul.mubr.bf16.gmra.mrb[0].mxu0 %v730
        %v807 = vpop.f32.mrb[0].mxu0
        %v808 = vadd.f32 0.0, %v807
        %v809 = vpop.f32.mrb[0].mxu0
        %v810 = vpop.f32.mrb[0].mxu0
        %v811 = vpop.f32.mrb[0].mxu0
        %812 = vdwg.mxu0
        %v813 = vpack.c.bf16 %v767, %v767
        %v814 = vpack.c.bf16 %v769, %v769
        %v815 = vpack.c.bf16 %v808, %v808
        %v816 = vld [vmem:[#allocation4] sm:$0xff]
        %v817 = vld [vmem:[#allocation4 + $0x8] sm:$0xff]
        %v818 = vld [vmem:[#allocation4 + $0x10] sm:$0xff]
        %v819 = vld [vmem:[#allocation4 + $0x18] sm:$0xff]
        %v820 = vld [vmem:[#allocation4 + $0x20] sm:$0xff]
        %v821 = vld [vmem:[#allocation4 + $0x28] sm:$0xff]
        %v822 = vld [vmem:[#allocation4 + $0x30] sm:$0xff]
        %v823 = vld [vmem:[#allocation4 + $0x38] sm:$0xff]
        %v824 = vld [vmem:[#allocation4 + $0x40] sm:$0xff]
        %v825 = vld [vmem:[#allocation4 + $0x48] sm:$0xff]
        %v826 = vld [vmem:[#allocation4 + $0x50] sm:$0xff]
        %v827 = vld [vmem:[#allocation4 + $0x58] sm:$0xff]
        %v828 = vld [vmem:[#allocation4 + $0x60] sm:$0xff]
        %v829 = vld [vmem:[#allocation4 + $0x68] sm:$0xff]
        %v830 = vld [vmem:[#allocation4 + $0x70] sm:$0xff]
        %v831 = vld [vmem:[#allocation4 + $0x78] sm:$0xff]
        %v832 = vld [vmem:[#allocation4 + $0x80] sm:$0xff]
        %v833 = vld [vmem:[#allocation4 + $0x88] sm:$0xff]
        %v834 = vld [vmem:[#allocation4 + $0x90] sm:$0xff]
        %v835 = vld [vmem:[#allocation4 + $0x98] sm:$0xff]
        %v836 = vld [vmem:[#allocation4 + $0xa0] sm:$0xff]
        %v837 = vld [vmem:[#allocation4 + $0xa8] sm:$0xff]
        %v838 = vld [vmem:[#allocation4 + $0xb0] sm:$0xff]
        %v839 = vld [vmem:[#allocation4 + $0xb8] sm:$0xff]
        %v840 = vld [vmem:[#allocation4 + $0xc0] sm:$0xff]
        %v841 = vld [vmem:[#allocation4 + $0xc8] sm:$0xff]
        %v842 = vld [vmem:[#allocation4 + $0xd0] sm:$0xff]
        %v843 = vld [vmem:[#allocation4 + $0xd8] sm:$0xff]
        %v844 = vld [vmem:[#allocation4 + $0xe0] sm:$0xff]
        %v845 = vld [vmem:[#allocation4 + $0xe8] sm:$0xff]
        %v846 = vld [vmem:[#allocation4 + $0xf0] sm:$0xff]
        %v847 = vld [vmem:[#allocation4 + $0xf8] sm:$0xff]
        %v848 = vld [vmem:[#allocation4 + $0x100] sm:$0xff]
        %v849 = vld [vmem:[#allocation4 + $0x108] sm:$0xff]
        %v850 = vld [vmem:[#allocation4 + $0x110] sm:$0xff]
        %v851 = vld [vmem:[#allocation4 + $0x118] sm:$0xff]
        %s852 = scalar_lea.vmem [#allocation4], 288
        %v853 = vld [vmem:[%s852] sm:$0xff]
        %v854 = vld [vmem:[%s852 + $0x8] sm:$0xff]
        %v855 = vld [vmem:[%s852 + $0x10] sm:$0xff]
        %v856 = vld [vmem:[%s852 + $0x18] sm:$0xff]
        %v857 = vld [vmem:[%s852 + $0x20] sm:$0xff]
        %v858 = vld [vmem:[%s852 + $0x28] sm:$0xff]
        %v859 = vld [vmem:[%s852 + $0x30] sm:$0xff]
        %v860 = vld [vmem:[%s852 + $0x38] sm:$0xff]
        %v861 = vld [vmem:[%s852 + $0x40] sm:$0xff]
        %v862 = vld [vmem:[%s852 + $0x48] sm:$0xff]
        %v863 = vld [vmem:[%s852 + $0x50] sm:$0xff]
        %v864 = vld [vmem:[%s852 + $0x58] sm:$0xff]
        %v865 = vld [vmem:[%s852 + $0x60] sm:$0xff]
        %v866 = vld [vmem:[%s852 + $0x68] sm:$0xff]
        %v867 = vld [vmem:[%s852 + $0x70] sm:$0xff]
        %v868 = vld [vmem:[%s852 + $0x78] sm:$0xff]
        %v869 = vld [vmem:[%s852 + $0x80] sm:$0xff]
        %v870 = vld [vmem:[%s852 + $0x88] sm:$0xff]
        %v871 = vld [vmem:[%s852 + $0x90] sm:$0xff]
        %v872 = vld [vmem:[%s852 + $0x98] sm:$0xff]
        %v873 = vld [vmem:[%s852 + $0xa0] sm:$0xff]
        %v874 = vld [vmem:[%s852 + $0xa8] sm:$0xff]
        %v875 = vld [vmem:[%s852 + $0xb0] sm:$0xff]
        %v876 = vld [vmem:[%s852 + $0xb8] sm:$0xff]
        %v877 = vld [vmem:[%s852 + $0xc0] sm:$0xff]
        %v878 = vld [vmem:[%s852 + $0xc8] sm:$0xff]
        %v879 = vld [vmem:[%s852 + $0xd0] sm:$0xff]
        %v880 = vld [vmem:[%s852 + $0xd8] sm:$0xff]
        %v881 = vld [vmem:[%s852 + $0xe0] sm:$0xff]
        %v882 = vld [vmem:[%s852 + $0xe8] sm:$0xff]
        %v883 = vld [vmem:[%s852 + $0xf0] sm:$0xff]
        %v884 = vld [vmem:[%s852 + $0xf8] sm:$0xff]
        %v885 = vld [vmem:[%s852 + $0x100] sm:$0xff]
        %v886 = vld [vmem:[%s852 + $0x108] sm:$0xff]
        %v887 = vld [vmem:[%s852 + $0x110] sm:$0xff]
        %v888 = vld [vmem:[%s852 + $0x118] sm:$0xff]
        %v925 = vunpack.c.l.b16 %v853
        %v926 = vunpack.c.h.b16 %v853
        %v927 = vunpack.c.l.b16 %v854
        %v928 = vunpack.c.h.b16 %v854
        %v929 = vunpack.c.l.b16 %v855
        %v930 = vunpack.c.h.b16 %v855
        %v931 = vunpack.c.l.b16 %v856
        %v932 = vunpack.c.h.b16 %v856
        %v933 = vunpack.c.l.b16 %v857
        %v934 = vunpack.c.h.b16 %v857
        %v935 = vunpack.c.l.b16 %v858
        %v936 = vunpack.c.h.b16 %v858
        %v937 = vunpack.c.l.b16 %v859
        %v938 = vunpack.c.h.b16 %v859
        %v939 = vunpack.c.l.b16 %v860
        %v940 = vunpack.c.h.b16 %v860
        %v941 = vunpack.c.l.b16 %v861
        %v942 = vunpack.c.h.b16 %v861
        %v943 = vunpack.c.l.b16 %v862
        %v944 = vunpack.c.h.b16 %v862
        %v945 = vunpack.c.l.b16 %v863
        %v946 = vunpack.c.h.b16 %v863
        %v947 = vunpack.c.l.b16 %v864
        %v948 = vunpack.c.h.b16 %v864
        %v949 = vunpack.c.l.b16 %v865
        %v950 = vunpack.c.h.b16 %v865
        %v951 = vunpack.c.l.b16 %v866
        %v952 = vunpack.c.h.b16 %v866
        %v953 = vunpack.c.l.b16 %v867
        %v954 = vunpack.c.h.b16 %v867
        %v955 = vunpack.c.l.b16 %v868
        %v956 = vunpack.c.h.b16 %v868
        %v957 = vunpack.c.l.b16 %v869
        %v958 = vunpack.c.h.b16 %v869
        %v959 = vunpack.c.l.b16 %v870
        %v960 = vunpack.c.h.b16 %v870
        %v961 = vunpack.c.l.b16 %v871
        %v962 = vunpack.c.h.b16 %v871
        %v963 = vunpack.c.l.b16 %v872
        %v964 = vunpack.c.h.b16 %v872
        %v965 = vunpack.c.l.b16 %v873
        %v966 = vunpack.c.h.b16 %v873
        %v967 = vunpack.c.l.b16 %v874
        %v968 = vunpack.c.h.b16 %v874
        %v969 = vunpack.c.l.b16 %v875
        %v970 = vunpack.c.h.b16 %v875
        %v971 = vunpack.c.l.b16 %v876
        %v972 = vunpack.c.h.b16 %v876
        %v973 = vunpack.c.l.b16 %v877
        %v974 = vunpack.c.h.b16 %v877
        %v975 = vunpack.c.l.b16 %v878
        %v976 = vunpack.c.h.b16 %v878
        %v977 = vunpack.c.l.b16 %v879
        %v978 = vunpack.c.h.b16 %v879
        %v979 = vunpack.c.l.b16 %v880
        %v980 = vunpack.c.h.b16 %v880
        %v981 = vunpack.c.l.b16 %v881
        %v982 = vunpack.c.h.b16 %v881
        %v983 = vunpack.c.l.b16 %v882
        %v984 = vunpack.c.h.b16 %v882
        %v985 = vunpack.c.l.b16 %v883
        %v986 = vunpack.c.h.b16 %v883
        %v987 = vunpack.c.l.b16 %v884
        %v988 = vunpack.c.h.b16 %v884
        %v989 = vunpack.c.l.b16 %v885
        %v990 = vunpack.c.h.b16 %v885
        %v991 = vunpack.c.l.b16 %v886
        %v992 = vunpack.c.h.b16 %v886
        %v993 = vunpack.c.l.b16 %v887
        %v994 = vunpack.c.h.b16 %v887
        %v995 = vunpack.c.l.b16 %v888
        %v996 = vunpack.c.h.b16 %v888
        %v997 = vpack.c.b16 %v927, %v925
        %v998 = vpack.c.b16 %v928, %v926
        %v999 = vpack.c.b16 %v931, %v929
        %v1000 = vpack.c.b16 %v932, %v930
        %v1001 = vpack.c.b16 %v935, %v933
        %v1002 = vpack.c.b16 %v936, %v934
        %v1003 = vpack.c.b16 %v939, %v937
        %v1004 = vpack.c.b16 %v940, %v938
        %v1005 = vpack.c.b16 %v943, %v941
        %v1006 = vpack.c.b16 %v944, %v942
        %v1007 = vpack.c.b16 %v947, %v945
        %v1008 = vpack.c.b16 %v948, %v946
        %v1009 = vpack.c.b16 %v951, %v949
        %v1010 = vpack.c.b16 %v952, %v950
        %v1011 = vpack.c.b16 %v955, %v953
        %v1012 = vpack.c.b16 %v956, %v954
        %v1013 = vpack.c.b16 %v959, %v957
        %v1014 = vpack.c.b16 %v960, %v958
        %v1015 = vpack.c.b16 %v963, %v961
        %v1016 = vpack.c.b16 %v964, %v962
        %v1017 = vpack.c.b16 %v967, %v965
        %v1018 = vpack.c.b16 %v968, %v966
        %v1019 = vpack.c.b16 %v971, %v969
        %v1020 = vpack.c.b16 %v972, %v970
        %v1021 = vpack.c.b16 %v975, %v973
        %v1022 = vpack.c.b16 %v976, %v974
        %v1023 = vpack.c.b16 %v979, %v977
        %v1024 = vpack.c.b16 %v980, %v978
        %v1025 = vpack.c.b16 %v983, %v981
        %v1026 = vpack.c.b16 %v984, %v982
        %v1027 = vpack.c.b16 %v987, %v985
        %v1028 = vpack.c.b16 %v988, %v986
        %v1029 = vpack.c.b16 %v991, %v989
        %v1030 = vpack.c.b16 %v992, %v990
        %v1031 = vpack.c.b16 %v995, %v993
        %v1032 = vpack.c.b16 %v996, %v994
        %vm1069 = vcmask 261120
        %v1071 = vsel %vm1069, %v459, 0
        %1073 = vmatprep.subr.bf16.mxu0 %v998
        %1074 = vmatpush1.bf16.msra.mxu0 %v997
        %1075 = vmatprep.subr.bf16.mxu0 %v1000
        %1076 = vmatpush1.bf16.msra.mxu0 %v999
        %1077 = vmatprep.subr.bf16.mxu0 %v1002
        %1078 = vmatpush1.bf16.msra.mxu0 %v1001
        %1079 = vmatprep.subr.bf16.mxu0 %v1004
        %1080 = vmatpush1.bf16.msra.mxu0 %v1003
        %1081 = vmatprep.subr.bf16.mxu0 %v1006
        %1082 = vmatpush1.bf16.msra.mxu0 %v1005
        %1083 = vmatprep.subr.bf16.mxu0 %v1008
        %1084 = vmatpush1.bf16.msra.mxu0 %v1007
        %1085 = vmatprep.subr.bf16.mxu0 %v1010
        %1086 = vmatpush1.bf16.msra.mxu0 %v1009
        %1087 = vmatprep.subr.bf16.mxu0 %v1012
        %1088 = vmatpush1.bf16.msra.mxu0 %v1011
        %1089 = vmatprep.subr.bf16.mxu0 %v1014
        %1090 = vmatpush1.bf16.msra.mxu0 %v1013
        %1091 = vmatprep.subr.bf16.mxu0 %v1016
        %1092 = vmatpush1.bf16.msra.mxu0 %v1015
        %1093 = vmatprep.subr.bf16.mxu0 %v1018
        %1094 = vmatpush1.bf16.msra.mxu0 %v1017
        %1095 = vmatprep.subr.bf16.mxu0 %v1020
        %1096 = vmatpush1.bf16.msra.mxu0 %v1019
        %1097 = vmatprep.subr.bf16.mxu0 %v1022
        %1098 = vmatpush1.bf16.msra.mxu0 %v1021
        %1099 = vmatprep.subr.bf16.mxu0 %v1024
        %1100 = vmatpush1.bf16.msra.mxu0 %v1023
        %1101 = vmatprep.subr.bf16.mxu0 %v1026
        %1102 = vmatpush1.bf16.msra.mxu0 %v1025
        %1103 = vmatprep.subr.bf16.mxu0 %v1028
        %1104 = vmatpush1.bf16.msra.mxu0 %v1027
        %1105 = vmatprep.mubr.bf16.mxu0 %v458
        %1106 = vmatmul.mubr.bf16.gmra.mrb[0].mxu0 %v457
        %v1107 = vpop.f32.mrb[0].mxu0
        %v1108 = vadd.f32 0.0, %v1107
        %v1109 = vpop.f32.mrb[0].mxu0
        %v1110 = vadd.f32 0.0, %v1109
        %v1111 = vpop.f32.mrb[0].mxu0
        %v1112 = vpop.f32.mrb[0].mxu0
        %1113 = vdwg.mxu0
        %1114 = vmatprep.subr.bf16.mxu0 %v1030
        %1115 = vmatpush1.bf16.msra.mxu0 %v1029
        %1116 = vmatprep.subr.bf16.mxu0 %v1032
        %1117 = vmatpush1.bf16.msra.mxu0 %v1031
        %1118 = vmatprep.subr.bf16.mxu0 0
        %1119 = vmatpush1.bf16.msra.mxu0 0
        %1120 = vmatprep.subr.bf16.mxu0 0
        %1121 = vmatpush1.bf16.msra.mxu0 0
        %1122 = vmatprep.subr.bf16.mxu0 0
        %1123 = vmatpush1.bf16.msra.mxu0 0
        %1124 = vmatprep.subr.bf16.mxu0 0
        %1125 = vmatpush1.bf16.msra.mxu0 0
        %1126 = vmatprep.subr.bf16.mxu0 0
        %1127 = vmatpush1.bf16.msra.mxu0 0
        %1128 = vmatprep.subr.bf16.mxu0 0
        %1129 = vmatpush1.bf16.msra.mxu0 0
        %1130 = vmatprep.subr.bf16.mxu0 0
        %1131 = vmatpush1.bf16.msra.mxu0 0
        %1132 = vmatprep.subr.bf16.mxu0 0
        %1133 = vmatpush1.bf16.msra.mxu0 0
        %1134 = vmatprep.subr.bf16.mxu0 0
        %1135 = vmatpush1.bf16.msra.mxu0 0
        %1136 = vmatprep.subr.bf16.mxu0 0
        %1137 = vmatpush1.bf16.msra.mxu0 0
        %1138 = vmatprep.subr.bf16.mxu0 0
        %1139 = vmatpush1.bf16.msra.mxu0 0
        %1140 = vmatprep.subr.bf16.mxu0 0
        %1141 = vmatpush1.bf16.msra.mxu0 0
        %1142 = vmatprep.subr.bf16.mxu0 0
        %1143 = vmatpush1.bf16.msra.mxu0 0
        %1144 = vmatprep.subr.bf16.mxu0 0
        %1145 = vmatpush1.bf16.msra.mxu0 0
        %1146 = vmatprep.mubr.bf16.mxu0 0
        %1147 = vmatmul.mubr.bf16.gmra.mrb[0].mxu0 %v1071
        %v1148 = vpop.f32.mrb[0].mxu0
        %v1149 = vadd.f32 %v1108, %v1148
        %v1150 = vpop.f32.mrb[0].mxu0
        %v1151 = vadd.f32 %v1110, %v1150
        %v1152 = vpop.f32.mrb[0].mxu0
        %v1153 = vpop.f32.mrb[0].mxu0
        %1154 = vdwg.mxu0
        %v1191 = vunpack.c.l.b16 %v816
        %v1192 = vunpack.c.h.b16 %v816
        %v1193 = vunpack.c.l.b16 %v817
        %v1194 = vunpack.c.h.b16 %v817
        %v1195 = vunpack.c.l.b16 %v818
        %v1196 = vunpack.c.h.b16 %v818
        %v1197 = vunpack.c.l.b16 %v819
        %v1198 = vunpack.c.h.b16 %v819
        %v1199 = vunpack.c.l.b16 %v820
        %v1200 = vunpack.c.h.b16 %v820
        %v1201 = vunpack.c.l.b16 %v821
        %v1202 = vunpack.c.h.b16 %v821
        %v1203 = vunpack.c.l.b16 %v822
        %v1204 = vunpack.c.h.b16 %v822
        %v1205 = vunpack.c.l.b16 %v823
        %v1206 = vunpack.c.h.b16 %v823
        %v1207 = vunpack.c.l.b16 %v824
        %v1208 = vunpack.c.h.b16 %v824
        %v1209 = vunpack.c.l.b16 %v825
        %v1210 = vunpack.c.h.b16 %v825
        %v1211 = vunpack.c.l.b16 %v826
        %v1212 = vunpack.c.h.b16 %v826
        %v1213 = vunpack.c.l.b16 %v827
        %v1214 = vunpack.c.h.b16 %v827
        %v1215 = vunpack.c.l.b16 %v828
        %v1216 = vunpack.c.h.b16 %v828
        %v1217 = vunpack.c.l.b16 %v829
        %v1218 = vunpack.c.h.b16 %v829
        %v1219 = vunpack.c.l.b16 %v830
        %v1220 = vunpack.c.h.b16 %v830
        %v1221 = vunpack.c.l.b16 %v831
        %v1222 = vunpack.c.h.b16 %v831
        %v1223 = vunpack.c.l.b16 %v832
        %v1224 = vunpack.c.h.b16 %v832
        %v1225 = vunpack.c.l.b16 %v833
        %v1226 = vunpack.c.h.b16 %v833
        %v1227 = vunpack.c.l.b16 %v834
        %v1228 = vunpack.c.h.b16 %v834
        %v1229 = vunpack.c.l.b16 %v835
        %v1230 = vunpack.c.h.b16 %v835
        %v1231 = vunpack.c.l.b16 %v836
        %v1232 = vunpack.c.h.b16 %v836
        %v1233 = vunpack.c.l.b16 %v837
        %v1234 = vunpack.c.h.b16 %v837
        %v1235 = vunpack.c.l.b16 %v838
        %v1236 = vunpack.c.h.b16 %v838
        %v1237 = vunpack.c.l.b16 %v839
        %v1238 = vunpack.c.h.b16 %v839
        %v1239 = vunpack.c.l.b16 %v840
        %v1240 = vunpack.c.h.b16 %v840
        %v1241 = vunpack.c.l.b16 %v841
        %v1242 = vunpack.c.h.b16 %v841
        %v1243 = vunpack.c.l.b16 %v842
        %v1244 = vunpack.c.h.b16 %v842
        %v1245 = vunpack.c.l.b16 %v843
        %v1246 = vunpack.c.h.b16 %v843
        %v1247 = vunpack.c.l.b16 %v844
        %v1248 = vunpack.c.h.b16 %v844
        %v1249 = vunpack.c.l.b16 %v845
        %v1250 = vunpack.c.h.b16 %v845
        %v1251 = vunpack.c.l.b16 %v846
        %v1252 = vunpack.c.h.b16 %v846
        %v1253 = vunpack.c.l.b16 %v847
        %v1254 = vunpack.c.h.b16 %v847
        %v1255 = vunpack.c.l.b16 %v848
        %v1256 = vunpack.c.h.b16 %v848
        %v1257 = vunpack.c.l.b16 %v849
        %v1258 = vunpack.c.h.b16 %v849
        %v1259 = vunpack.c.l.b16 %v850
        %v1260 = vunpack.c.h.b16 %v850
        %v1261 = vunpack.c.l.b16 %v851
        %v1262 = vunpack.c.h.b16 %v851
        %v1263 = vpack.c.b16 %v1193, %v1191
        %v1264 = vpack.c.b16 %v1194, %v1192
        %v1265 = vpack.c.b16 %v1197, %v1195
        %v1266 = vpack.c.b16 %v1198, %v1196
        %v1267 = vpack.c.b16 %v1201, %v1199
        %v1268 = vpack.c.b16 %v1202, %v1200
        %v1269 = vpack.c.b16 %v1205, %v1203
        %v1270 = vpack.c.b16 %v1206, %v1204
        %v1271 = vpack.c.b16 %v1209, %v1207
        %v1272 = vpack.c.b16 %v1210, %v1208
        %v1273 = vpack.c.b16 %v1213, %v1211
        %v1274 = vpack.c.b16 %v1214, %v1212
        %v1275 = vpack.c.b16 %v1217, %v1215
        %v1276 = vpack.c.b16 %v1218, %v1216
        %v1277 = vpack.c.b16 %v1221, %v1219
        %v1278 = vpack.c.b16 %v1222, %v1220
        %v1279 = vpack.c.b16 %v1225, %v1223
        %v1280 = vpack.c.b16 %v1226, %v1224
        %v1281 = vpack.c.b16 %v1229, %v1227
        %v1282 = vpack.c.b16 %v1230, %v1228
        %v1283 = vpack.c.b16 %v1233, %v1231
        %v1284 = vpack.c.b16 %v1234, %v1232
        %v1285 = vpack.c.b16 %v1237, %v1235
        %v1286 = vpack.c.b16 %v1238, %v1236
        %v1287 = vpack.c.b16 %v1241, %v1239
        %v1288 = vpack.c.b16 %v1242, %v1240
        %v1289 = vpack.c.b16 %v1245, %v1243
        %v1290 = vpack.c.b16 %v1246, %v1244
        %v1291 = vpack.c.b16 %v1249, %v1247
        %v1292 = vpack.c.b16 %v1250, %v1248
        %v1293 = vpack.c.b16 %v1253, %v1251
        %v1294 = vpack.c.b16 %v1254, %v1252
        %v1295 = vpack.c.b16 %v1257, %v1255
        %v1296 = vpack.c.b16 %v1258, %v1256
        %v1297 = vpack.c.b16 %v1261, %v1259
        %v1298 = vpack.c.b16 %v1262, %v1260
        %v1336 = vsel %vm1069, %v370, 0
        %1338 = vmatprep.subr.bf16.mxu0 %v1264
        %1339 = vmatpush1.bf16.msra.mxu0 %v1263
        %1340 = vmatprep.subr.bf16.mxu0 %v1266
        %1341 = vmatpush1.bf16.msra.mxu0 %v1265
        %1342 = vmatprep.subr.bf16.mxu0 %v1268
        %1343 = vmatpush1.bf16.msra.mxu0 %v1267
        %1344 = vmatprep.subr.bf16.mxu0 %v1270
        %1345 = vmatpush1.bf16.msra.mxu0 %v1269
        %1346 = vmatprep.subr.bf16.mxu0 %v1272
        %1347 = vmatpush1.bf16.msra.mxu0 %v1271
        %1348 = vmatprep.subr.bf16.mxu0 %v1274
        %1349 = vmatpush1.bf16.msra.mxu0 %v1273
        %1350 = vmatprep.subr.bf16.mxu0 %v1276
        %1351 = vmatpush1.bf16.msra.mxu0 %v1275
        %1352 = vmatprep.subr.bf16.mxu0 %v1278
        %1353 = vmatpush1.bf16.msra.mxu0 %v1277
        %1354 = vmatprep.subr.bf16.mxu0 %v1280
        %1355 = vmatpush1.bf16.msra.mxu0 %v1279
        %1356 = vmatprep.subr.bf16.mxu0 %v1282
        %1357 = vmatpush1.bf16.msra.mxu0 %v1281
        %1358 = vmatprep.subr.bf16.mxu0 %v1284
        %1359 = vmatpush1.bf16.msra.mxu0 %v1283
        %1360 = vmatprep.subr.bf16.mxu0 %v1286
        %1361 = vmatpush1.bf16.msra.mxu0 %v1285
        %1362 = vmatprep.subr.bf16.mxu0 %v1288
        %1363 = vmatpush1.bf16.msra.mxu0 %v1287
        %1364 = vmatprep.subr.bf16.mxu0 %v1290
        %1365 = vmatpush1.bf16.msra.mxu0 %v1289
        %1366 = vmatprep.subr.bf16.mxu0 %v1292
        %1367 = vmatpush1.bf16.msra.mxu0 %v1291
        %1368 = vmatprep.subr.bf16.mxu0 %v1294
        %1369 = vmatpush1.bf16.msra.mxu0 %v1293
        %1370 = vmatprep.mubr.bf16.mxu0 %v369
        %1371 = vmatmul.mubr.bf16.gmra.mrb[0].mxu0 %v368
        %v1372 = vpop.f32.mrb[0].mxu0
        %v1373 = vadd.f32 %v1149, %v1372
        %v1374 = vpop.f32.mrb[0].mxu0
        %v1375 = vadd.f32 %v1151, %v1374
        %v1376 = vpop.f32.mrb[0].mxu0
        %v1377 = vpop.f32.mrb[0].mxu0
        %1378 = vdwg.mxu0
        %1379 = vmatprep.subr.bf16.mxu0 %v1296
        %1380 = vmatpush1.bf16.msra.mxu0 %v1295
        %1381 = vmatprep.subr.bf16.mxu0 %v1298
        %1382 = vmatpush1.bf16.msra.mxu0 %v1297
        %1383 = vmatprep.subr.bf16.mxu0 0
        %1384 = vmatpush1.bf16.msra.mxu0 0
        %1385 = vmatprep.subr.bf16.mxu0 0
        %1386 = vmatpush1.bf16.msra.mxu0 0
        %1387 = vmatprep.subr.bf16.mxu0 0
        %1388 = vmatpush1.bf16.msra.mxu0 0
        %1389 = vmatprep.subr.bf16.mxu0 0
        %1390 = vmatpush1.bf16.msra.mxu0 0
        %1391 = vmatprep.subr.bf16.mxu0 0
        %1392 = vmatpush1.bf16.msra.mxu0 0
        %1393 = vmatprep.subr.bf16.mxu0 0
        %1394 = vmatpush1.bf16.msra.mxu0 0
        %1395 = vmatprep.subr.bf16.mxu0 0
        %1396 = vmatpush1.bf16.msra.mxu0 0
        %1397 = vmatprep.subr.bf16.mxu0 0
        %1398 = vmatpush1.bf16.msra.mxu0 0
        %1399 = vmatprep.subr.bf16.mxu0 0
        %1400 = vmatpush1.bf16.msra.mxu0 0
        %1401 = vmatprep.subr.bf16.mxu0 0
        %1402 = vmatpush1.bf16.msra.mxu0 0
        %1403 = vmatprep.subr.bf16.mxu0 0
        %1404 = vmatpush1.bf16.msra.mxu0 0
        %1405 = vmatprep.subr.bf16.mxu0 0
        %1406 = vmatpush1.bf16.msra.mxu0 0
        %1407 = vmatprep.subr.bf16.mxu0 0
        %1408 = vmatpush1.bf16.msra.mxu0 0
        %1409 = vmatprep.subr.bf16.mxu0 0
        %1410 = vmatpush1.bf16.msra.mxu0 0
        %1411 = vmatprep.mubr.bf16.mxu0 0
        %1412 = vmatmul.mubr.bf16.gmra.mrb[0].mxu0 %v1336
        %v1413 = vpop.f32.mrb[0].mxu0
        %v1414 = vadd.f32 %v1373, %v1413
        %v1415 = vpop.f32.mrb[0].mxu0
        %v1416 = vadd.f32 %v1375, %v1415
        %v1417 = vpop.f32.mrb[0].mxu0
        %v1418 = vpop.f32.mrb[0].mxu0
        %1419 = vdwg.mxu0
        %s1420 = scalar_lea.vmem [#allocation4], 576
        %v1421 = vld [vmem:[%s1420] sm:$0xff]
        %v1422 = vld [vmem:[%s1420 + $0x8] sm:$0xff]
        %v1423 = vld [vmem:[%s1420 + $0x10] sm:$0xff]
        %v1424 = vld [vmem:[%s1420 + $0x18] sm:$0xff]
        %v1425 = vld [vmem:[%s1420 + $0x20] sm:$0xff]
        %v1426 = vld [vmem:[%s1420 + $0x28] sm:$0xff]
        %v1427 = vld [vmem:[%s1420 + $0x30] sm:$0xff]
        %v1428 = vld [vmem:[%s1420 + $0x38] sm:$0xff]
        %v1429 = vld [vmem:[%s1420 + $0x40] sm:$0xff]
        %v1430 = vld [vmem:[%s1420 + $0x48] sm:$0xff]
        %v1431 = vld [vmem:[%s1420 + $0x50] sm:$0xff]
        %v1432 = vld [vmem:[%s1420 + $0x58] sm:$0xff]
        %v1433 = vld [vmem:[%s1420 + $0x60] sm:$0xff]
        %v1434 = vld [vmem:[%s1420 + $0x68] sm:$0xff]
        %v1435 = vld [vmem:[%s1420 + $0x70] sm:$0xff]
        %v1436 = vld [vmem:[%s1420 + $0x78] sm:$0xff]
        %v1437 = vld [vmem:[%s1420 + $0x80] sm:$0xff]
        %v1438 = vld [vmem:[%s1420 + $0x88] sm:$0xff]
        %v1439 = vld [vmem:[%s1420 + $0x90] sm:$0xff]
        %v1440 = vld [vmem:[%s1420 + $0x98] sm:$0xff]
        %v1441 = vld [vmem:[%s1420 + $0xa0] sm:$0xff]
        %v1442 = vld [vmem:[%s1420 + $0xa8] sm:$0xff]
        %v1443 = vld [vmem:[%s1420 + $0xb0] sm:$0xff]
        %v1444 = vld [vmem:[%s1420 + $0xb8] sm:$0xff]
        %v1445 = vld [vmem:[%s1420 + $0xc0] sm:$0xff]
        %v1446 = vld [vmem:[%s1420 + $0xc8] sm:$0xff]
        %v1447 = vld [vmem:[%s1420 + $0xd0] sm:$0xff]
        %v1448 = vld [vmem:[%s1420 + $0xd8] sm:$0xff]
        %v1449 = vld [vmem:[%s1420 + $0xe0] sm:$0xff]
        %v1450 = vld [vmem:[%s1420 + $0xe8] sm:$0xff]
        %v1451 = vld [vmem:[%s1420 + $0xf0] sm:$0xff]
        %v1452 = vld [vmem:[%s1420 + $0xf8] sm:$0xff]
        %v1453 = vld [vmem:[%s1420 + $0x100] sm:$0xff]
        %v1454 = vld [vmem:[%s1420 + $0x108] sm:$0xff]
        %v1455 = vld [vmem:[%s1420 + $0x110] sm:$0xff]
        %v1456 = vld [vmem:[%s1420 + $0x118] sm:$0xff]
        %v1493 = vunpack.c.l.b16 %v1421
        %v1494 = vunpack.c.h.b16 %v1421
        %v1495 = vunpack.c.l.b16 %v1422
        %v1496 = vunpack.c.h.b16 %v1422
        %v1497 = vunpack.c.l.b16 %v1423
        %v1498 = vunpack.c.h.b16 %v1423
        %v1499 = vunpack.c.l.b16 %v1424
        %v1500 = vunpack.c.h.b16 %v1424
        %v1501 = vunpack.c.l.b16 %v1425
        %v1502 = vunpack.c.h.b16 %v1425
        %v1503 = vunpack.c.l.b16 %v1426
        %v1504 = vunpack.c.h.b16 %v1426
        %v1505 = vunpack.c.l.b16 %v1427
        %v1506 = vunpack.c.h.b16 %v1427
        %v1507 = vunpack.c.l.b16 %v1428
        %v1508 = vunpack.c.h.b16 %v1428
        %v1509 = vunpack.c.l.b16 %v1429
        %v1510 = vunpack.c.h.b16 %v1429
        %v1511 = vunpack.c.l.b16 %v1430
        %v1512 = vunpack.c.h.b16 %v1430
        %v1513 = vunpack.c.l.b16 %v1431
        %v1514 = vunpack.c.h.b16 %v1431
        %v1515 = vunpack.c.l.b16 %v1432
        %v1516 = vunpack.c.h.b16 %v1432
        %v1517 = vunpack.c.l.b16 %v1433
        %v1518 = vunpack.c.h.b16 %v1433
        %v1519 = vunpack.c.l.b16 %v1434
        %v1520 = vunpack.c.h.b16 %v1434
        %v1521 = vunpack.c.l.b16 %v1435
        %v1522 = vunpack.c.h.b16 %v1435
        %v1523 = vunpack.c.l.b16 %v1436
        %v1524 = vunpack.c.h.b16 %v1436
        %v1525 = vunpack.c.l.b16 %v1437
        %v1526 = vunpack.c.h.b16 %v1437
        %v1527 = vunpack.c.l.b16 %v1438
        %v1528 = vunpack.c.h.b16 %v1438
        %v1529 = vunpack.c.l.b16 %v1439
        %v1530 = vunpack.c.h.b16 %v1439
        %v1531 = vunpack.c.l.b16 %v1440
        %v1532 = vunpack.c.h.b16 %v1440
        %v1533 = vunpack.c.l.b16 %v1441
        %v1534 = vunpack.c.h.b16 %v1441
        %v1535 = vunpack.c.l.b16 %v1442
        %v1536 = vunpack.c.h.b16 %v1442
        %v1537 = vunpack.c.l.b16 %v1443
        %v1538 = vunpack.c.h.b16 %v1443
        %v1539 = vunpack.c.l.b16 %v1444
        %v1540 = vunpack.c.h.b16 %v1444
        %v1541 = vunpack.c.l.b16 %v1445
        %v1542 = vunpack.c.h.b16 %v1445
        %v1543 = vunpack.c.l.b16 %v1446
        %v1544 = vunpack.c.h.b16 %v1446
        %v1545 = vunpack.c.l.b16 %v1447
        %v1546 = vunpack.c.h.b16 %v1447
        %v1547 = vunpack.c.l.b16 %v1448
        %v1548 = vunpack.c.h.b16 %v1448
        %v1549 = vunpack.c.l.b16 %v1449
        %v1550 = vunpack.c.h.b16 %v1449
        %v1551 = vunpack.c.l.b16 %v1450
        %v1552 = vunpack.c.h.b16 %v1450
        %v1553 = vunpack.c.l.b16 %v1451
        %v1554 = vunpack.c.h.b16 %v1451
        %v1555 = vunpack.c.l.b16 %v1452
        %v1556 = vunpack.c.h.b16 %v1452
        %v1557 = vunpack.c.l.b16 %v1453
        %v1558 = vunpack.c.h.b16 %v1453
        %v1559 = vunpack.c.l.b16 %v1454
        %v1560 = vunpack.c.h.b16 %v1454
        %v1561 = vunpack.c.l.b16 %v1455
        %v1562 = vunpack.c.h.b16 %v1455
        %v1563 = vunpack.c.l.b16 %v1456
        %v1564 = vunpack.c.h.b16 %v1456
        %v1565 = vpack.c.b16 %v1495, %v1493
        %v1566 = vpack.c.b16 %v1496, %v1494
        %v1567 = vpack.c.b16 %v1499, %v1497
        %v1568 = vpack.c.b16 %v1500, %v1498
        %v1569 = vpack.c.b16 %v1503, %v1501
        %v1570 = vpack.c.b16 %v1504, %v1502
        %v1571 = vpack.c.b16 %v1507, %v1505
        %v1572 = vpack.c.b16 %v1508, %v1506
        %v1573 = vpack.c.b16 %v1511, %v1509
        %v1574 = vpack.c.b16 %v1512, %v1510
        %v1575 = vpack.c.b16 %v1515, %v1513
        %v1576 = vpack.c.b16 %v1516, %v1514
        %v1577 = vpack.c.b16 %v1519, %v1517
        %v1578 = vpack.c.b16 %v1520, %v1518
        %v1579 = vpack.c.b16 %v1523, %v1521
        %v1580 = vpack.c.b16 %v1524, %v1522
        %v1581 = vpack.c.b16 %v1527, %v1525
        %v1582 = vpack.c.b16 %v1528, %v1526
        %v1583 = vpack.c.b16 %v1531, %v1529
        %v1584 = vpack.c.b16 %v1532, %v1530
        %v1585 = vpack.c.b16 %v1535, %v1533
        %v1586 = vpack.c.b16 %v1536, %v1534
        %v1587 = vpack.c.b16 %v1539, %v1537
        %v1588 = vpack.c.b16 %v1540, %v1538
        %v1589 = vpack.c.b16 %v1543, %v1541
        %v1590 = vpack.c.b16 %v1544, %v1542
        %v1591 = vpack.c.b16 %v1547, %v1545
        %v1592 = vpack.c.b16 %v1548, %v1546
        %v1593 = vpack.c.b16 %v1551, %v1549
        %v1594 = vpack.c.b16 %v1552, %v1550
        %v1595 = vpack.c.b16 %v1555, %v1553
        %v1596 = vpack.c.b16 %v1556, %v1554
        %v1597 = vpack.c.b16 %v1559, %v1557
        %v1598 = vpack.c.b16 %v1560, %v1558
        %v1599 = vpack.c.b16 %v1563, %v1561
        %v1600 = vpack.c.b16 %v1564, %v1562
        %v1638 = vsel %vm1069, %v548, 0
        %1640 = vmatprep.subr.bf16.mxu0 %v1566
        %1641 = vmatpush1.bf16.msra.mxu0 %v1565
        %1642 = vmatprep.subr.bf16.mxu0 %v1568
        %1643 = vmatpush1.bf16.msra.mxu0 %v1567
        %1644 = vmatprep.subr.bf16.mxu0 %v1570
        %1645 = vmatpush1.bf16.msra.mxu0 %v1569
        %1646 = vmatprep.subr.bf16.mxu0 %v1572
        %1647 = vmatpush1.bf16.msra.mxu0 %v1571
        %1648 = vmatprep.subr.bf16.mxu0 %v1574
        %1649 = vmatpush1.bf16.msra.mxu0 %v1573
        %1650 = vmatprep.subr.bf16.mxu0 %v1576
        %1651 = vmatpush1.bf16.msra.mxu0 %v1575
        %1652 = vmatprep.subr.bf16.mxu0 %v1578
        %1653 = vmatpush1.bf16.msra.mxu0 %v1577
        %1654 = vmatprep.subr.bf16.mxu0 %v1580
        %1655 = vmatpush1.bf16.msra.mxu0 %v1579
        %1656 = vmatprep.subr.bf16.mxu0 %v1582
        %1657 = vmatpush1.bf16.msra.mxu0 %v1581
        %1658 = vmatprep.subr.bf16.mxu0 %v1584
        %1659 = vmatpush1.bf16.msra.mxu0 %v1583
        %1660 = vmatprep.subr.bf16.mxu0 %v1586
        %1661 = vmatpush1.bf16.msra.mxu0 %v1585
        %1662 = vmatprep.subr.bf16.mxu0 %v1588
        %1663 = vmatpush1.bf16.msra.mxu0 %v1587
        %1664 = vmatprep.subr.bf16.mxu0 %v1590
        %1665 = vmatpush1.bf16.msra.mxu0 %v1589
        %1666 = vmatprep.subr.bf16.mxu0 %v1592
        %1667 = vmatpush1.bf16.msra.mxu0 %v1591
        %1668 = vmatprep.subr.bf16.mxu0 %v1594
        %1669 = vmatpush1.bf16.msra.mxu0 %v1593
        %1670 = vmatprep.subr.bf16.mxu0 %v1596
        %1671 = vmatpush1.bf16.msra.mxu0 %v1595
        %1672 = vmatprep.mubr.bf16.mxu0 %v547
        %1673 = vmatmul.mubr.bf16.gmra.mrb[0].mxu0 %v546
        %v1674 = vpop.f32.mrb[0].mxu0
        %v1675 = vadd.f32 0.0, %v1674
        %v1676 = vpop.f32.mrb[0].mxu0
        %v1677 = vadd.f32 0.0, %v1676
        %v1678 = vpop.f32.mrb[0].mxu0
        %v1679 = vpop.f32.mrb[0].mxu0
        %1680 = vdwg.mxu0
        %1681 = vmatprep.subr.bf16.mxu0 %v1598
        %1682 = vmatpush1.bf16.msra.mxu0 %v1597
        %1683 = vmatprep.subr.bf16.mxu0 %v1600
        %1684 = vmatpush1.bf16.msra.mxu0 %v1599
        %1685 = vmatprep.subr.bf16.mxu0 0
        %1686 = vmatpush1.bf16.msra.mxu0 0
        %1687 = vmatprep.subr.bf16.mxu0 0
        %1688 = vmatpush1.bf16.msra.mxu0 0
        %1689 = vmatprep.subr.bf16.mxu0 0
        %1690 = vmatpush1.bf16.msra.mxu0 0
        %1691 = vmatprep.subr.bf16.mxu0 0
        %1692 = vmatpush1.bf16.msra.mxu0 0
        %1693 = vmatprep.subr.bf16.mxu0 0
        %1694 = vmatpush1.bf16.msra.mxu0 0
        %1695 = vmatprep.subr.bf16.mxu0 0
        %1696 = vmatpush1.bf16.msra.mxu0 0
        %1697 = vmatprep.subr.bf16.mxu0 0
        %1698 = vmatpush1.bf16.msra.mxu0 0
        %1699 = vmatprep.subr.bf16.mxu0 0
        %1700 = vmatpush1.bf16.msra.mxu0 0
        %1701 = vmatprep.subr.bf16.mxu0 0
        %1702 = vmatpush1.bf16.msra.mxu0 0
        %1703 = vmatprep.subr.bf16.mxu0 0
        %1704 = vmatpush1.bf16.msra.mxu0 0
        %1705 = vmatprep.subr.bf16.mxu0 0
        %1706 = vmatpush1.bf16.msra.mxu0 0
        %1707 = vmatprep.subr.bf16.mxu0 0
        %1708 = vmatpush1.bf16.msra.mxu0 0
        %1709 = vmatprep.subr.bf16.mxu0 0
        %1710 = vmatpush1.bf16.msra.mxu0 0
        %1711 = vmatprep.subr.bf16.mxu0 0
        %1712 = vmatpush1.bf16.msra.mxu0 0
        %1713 = vmatprep.mubr.bf16.mxu0 0
        %1714 = vmatmul.mubr.bf16.gmra.mrb[0].mxu0 %v1638
        %v1715 = vpop.f32.mrb[0].mxu0
        %v1716 = vadd.f32 %v1675, %v1715
        %v1717 = vpop.f32.mrb[0].mxu0
        %v1718 = vadd.f32 %v1677, %v1717
        %v1719 = vpop.f32.mrb[0].mxu0
        %v1720 = vpop.f32.mrb[0].mxu0
        %1721 = vdwg.mxu0
        %v1722 = vadd.f32 %v1414, %v1716
        %v1723 = vadd.f32 %v1416, %v1718
        %s1724 = scalar_lea.vmem [#allocation4], 864
        %v1725 = vld [vmem:[%s1724] sm:$0xff]
        %v1726 = vld [vmem:[%s1724 + $0x8] sm:$0xff]
        %v1727 = vld [vmem:[%s1724 + $0x10] sm:$0xff]
        %v1728 = vld [vmem:[%s1724 + $0x18] sm:$0xff]
        %v1729 = vld [vmem:[%s1724 + $0x20] sm:$0xff]
        %v1730 = vld [vmem:[%s1724 + $0x28] sm:$0xff]
        %v1731 = vld [vmem:[%s1724 + $0x30] sm:$0xff]
        %v1732 = vld [vmem:[%s1724 + $0x38] sm:$0xff]
        %v1733 = vld [vmem:[%s1724 + $0x40] sm:$0xff]
        %v1734 = vld [vmem:[%s1724 + $0x48] sm:$0xff]
        %v1735 = vld [vmem:[%s1724 + $0x50] sm:$0xff]
        %v1736 = vld [vmem:[%s1724 + $0x58] sm:$0xff]
        %v1737 = vld [vmem:[%s1724 + $0x60] sm:$0xff]
        %v1738 = vld [vmem:[%s1724 + $0x68] sm:$0xff]
        %v1739 = vld [vmem:[%s1724 + $0x70] sm:$0xff]
        %v1740 = vld [vmem:[%s1724 + $0x78] sm:$0xff]
        %v1741 = vld [vmem:[%s1724 + $0x80] sm:$0xff]
        %v1742 = vld [vmem:[%s1724 + $0x88] sm:$0xff]
        %v1743 = vld [vmem:[%s1724 + $0x90] sm:$0xff]
        %v1744 = vld [vmem:[%s1724 + $0x98] sm:$0xff]
        %v1745 = vld [vmem:[%s1724 + $0xa0] sm:$0xff]
        %v1746 = vld [vmem:[%s1724 + $0xa8] sm:$0xff]
        %v1747 = vld [vmem:[%s1724 + $0xb0] sm:$0xff]
        %v1748 = vld [vmem:[%s1724 + $0xb8] sm:$0xff]
        %v1749 = vld [vmem:[%s1724 + $0xc0] sm:$0xff]
        %v1750 = vld [vmem:[%s1724 + $0xc8] sm:$0xff]
        %v1751 = vld [vmem:[%s1724 + $0xd0] sm:$0xff]
        %v1752 = vld [vmem:[%s1724 + $0xd8] sm:$0xff]
        %v1753 = vld [vmem:[%s1724 + $0xe0] sm:$0xff]
        %v1754 = vld [vmem:[%s1724 + $0xe8] sm:$0xff]
        %v1755 = vld [vmem:[%s1724 + $0xf0] sm:$0xff]
        %v1756 = vld [vmem:[%s1724 + $0xf8] sm:$0xff]
        %v1757 = vld [vmem:[%s1724 + $0x100] sm:$0xff]
        %v1758 = vld [vmem:[%s1724 + $0x108] sm:$0xff]
        %v1759 = vld [vmem:[%s1724 + $0x110] sm:$0xff]
        %v1760 = vld [vmem:[%s1724 + $0x118] sm:$0xff]
        %v1797 = vunpack.c.l.b16 %v1725
        %v1798 = vunpack.c.h.b16 %v1725
        %v1799 = vunpack.c.l.b16 %v1726
        %v1800 = vunpack.c.h.b16 %v1726
        %v1801 = vunpack.c.l.b16 %v1727
        %v1802 = vunpack.c.h.b16 %v1727
        %v1803 = vunpack.c.l.b16 %v1728
        %v1804 = vunpack.c.h.b16 %v1728
        %v1805 = vunpack.c.l.b16 %v1729
        %v1806 = vunpack.c.h.b16 %v1729
        %v1807 = vunpack.c.l.b16 %v1730
        %v1808 = vunpack.c.h.b16 %v1730
        %v1809 = vunpack.c.l.b16 %v1731
        %v1810 = vunpack.c.h.b16 %v1731
        %v1811 = vunpack.c.l.b16 %v1732
        %v1812 = vunpack.c.h.b16 %v1732
        %v1813 = vunpack.c.l.b16 %v1733
        %v1814 = vunpack.c.h.b16 %v1733
        %v1815 = vunpack.c.l.b16 %v1734
        %v1816 = vunpack.c.h.b16 %v1734
        %v1817 = vunpack.c.l.b16 %v1735
        %v1818 = vunpack.c.h.b16 %v1735
        %v1819 = vunpack.c.l.b16 %v1736
        %v1820 = vunpack.c.h.b16 %v1736
        %v1821 = vunpack.c.l.b16 %v1737
        %v1822 = vunpack.c.h.b16 %v1737
        %v1823 = vunpack.c.l.b16 %v1738
        %v1824 = vunpack.c.h.b16 %v1738
        %v1825 = vunpack.c.l.b16 %v1739
        %v1826 = vunpack.c.h.b16 %v1739
        %v1827 = vunpack.c.l.b16 %v1740
        %v1828 = vunpack.c.h.b16 %v1740
        %v1829 = vunpack.c.l.b16 %v1741
        %v1830 = vunpack.c.h.b16 %v1741
        %v1831 = vunpack.c.l.b16 %v1742
        %v1832 = vunpack.c.h.b16 %v1742
        %v1833 = vunpack.c.l.b16 %v1743
        %v1834 = vunpack.c.h.b16 %v1743
        %v1835 = vunpack.c.l.b16 %v1744
        %v1836 = vunpack.c.h.b16 %v1744
        %v1837 = vunpack.c.l.b16 %v1745
        %v1838 = vunpack.c.h.b16 %v1745
        %v1839 = vunpack.c.l.b16 %v1746
        %v1840 = vunpack.c.h.b16 %v1746
        %v1841 = vunpack.c.l.b16 %v1747
        %v1842 = vunpack.c.h.b16 %v1747
        %v1843 = vunpack.c.l.b16 %v1748
        %v1844 = vunpack.c.h.b16 %v1748
        %v1845 = vunpack.c.l.b16 %v1749
        %v1846 = vunpack.c.h.b16 %v1749
        %v1847 = vunpack.c.l.b16 %v1750
        %v1848 = vunpack.c.h.b16 %v1750
        %v1849 = vunpack.c.l.b16 %v1751
        %v1850 = vunpack.c.h.b16 %v1751
        %v1851 = vunpack.c.l.b16 %v1752
        %v1852 = vunpack.c.h.b16 %v1752
        %v1853 = vunpack.c.l.b16 %v1753
        %v1854 = vunpack.c.h.b16 %v1753
        %v1855 = vunpack.c.l.b16 %v1754
        %v1856 = vunpack.c.h.b16 %v1754
        %v1857 = vunpack.c.l.b16 %v1755
        %v1858 = vunpack.c.h.b16 %v1755
        %v1859 = vunpack.c.l.b16 %v1756
        %v1860 = vunpack.c.h.b16 %v1756
        %v1861 = vunpack.c.l.b16 %v1757
        %v1862 = vunpack.c.h.b16 %v1757
        %v1863 = vunpack.c.l.b16 %v1758
        %v1864 = vunpack.c.h.b16 %v1758
        %v1865 = vunpack.c.l.b16 %v1759
        %v1866 = vunpack.c.h.b16 %v1759
        %v1867 = vunpack.c.l.b16 %v1760
        %v1868 = vunpack.c.h.b16 %v1760
        %v1869 = vpack.c.b16 %v1799, %v1797
        %v1870 = vpack.c.b16 %v1800, %v1798
        %v1871 = vpack.c.b16 %v1803, %v1801
        %v1872 = vpack.c.b16 %v1804, %v1802
        %v1873 = vpack.c.b16 %v1807, %v1805
        %v1874 = vpack.c.b16 %v1808, %v1806
        %v1875 = vpack.c.b16 %v1811, %v1809
        %v1876 = vpack.c.b16 %v1812, %v1810
        %v1877 = vpack.c.b16 %v1815, %v1813
        %v1878 = vpack.c.b16 %v1816, %v1814
        %v1879 = vpack.c.b16 %v1819, %v1817
        %v1880 = vpack.c.b16 %v1820, %v1818
        %v1881 = vpack.c.b16 %v1823, %v1821
        %v1882 = vpack.c.b16 %v1824, %v1822
        %v1883 = vpack.c.b16 %v1827, %v1825
        %v1884 = vpack.c.b16 %v1828, %v1826
        %v1885 = vpack.c.b16 %v1831, %v1829
        %v1886 = vpack.c.b16 %v1832, %v1830
        %v1887 = vpack.c.b16 %v1835, %v1833
        %v1888 = vpack.c.b16 %v1836, %v1834
        %v1889 = vpack.c.b16 %v1839, %v1837
        %v1890 = vpack.c.b16 %v1840, %v1838
        %v1891 = vpack.c.b16 %v1843, %v1841
        %v1892 = vpack.c.b16 %v1844, %v1842
        %v1893 = vpack.c.b16 %v1847, %v1845
        %v1894 = vpack.c.b16 %v1848, %v1846
        %v1895 = vpack.c.b16 %v1851, %v1849
        %v1896 = vpack.c.b16 %v1852, %v1850
        %v1897 = vpack.c.b16 %v1855, %v1853
        %v1898 = vpack.c.b16 %v1856, %v1854
        %v1899 = vpack.c.b16 %v1859, %v1857
        %v1900 = vpack.c.b16 %v1860, %v1858
        %v1901 = vpack.c.b16 %v1863, %v1861
        %v1902 = vpack.c.b16 %v1864, %v1862
        %v1903 = vpack.c.b16 %v1867, %v1865
        %v1904 = vpack.c.b16 %v1868, %v1866
        %v1942 = vsel %vm1069, %v637, 0
        %1944 = vmatprep.subr.bf16.mxu0 %v1870
        %1945 = vmatpush1.bf16.msra.mxu0 %v1869
        %1946 = vmatprep.subr.bf16.mxu0 %v1872
        %1947 = vmatpush1.bf16.msra.mxu0 %v1871
        %1948 = vmatprep.subr.bf16.mxu0 %v1874
        %1949 = vmatpush1.bf16.msra.mxu0 %v1873
        %1950 = vmatprep.subr.bf16.mxu0 %v1876
        %1951 = vmatpush1.bf16.msra.mxu0 %v1875
        %1952 = vmatprep.subr.bf16.mxu0 %v1878
        %1953 = vmatpush1.bf16.msra.mxu0 %v1877
        %1954 = vmatprep.subr.bf16.mxu0 %v1880
        %1955 = vmatpush1.bf16.msra.mxu0 %v1879
        %1956 = vmatprep.subr.bf16.mxu0 %v1882
        %1957 = vmatpush1.bf16.msra.mxu0 %v1881
        %1958 = vmatprep.subr.bf16.mxu0 %v1884
        %1959 = vmatpush1.bf16.msra.mxu0 %v1883
        %1960 = vmatprep.subr.bf16.mxu0 %v1886
        %1961 = vmatpush1.bf16.msra.mxu0 %v1885
        %1962 = vmatprep.subr.bf16.mxu0 %v1888
        %1963 = vmatpush1.bf16.msra.mxu0 %v1887
        %1964 = vmatprep.subr.bf16.mxu0 %v1890
        %1965 = vmatpush1.bf16.msra.mxu0 %v1889
        %1966 = vmatprep.subr.bf16.mxu0 %v1892
        %1967 = vmatpush1.bf16.msra.mxu0 %v1891
        %1968 = vmatprep.subr.bf16.mxu0 %v1894
        %1969 = vmatpush1.bf16.msra.mxu0 %v1893
        %1970 = vmatprep.subr.bf16.mxu0 %v1896
        %1971 = vmatpush1.bf16.msra.mxu0 %v1895
        %1972 = vmatprep.subr.bf16.mxu0 %v1898
        %1973 = vmatpush1.bf16.msra.mxu0 %v1897
        %1974 = vmatprep.subr.bf16.mxu0 %v1900
        %1975 = vmatpush1.bf16.msra.mxu0 %v1899
        %1976 = vmatprep.mubr.bf16.mxu0 %v636
        %1977 = vmatmul.mubr.bf16.gmra.mrb[0].mxu0 %v635
        %v1978 = vpop.f32.mrb[0].mxu0
        %v1979 = vadd.f32 0.0, %v1978
        %v1980 = vpop.f32.mrb[0].mxu0
        %v1981 = vadd.f32 0.0, %v1980
        %v1982 = vpop.f32.mrb[0].mxu0
        %v1983 = vpop.f32.mrb[0].mxu0
        %1984 = vdwg.mxu0
        %1985 = vmatprep.subr.bf16.mxu0 %v1902
        %1986 = vmatpush1.bf16.msra.mxu0 %v1901
        %1987 = vmatprep.subr.bf16.mxu0 %v1904
        %1988 = vmatpush1.bf16.msra.mxu0 %v1903
        %1989 = vmatprep.subr.bf16.mxu0 0
        %1990 = vmatpush1.bf16.msra.mxu0 0
        %1991 = vmatprep.subr.bf16.mxu0 0
        %1992 = vmatpush1.bf16.msra.mxu0 0
        %1993 = vmatprep.subr.bf16.mxu0 0
        %1994 = vmatpush1.bf16.msra.mxu0 0
        %1995 = vmatprep.subr.bf16.mxu0 0
        %1996 = vmatpush1.bf16.msra.mxu0 0
        %1997 = vmatprep.subr.bf16.mxu0 0
        %1998 = vmatpush1.bf16.msra.mxu0 0
        %1999 = vmatprep.subr.bf16.mxu0 0
        %2000 = vmatpush1.bf16.msra.mxu0 0
        %2001 = vmatprep.subr.bf16.mxu0 0
        %2002 = vmatpush1.bf16.msra.mxu0 0
        %2003 = vmatprep.subr.bf16.mxu0 0
        %2004 = vmatpush1.bf16.msra.mxu0 0
        %2005 = vmatprep.subr.bf16.mxu0 0
        %2006 = vmatpush1.bf16.msra.mxu0 0
        %2007 = vmatprep.subr.bf16.mxu0 0
        %2008 = vmatpush1.bf16.msra.mxu0 0
        %2009 = vmatprep.subr.bf16.mxu0 0
        %2010 = vmatpush1.bf16.msra.mxu0 0
        %2011 = vmatprep.subr.bf16.mxu0 0
        %2012 = vmatpush1.bf16.msra.mxu0 0
        %2013 = vmatprep.subr.bf16.mxu0 0
        %2014 = vmatpush1.bf16.msra.mxu0 0
        %2015 = vmatprep.subr.bf16.mxu0 0
        %2016 = vmatpush1.bf16.msra.mxu0 0
        %2017 = vmatprep.mubr.bf16.mxu0 0
        %2018 = vmatmul.mubr.bf16.gmra.mrb[0].mxu0 %v1942
        %v2019 = vpop.f32.mrb[0].mxu0
        %v2020 = vadd.f32 %v1979, %v2019
        %v2021 = vpop.f32.mrb[0].mxu0
        %v2022 = vadd.f32 %v1981, %v2021
        %v2023 = vpop.f32.mrb[0].mxu0
        %v2024 = vpop.f32.mrb[0].mxu0
        %2025 = vdwg.mxu0
        %v2026 = vadd.f32 %v1722, %v2020
        %v2027 = vadd.f32 %v1723, %v2022
        %s2028 = scalar_lea.vmem [#allocation4], 1152
        %v2029 = vld [vmem:[%s2028] sm:$0xff]
        %v2030 = vld [vmem:[%s2028 + $0x8] sm:$0xff]
        %v2031 = vld [vmem:[%s2028 + $0x10] sm:$0xff]
        %v2032 = vld [vmem:[%s2028 + $0x18] sm:$0xff]
        %v2033 = vld [vmem:[%s2028 + $0x20] sm:$0xff]
        %v2034 = vld [vmem:[%s2028 + $0x28] sm:$0xff]
        %v2035 = vld [vmem:[%s2028 + $0x30] sm:$0xff]
        %v2036 = vld [vmem:[%s2028 + $0x38] sm:$0xff]
        %v2037 = vld [vmem:[%s2028 + $0x40] sm:$0xff]
        %v2038 = vld [vmem:[%s2028 + $0x48] sm:$0xff]
        %v2039 = vld [vmem:[%s2028 + $0x50] sm:$0xff]
        %v2040 = vld [vmem:[%s2028 + $0x58] sm:$0xff]
        %v2041 = vld [vmem:[%s2028 + $0x60] sm:$0xff]
        %v2042 = vld [vmem:[%s2028 + $0x68] sm:$0xff]
        %v2043 = vld [vmem:[%s2028 + $0x70] sm:$0xff]
        %v2044 = vld [vmem:[%s2028 + $0x78] sm:$0xff]
        %v2045 = vld [vmem:[%s2028 + $0x80] sm:$0xff]
        %v2046 = vld [vmem:[%s2028 + $0x88] sm:$0xff]
        %v2047 = vld [vmem:[%s2028 + $0x90] sm:$0xff]
        %v2048 = vld [vmem:[%s2028 + $0x98] sm:$0xff]
        %v2049 = vld [vmem:[%s2028 + $0xa0] sm:$0xff]
        %v2050 = vld [vmem:[%s2028 + $0xa8] sm:$0xff]
        %v2051 = vld [vmem:[%s2028 + $0xb0] sm:$0xff]
        %v2052 = vld [vmem:[%s2028 + $0xb8] sm:$0xff]
        %v2053 = vld [vmem:[%s2028 + $0xc0] sm:$0xff]
        %v2054 = vld [vmem:[%s2028 + $0xc8] sm:$0xff]
        %v2055 = vld [vmem:[%s2028 + $0xd0] sm:$0xff]
        %v2056 = vld [vmem:[%s2028 + $0xd8] sm:$0xff]
        %v2057 = vld [vmem:[%s2028 + $0xe0] sm:$0xff]
        %v2058 = vld [vmem:[%s2028 + $0xe8] sm:$0xff]
        %v2059 = vld [vmem:[%s2028 + $0xf0] sm:$0xff]
        %v2060 = vld [vmem:[%s2028 + $0xf8] sm:$0xff]
        %v2061 = vld [vmem:[%s2028 + $0x100] sm:$0xff]
        %v2062 = vld [vmem:[%s2028 + $0x108] sm:$0xff]
        %v2063 = vld [vmem:[%s2028 + $0x110] sm:$0xff]
        %v2064 = vld [vmem:[%s2028 + $0x118] sm:$0xff]
        %v2101 = vunpack.c.l.b16 %v2029
        %v2102 = vunpack.c.h.b16 %v2029
        %v2103 = vunpack.c.l.b16 %v2030
        %v2104 = vunpack.c.h.b16 %v2030
        %v2105 = vunpack.c.l.b16 %v2031
        %v2106 = vunpack.c.h.b16 %v2031
        %v2107 = vunpack.c.l.b16 %v2032
        %v2108 = vunpack.c.h.b16 %v2032
        %v2109 = vunpack.c.l.b16 %v2033
        %v2110 = vunpack.c.h.b16 %v2033
        %v2111 = vunpack.c.l.b16 %v2034
        %v2112 = vunpack.c.h.b16 %v2034
        %v2113 = vunpack.c.l.b16 %v2035
        %v2114 = vunpack.c.h.b16 %v2035
        %v2115 = vunpack.c.l.b16 %v2036
        %v2116 = vunpack.c.h.b16 %v2036
        %v2117 = vunpack.c.l.b16 %v2037
        %v2118 = vunpack.c.h.b16 %v2037
        %v2119 = vunpack.c.l.b16 %v2038
        %v2120 = vunpack.c.h.b16 %v2038
        %v2121 = vunpack.c.l.b16 %v2039
        %v2122 = vunpack.c.h.b16 %v2039
        %v2123 = vunpack.c.l.b16 %v2040
        %v2124 = vunpack.c.h.b16 %v2040
        %v2125 = vunpack.c.l.b16 %v2041
        %v2126 = vunpack.c.h.b16 %v2041
        %v2127 = vunpack.c.l.b16 %v2042
        %v2128 = vunpack.c.h.b16 %v2042
        %v2129 = vunpack.c.l.b16 %v2043
        %v2130 = vunpack.c.h.b16 %v2043
        %v2131 = vunpack.c.l.b16 %v2044
        %v2132 = vunpack.c.h.b16 %v2044
        %v2133 = vunpack.c.l.b16 %v2045
        %v2134 = vunpack.c.h.b16 %v2045
        %v2135 = vunpack.c.l.b16 %v2046
        %v2136 = vunpack.c.h.b16 %v2046
        %v2137 = vunpack.c.l.b16 %v2047
        %v2138 = vunpack.c.h.b16 %v2047
        %v2139 = vunpack.c.l.b16 %v2048
        %v2140 = vunpack.c.h.b16 %v2048
        %v2141 = vunpack.c.l.b16 %v2049
        %v2142 = vunpack.c.h.b16 %v2049
        %v2143 = vunpack.c.l.b16 %v2050
        %v2144 = vunpack.c.h.b16 %v2050
        %v2145 = vunpack.c.l.b16 %v2051
        %v2146 = vunpack.c.h.b16 %v2051
        %v2147 = vunpack.c.l.b16 %v2052
        %v2148 = vunpack.c.h.b16 %v2052
        %v2149 = vunpack.c.l.b16 %v2053
        %v2150 = vunpack.c.h.b16 %v2053
        %v2151 = vunpack.c.l.b16 %v2054
        %v2152 = vunpack.c.h.b16 %v2054
        %v2153 = vunpack.c.l.b16 %v2055
        %v2154 = vunpack.c.h.b16 %v2055
        %v2155 = vunpack.c.l.b16 %v2056
        %v2156 = vunpack.c.h.b16 %v2056
        %v2157 = vunpack.c.l.b16 %v2057
        %v2158 = vunpack.c.h.b16 %v2057
        %v2159 = vunpack.c.l.b16 %v2058
        %v2160 = vunpack.c.h.b16 %v2058
        %v2161 = vunpack.c.l.b16 %v2059
        %v2162 = vunpack.c.h.b16 %v2059
        %v2163 = vunpack.c.l.b16 %v2060
        %v2164 = vunpack.c.h.b16 %v2060
        %v2165 = vunpack.c.l.b16 %v2061
        %v2166 = vunpack.c.h.b16 %v2061
        %v2167 = vunpack.c.l.b16 %v2062
        %v2168 = vunpack.c.h.b16 %v2062
        %v2169 = vunpack.c.l.b16 %v2063
        %v2170 = vunpack.c.h.b16 %v2063
        %v2171 = vunpack.c.l.b16 %v2064
        %v2172 = vunpack.c.h.b16 %v2064
        %v2173 = vpack.c.b16 %v2103, %v2101
        %v2174 = vpack.c.b16 %v2104, %v2102
        %v2175 = vpack.c.b16 %v2107, %v2105
        %v2176 = vpack.c.b16 %v2108, %v2106
        %v2177 = vpack.c.b16 %v2111, %v2109
        %v2178 = vpack.c.b16 %v2112, %v2110
        %v2179 = vpack.c.b16 %v2115, %v2113
        %v2180 = vpack.c.b16 %v2116, %v2114
        %v2181 = vpack.c.b16 %v2119, %v2117
        %v2182 = vpack.c.b16 %v2120, %v2118
        %v2183 = vpack.c.b16 %v2123, %v2121
        %v2184 = vpack.c.b16 %v2124, %v2122
        %v2185 = vpack.c.b16 %v2127, %v2125
        %v2186 = vpack.c.b16 %v2128, %v2126
        %v2187 = vpack.c.b16 %v2131, %v2129
        %v2188 = vpack.c.b16 %v2132, %v2130
        %v2189 = vpack.c.b16 %v2135, %v2133
        %v2190 = vpack.c.b16 %v2136, %v2134
        %v2191 = vpack.c.b16 %v2139, %v2137
        %v2192 = vpack.c.b16 %v2140, %v2138
        %v2193 = vpack.c.b16 %v2143, %v2141
        %v2194 = vpack.c.b16 %v2144, %v2142
        %v2195 = vpack.c.b16 %v2147, %v2145
        %v2196 = vpack.c.b16 %v2148, %v2146
        %v2197 = vpack.c.b16 %v2151, %v2149
        %v2198 = vpack.c.b16 %v2152, %v2150
        %v2199 = vpack.c.b16 %v2155, %v2153
        %v2200 = vpack.c.b16 %v2156, %v2154
        %v2201 = vpack.c.b16 %v2159, %v2157
        %v2202 = vpack.c.b16 %v2160, %v2158
        %v2203 = vpack.c.b16 %v2163, %v2161
        %v2204 = vpack.c.b16 %v2164, %v2162
        %v2205 = vpack.c.b16 %v2167, %v2165
        %v2206 = vpack.c.b16 %v2168, %v2166
        %v2207 = vpack.c.b16 %v2171, %v2169
        %v2208 = vpack.c.b16 %v2172, %v2170
        %v2246 = vsel %vm1069, %v726, 0
        %2248 = vmatprep.subr.bf16.mxu0 %v2174
        %2249 = vmatpush1.bf16.msra.mxu0 %v2173
        %2250 = vmatprep.subr.bf16.mxu0 %v2176
        %2251 = vmatpush1.bf16.msra.mxu0 %v2175
        %2252 = vmatprep.subr.bf16.mxu0 %v2178
        %2253 = vmatpush1.bf16.msra.mxu0 %v2177
        %2254 = vmatprep.subr.bf16.mxu0 %v2180
        %2255 = vmatpush1.bf16.msra.mxu0 %v2179
        %2256 = vmatprep.subr.bf16.mxu0 %v2182
        %2257 = vmatpush1.bf16.msra.mxu0 %v2181
        %2258 = vmatprep.subr.bf16.mxu0 %v2184
        %2259 = vmatpush1.bf16.msra.mxu0 %v2183
        %2260 = vmatprep.subr.bf16.mxu0 %v2186
        %2261 = vmatpush1.bf16.msra.mxu0 %v2185
        %2262 = vmatprep.subr.bf16.mxu0 %v2188
        %2263 = vmatpush1.bf16.msra.mxu0 %v2187
        %2264 = vmatprep.subr.bf16.mxu0 %v2190
        %2265 = vmatpush1.bf16.msra.mxu0 %v2189
        %2266 = vmatprep.subr.bf16.mxu0 %v2192
        %2267 = vmatpush1.bf16.msra.mxu0 %v2191
        %2268 = vmatprep.subr.bf16.mxu0 %v2194
        %2269 = vmatpush1.bf16.msra.mxu0 %v2193
        %2270 = vmatprep.subr.bf16.mxu0 %v2196
        %2271 = vmatpush1.bf16.msra.mxu0 %v2195
        %2272 = vmatprep.subr.bf16.mxu0 %v2198
        %2273 = vmatpush1.bf16.msra.mxu0 %v2197
        %2274 = vmatprep.subr.bf16.mxu0 %v2200
        %2275 = vmatpush1.bf16.msra.mxu0 %v2199
        %2276 = vmatprep.subr.bf16.mxu0 %v2202
        %2277 = vmatpush1.bf16.msra.mxu0 %v2201
        %2278 = vmatprep.subr.bf16.mxu0 %v2204
        %2279 = vmatpush1.bf16.msra.mxu0 %v2203
        %2280 = vmatprep.mubr.bf16.mxu0 %v725
        %2281 = vmatmul.mubr.bf16.gmra.mrb[0].mxu0 %v724
        %v2282 = vpop.f32.mrb[0].mxu0
        %v2283 = vadd.f32 0.0, %v2282
        %v2284 = vpop.f32.mrb[0].mxu0
        %v2285 = vadd.f32 0.0, %v2284
        %v2286 = vpop.f32.mrb[0].mxu0
        %v2287 = vpop.f32.mrb[0].mxu0
        %2288 = vdwg.mxu0
        %2289 = vmatprep.subr.bf16.mxu0 %v2206
        %2290 = vmatpush1.bf16.msra.mxu0 %v2205
        %2291 = vmatprep.subr.bf16.mxu0 %v2208
        %2292 = vmatpush1.bf16.msra.mxu0 %v2207
        %2293 = vmatprep.subr.bf16.mxu0 0
        %2294 = vmatpush1.bf16.msra.mxu0 0
        %2295 = vmatprep.subr.bf16.mxu0 0
        %2296 = vmatpush1.bf16.msra.mxu0 0
        %2297 = vmatprep.subr.bf16.mxu0 0
        %2298 = vmatpush1.bf16.msra.mxu0 0
        %2299 = vmatprep.subr.bf16.mxu0 0
        %2300 = vmatpush1.bf16.msra.mxu0 0
        %2301 = vmatprep.subr.bf16.mxu0 0
        %2302 = vmatpush1.bf16.msra.mxu0 0
        %2303 = vmatprep.subr.bf16.mxu0 0
        %2304 = vmatpush1.bf16.msra.mxu0 0
        %2305 = vmatprep.subr.bf16.mxu0 0
        %2306 = vmatpush1.bf16.msra.mxu0 0
        %2307 = vmatprep.subr.bf16.mxu0 0
        %2308 = vmatpush1.bf16.msra.mxu0 0
        %2309 = vmatprep.subr.bf16.mxu0 0
        %2310 = vmatpush1.bf16.msra.mxu0 0
        %2311 = vmatprep.subr.bf16.mxu0 0
        %2312 = vmatpush1.bf16.msra.mxu0 0
        %2313 = vmatprep.subr.bf16.mxu0 0
        %2314 = vmatpush1.bf16.msra.mxu0 0
        %2315 = vmatprep.subr.bf16.mxu0 0
        %2316 = vmatpush1.bf16.msra.mxu0 0
        %2317 = vmatprep.subr.bf16.mxu0 0
        %2318 = vmatpush1.bf16.msra.mxu0 0
        %2319 = vmatprep.subr.bf16.mxu0 0
        %2320 = vmatpush1.bf16.msra.mxu0 0
        %2321 = vmatprep.mubr.bf16.mxu0 0
        %2322 = vmatmul.mubr.bf16.gmra.mrb[0].mxu0 %v2246
        %v2323 = vpop.f32.mrb[0].mxu0
        %v2324 = vadd.f32 %v2283, %v2323
        %v2325 = vpop.f32.mrb[0].mxu0
        %v2326 = vadd.f32 %v2285, %v2325
        %v2327 = vpop.f32.mrb[0].mxu0
        %v2328 = vpop.f32.mrb[0].mxu0
        %2329 = vdwg.mxu0
        %v2330 = vadd.f32 %v2026, %v2324
        %v2331 = vadd.f32 %v2027, %v2326
        %2332 = vmatprep.subr.bf16.mxu0 %v998
        %2333 = vmatpush1.bf16.msra.mxu0 %v997
        %2334 = vmatprep.subr.bf16.mxu0 %v1000
        %2335 = vmatpush1.bf16.msra.mxu0 %v999
        %2336 = vmatprep.subr.bf16.mxu0 %v1002
        %2337 = vmatpush1.bf16.msra.mxu0 %v1001
        %2338 = vmatprep.subr.bf16.mxu0 %v1004
        %2339 = vmatpush1.bf16.msra.mxu0 %v1003
        %2340 = vmatprep.subr.bf16.mxu0 %v1006
        %2341 = vmatpush1.bf16.msra.mxu0 %v1005
        %2342 = vmatprep.subr.bf16.mxu0 %v1008
        %2343 = vmatpush1.bf16.msra.mxu0 %v1007
        %2344 = vmatprep.subr.bf16.mxu0 %v1010
        %2345 = vmatpush1.bf16.msra.mxu0 %v1009
        %2346 = vmatprep.subr.bf16.mxu0 %v1012
        %2347 = vmatpush1.bf16.msra.mxu0 %v1011
        %2348 = vmatprep.subr.bf16.mxu0 %v1014
        %2349 = vmatpush1.bf16.msra.mxu0 %v1013
        %2350 = vmatprep.subr.bf16.mxu0 %v1016
        %2351 = vmatpush1.bf16.msra.mxu0 %v1015
        %2352 = vmatprep.subr.bf16.mxu0 %v1018
        %2353 = vmatpush1.bf16.msra.mxu0 %v1017
        %2354 = vmatprep.subr.bf16.mxu0 %v1020
        %2355 = vmatpush1.bf16.msra.mxu0 %v1019
        %2356 = vmatprep.subr.bf16.mxu0 %v1022
        %2357 = vmatpush1.bf16.msra.mxu0 %v1021
        %2358 = vmatprep.subr.bf16.mxu0 %v1024
        %2359 = vmatpush1.bf16.msra.mxu0 %v1023
        %2360 = vmatprep.subr.bf16.mxu0 %v1026
        %2361 = vmatpush1.bf16.msra.mxu0 %v1025
        %2362 = vmatprep.subr.bf16.mxu0 %v1028
        %2363 = vmatpush1.bf16.msra.mxu0 %v1027
        %2364 = vmatprep.mubr.bf16.mxu0 %v547
        %2365 = vmatmul.mubr.bf16.gmra.mrb[0].mxu0 %v546
        %v2366 = vpop.f32.mrb[0].mxu0
        %v2367 = vadd.f32 0.0, %v2366
        %v2368 = vpop.f32.mrb[0].mxu0
        %v2369 = vadd.f32 0.0, %v2368
        %v2370 = vpop.f32.mrb[0].mxu0
        %v2371 = vpop.f32.mrb[0].mxu0
        %2372 = vdwg.mxu0
        %2373 = vmatprep.subr.bf16.mxu0 %v1030
        %2374 = vmatpush1.bf16.msra.mxu0 %v1029
        %2375 = vmatprep.subr.bf16.mxu0 %v1032
        %2376 = vmatpush1.bf16.msra.mxu0 %v1031
        %2377 = vmatprep.subr.bf16.mxu0 0
        %2378 = vmatpush1.bf16.msra.mxu0 0
        %2379 = vmatprep.subr.bf16.mxu0 0
        %2380 = vmatpush1.bf16.msra.mxu0 0
        %2381 = vmatprep.subr.bf16.mxu0 0
        %2382 = vmatpush1.bf16.msra.mxu0 0
        %2383 = vmatprep.subr.bf16.mxu0 0
        %2384 = vmatpush1.bf16.msra.mxu0 0
        %2385 = vmatprep.subr.bf16.mxu0 0
        %2386 = vmatpush1.bf16.msra.mxu0 0
        %2387 = vmatprep.subr.bf16.mxu0 0
        %2388 = vmatpush1.bf16.msra.mxu0 0
        %2389 = vmatprep.subr.bf16.mxu0 0
        %2390 = vmatpush1.bf16.msra.mxu0 0
        %2391 = vmatprep.subr.bf16.mxu0 0
        %2392 = vmatpush1.bf16.msra.mxu0 0
        %2393 = vmatprep.subr.bf16.mxu0 0
        %2394 = vmatpush1.bf16.msra.mxu0 0
        %2395 = vmatprep.subr.bf16.mxu0 0
        %2396 = vmatpush1.bf16.msra.mxu0 0
        %2397 = vmatprep.subr.bf16.mxu0 0
        %2398 = vmatpush1.bf16.msra.mxu0 0
        %2399 = vmatprep.subr.bf16.mxu0 0
        %2400 = vmatpush1.bf16.msra.mxu0 0
        %2401 = vmatprep.subr.bf16.mxu0 0
        %2402 = vmatpush1.bf16.msra.mxu0 0
        %2403 = vmatprep.subr.bf16.mxu0 0
        %2404 = vmatpush1.bf16.msra.mxu0 0
        %2405 = vmatprep.mubr.bf16.mxu0 0
        %2406 = vmatmul.mubr.bf16.gmra.mrb[0].mxu0 %v1638
        %v2407 = vpop.f32.mrb[0].mxu0
        %v2408 = vadd.f32 %v2367, %v2407
        %v2409 = vpop.f32.mrb[0].mxu0
        %v2410 = vadd.f32 %v2369, %v2409
        %v2411 = vpop.f32.mrb[0].mxu0
        %v2412 = vpop.f32.mrb[0].mxu0
        %2413 = vdwg.mxu0
        %2414 = vmatprep.subr.bf16.mxu0 %v1264
        %2415 = vmatpush1.bf16.msra.mxu0 %v1263
        %2416 = vmatprep.subr.bf16.mxu0 %v1266
        %2417 = vmatpush1.bf16.msra.mxu0 %v1265
        %2418 = vmatprep.subr.bf16.mxu0 %v1268
        %2419 = vmatpush1.bf16.msra.mxu0 %v1267
        %2420 = vmatprep.subr.bf16.mxu0 %v1270
        %2421 = vmatpush1.bf16.msra.mxu0 %v1269
        %2422 = vmatprep.subr.bf16.mxu0 %v1272
        %2423 = vmatpush1.bf16.msra.mxu0 %v1271
        %2424 = vmatprep.subr.bf16.mxu0 %v1274
        %2425 = vmatpush1.bf16.msra.mxu0 %v1273
        %2426 = vmatprep.subr.bf16.mxu0 %v1276
        %2427 = vmatpush1.bf16.msra.mxu0 %v1275
        %2428 = vmatprep.subr.bf16.mxu0 %v1278
        %2429 = vmatpush1.bf16.msra.mxu0 %v1277
        %2430 = vmatprep.subr.bf16.mxu0 %v1280
        %2431 = vmatpush1.bf16.msra.mxu0 %v1279
        %2432 = vmatprep.subr.bf16.mxu0 %v1282
        %2433 = vmatpush1.bf16.msra.mxu0 %v1281
        %2434 = vmatprep.subr.bf16.mxu0 %v1284
        %2435 = vmatpush1.bf16.msra.mxu0 %v1283
        %2436 = vmatprep.subr.bf16.mxu0 %v1286
        %2437 = vmatpush1.bf16.msra.mxu0 %v1285
        %2438 = vmatprep.subr.bf16.mxu0 %v1288
        %2439 = vmatpush1.bf16.msra.mxu0 %v1287
        %2440 = vmatprep.subr.bf16.mxu0 %v1290
        %2441 = vmatpush1.bf16.msra.mxu0 %v1289
        %2442 = vmatprep.subr.bf16.mxu0 %v1292
        %2443 = vmatpush1.bf16.msra.mxu0 %v1291
        %2444 = vmatprep.subr.bf16.mxu0 %v1294
        %2445 = vmatpush1.bf16.msra.mxu0 %v1293
        %2446 = vmatprep.mubr.bf16.mxu0 %v458
        %2447 = vmatmul.mubr.bf16.gmra.mrb[0].mxu0 %v457
        %v2448 = vpop.f32.mrb[0].mxu0
        %v2449 = vadd.f32 %v2408, %v2448
        %v2450 = vpop.f32.mrb[0].mxu0
        %v2451 = vadd.f32 %v2410, %v2450
        %v2452 = vpop.f32.mrb[0].mxu0
        %v2453 = vpop.f32.mrb[0].mxu0
        %2454 = vdwg.mxu0
        %2455 = vmatprep.subr.bf16.mxu0 %v1296
        %2456 = vmatpush1.bf16.msra.mxu0 %v1295
        %2457 = vmatprep.subr.bf16.mxu0 %v1298
        %2458 = vmatpush1.bf16.msra.mxu0 %v1297
        %2459 = vmatprep.subr.bf16.mxu0 0
        %2460 = vmatpush1.bf16.msra.mxu0 0
        %2461 = vmatprep.subr.bf16.mxu0 0
        %2462 = vmatpush1.bf16.msra.mxu0 0
        %2463 = vmatprep.subr.bf16.mxu0 0
        %2464 = vmatpush1.bf16.msra.mxu0 0
        %2465 = vmatprep.subr.bf16.mxu0 0
        %2466 = vmatpush1.bf16.msra.mxu0 0
        %2467 = vmatprep.subr.bf16.mxu0 0
        %2468 = vmatpush1.bf16.msra.mxu0 0
        %2469 = vmatprep.subr.bf16.mxu0 0
        %2470 = vmatpush1.bf16.msra.mxu0 0
        %2471 = vmatprep.subr.bf16.mxu0 0
        %2472 = vmatpush1.bf16.msra.mxu0 0
        %2473 = vmatprep.subr.bf16.mxu0 0
        %2474 = vmatpush1.bf16.msra.mxu0 0
        %2475 = vmatprep.subr.bf16.mxu0 0
        %2476 = vmatpush1.bf16.msra.mxu0 0
        %2477 = vmatprep.subr.bf16.mxu0 0
        %2478 = vmatpush1.bf16.msra.mxu0 0
        %2479 = vmatprep.subr.bf16.mxu0 0
        %2480 = vmatpush1.bf16.msra.mxu0 0
        %2481 = vmatprep.subr.bf16.mxu0 0
        %2482 = vmatpush1.bf16.msra.mxu0 0
        %2483 = vmatprep.subr.bf16.mxu0 0
        %2484 = vmatpush1.bf16.msra.mxu0 0
        %2485 = vmatprep.subr.bf16.mxu0 0
        %2486 = vmatpush1.bf16.msra.mxu0 0
        %2487 = vmatprep.mubr.bf16.mxu0 0
        %2488 = vmatmul.mubr.bf16.gmra.mrb[0].mxu0 %v1071
        %v2489 = vpop.f32.mrb[0].mxu0
        %v2490 = vadd.f32 %v2449, %v2489
        %v2491 = vpop.f32.mrb[0].mxu0
        %v2492 = vadd.f32 %v2451, %v2491
        %v2493 = vpop.f32.mrb[0].mxu0
        %v2494 = vpop.f32.mrb[0].mxu0
        %2495 = vdwg.mxu0
        %2496 = vmatprep.subr.bf16.mxu0 %v1566
        %2497 = vmatpush1.bf16.msra.mxu0 %v1565
        %2498 = vmatprep.subr.bf16.mxu0 %v1568
        %2499 = vmatpush1.bf16.msra.mxu0 %v1567
        %2500 = vmatprep.subr.bf16.mxu0 %v1570
        %2501 = vmatpush1.bf16.msra.mxu0 %v1569
        %2502 = vmatprep.subr.bf16.mxu0 %v1572
        %2503 = vmatpush1.bf16.msra.mxu0 %v1571
        %2504 = vmatprep.subr.bf16.mxu0 %v1574
        %2505 = vmatpush1.bf16.msra.mxu0 %v1573
        %2506 = vmatprep.subr.bf16.mxu0 %v1576
        %2507 = vmatpush1.bf16.msra.mxu0 %v1575
        %2508 = vmatprep.subr.bf16.mxu0 %v1578
        %2509 = vmatpush1.bf16.msra.mxu0 %v1577
        %2510 = vmatprep.subr.bf16.mxu0 %v1580
        %2511 = vmatpush1.bf16.msra.mxu0 %v1579
        %2512 = vmatprep.subr.bf16.mxu0 %v1582
        %2513 = vmatpush1.bf16.msra.mxu0 %v1581
        %2514 = vmatprep.subr.bf16.mxu0 %v1584
        %2515 = vmatpush1.bf16.msra.mxu0 %v1583
        %2516 = vmatprep.subr.bf16.mxu0 %v1586
        %2517 = vmatpush1.bf16.msra.mxu0 %v1585
        %2518 = vmatprep.subr.bf16.mxu0 %v1588
        %2519 = vmatpush1.bf16.msra.mxu0 %v1587
        %2520 = vmatprep.subr.bf16.mxu0 %v1590
        %2521 = vmatpush1.bf16.msra.mxu0 %v1589
        %2522 = vmatprep.subr.bf16.mxu0 %v1592
        %2523 = vmatpush1.bf16.msra.mxu0 %v1591
        %2524 = vmatprep.subr.bf16.mxu0 %v1594
        %2525 = vmatpush1.bf16.msra.mxu0 %v1593
        %2526 = vmatprep.subr.bf16.mxu0 %v1596
        %2527 = vmatpush1.bf16.msra.mxu0 %v1595
        %2528 = vmatprep.mubr.bf16.mxu0 %v636
        %2529 = vmatmul.mubr.bf16.gmra.mrb[0].mxu0 %v635
        %v2530 = vpop.f32.mrb[0].mxu0
        %v2531 = vadd.f32 0.0, %v2530
        %v2532 = vpop.f32.mrb[0].mxu0
        %v2533 = vadd.f32 0.0, %v2532
        %v2534 = vpop.f32.mrb[0].mxu0
        %v2535 = vpop.f32.mrb[0].mxu0
        %2536 = vdwg.mxu0
        %2537 = vmatprep.subr.bf16.mxu0 %v1598
        %2538 = vmatpush1.bf16.msra.mxu0 %v1597
        %2539 = vmatprep.subr.bf16.mxu0 %v1600
        %2540 = vmatpush1.bf16.msra.mxu0 %v1599
        %2541 = vmatprep.subr.bf16.mxu0 0
        %2542 = vmatpush1.bf16.msra.mxu0 0
        %2543 = vmatprep.subr.bf16.mxu0 0
        %2544 = vmatpush1.bf16.msra.mxu0 0
        %2545 = vmatprep.subr.bf16.mxu0 0
        %2546 = vmatpush1.bf16.msra.mxu0 0
        %2547 = vmatprep.subr.bf16.mxu0 0
        %2548 = vmatpush1.bf16.msra.mxu0 0
        %2549 = vmatprep.subr.bf16.mxu0 0
        %2550 = vmatpush1.bf16.msra.mxu0 0
        %2551 = vmatprep.subr.bf16.mxu0 0
        %2552 = vmatpush1.bf16.msra.mxu0 0
        %2553 = vmatprep.subr.bf16.mxu0 0
        %2554 = vmatpush1.bf16.msra.mxu0 0
        %2555 = vmatprep.subr.bf16.mxu0 0
        %2556 = vmatpush1.bf16.msra.mxu0 0
        %2557 = vmatprep.subr.bf16.mxu0 0
        %2558 = vmatpush1.bf16.msra.mxu0 0
        %2559 = vmatprep.subr.bf16.mxu0 0
        %2560 = vmatpush1.bf16.msra.mxu0 0
        %2561 = vmatprep.subr.bf16.mxu0 0
        %2562 = vmatpush1.bf16.msra.mxu0 0
        %2563 = vmatprep.subr.bf16.mxu0 0
        %2564 = vmatpush1.bf16.msra.mxu0 0
        %2565 = vmatprep.subr.bf16.mxu0 0
        %2566 = vmatpush1.bf16.msra.mxu0 0
        %2567 = vmatprep.subr.bf16.mxu0 0
        %2568 = vmatpush1.bf16.msra.mxu0 0
        %2569 = vmatprep.mubr.bf16.mxu0 0
        %2570 = vmatmul.mubr.bf16.gmra.mrb[0].mxu0 %v1942
        %v2571 = vpop.f32.mrb[0].mxu0
        %v2572 = vadd.f32 %v2531, %v2571
        %v2573 = vpop.f32.mrb[0].mxu0
        %v2574 = vadd.f32 %v2533, %v2573
        %v2575 = vpop.f32.mrb[0].mxu0
        %v2576 = vpop.f32.mrb[0].mxu0
        %2577 = vdwg.mxu0
        %v2578 = vadd.f32 %v2490, %v2572
        %v2579 = vadd.f32 %v2492, %v2574
        %2580 = vmatprep.subr.bf16.mxu0 %v1870
        %2581 = vmatpush1.bf16.msra.mxu0 %v1869
        %2582 = vmatprep.subr.bf16.mxu0 %v1872
        %2583 = vmatpush1.bf16.msra.mxu0 %v1871
        %2584 = vmatprep.subr.bf16.mxu0 %v1874
        %2585 = vmatpush1.bf16.msra.mxu0 %v1873
        %2586 = vmatprep.subr.bf16.mxu0 %v1876
        %2587 = vmatpush1.bf16.msra.mxu0 %v1875
        %2588 = vmatprep.subr.bf16.mxu0 %v1878
        %2589 = vmatpush1.bf16.msra.mxu0 %v1877
        %2590 = vmatprep.subr.bf16.mxu0 %v1880
        %2591 = vmatpush1.bf16.msra.mxu0 %v1879
        %2592 = vmatprep.subr.bf16.mxu0 %v1882
        %2593 = vmatpush1.bf16.msra.mxu0 %v1881
        %2594 = vmatprep.subr.bf16.mxu0 %v1884
        %2595 = vmatpush1.bf16.msra.mxu0 %v1883
        %2596 = vmatprep.subr.bf16.mxu0 %v1886
        %2597 = vmatpush1.bf16.msra.mxu0 %v1885
        %2598 = vmatprep.subr.bf16.mxu0 %v1888
        %2599 = vmatpush1.bf16.msra.mxu0 %v1887
        %2600 = vmatprep.subr.bf16.mxu0 %v1890
        %2601 = vmatpush1.bf16.msra.mxu0 %v1889
        %2602 = vmatprep.subr.bf16.mxu0 %v1892
        %2603 = vmatpush1.bf16.msra.mxu0 %v1891
        %2604 = vmatprep.subr.bf16.mxu0 %v1894
        %2605 = vmatpush1.bf16.msra.mxu0 %v1893
        %2606 = vmatprep.subr.bf16.mxu0 %v1896
        %2607 = vmatpush1.bf16.msra.mxu0 %v1895
        %2608 = vmatprep.subr.bf16.mxu0 %v1898
        %2609 = vmatpush1.bf16.msra.mxu0 %v1897
        %2610 = vmatprep.subr.bf16.mxu0 %v1900
        %2611 = vmatpush1.bf16.msra.mxu0 %v1899
        %2612 = vmatprep.mubr.bf16.mxu0 %v725
        %2613 = vmatmul.mubr.bf16.gmra.mrb[0].mxu0 %v724
        %v2614 = vpop.f32.mrb[0].mxu0
        %v2615 = vadd.f32 0.0, %v2614
        %v2616 = vpop.f32.mrb[0].mxu0
        %v2617 = vadd.f32 0.0, %v2616
        %v2618 = vpop.f32.mrb[0].mxu0
        %v2619 = vpop.f32.mrb[0].mxu0
        %2620 = vdwg.mxu0
        %2621 = vmatprep.subr.bf16.mxu0 %v1902
        %2622 = vmatpush1.bf16.msra.mxu0 %v1901
        %2623 = vmatprep.subr.bf16.mxu0 %v1904
        %2624 = vmatpush1.bf16.msra.mxu0 %v1903
        %2625 = vmatprep.subr.bf16.mxu0 0
        %2626 = vmatpush1.bf16.msra.mxu0 0
        %2627 = vmatprep.subr.bf16.mxu0 0
        %2628 = vmatpush1.bf16.msra.mxu0 0
        %2629 = vmatprep.subr.bf16.mxu0 0
        %2630 = vmatpush1.bf16.msra.mxu0 0
        %2631 = vmatprep.subr.bf16.mxu0 0
        %2632 = vmatpush1.bf16.msra.mxu0 0
        %2633 = vmatprep.subr.bf16.mxu0 0
        %2634 = vmatpush1.bf16.msra.mxu0 0
        %2635 = vmatprep.subr.bf16.mxu0 0
        %2636 = vmatpush1.bf16.msra.mxu0 0
        %2637 = vmatprep.subr.bf16.mxu0 0
        %2638 = vmatpush1.bf16.msra.mxu0 0
        %2639 = vmatprep.subr.bf16.mxu0 0
        %2640 = vmatpush1.bf16.msra.mxu0 0
        %2641 = vmatprep.subr.bf16.mxu0 0
        %2642 = vmatpush1.bf16.msra.mxu0 0
        %2643 = vmatprep.subr.bf16.mxu0 0
        %2644 = vmatpush1.bf16.msra.mxu0 0
        %2645 = vmatprep.subr.bf16.mxu0 0
        %2646 = vmatpush1.bf16.msra.mxu0 0
        %2647 = vmatprep.subr.bf16.mxu0 0
        %2648 = vmatpush1.bf16.msra.mxu0 0
        %2649 = vmatprep.subr.bf16.mxu0 0
        %2650 = vmatpush1.bf16.msra.mxu0 0
        %2651 = vmatprep.subr.bf16.mxu0 0
        %2652 = vmatpush1.bf16.msra.mxu0 0
        %2653 = vmatprep.mubr.bf16.mxu0 0
        %2654 = vmatmul.mubr.bf16.gmra.mrb[0].mxu0 %v2246
        %v2655 = vpop.f32.mrb[0].mxu0
        %v2656 = vadd.f32 %v2615, %v2655
        %v2657 = vpop.f32.mrb[0].mxu0
        %v2658 = vadd.f32 %v2617, %v2657
        %v2659 = vpop.f32.mrb[0].mxu0
        %v2660 = vpop.f32.mrb[0].mxu0
        %2661 = vdwg.mxu0
        %v2662 = vadd.f32 %v2578, %v2656
        %v2663 = vadd.f32 %v2579, %v2658
        %v2665 = vsel %vm1069, %v815, 0
        %2667 = vmatprep.subr.bf16.mxu0 %v2174
        %2668 = vmatpush1.bf16.msra.mxu0 %v2173
        %2669 = vmatprep.subr.bf16.mxu0 %v2176
        %2670 = vmatpush1.bf16.msra.mxu0 %v2175
        %2671 = vmatprep.subr.bf16.mxu0 %v2178
        %2672 = vmatpush1.bf16.msra.mxu0 %v2177
        %2673 = vmatprep.subr.bf16.mxu0 %v2180
        %2674 = vmatpush1.bf16.msra.mxu0 %v2179
        %2675 = vmatprep.subr.bf16.mxu0 %v2182
        %2676 = vmatpush1.bf16.msra.mxu0 %v2181
        %2677 = vmatprep.subr.bf16.mxu0 %v2184
        %2678 = vmatpush1.bf16.msra.mxu0 %v2183
        %2679 = vmatprep.subr.bf16.mxu0 %v2186
        %2680 = vmatpush1.bf16.msra.mxu0 %v2185
        %2681 = vmatprep.subr.bf16.mxu0 %v2188
        %2682 = vmatpush1.bf16.msra.mxu0 %v2187
        %2683 = vmatprep.subr.bf16.mxu0 %v2190
        %2684 = vmatpush1.bf16.msra.mxu0 %v2189
        %2685 = vmatprep.subr.bf16.mxu0 %v2192
        %2686 = vmatpush1.bf16.msra.mxu0 %v2191
        %2687 = vmatprep.subr.bf16.mxu0 %v2194
        %2688 = vmatpush1.bf16.msra.mxu0 %v2193
        %2689 = vmatprep.subr.bf16.mxu0 %v2196
        %2690 = vmatpush1.bf16.msra.mxu0 %v2195
        %2691 = vmatprep.subr.bf16.mxu0 %v2198
        %2692 = vmatpush1.bf16.msra.mxu0 %v2197
        %2693 = vmatprep.subr.bf16.mxu0 %v2200
        %2694 = vmatpush1.bf16.msra.mxu0 %v2199
        %2695 = vmatprep.subr.bf16.mxu0 %v2202
        %2696 = vmatpush1.bf16.msra.mxu0 %v2201
        %2697 = vmatprep.subr.bf16.mxu0 %v2204
        %2698 = vmatpush1.bf16.msra.mxu0 %v2203
        %2699 = vmatprep.mubr.bf16.mxu0 %v814
        %2700 = vmatmul.mubr.bf16.gmra.mrb[0].mxu0 %v813
        %v2701 = vpop.f32.mrb[0].mxu0
        %v2702 = vadd.f32 0.0, %v2701
        %v2703 = vpop.f32.mrb[0].mxu0
        %v2704 = vadd.f32 0.0, %v2703
        %v2705 = vpop.f32.mrb[0].mxu0
        %v2706 = vpop.f32.mrb[0].mxu0
        %2707 = vdwg.mxu0
        %2708 = vmatprep.subr.bf16.mxu0 %v2206
        %2709 = vmatpush1.bf16.msra.mxu0 %v2205
        %2710 = vmatprep.subr.bf16.mxu0 %v2208
        %2711 = vmatpush1.bf16.msra.mxu0 %v2207
        %2712 = vmatprep.subr.bf16.mxu0 0
        %2713 = vmatpush1.bf16.msra.mxu0 0
        %2714 = vmatprep.subr.bf16.mxu0 0
        %2715 = vmatpush1.bf16.msra.mxu0 0
        %2716 = vmatprep.subr.bf16.mxu0 0
        %2717 = vmatpush1.bf16.msra.mxu0 0
        %2718 = vmatprep.subr.bf16.mxu0 0
        %2719 = vmatpush1.bf16.msra.mxu0 0
        %2720 = vmatprep.subr.bf16.mxu0 0
        %2721 = vmatpush1.bf16.msra.mxu0 0
        %2722 = vmatprep.subr.bf16.mxu0 0
        %2723 = vmatpush1.bf16.msra.mxu0 0
        %2724 = vmatprep.subr.bf16.mxu0 0
        %2725 = vmatpush1.bf16.msra.mxu0 0
        %2726 = vmatprep.subr.bf16.mxu0 0
        %2727 = vmatpush1.bf16.msra.mxu0 0
        %2728 = vmatprep.subr.bf16.mxu0 0
        %2729 = vmatpush1.bf16.msra.mxu0 0
        %2730 = vmatprep.subr.bf16.mxu0 0
        %2731 = vmatpush1.bf16.msra.mxu0 0
        %2732 = vmatprep.subr.bf16.mxu0 0
        %2733 = vmatpush1.bf16.msra.mxu0 0
        %2734 = vmatprep.subr.bf16.mxu0 0
        %2735 = vmatpush1.bf16.msra.mxu0 0
        %2736 = vmatprep.subr.bf16.mxu0 0
        %2737 = vmatpush1.bf16.msra.mxu0 0
        %2738 = vmatprep.subr.bf16.mxu0 0
        %2739 = vmatpush1.bf16.msra.mxu0 0
        %2740 = vmatprep.mubr.bf16.mxu0 0
        %2741 = vmatmul.mubr.bf16.gmra.mrb[0].mxu0 %v2665
        %v2742 = vpop.f32.mrb[0].mxu0
        %v2743 = vadd.f32 %v2702, %v2742
        %v2744 = vpop.f32.mrb[0].mxu0
        %v2745 = vadd.f32 %v2704, %v2744
        %v2746 = vpop.f32.mrb[0].mxu0
        %v2747 = vpop.f32.mrb[0].mxu0
        %2748 = vdwg.mxu0
        %v2749 = vadd.f32 %v2662, %v2743
        %v2750 = vadd.f32 %v2663, %v2745
        %v2751 = vmax.f32 %v2330, %v2749
        %v2752 = vmax.f32 %v2331, %v2750
        %s2753 = scalar_lea.vmem [#allocation4], 1440
        %v2754 = vld [vmem:[%s2753] sm:$0xff]
        %v2755 = vld [vmem:[%s2753 + $0x8] sm:$0xff]
        %v2756 = vld [vmem:[%s2753 + $0x10] sm:$0xff]
        %v2757 = vld [vmem:[%s2753 + $0x18] sm:$0xff]
        %v2758 = vld [vmem:[%s2753 + $0x20] sm:$0xff]
        %v2759 = vld [vmem:[%s2753 + $0x28] sm:$0xff]
        %v2760 = vld [vmem:[%s2753 + $0x30] sm:$0xff]
        %v2761 = vld [vmem:[%s2753 + $0x38] sm:$0xff]
        %v2762 = vld [vmem:[%s2753 + $0x40] sm:$0xff]
        %v2763 = vld [vmem:[%s2753 + $0x48] sm:$0xff]
        %v2764 = vld [vmem:[%s2753 + $0x50] sm:$0xff]
        %v2765 = vld [vmem:[%s2753 + $0x58] sm:$0xff]
        %v2766 = vld [vmem:[%s2753 + $0x60] sm:$0xff]
        %v2767 = vld [vmem:[%s2753 + $0x68] sm:$0xff]
        %v2768 = vld [vmem:[%s2753 + $0x70] sm:$0xff]
        %v2769 = vld [vmem:[%s2753 + $0x78] sm:$0xff]
        %v2770 = vld [vmem:[%s2753 + $0x80] sm:$0xff]
        %v2771 = vld [vmem:[%s2753 + $0x88] sm:$0xff]
        %v2772 = vld [vmem:[%s2753 + $0x90] sm:$0xff]
        %v2773 = vld [vmem:[%s2753 + $0x98] sm:$0xff]
        %v2774 = vld [vmem:[%s2753 + $0xa0] sm:$0xff]
        %v2775 = vld [vmem:[%s2753 + $0xa8] sm:$0xff]
        %v2776 = vld [vmem:[%s2753 + $0xb0] sm:$0xff]
        %v2777 = vld [vmem:[%s2753 + $0xb8] sm:$0xff]
        %v2778 = vld [vmem:[%s2753 + $0xc0] sm:$0xff]
        %v2779 = vld [vmem:[%s2753 + $0xc8] sm:$0xff]
        %v2780 = vld [vmem:[%s2753 + $0xd0] sm:$0xff]
        %v2781 = vld [vmem:[%s2753 + $0xd8] sm:$0xff]
        %v2782 = vld [vmem:[%s2753 + $0xe0] sm:$0xff]
        %v2783 = vld [vmem:[%s2753 + $0xe8] sm:$0xff]
        %v2784 = vld [vmem:[%s2753 + $0xf0] sm:$0xff]
        %v2785 = vld [vmem:[%s2753 + $0xf8] sm:$0xff]
        %v2786 = vld [vmem:[%s2753 + $0x100] sm:$0xff]
        %v2787 = vld [vmem:[%s2753 + $0x108] sm:$0xff]
        %v2788 = vld [vmem:[%s2753 + $0x110] sm:$0xff]
        %v2789 = vld [vmem:[%s2753 + $0x118] sm:$0xff]
        %s2790 = scalar_lea.vmem [#allocation4], 1728
        %v2791 = vld [vmem:[%s2790] sm:$0xff]
        %v2792 = vld [vmem:[%s2790 + $0x8] sm:$0xff]
        %v2793 = vld [vmem:[%s2790 + $0x10] sm:$0xff]
        %v2794 = vld [vmem:[%s2790 + $0x18] sm:$0xff]
        %v2795 = vld [vmem:[%s2790 + $0x20] sm:$0xff]
        %v2796 = vld [vmem:[%s2790 + $0x28] sm:$0xff]
        %v2797 = vld [vmem:[%s2790 + $0x30] sm:$0xff]
        %v2798 = vld [vmem:[%s2790 + $0x38] sm:$0xff]
        %v2799 = vld [vmem:[%s2790 + $0x40] sm:$0xff]
        %v2800 = vld [vmem:[%s2790 + $0x48] sm:$0xff]
        %v2801 = vld [vmem:[%s2790 + $0x50] sm:$0xff]
        %v2802 = vld [vmem:[%s2790 + $0x58] sm:$0xff]
        %v2803 = vld [vmem:[%s2790 + $0x60] sm:$0xff]
        %v2804 = vld [vmem:[%s2790 + $0x68] sm:$0xff]
        %v2805 = vld [vmem:[%s2790 + $0x70] sm:$0xff]
        %v2806 = vld [vmem:[%s2790 + $0x78] sm:$0xff]
        %v2807 = vld [vmem:[%s2790 + $0x80] sm:$0xff]
        %v2808 = vld [vmem:[%s2790 + $0x88] sm:$0xff]
        %v2809 = vld [vmem:[%s2790 + $0x90] sm:$0xff]
        %v2810 = vld [vmem:[%s2790 + $0x98] sm:$0xff]
        %v2811 = vld [vmem:[%s2790 + $0xa0] sm:$0xff]
        %v2812 = vld [vmem:[%s2790 + $0xa8] sm:$0xff]
        %v2813 = vld [vmem:[%s2790 + $0xb0] sm:$0xff]
        %v2814 = vld [vmem:[%s2790 + $0xb8] sm:$0xff]
        %v2815 = vld [vmem:[%s2790 + $0xc0] sm:$0xff]
        %v2816 = vld [vmem:[%s2790 + $0xc8] sm:$0xff]
        %v2817 = vld [vmem:[%s2790 + $0xd0] sm:$0xff]
        %v2818 = vld [vmem:[%s2790 + $0xd8] sm:$0xff]
        %v2819 = vld [vmem:[%s2790 + $0xe0] sm:$0xff]
        %v2820 = vld [vmem:[%s2790 + $0xe8] sm:$0xff]
        %v2821 = vld [vmem:[%s2790 + $0xf0] sm:$0xff]
        %v2822 = vld [vmem:[%s2790 + $0xf8] sm:$0xff]
        %v2823 = vld [vmem:[%s2790 + $0x100] sm:$0xff]
        %v2824 = vld [vmem:[%s2790 + $0x108] sm:$0xff]
        %v2825 = vld [vmem:[%s2790 + $0x110] sm:$0xff]
        %v2826 = vld [vmem:[%s2790 + $0x118] sm:$0xff]
        %v2863 = vunpack.c.l.b16 %v2791
        %v2864 = vunpack.c.h.b16 %v2791
        %v2865 = vunpack.c.l.b16 %v2792
        %v2866 = vunpack.c.h.b16 %v2792
        %v2867 = vunpack.c.l.b16 %v2793
        %v2868 = vunpack.c.h.b16 %v2793
        %v2869 = vunpack.c.l.b16 %v2794
        %v2870 = vunpack.c.h.b16 %v2794
        %v2871 = vunpack.c.l.b16 %v2795
        %v2872 = vunpack.c.h.b16 %v2795
        %v2873 = vunpack.c.l.b16 %v2796
        %v2874 = vunpack.c.h.b16 %v2796
        %v2875 = vunpack.c.l.b16 %v2797
        %v2876 = vunpack.c.h.b16 %v2797
        %v2877 = vunpack.c.l.b16 %v2798
        %v2878 = vunpack.c.h.b16 %v2798
        %v2879 = vunpack.c.l.b16 %v2799
        %v2880 = vunpack.c.h.b16 %v2799
        %v2881 = vunpack.c.l.b16 %v2800
        %v2882 = vunpack.c.h.b16 %v2800
        %v2883 = vunpack.c.l.b16 %v2801
        %v2884 = vunpack.c.h.b16 %v2801
        %v2885 = vunpack.c.l.b16 %v2802
        %v2886 = vunpack.c.h.b16 %v2802
        %v2887 = vunpack.c.l.b16 %v2803
        %v2888 = vunpack.c.h.b16 %v2803
        %v2889 = vunpack.c.l.b16 %v2804
        %v2890 = vunpack.c.h.b16 %v2804
        %v2891 = vunpack.c.l.b16 %v2805
        %v2892 = vunpack.c.h.b16 %v2805
        %v2893 = vunpack.c.l.b16 %v2806
        %v2894 = vunpack.c.h.b16 %v2806
        %v2895 = vunpack.c.l.b16 %v2807
        %v2896 = vunpack.c.h.b16 %v2807
        %v2897 = vunpack.c.l.b16 %v2808
        %v2898 = vunpack.c.h.b16 %v2808
        %v2899 = vunpack.c.l.b16 %v2809
        %v2900 = vunpack.c.h.b16 %v2809
        %v2901 = vunpack.c.l.b16 %v2810
        %v2902 = vunpack.c.h.b16 %v2810
        %v2903 = vunpack.c.l.b16 %v2811
        %v2904 = vunpack.c.h.b16 %v2811
        %v2905 = vunpack.c.l.b16 %v2812
        %v2906 = vunpack.c.h.b16 %v2812
        %v2907 = vunpack.c.l.b16 %v2813
        %v2908 = vunpack.c.h.b16 %v2813
        %v2909 = vunpack.c.l.b16 %v2814
        %v2910 = vunpack.c.h.b16 %v2814
        %v2911 = vunpack.c.l.b16 %v2815
        %v2912 = vunpack.c.h.b16 %v2815
        %v2913 = vunpack.c.l.b16 %v2816
        %v2914 = vunpack.c.h.b16 %v2816
        %v2915 = vunpack.c.l.b16 %v2817
        %v2916 = vunpack.c.h.b16 %v2817
        %v2917 = vunpack.c.l.b16 %v2818
        %v2918 = vunpack.c.h.b16 %v2818
        %v2919 = vunpack.c.l.b16 %v2819
        %v2920 = vunpack.c.h.b16 %v2819
        %v2921 = vunpack.c.l.b16 %v2820
        %v2922 = vunpack.c.h.b16 %v2820
        %v2923 = vunpack.c.l.b16 %v2821
        %v2924 = vunpack.c.h.b16 %v2821
        %v2925 = vunpack.c.l.b16 %v2822
        %v2926 = vunpack.c.h.b16 %v2822
        %v2927 = vunpack.c.l.b16 %v2823
        %v2928 = vunpack.c.h.b16 %v2823
        %v2929 = vunpack.c.l.b16 %v2824
        %v2930 = vunpack.c.h.b16 %v2824
        %v2931 = vunpack.c.l.b16 %v2825
        %v2932 = vunpack.c.h.b16 %v2825
        %v2933 = vunpack.c.l.b16 %v2826
        %v2934 = vunpack.c.h.b16 %v2826
        %v2935 = vpack.c.b16 %v2865, %v2863
        %v2936 = vpack.c.b16 %v2866, %v2864
        %v2937 = vpack.c.b16 %v2869, %v2867
        %v2938 = vpack.c.b16 %v2870, %v2868
        %v2939 = vpack.c.b16 %v2873, %v2871
        %v2940 = vpack.c.b16 %v2874, %v2872
        %v2941 = vpack.c.b16 %v2877, %v2875
        %v2942 = vpack.c.b16 %v2878, %v2876
        %v2943 = vpack.c.b16 %v2881, %v2879
        %v2944 = vpack.c.b16 %v2882, %v2880
        %v2945 = vpack.c.b16 %v2885, %v2883
        %v2946 = vpack.c.b16 %v2886, %v2884
        %v2947 = vpack.c.b16 %v2889, %v2887
        %v2948 = vpack.c.b16 %v2890, %v2888
        %v2949 = vpack.c.b16 %v2893, %v2891
        %v2950 = vpack.c.b16 %v2894, %v2892
        %v2951 = vpack.c.b16 %v2897, %v2895
        %v2952 = vpack.c.b16 %v2898, %v2896
        %v2953 = vpack.c.b16 %v2901, %v2899
        %v2954 = vpack.c.b16 %v2902, %v2900
        %v2955 = vpack.c.b16 %v2905, %v2903
        %v2956 = vpack.c.b16 %v2906, %v2904
        %v2957 = vpack.c.b16 %v2909, %v2907
        %v2958 = vpack.c.b16 %v2910, %v2908
        %v2959 = vpack.c.b16 %v2913, %v2911
        %v2960 = vpack.c.b16 %v2914, %v2912
        %v2961 = vpack.c.b16 %v2917, %v2915
        %v2962 = vpack.c.b16 %v2918, %v2916
        %v2963 = vpack.c.b16 %v2921, %v2919
        %v2964 = vpack.c.b16 %v2922, %v2920
        %v2965 = vpack.c.b16 %v2925, %v2923
        %v2966 = vpack.c.b16 %v2926, %v2924
        %v2967 = vpack.c.b16 %v2929, %v2927
        %v2968 = vpack.c.b16 %v2930, %v2928
        %v2969 = vpack.c.b16 %v2933, %v2931
        %v2970 = vpack.c.b16 %v2934, %v2932
        %3007 = vmatprep.subr.bf16.mxu0 %v2936
        %3008 = vmatpush1.bf16.msra.mxu0 %v2935
        %3009 = vmatprep.subr.bf16.mxu0 %v2938
        %3010 = vmatpush1.bf16.msra.mxu0 %v2937
        %3011 = vmatprep.subr.bf16.mxu0 %v2940
        %3012 = vmatpush1.bf16.msra.mxu0 %v2939
        %3013 = vmatprep.subr.bf16.mxu0 %v2942
        %3014 = vmatpush1.bf16.msra.mxu0 %v2941
        %3015 = vmatprep.subr.bf16.mxu0 %v2944
        %3016 = vmatpush1.bf16.msra.mxu0 %v2943
        %3017 = vmatprep.subr.bf16.mxu0 %v2946
        %3018 = vmatpush1.bf16.msra.mxu0 %v2945
        %3019 = vmatprep.subr.bf16.mxu0 %v2948
        %3020 = vmatpush1.bf16.msra.mxu0 %v2947
        %3021 = vmatprep.subr.bf16.mxu0 %v2950
        %3022 = vmatpush1.bf16.msra.mxu0 %v2949
        %3023 = vmatprep.subr.bf16.mxu0 %v2952
        %3024 = vmatpush1.bf16.msra.mxu0 %v2951
        %3025 = vmatprep.subr.bf16.mxu0 %v2954
        %3026 = vmatpush1.bf16.msra.mxu0 %v2953
        %3027 = vmatprep.subr.bf16.mxu0 %v2956
        %3028 = vmatpush1.bf16.msra.mxu0 %v2955
        %3029 = vmatprep.subr.bf16.mxu0 %v2958
        %3030 = vmatpush1.bf16.msra.mxu0 %v2957
        %3031 = vmatprep.subr.bf16.mxu0 %v2960
        %3032 = vmatpush1.bf16.msra.mxu0 %v2959
        %3033 = vmatprep.subr.bf16.mxu0 %v2962
        %3034 = vmatpush1.bf16.msra.mxu0 %v2961
        %3035 = vmatprep.subr.bf16.mxu0 %v2964
        %3036 = vmatpush1.bf16.msra.mxu0 %v2963
        %3037 = vmatprep.subr.bf16.mxu0 %v2966
        %3038 = vmatpush1.bf16.msra.mxu0 %v2965
        %3039 = vmatprep.mubr.bf16.mxu0 %v458
        %3040 = vmatmul.mubr.bf16.gmra.mrb[0].mxu0 %v457
        %v3041 = vpop.f32.mrb[0].mxu0
        %v3042 = vadd.f32 0.0, %v3041
        %v3043 = vpop.f32.mrb[0].mxu0
        %v3044 = vadd.f32 0.0, %v3043
        %v3045 = vpop.f32.mrb[0].mxu0
        %v3046 = vpop.f32.mrb[0].mxu0
        %3047 = vdwg.mxu0
        %3048 = vmatprep.subr.bf16.mxu0 %v2968
        %3049 = vmatpush1.bf16.msra.mxu0 %v2967
        %3050 = vmatprep.subr.bf16.mxu0 %v2970
        %3051 = vmatpush1.bf16.msra.mxu0 %v2969
        %3052 = vmatprep.subr.bf16.mxu0 0
        %3053 = vmatpush1.bf16.msra.mxu0 0
        %3054 = vmatprep.subr.bf16.mxu0 0
        %3055 = vmatpush1.bf16.msra.mxu0 0
        %3056 = vmatprep.subr.bf16.mxu0 0
        %3057 = vmatpush1.bf16.msra.mxu0 0
        %3058 = vmatprep.subr.bf16.mxu0 0
        %3059 = vmatpush1.bf16.msra.mxu0 0
        %3060 = vmatprep.subr.bf16.mxu0 0
        %3061 = vmatpush1.bf16.msra.mxu0 0
        %3062 = vmatprep.subr.bf16.mxu0 0
        %3063 = vmatpush1.bf16.msra.mxu0 0
        %3064 = vmatprep.subr.bf16.mxu0 0
        %3065 = vmatpush1.bf16.msra.mxu0 0
        %3066 = vmatprep.subr.bf16.mxu0 0
        %3067 = vmatpush1.bf16.msra.mxu0 0
        %3068 = vmatprep.subr.bf16.mxu0 0
        %3069 = vmatpush1.bf16.msra.mxu0 0
        %3070 = vmatprep.subr.bf16.mxu0 0
        %3071 = vmatpush1.bf16.msra.mxu0 0
        %3072 = vmatprep.subr.bf16.mxu0 0
        %3073 = vmatpush1.bf16.msra.mxu0 0
        %3074 = vmatprep.subr.bf16.mxu0 0
        %3075 = vmatpush1.bf16.msra.mxu0 0
        %3076 = vmatprep.subr.bf16.mxu0 0
        %3077 = vmatpush1.bf16.msra.mxu0 0
        %3078 = vmatprep.subr.bf16.mxu0 0
        %3079 = vmatpush1.bf16.msra.mxu0 0
        %3080 = vmatprep.mubr.bf16.mxu0 0
        %3081 = vmatmul.mubr.bf16.gmra.mrb[0].mxu0 %v1071
        %v3082 = vpop.f32.mrb[0].mxu0
        %v3083 = vadd.f32 %v3042, %v3082
        %v3084 = vpop.f32.mrb[0].mxu0
        %v3085 = vadd.f32 %v3044, %v3084
        %v3086 = vpop.f32.mrb[0].mxu0
        %v3087 = vpop.f32.mrb[0].mxu0
        %3088 = vdwg.mxu0
        %v3125 = vunpack.c.l.b16 %v2754
        %v3126 = vunpack.c.h.b16 %v2754
        %v3127 = vunpack.c.l.b16 %v2755
        %v3128 = vunpack.c.h.b16 %v2755
        %v3129 = vunpack.c.l.b16 %v2756
        %v3130 = vunpack.c.h.b16 %v2756
        %v3131 = vunpack.c.l.b16 %v2757
        %v3132 = vunpack.c.h.b16 %v2757
        %v3133 = vunpack.c.l.b16 %v2758
        %v3134 = vunpack.c.h.b16 %v2758
        %v3135 = vunpack.c.l.b16 %v2759
        %v3136 = vunpack.c.h.b16 %v2759
        %v3137 = vunpack.c.l.b16 %v2760
        %v3138 = vunpack.c.h.b16 %v2760
        %v3139 = vunpack.c.l.b16 %v2761
        %v3140 = vunpack.c.h.b16 %v2761
        %v3141 = vunpack.c.l.b16 %v2762
        %v3142 = vunpack.c.h.b16 %v2762
        %v3143 = vunpack.c.l.b16 %v2763
        %v3144 = vunpack.c.h.b16 %v2763
        %v3145 = vunpack.c.l.b16 %v2764
        %v3146 = vunpack.c.h.b16 %v2764
        %v3147 = vunpack.c.l.b16 %v2765
        %v3148 = vunpack.c.h.b16 %v2765
        %v3149 = vunpack.c.l.b16 %v2766
        %v3150 = vunpack.c.h.b16 %v2766
        %v3151 = vunpack.c.l.b16 %v2767
        %v3152 = vunpack.c.h.b16 %v2767
        %v3153 = vunpack.c.l.b16 %v2768
        %v3154 = vunpack.c.h.b16 %v2768
        %v3155 = vunpack.c.l.b16 %v2769
        %v3156 = vunpack.c.h.b16 %v2769
        %v3157 = vunpack.c.l.b16 %v2770
        %v3158 = vunpack.c.h.b16 %v2770
        %v3159 = vunpack.c.l.b16 %v2771
        %v3160 = vunpack.c.h.b16 %v2771
        %v3161 = vunpack.c.l.b16 %v2772
        %v3162 = vunpack.c.h.b16 %v2772
        %v3163 = vunpack.c.l.b16 %v2773
        %v3164 = vunpack.c.h.b16 %v2773
        %v3165 = vunpack.c.l.b16 %v2774
        %v3166 = vunpack.c.h.b16 %v2774
        %v3167 = vunpack.c.l.b16 %v2775
        %v3168 = vunpack.c.h.b16 %v2775
        %v3169 = vunpack.c.l.b16 %v2776
        %v3170 = vunpack.c.h.b16 %v2776
        %v3171 = vunpack.c.l.b16 %v2777
        %v3172 = vunpack.c.h.b16 %v2777
        %v3173 = vunpack.c.l.b16 %v2778
        %v3174 = vunpack.c.h.b16 %v2778
        %v3175 = vunpack.c.l.b16 %v2779
        %v3176 = vunpack.c.h.b16 %v2779
        %v3177 = vunpack.c.l.b16 %v2780
        %v3178 = vunpack.c.h.b16 %v2780
        %v3179 = vunpack.c.l.b16 %v2781
        %v3180 = vunpack.c.h.b16 %v2781
        %v3181 = vunpack.c.l.b16 %v2782
        %v3182 = vunpack.c.h.b16 %v2782
        %v3183 = vunpack.c.l.b16 %v2783
        %v3184 = vunpack.c.h.b16 %v2783
        %v3185 = vunpack.c.l.b16 %v2784
        %v3186 = vunpack.c.h.b16 %v2784
        %v3187 = vunpack.c.l.b16 %v2785
        %v3188 = vunpack.c.h.b16 %v2785
        %v3189 = vunpack.c.l.b16 %v2786
        %v3190 = vunpack.c.h.b16 %v2786
        %v3191 = vunpack.c.l.b16 %v2787
        %v3192 = vunpack.c.h.b16 %v2787
        %v3193 = vunpack.c.l.b16 %v2788
        %v3194 = vunpack.c.h.b16 %v2788
        %v3195 = vunpack.c.l.b16 %v2789
        %v3196 = vunpack.c.h.b16 %v2789
        %v3197 = vpack.c.b16 %v3127, %v3125
        %v3198 = vpack.c.b16 %v3128, %v3126
        %v3199 = vpack.c.b16 %v3131, %v3129
        %v3200 = vpack.c.b16 %v3132, %v3130
        %v3201 = vpack.c.b16 %v3135, %v3133
        %v3202 = vpack.c.b16 %v3136, %v3134
        %v3203 = vpack.c.b16 %v3139, %v3137
        %v3204 = vpack.c.b16 %v3140, %v3138
        %v3205 = vpack.c.b16 %v3143, %v3141
        %v3206 = vpack.c.b16 %v3144, %v3142
        %v3207 = vpack.c.b16 %v3147, %v3145
        %v3208 = vpack.c.b16 %v3148, %v3146
        %v3209 = vpack.c.b16 %v3151, %v3149
        %v3210 = vpack.c.b16 %v3152, %v3150
        %v3211 = vpack.c.b16 %v3155, %v3153
        %v3212 = vpack.c.b16 %v3156, %v3154
        %v3213 = vpack.c.b16 %v3159, %v3157
        %v3214 = vpack.c.b16 %v3160, %v3158
        %v3215 = vpack.c.b16 %v3163, %v3161
        %v3216 = vpack.c.b16 %v3164, %v3162
        %v3217 = vpack.c.b16 %v3167, %v3165
        %v3218 = vpack.c.b16 %v3168, %v3166
        %v3219 = vpack.c.b16 %v3171, %v3169
        %v3220 = vpack.c.b16 %v3172, %v3170
        %v3221 = vpack.c.b16 %v3175, %v3173
        %v3222 = vpack.c.b16 %v3176, %v3174
        %v3223 = vpack.c.b16 %v3179, %v3177
        %v3224 = vpack.c.b16 %v3180, %v3178
        %v3225 = vpack.c.b16 %v3183, %v3181
        %v3226 = vpack.c.b16 %v3184, %v3182
        %v3227 = vpack.c.b16 %v3187, %v3185
        %v3228 = vpack.c.b16 %v3188, %v3186
        %v3229 = vpack.c.b16 %v3191, %v3189
        %v3230 = vpack.c.b16 %v3192, %v3190
        %v3231 = vpack.c.b16 %v3195, %v3193
        %v3232 = vpack.c.b16 %v3196, %v3194
        %3269 = vmatprep.subr.bf16.mxu0 %v3198
        %3270 = vmatpush1.bf16.msra.mxu0 %v3197
        %3271 = vmatprep.subr.bf16.mxu0 %v3200
        %3272 = vmatpush1.bf16.msra.mxu0 %v3199
        %3273 = vmatprep.subr.bf16.mxu0 %v3202
        %3274 = vmatpush1.bf16.msra.mxu0 %v3201
        %3275 = vmatprep.subr.bf16.mxu0 %v3204
        %3276 = vmatpush1.bf16.msra.mxu0 %v3203
        %3277 = vmatprep.subr.bf16.mxu0 %v3206
        %3278 = vmatpush1.bf16.msra.mxu0 %v3205
        %3279 = vmatprep.subr.bf16.mxu0 %v3208
        %3280 = vmatpush1.bf16.msra.mxu0 %v3207
        %3281 = vmatprep.subr.bf16.mxu0 %v3210
        %3282 = vmatpush1.bf16.msra.mxu0 %v3209
        %3283 = vmatprep.subr.bf16.mxu0 %v3212
        %3284 = vmatpush1.bf16.msra.mxu0 %v3211
        %3285 = vmatprep.subr.bf16.mxu0 %v3214
        %3286 = vmatpush1.bf16.msra.mxu0 %v3213
        %3287 = vmatprep.subr.bf16.mxu0 %v3216
        %3288 = vmatpush1.bf16.msra.mxu0 %v3215
        %3289 = vmatprep.subr.bf16.mxu0 %v3218
        %3290 = vmatpush1.bf16.msra.mxu0 %v3217
        %3291 = vmatprep.subr.bf16.mxu0 %v3220
        %3292 = vmatpush1.bf16.msra.mxu0 %v3219
        %3293 = vmatprep.subr.bf16.mxu0 %v3222
        %3294 = vmatpush1.bf16.msra.mxu0 %v3221
        %3295 = vmatprep.subr.bf16.mxu0 %v3224
        %3296 = vmatpush1.bf16.msra.mxu0 %v3223
        %3297 = vmatprep.subr.bf16.mxu0 %v3226
        %3298 = vmatpush1.bf16.msra.mxu0 %v3225
        %3299 = vmatprep.subr.bf16.mxu0 %v3228
        %3300 = vmatpush1.bf16.msra.mxu0 %v3227
        %3301 = vmatprep.mubr.bf16.mxu0 %v369
        %3302 = vmatmul.mubr.bf16.gmra.mrb[0].mxu0 %v368
        %v3303 = vpop.f32.mrb[0].mxu0
        %v3304 = vadd.f32 %v3083, %v3303
        %v3305 = vpop.f32.mrb[0].mxu0
        %v3306 = vadd.f32 %v3085, %v3305
        %v3307 = vpop.f32.mrb[0].mxu0
        %v3308 = vpop.f32.mrb[0].mxu0
        %3309 = vdwg.mxu0
        %3310 = vmatprep.subr.bf16.mxu0 %v3230
        %3311 = vmatpush1.bf16.msra.mxu0 %v3229
        %3312 = vmatprep.subr.bf16.mxu0 %v3232
        %3313 = vmatpush1.bf16.msra.mxu0 %v3231
        %3314 = vmatprep.subr.bf16.mxu0 0
        %3315 = vmatpush1.bf16.msra.mxu0 0
        %3316 = vmatprep.subr.bf16.mxu0 0
        %3317 = vmatpush1.bf16.msra.mxu0 0
        %3318 = vmatprep.subr.bf16.mxu0 0
        %3319 = vmatpush1.bf16.msra.mxu0 0
        %3320 = vmatprep.subr.bf16.mxu0 0
        %3321 = vmatpush1.bf16.msra.mxu0 0
        %3322 = vmatprep.subr.bf16.mxu0 0
        %3323 = vmatpush1.bf16.msra.mxu0 0
        %3324 = vmatprep.subr.bf16.mxu0 0
        %3325 = vmatpush1.bf16.msra.mxu0 0
        %3326 = vmatprep.subr.bf16.mxu0 0
        %3327 = vmatpush1.bf16.msra.mxu0 0
        %3328 = vmatprep.subr.bf16.mxu0 0
        %3329 = vmatpush1.bf16.msra.mxu0 0
        %3330 = vmatprep.subr.bf16.mxu0 0
        %3331 = vmatpush1.bf16.msra.mxu0 0
        %3332 = vmatprep.subr.bf16.mxu0 0
        %3333 = vmatpush1.bf16.msra.mxu0 0
        %3334 = vmatprep.subr.bf16.mxu0 0
        %3335 = vmatpush1.bf16.msra.mxu0 0
        %3336 = vmatprep.subr.bf16.mxu0 0
        %3337 = vmatpush1.bf16.msra.mxu0 0
        %3338 = vmatprep.subr.bf16.mxu0 0
        %3339 = vmatpush1.bf16.msra.mxu0 0
        %3340 = vmatprep.subr.bf16.mxu0 0
        %3341 = vmatpush1.bf16.msra.mxu0 0
        %3342 = vmatprep.mubr.bf16.mxu0 0
        %3343 = vmatmul.mubr.bf16.gmra.mrb[0].mxu0 %v1336
        %v3344 = vpop.f32.mrb[0].mxu0
        %v3345 = vadd.f32 %v3304, %v3344
        %v3346 = vpop.f32.mrb[0].mxu0
        %v3347 = vadd.f32 %v3306, %v3346
        %v3348 = vpop.f32.mrb[0].mxu0
        %v3349 = vpop.f32.mrb[0].mxu0
        %3350 = vdwg.mxu0
        %s3351 = scalar_lea.vmem [#allocation4], 2016
        %v3352 = vld [vmem:[%s3351] sm:$0xff]
        %v3353 = vld [vmem:[%s3351 + $0x8] sm:$0xff]
        %v3354 = vld [vmem:[%s3351 + $0x10] sm:$0xff]
        %v3355 = vld [vmem:[%s3351 + $0x18] sm:$0xff]
        %v3356 = vld [vmem:[%s3351 + $0x20] sm:$0xff]
        %v3357 = vld [vmem:[%s3351 + $0x28] sm:$0xff]
        %v3358 = vld [vmem:[%s3351 + $0x30] sm:$0xff]
        %v3359 = vld [vmem:[%s3351 + $0x38] sm:$0xff]
        %v3360 = vld [vmem:[%s3351 + $0x40] sm:$0xff]
        %v3361 = vld [vmem:[%s3351 + $0x48] sm:$0xff]
        %v3362 = vld [vmem:[%s3351 + $0x50] sm:$0xff]
        %v3363 = vld [vmem:[%s3351 + $0x58] sm:$0xff]
        %v3364 = vld [vmem:[%s3351 + $0x60] sm:$0xff]
        %v3365 = vld [vmem:[%s3351 + $0x68] sm:$0xff]
        %v3366 = vld [vmem:[%s3351 + $0x70] sm:$0xff]
        %v3367 = vld [vmem:[%s3351 + $0x78] sm:$0xff]
        %v3368 = vld [vmem:[%s3351 + $0x80] sm:$0xff]
        %v3369 = vld [vmem:[%s3351 + $0x88] sm:$0xff]
        %v3370 = vld [vmem:[%s3351 + $0x90] sm:$0xff]
        %v3371 = vld [vmem:[%s3351 + $0x98] sm:$0xff]
        %v3372 = vld [vmem:[%s3351 + $0xa0] sm:$0xff]
        %v3373 = vld [vmem:[%s3351 + $0xa8] sm:$0xff]
        %v3374 = vld [vmem:[%s3351 + $0xb0] sm:$0xff]
        %v3375 = vld [vmem:[%s3351 + $0xb8] sm:$0xff]
        %v3376 = vld [vmem:[%s3351 + $0xc0] sm:$0xff]
        %v3377 = vld [vmem:[%s3351 + $0xc8] sm:$0xff]
        %v3378 = vld [vmem:[%s3351 + $0xd0] sm:$0xff]
        %v3379 = vld [vmem:[%s3351 + $0xd8] sm:$0xff]
        %v3380 = vld [vmem:[%s3351 + $0xe0] sm:$0xff]
        %v3381 = vld [vmem:[%s3351 + $0xe8] sm:$0xff]
        %v3382 = vld [vmem:[%s3351 + $0xf0] sm:$0xff]
        %v3383 = vld [vmem:[%s3351 + $0xf8] sm:$0xff]
        %v3384 = vld [vmem:[%s3351 + $0x100] sm:$0xff]
        %v3385 = vld [vmem:[%s3351 + $0x108] sm:$0xff]
        %v3386 = vld [vmem:[%s3351 + $0x110] sm:$0xff]
        %v3387 = vld [vmem:[%s3351 + $0x118] sm:$0xff]
        %v3424 = vunpack.c.l.b16 %v3352
        %v3425 = vunpack.c.h.b16 %v3352
        %v3426 = vunpack.c.l.b16 %v3353
        %v3427 = vunpack.c.h.b16 %v3353
        %v3428 = vunpack.c.l.b16 %v3354
        %v3429 = vunpack.c.h.b16 %v3354
        %v3430 = vunpack.c.l.b16 %v3355
        %v3431 = vunpack.c.h.b16 %v3355
        %v3432 = vunpack.c.l.b16 %v3356
        %v3433 = vunpack.c.h.b16 %v3356
        %v3434 = vunpack.c.l.b16 %v3357
        %v3435 = vunpack.c.h.b16 %v3357
        %v3436 = vunpack.c.l.b16 %v3358
        %v3437 = vunpack.c.h.b16 %v3358
        %v3438 = vunpack.c.l.b16 %v3359
        %v3439 = vunpack.c.h.b16 %v3359
        %v3440 = vunpack.c.l.b16 %v3360
        %v3441 = vunpack.c.h.b16 %v3360
        %v3442 = vunpack.c.l.b16 %v3361
        %v3443 = vunpack.c.h.b16 %v3361
        %v3444 = vunpack.c.l.b16 %v3362
        %v3445 = vunpack.c.h.b16 %v3362
        %v3446 = vunpack.c.l.b16 %v3363
        %v3447 = vunpack.c.h.b16 %v3363
        %v3448 = vunpack.c.l.b16 %v3364
        %v3449 = vunpack.c.h.b16 %v3364
        %v3450 = vunpack.c.l.b16 %v3365
        %v3451 = vunpack.c.h.b16 %v3365
        %v3452 = vunpack.c.l.b16 %v3366
        %v3453 = vunpack.c.h.b16 %v3366
        %v3454 = vunpack.c.l.b16 %v3367
        %v3455 = vunpack.c.h.b16 %v3367
        %v3456 = vunpack.c.l.b16 %v3368
        %v3457 = vunpack.c.h.b16 %v3368
        %v3458 = vunpack.c.l.b16 %v3369
        %v3459 = vunpack.c.h.b16 %v3369
        %v3460 = vunpack.c.l.b16 %v3370
        %v3461 = vunpack.c.h.b16 %v3370
        %v3462 = vunpack.c.l.b16 %v3371
        %v3463 = vunpack.c.h.b16 %v3371
        %v3464 = vunpack.c.l.b16 %v3372
        %v3465 = vunpack.c.h.b16 %v3372
        %v3466 = vunpack.c.l.b16 %v3373
        %v3467 = vunpack.c.h.b16 %v3373
        %v3468 = vunpack.c.l.b16 %v3374
        %v3469 = vunpack.c.h.b16 %v3374
        %v3470 = vunpack.c.l.b16 %v3375
        %v3471 = vunpack.c.h.b16 %v3375
        %v3472 = vunpack.c.l.b16 %v3376
        %v3473 = vunpack.c.h.b16 %v3376
        %v3474 = vunpack.c.l.b16 %v3377
        %v3475 = vunpack.c.h.b16 %v3377
        %v3476 = vunpack.c.l.b16 %v3378
        %v3477 = vunpack.c.h.b16 %v3378
        %v3478 = vunpack.c.l.b16 %v3379
        %v3479 = vunpack.c.h.b16 %v3379
        %v3480 = vunpack.c.l.b16 %v3380
        %v3481 = vunpack.c.h.b16 %v3380
        %v3482 = vunpack.c.l.b16 %v3381
        %v3483 = vunpack.c.h.b16 %v3381
        %v3484 = vunpack.c.l.b16 %v3382
        %v3485 = vunpack.c.h.b16 %v3382
        %v3486 = vunpack.c.l.b16 %v3383
        %v3487 = vunpack.c.h.b16 %v3383
        %v3488 = vunpack.c.l.b16 %v3384
        %v3489 = vunpack.c.h.b16 %v3384
        %v3490 = vunpack.c.l.b16 %v3385
        %v3491 = vunpack.c.h.b16 %v3385
        %v3492 = vunpack.c.l.b16 %v3386
        %v3493 = vunpack.c.h.b16 %v3386
        %v3494 = vunpack.c.l.b16 %v3387
        %v3495 = vunpack.c.h.b16 %v3387
        %v3496 = vpack.c.b16 %v3426, %v3424
        %v3497 = vpack.c.b16 %v3427, %v3425
        %v3498 = vpack.c.b16 %v3430, %v3428
        %v3499 = vpack.c.b16 %v3431, %v3429
        %v3500 = vpack.c.b16 %v3434, %v3432
        %v3501 = vpack.c.b16 %v3435, %v3433
        %v3502 = vpack.c.b16 %v3438, %v3436
        %v3503 = vpack.c.b16 %v3439, %v3437
        %v3504 = vpack.c.b16 %v3442, %v3440
        %v3505 = vpack.c.b16 %v3443, %v3441
        %v3506 = vpack.c.b16 %v3446, %v3444
        %v3507 = vpack.c.b16 %v3447, %v3445
        %v3508 = vpack.c.b16 %v3450, %v3448
        %v3509 = vpack.c.b16 %v3451, %v3449
        %v3510 = vpack.c.b16 %v3454, %v3452
        %v3511 = vpack.c.b16 %v3455, %v3453
        %v3512 = vpack.c.b16 %v3458, %v3456
        %v3513 = vpack.c.b16 %v3459, %v3457
        %v3514 = vpack.c.b16 %v3462, %v3460
        %v3515 = vpack.c.b16 %v3463, %v3461
        %v3516 = vpack.c.b16 %v3466, %v3464
        %v3517 = vpack.c.b16 %v3467, %v3465
        %v3518 = vpack.c.b16 %v3470, %v3468
        %v3519 = vpack.c.b16 %v3471, %v3469
        %v3520 = vpack.c.b16 %v3474, %v3472
        %v3521 = vpack.c.b16 %v3475, %v3473
        %v3522 = vpack.c.b16 %v3478, %v3476
        %v3523 = vpack.c.b16 %v3479, %v3477
        %v3524 = vpack.c.b16 %v3482, %v3480
        %v3525 = vpack.c.b16 %v3483, %v3481
        %v3526 = vpack.c.b16 %v3486, %v3484
        %v3527 = vpack.c.b16 %v3487, %v3485
        %v3528 = vpack.c.b16 %v3490, %v3488
        %v3529 = vpack.c.b16 %v3491, %v3489
        %v3530 = vpack.c.b16 %v3494, %v3492
        %v3531 = vpack.c.b16 %v3495, %v3493
        %3568 = vmatprep.subr.bf16.mxu0 %v3497
        %3569 = vmatpush1.bf16.msra.mxu0 %v3496
        %3570 = vmatprep.subr.bf16.mxu0 %v3499
        %3571 = vmatpush1.bf16.msra.mxu0 %v3498
        %3572 = vmatprep.subr.bf16.mxu0 %v3501
        %3573 = vmatpush1.bf16.msra.mxu0 %v3500
        %3574 = vmatprep.subr.bf16.mxu0 %v3503
        %3575 = vmatpush1.bf16.msra.mxu0 %v3502
        %3576 = vmatprep.subr.bf16.mxu0 %v3505
        %3577 = vmatpush1.bf16.msra.mxu0 %v3504
        %3578 = vmatprep.subr.bf16.mxu0 %v3507
        %3579 = vmatpush1.bf16.msra.mxu0 %v3506
        %3580 = vmatprep.subr.bf16.mxu0 %v3509
        %3581 = vmatpush1.bf16.msra.mxu0 %v3508
        %3582 = vmatprep.subr.bf16.mxu0 %v3511
        %3583 = vmatpush1.bf16.msra.mxu0 %v3510
        %3584 = vmatprep.subr.bf16.mxu0 %v3513
        %3585 = vmatpush1.bf16.msra.mxu0 %v3512
        %3586 = vmatprep.subr.bf16.mxu0 %v3515
        %3587 = vmatpush1.bf16.msra.mxu0 %v3514
        %3588 = vmatprep.subr.bf16.mxu0 %v3517
        %3589 = vmatpush1.bf16.msra.mxu0 %v3516
        %3590 = vmatprep.subr.bf16.mxu0 %v3519
        %3591 = vmatpush1.bf16.msra.mxu0 %v3518
        %3592 = vmatprep.subr.bf16.mxu0 %v3521
        %3593 = vmatpush1.bf16.msra.mxu0 %v3520
        %3594 = vmatprep.subr.bf16.mxu0 %v3523
        %3595 = vmatpush1.bf16.msra.mxu0 %v3522
        %3596 = vmatprep.subr.bf16.mxu0 %v3525
        %3597 = vmatpush1.bf16.msra.mxu0 %v3524
        %3598 = vmatprep.subr.bf16.mxu0 %v3527
        %3599 = vmatpush1.bf16.msra.mxu0 %v3526
        %3600 = vmatprep.mubr.bf16.mxu0 %v547
        %3601 = vmatmul.mubr.bf16.gmra.mrb[0].mxu0 %v546
        %v3602 = vpop.f32.mrb[0].mxu0
        %v3603 = vadd.f32 0.0, %v3602
        %v3604 = vpop.f32.mrb[0].mxu0
        %v3605 = vadd.f32 0.0, %v3604
        %v3606 = vpop.f32.mrb[0].mxu0
        %v3607 = vpop.f32.mrb[0].mxu0
        %3608 = vdwg.mxu0
        %3609 = vmatprep.subr.bf16.mxu0 %v3529
        %3610 = vmatpush1.bf16.msra.mxu0 %v3528
        %3611 = vmatprep.subr.bf16.mxu0 %v3531
        %3612 = vmatpush1.bf16.msra.mxu0 %v3530
        %3613 = vmatprep.subr.bf16.mxu0 0
        %3614 = vmatpush1.bf16.msra.mxu0 0
        %3615 = vmatprep.subr.bf16.mxu0 0
        %3616 = vmatpush1.bf16.msra.mxu0 0
        %3617 = vmatprep.subr.bf16.mxu0 0
        %3618 = vmatpush1.bf16.msra.mxu0 0
        %3619 = vmatprep.subr.bf16.mxu0 0
        %3620 = vmatpush1.bf16.msra.mxu0 0
        %3621 = vmatprep.subr.bf16.mxu0 0
        %3622 = vmatpush1.bf16.msra.mxu0 0
        %3623 = vmatprep.subr.bf16.mxu0 0
        %3624 = vmatpush1.bf16.msra.mxu0 0
        %3625 = vmatprep.subr.bf16.mxu0 0
        %3626 = vmatpush1.bf16.msra.mxu0 0
        %3627 = vmatprep.subr.bf16.mxu0 0
        %3628 = vmatpush1.bf16.msra.mxu0 0
        %3629 = vmatprep.subr.bf16.mxu0 0
        %3630 = vmatpush1.bf16.msra.mxu0 0
        %3631 = vmatprep.subr.bf16.mxu0 0
        %3632 = vmatpush1.bf16.msra.mxu0 0
        %3633 = vmatprep.subr.bf16.mxu0 0
        %3634 = vmatpush1.bf16.msra.mxu0 0
        %3635 = vmatprep.subr.bf16.mxu0 0
        %3636 = vmatpush1.bf16.msra.mxu0 0
        %3637 = vmatprep.subr.bf16.mxu0 0
        %3638 = vmatpush1.bf16.msra.mxu0 0
        %3639 = vmatprep.subr.bf16.mxu0 0
        %3640 = vmatpush1.bf16.msra.mxu0 0
        %3641 = vmatprep.mubr.bf16.mxu0 0
        %3642 = vmatmul.mubr.bf16.gmra.mrb[0].mxu0 %v1638
        %v3643 = vpop.f32.mrb[0].mxu0
        %v3644 = vadd.f32 %v3603, %v3643
        %v3645 = vpop.f32.mrb[0].mxu0
        %v3646 = vadd.f32 %v3605, %v3645
        %v3647 = vpop.f32.mrb[0].mxu0
        %v3648 = vpop.f32.mrb[0].mxu0
        %3649 = vdwg.mxu0
        %v3650 = vadd.f32 %v3345, %v3644
        %v3651 = vadd.f32 %v3347, %v3646
        %s3652 = scalar_lea.vmem [#allocation4], 2304
        %v3653 = vld [vmem:[%s3652] sm:$0xff]
        %v3654 = vld [vmem:[%s3652 + $0x8] sm:$0xff]
        %v3655 = vld [vmem:[%s3652 + $0x10] sm:$0xff]
        %v3656 = vld [vmem:[%s3652 + $0x18] sm:$0xff]
        %v3657 = vld [vmem:[%s3652 + $0x20] sm:$0xff]
        %v3658 = vld [vmem:[%s3652 + $0x28] sm:$0xff]
        %v3659 = vld [vmem:[%s3652 + $0x30] sm:$0xff]
        %v3660 = vld [vmem:[%s3652 + $0x38] sm:$0xff]
        %v3661 = vld [vmem:[%s3652 + $0x40] sm:$0xff]
        %v3662 = vld [vmem:[%s3652 + $0x48] sm:$0xff]
        %v3663 = vld [vmem:[%s3652 + $0x50] sm:$0xff]
        %v3664 = vld [vmem:[%s3652 + $0x58] sm:$0xff]
        %v3665 = vld [vmem:[%s3652 + $0x60] sm:$0xff]
        %v3666 = vld [vmem:[%s3652 + $0x68] sm:$0xff]
        %v3667 = vld [vmem:[%s3652 + $0x70] sm:$0xff]
        %v3668 = vld [vmem:[%s3652 + $0x78] sm:$0xff]
        %v3669 = vld [vmem:[%s3652 + $0x80] sm:$0xff]
        %v3670 = vld [vmem:[%s3652 + $0x88] sm:$0xff]
        %v3671 = vld [vmem:[%s3652 + $0x90] sm:$0xff]
        %v3672 = vld [vmem:[%s3652 + $0x98] sm:$0xff]
        %v3673 = vld [vmem:[%s3652 + $0xa0] sm:$0xff]
        %v3674 = vld [vmem:[%s3652 + $0xa8] sm:$0xff]
        %v3675 = vld [vmem:[%s3652 + $0xb0] sm:$0xff]
        %v3676 = vld [vmem:[%s3652 + $0xb8] sm:$0xff]
        %v3677 = vld [vmem:[%s3652 + $0xc0] sm:$0xff]
        %v3678 = vld [vmem:[%s3652 + $0xc8] sm:$0xff]
        %v3679 = vld [vmem:[%s3652 + $0xd0] sm:$0xff]
        %v3680 = vld [vmem:[%s3652 + $0xd8] sm:$0xff]
        %v3681 = vld [vmem:[%s3652 + $0xe0] sm:$0xff]
        %v3682 = vld [vmem:[%s3652 + $0xe8] sm:$0xff]
        %v3683 = vld [vmem:[%s3652 + $0xf0] sm:$0xff]
        %v3684 = vld [vmem:[%s3652 + $0xf8] sm:$0xff]
        %v3685 = vld [vmem:[%s3652 + $0x100] sm:$0xff]
        %v3686 = vld [vmem:[%s3652 + $0x108] sm:$0xff]
        %v3687 = vld [vmem:[%s3652 + $0x110] sm:$0xff]
        %v3688 = vld [vmem:[%s3652 + $0x118] sm:$0xff]
        %v3725 = vunpack.c.l.b16 %v3653
        %v3726 = vunpack.c.h.b16 %v3653
        %v3727 = vunpack.c.l.b16 %v3654
        %v3728 = vunpack.c.h.b16 %v3654
        %v3729 = vunpack.c.l.b16 %v3655
        %v3730 = vunpack.c.h.b16 %v3655
        %v3731 = vunpack.c.l.b16 %v3656
        %v3732 = vunpack.c.h.b16 %v3656
        %v3733 = vunpack.c.l.b16 %v3657
        %v3734 = vunpack.c.h.b16 %v3657
        %v3735 = vunpack.c.l.b16 %v3658
        %v3736 = vunpack.c.h.b16 %v3658
        %v3737 = vunpack.c.l.b16 %v3659
        %v3738 = vunpack.c.h.b16 %v3659
        %v3739 = vunpack.c.l.b16 %v3660
        %v3740 = vunpack.c.h.b16 %v3660
        %v3741 = vunpack.c.l.b16 %v3661
        %v3742 = vunpack.c.h.b16 %v3661
        %v3743 = vunpack.c.l.b16 %v3662
        %v3744 = vunpack.c.h.b16 %v3662
        %v3745 = vunpack.c.l.b16 %v3663
        %v3746 = vunpack.c.h.b16 %v3663
        %v3747 = vunpack.c.l.b16 %v3664
        %v3748 = vunpack.c.h.b16 %v3664
        %v3749 = vunpack.c.l.b16 %v3665
        %v3750 = vunpack.c.h.b16 %v3665
        %v3751 = vunpack.c.l.b16 %v3666
        %v3752 = vunpack.c.h.b16 %v3666
        %v3753 = vunpack.c.l.b16 %v3667
        %v3754 = vunpack.c.h.b16 %v3667
        %v3755 = vunpack.c.l.b16 %v3668
        %v3756 = vunpack.c.h.b16 %v3668
        %v3757 = vunpack.c.l.b16 %v3669
        %v3758 = vunpack.c.h.b16 %v3669
        %v3759 = vunpack.c.l.b16 %v3670
        %v3760 = vunpack.c.h.b16 %v3670
        %v3761 = vunpack.c.l.b16 %v3671
        %v3762 = vunpack.c.h.b16 %v3671
        %v3763 = vunpack.c.l.b16 %v3672
        %v3764 = vunpack.c.h.b16 %v3672
        %v3765 = vunpack.c.l.b16 %v3673
        %v3766 = vunpack.c.h.b16 %v3673
        %v3767 = vunpack.c.l.b16 %v3674
        %v3768 = vunpack.c.h.b16 %v3674
        %v3769 = vunpack.c.l.b16 %v3675
        %v3770 = vunpack.c.h.b16 %v3675
        %v3771 = vunpack.c.l.b16 %v3676
        %v3772 = vunpack.c.h.b16 %v3676
        %v3773 = vunpack.c.l.b16 %v3677
        %v3774 = vunpack.c.h.b16 %v3677
        %v3775 = vunpack.c.l.b16 %v3678
        %v3776 = vunpack.c.h.b16 %v3678
        %v3777 = vunpack.c.l.b16 %v3679
        %v3778 = vunpack.c.h.b16 %v3679
        %v3779 = vunpack.c.l.b16 %v3680
        %v3780 = vunpack.c.h.b16 %v3680
        %v3781 = vunpack.c.l.b16 %v3681
        %v3782 = vunpack.c.h.b16 %v3681
        %v3783 = vunpack.c.l.b16 %v3682
        %v3784 = vunpack.c.h.b16 %v3682
        %v3785 = vunpack.c.l.b16 %v3683
        %v3786 = vunpack.c.h.b16 %v3683
        %v3787 = vunpack.c.l.b16 %v3684
        %v3788 = vunpack.c.h.b16 %v3684
        %v3789 = vunpack.c.l.b16 %v3685
        %v3790 = vunpack.c.h.b16 %v3685
        %v3791 = vunpack.c.l.b16 %v3686
        %v3792 = vunpack.c.h.b16 %v3686
        %v3793 = vunpack.c.l.b16 %v3687
        %v3794 = vunpack.c.h.b16 %v3687
        %v3795 = vunpack.c.l.b16 %v3688
        %v3796 = vunpack.c.h.b16 %v3688
        %v3797 = vpack.c.b16 %v3727, %v3725
        %v3798 = vpack.c.b16 %v3728, %v3726
        %v3799 = vpack.c.b16 %v3731, %v3729
        %v3800 = vpack.c.b16 %v3732, %v3730
        %v3801 = vpack.c.b16 %v3735, %v3733
        %v3802 = vpack.c.b16 %v3736, %v3734
        %v3803 = vpack.c.b16 %v3739, %v3737
        %v3804 = vpack.c.b16 %v3740, %v3738
        %v3805 = vpack.c.b16 %v3743, %v3741
        %v3806 = vpack.c.b16 %v3744, %v3742
        %v3807 = vpack.c.b16 %v3747, %v3745
        %v3808 = vpack.c.b16 %v3748, %v3746
        %v3809 = vpack.c.b16 %v3751, %v3749
        %v3810 = vpack.c.b16 %v3752, %v3750
        %v3811 = vpack.c.b16 %v3755, %v3753
        %v3812 = vpack.c.b16 %v3756, %v3754
        %v3813 = vpack.c.b16 %v3759, %v3757
        %v3814 = vpack.c.b16 %v3760, %v3758
        %v3815 = vpack.c.b16 %v3763, %v3761
        %v3816 = vpack.c.b16 %v3764, %v3762
        %v3817 = vpack.c.b16 %v3767, %v3765
        %v3818 = vpack.c.b16 %v3768, %v3766
        %v3819 = vpack.c.b16 %v3771, %v3769
        %v3820 = vpack.c.b16 %v3772, %v3770
        %v3821 = vpack.c.b16 %v3775, %v3773
        %v3822 = vpack.c.b16 %v3776, %v3774
        %v3823 = vpack.c.b16 %v3779, %v3777
        %v3824 = vpack.c.b16 %v3780, %v3778
        %v3825 = vpack.c.b16 %v3783, %v3781
        %v3826 = vpack.c.b16 %v3784, %v3782
        %v3827 = vpack.c.b16 %v3787, %v3785
        %v3828 = vpack.c.b16 %v3788, %v3786
        %v3829 = vpack.c.b16 %v3791, %v3789
        %v3830 = vpack.c.b16 %v3792, %v3790
        %v3831 = vpack.c.b16 %v3795, %v3793
        %v3832 = vpack.c.b16 %v3796, %v3794
        %3869 = vmatprep.subr.bf16.mxu0 %v3798
        %3870 = vmatpush1.bf16.msra.mxu0 %v3797
        %3871 = vmatprep.subr.bf16.mxu0 %v3800
        %3872 = vmatpush1.bf16.msra.mxu0 %v3799
        %3873 = vmatprep.subr.bf16.mxu0 %v3802
        %3874 = vmatpush1.bf16.msra.mxu0 %v3801
        %3875 = vmatprep.subr.bf16.mxu0 %v3804
        %3876 = vmatpush1.bf16.msra.mxu0 %v3803
        %3877 = vmatprep.subr.bf16.mxu0 %v3806
        %3878 = vmatpush1.bf16.msra.mxu0 %v3805
        %3879 = vmatprep.subr.bf16.mxu0 %v3808
        %3880 = vmatpush1.bf16.msra.mxu0 %v3807
        %3881 = vmatprep.subr.bf16.mxu0 %v3810
        %3882 = vmatpush1.bf16.msra.mxu0 %v3809
        %3883 = vmatprep.subr.bf16.mxu0 %v3812
        %3884 = vmatpush1.bf16.msra.mxu0 %v3811
        %3885 = vmatprep.subr.bf16.mxu0 %v3814
        %3886 = vmatpush1.bf16.msra.mxu0 %v3813
        %3887 = vmatprep.subr.bf16.mxu0 %v3816
        %3888 = vmatpush1.bf16.msra.mxu0 %v3815
        %3889 = vmatprep.subr.bf16.mxu0 %v3818
        %3890 = vmatpush1.bf16.msra.mxu0 %v3817
        %3891 = vmatprep.subr.bf16.mxu0 %v3820
        %3892 = vmatpush1.bf16.msra.mxu0 %v3819
        %3893 = vmatprep.subr.bf16.mxu0 %v3822
        %3894 = vmatpush1.bf16.msra.mxu0 %v3821
        %3895 = vmatprep.subr.bf16.mxu0 %v3824
        %3896 = vmatpush1.bf16.msra.mxu0 %v3823
        %3897 = vmatprep.subr.bf16.mxu0 %v3826
        %3898 = vmatpush1.bf16.msra.mxu0 %v3825
        %3899 = vmatprep.subr.bf16.mxu0 %v3828
        %3900 = vmatpush1.bf16.msra.mxu0 %v3827
        %3901 = vmatprep.mubr.bf16.mxu0 %v636
        %3902 = vmatmul.mubr.bf16.gmra.mrb[0].mxu0 %v635
        %v3903 = vpop.f32.mrb[0].mxu0
        %v3904 = vadd.f32 0.0, %v3903
        %v3905 = vpop.f32.mrb[0].mxu0
        %v3906 = vadd.f32 0.0, %v3905
        %v3907 = vpop.f32.mrb[0].mxu0
        %v3908 = vpop.f32.mrb[0].mxu0
        %3909 = vdwg.mxu0
        %3910 = vmatprep.subr.bf16.mxu0 %v3830
        %3911 = vmatpush1.bf16.msra.mxu0 %v3829
        %3912 = vmatprep.subr.bf16.mxu0 %v3832
        %3913 = vmatpush1.bf16.msra.mxu0 %v3831
        %3914 = vmatprep.subr.bf16.mxu0 0
        %3915 = vmatpush1.bf16.msra.mxu0 0
        %3916 = vmatprep.subr.bf16.mxu0 0
        %3917 = vmatpush1.bf16.msra.mxu0 0
        %3918 = vmatprep.subr.bf16.mxu0 0
        %3919 = vmatpush1.bf16.msra.mxu0 0
        %3920 = vmatprep.subr.bf16.mxu0 0
        %3921 = vmatpush1.bf16.msra.mxu0 0
        %3922 = vmatprep.subr.bf16.mxu0 0
        %3923 = vmatpush1.bf16.msra.mxu0 0
        %3924 = vmatprep.subr.bf16.mxu0 0
        %3925 = vmatpush1.bf16.msra.mxu0 0
        %3926 = vmatprep.subr.bf16.mxu0 0
        %3927 = vmatpush1.bf16.msra.mxu0 0
        %3928 = vmatprep.subr.bf16.mxu0 0
        %3929 = vmatpush1.bf16.msra.mxu0 0
        %3930 = vmatprep.subr.bf16.mxu0 0
        %3931 = vmatpush1.bf16.msra.mxu0 0
        %3932 = vmatprep.subr.bf16.mxu0 0
        %3933 = vmatpush1.bf16.msra.mxu0 0
        %3934 = vmatprep.subr.bf16.mxu0 0
        %3935 = vmatpush1.bf16.msra.mxu0 0
        %3936 = vmatprep.subr.bf16.mxu0 0
        %3937 = vmatpush1.bf16.msra.mxu0 0
        %3938 = vmatprep.subr.bf16.mxu0 0
        %3939 = vmatpush1.bf16.msra.mxu0 0
        %3940 = vmatprep.subr.bf16.mxu0 0
        %3941 = vmatpush1.bf16.msra.mxu0 0
        %3942 = vmatprep.mubr.bf16.mxu0 0
        %3943 = vmatmul.mubr.bf16.gmra.mrb[0].mxu0 %v1942
        %v3944 = vpop.f32.mrb[0].mxu0
        %v3945 = vadd.f32 %v3904, %v3944
        %v3946 = vpop.f32.mrb[0].mxu0
        %v3947 = vadd.f32 %v3906, %v3946
        %v3948 = vpop.f32.mrb[0].mxu0
        %v3949 = vpop.f32.mrb[0].mxu0
        %3950 = vdwg.mxu0
        %v3951 = vadd.f32 %v3650, %v3945
        %v3952 = vadd.f32 %v3651, %v3947
        %s3953 = scalar_lea.vmem [#allocation4], 2592
        %v3954 = vld [vmem:[%s3953] sm:$0xff]
        %v3955 = vld [vmem:[%s3953 + $0x8] sm:$0xff]
        %v3956 = vld [vmem:[%s3953 + $0x10] sm:$0xff]
        %v3957 = vld [vmem:[%s3953 + $0x18] sm:$0xff]
        %v3958 = vld [vmem:[%s3953 + $0x20] sm:$0xff]
        %v3959 = vld [vmem:[%s3953 + $0x28] sm:$0xff]
        %v3960 = vld [vmem:[%s3953 + $0x30] sm:$0xff]
        %v3961 = vld [vmem:[%s3953 + $0x38] sm:$0xff]
        %v3962 = vld [vmem:[%s3953 + $0x40] sm:$0xff]
        %v3963 = vld [vmem:[%s3953 + $0x48] sm:$0xff]
        %v3964 = vld [vmem:[%s3953 + $0x50] sm:$0xff]
        %v3965 = vld [vmem:[%s3953 + $0x58] sm:$0xff]
        %v3966 = vld [vmem:[%s3953 + $0x60] sm:$0xff]
        %v3967 = vld [vmem:[%s3953 + $0x68] sm:$0xff]
        %v3968 = vld [vmem:[%s3953 + $0x70] sm:$0xff]
        %v3969 = vld [vmem:[%s3953 + $0x78] sm:$0xff]
        %v3970 = vld [vmem:[%s3953 + $0x80] sm:$0xff]
        %v3971 = vld [vmem:[%s3953 + $0x88] sm:$0xff]
        %v3972 = vld [vmem:[%s3953 + $0x90] sm:$0xff]
        %v3973 = vld [vmem:[%s3953 + $0x98] sm:$0xff]
        %v3974 = vld [vmem:[%s3953 + $0xa0] sm:$0xff]
        %v3975 = vld [vmem:[%s3953 + $0xa8] sm:$0xff]
        %v3976 = vld [vmem:[%s3953 + $0xb0] sm:$0xff]
        %v3977 = vld [vmem:[%s3953 + $0xb8] sm:$0xff]
        %v3978 = vld [vmem:[%s3953 + $0xc0] sm:$0xff]
        %v3979 = vld [vmem:[%s3953 + $0xc8] sm:$0xff]
        %v3980 = vld [vmem:[%s3953 + $0xd0] sm:$0xff]
        %v3981 = vld [vmem:[%s3953 + $0xd8] sm:$0xff]
        %v3982 = vld [vmem:[%s3953 + $0xe0] sm:$0xff]
        %v3983 = vld [vmem:[%s3953 + $0xe8] sm:$0xff]
        %v3984 = vld [vmem:[%s3953 + $0xf0] sm:$0xff]
        %v3985 = vld [vmem:[%s3953 + $0xf8] sm:$0xff]
        %v3986 = vld [vmem:[%s3953 + $0x100] sm:$0xff]
        %v3987 = vld [vmem:[%s3953 + $0x108] sm:$0xff]
        %v3988 = vld [vmem:[%s3953 + $0x110] sm:$0xff]
        %v3989 = vld [vmem:[%s3953 + $0x118] sm:$0xff]
        %v4026 = vunpack.c.l.b16 %v3954
        %v4027 = vunpack.c.h.b16 %v3954
        %v4028 = vunpack.c.l.b16 %v3955
        %v4029 = vunpack.c.h.b16 %v3955
        %v4030 = vunpack.c.l.b16 %v3956
        %v4031 = vunpack.c.h.b16 %v3956
        %v4032 = vunpack.c.l.b16 %v3957
        %v4033 = vunpack.c.h.b16 %v3957
        %v4034 = vunpack.c.l.b16 %v3958
        %v4035 = vunpack.c.h.b16 %v3958
        %v4036 = vunpack.c.l.b16 %v3959
        %v4037 = vunpack.c.h.b16 %v3959
        %v4038 = vunpack.c.l.b16 %v3960
        %v4039 = vunpack.c.h.b16 %v3960
        %v4040 = vunpack.c.l.b16 %v3961
        %v4041 = vunpack.c.h.b16 %v3961
        %v4042 = vunpack.c.l.b16 %v3962
        %v4043 = vunpack.c.h.b16 %v3962
        %v4044 = vunpack.c.l.b16 %v3963
        %v4045 = vunpack.c.h.b16 %v3963
        %v4046 = vunpack.c.l.b16 %v3964
        %v4047 = vunpack.c.h.b16 %v3964
        %v4048 = vunpack.c.l.b16 %v3965
        %v4049 = vunpack.c.h.b16 %v3965
        %v4050 = vunpack.c.l.b16 %v3966
        %v4051 = vunpack.c.h.b16 %v3966
        %v4052 = vunpack.c.l.b16 %v3967
        %v4053 = vunpack.c.h.b16 %v3967
        %v4054 = vunpack.c.l.b16 %v3968
        %v4055 = vunpack.c.h.b16 %v3968
        %v4056 = vunpack.c.l.b16 %v3969
        %v4057 = vunpack.c.h.b16 %v3969
        %v4058 = vunpack.c.l.b16 %v3970
        %v4059 = vunpack.c.h.b16 %v3970
        %v4060 = vunpack.c.l.b16 %v3971
        %v4061 = vunpack.c.h.b16 %v3971
        %v4062 = vunpack.c.l.b16 %v3972
        %v4063 = vunpack.c.h.b16 %v3972
        %v4064 = vunpack.c.l.b16 %v3973
        %v4065 = vunpack.c.h.b16 %v3973
        %v4066 = vunpack.c.l.b16 %v3974
        %v4067 = vunpack.c.h.b16 %v3974
        %v4068 = vunpack.c.l.b16 %v3975
        %v4069 = vunpack.c.h.b16 %v3975
        %v4070 = vunpack.c.l.b16 %v3976
        %v4071 = vunpack.c.h.b16 %v3976
        %v4072 = vunpack.c.l.b16 %v3977
        %v4073 = vunpack.c.h.b16 %v3977
        %v4074 = vunpack.c.l.b16 %v3978
        %v4075 = vunpack.c.h.b16 %v3978
        %v4076 = vunpack.c.l.b16 %v3979
        %v4077 = vunpack.c.h.b16 %v3979
        %v4078 = vunpack.c.l.b16 %v3980
        %v4079 = vunpack.c.h.b16 %v3980
        %v4080 = vunpack.c.l.b16 %v3981
        %v4081 = vunpack.c.h.b16 %v3981
        %v4082 = vunpack.c.l.b16 %v3982
        %v4083 = vunpack.c.h.b16 %v3982
        %v4084 = vunpack.c.l.b16 %v3983
        %v4085 = vunpack.c.h.b16 %v3983
        %v4086 = vunpack.c.l.b16 %v3984
        %v4087 = vunpack.c.h.b16 %v3984
        %v4088 = vunpack.c.l.b16 %v3985
        %v4089 = vunpack.c.h.b16 %v3985
        %v4090 = vunpack.c.l.b16 %v3986
        %v4091 = vunpack.c.h.b16 %v3986
        %v4092 = vunpack.c.l.b16 %v3987
        %v4093 = vunpack.c.h.b16 %v3987
        %v4094 = vunpack.c.l.b16 %v3988
        %v4095 = vunpack.c.h.b16 %v3988
        %v4096 = vunpack.c.l.b16 %v3989
        %v4097 = vunpack.c.h.b16 %v3989
        %v4098 = vpack.c.b16 %v4028, %v4026
        %v4099 = vpack.c.b16 %v4029, %v4027
        %v4100 = vpack.c.b16 %v4032, %v4030
        %v4101 = vpack.c.b16 %v4033, %v4031
        %v4102 = vpack.c.b16 %v4036, %v4034
        %v4103 = vpack.c.b16 %v4037, %v4035
        %v4104 = vpack.c.b16 %v4040, %v4038
        %v4105 = vpack.c.b16 %v4041, %v4039
        %v4106 = vpack.c.b16 %v4044, %v4042
        %v4107 = vpack.c.b16 %v4045, %v4043
        %v4108 = vpack.c.b16 %v4048, %v4046
        %v4109 = vpack.c.b16 %v4049, %v4047
        %v4110 = vpack.c.b16 %v4052, %v4050
        %v4111 = vpack.c.b16 %v4053, %v4051
        %v4112 = vpack.c.b16 %v4056, %v4054
        %v4113 = vpack.c.b16 %v4057, %v4055
        %v4114 = vpack.c.b16 %v4060, %v4058
        %v4115 = vpack.c.b16 %v4061, %v4059
        %v4116 = vpack.c.b16 %v4064, %v4062
        %v4117 = vpack.c.b16 %v4065, %v4063
        %v4118 = vpack.c.b16 %v4068, %v4066
        %v4119 = vpack.c.b16 %v4069, %v4067
        %v4120 = vpack.c.b16 %v4072, %v4070
        %v4121 = vpack.c.b16 %v4073, %v4071
        %v4122 = vpack.c.b16 %v4076, %v4074
        %v4123 = vpack.c.b16 %v4077, %v4075
        %v4124 = vpack.c.b16 %v4080, %v4078
        %v4125 = vpack.c.b16 %v4081, %v4079
        %v4126 = vpack.c.b16 %v4084, %v4082
        %v4127 = vpack.c.b16 %v4085, %v4083
        %v4128 = vpack.c.b16 %v4088, %v4086
        %v4129 = vpack.c.b16 %v4089, %v4087
        %v4130 = vpack.c.b16 %v4092, %v4090
        %v4131 = vpack.c.b16 %v4093, %v4091
        %v4132 = vpack.c.b16 %v4096, %v4094
        %v4133 = vpack.c.b16 %v4097, %v4095
        %4170 = vmatprep.subr.bf16.mxu0 %v4099
        %4171 = vmatpush1.bf16.msra.mxu0 %v4098
        %4172 = vmatprep.subr.bf16.mxu0 %v4101
        %4173 = vmatpush1.bf16.msra.mxu0 %v4100
        %4174 = vmatprep.subr.bf16.mxu0 %v4103
        %4175 = vmatpush1.bf16.msra.mxu0 %v4102
        %4176 = vmatprep.subr.bf16.mxu0 %v4105
        %4177 = vmatpush1.bf16.msra.mxu0 %v4104
        %4178 = vmatprep.subr.bf16.mxu0 %v4107
        %4179 = vmatpush1.bf16.msra.mxu0 %v4106
        %4180 = vmatprep.subr.bf16.mxu0 %v4109
        %4181 = vmatpush1.bf16.msra.mxu0 %v4108
        %4182 = vmatprep.subr.bf16.mxu0 %v4111
        %4183 = vmatpush1.bf16.msra.mxu0 %v4110
        %4184 = vmatprep.subr.bf16.mxu0 %v4113
        %4185 = vmatpush1.bf16.msra.mxu0 %v4112
        %4186 = vmatprep.subr.bf16.mxu0 %v4115
        %4187 = vmatpush1.bf16.msra.mxu0 %v4114
        %4188 = vmatprep.subr.bf16.mxu0 %v4117
        %4189 = vmatpush1.bf16.msra.mxu0 %v4116
        %4190 = vmatprep.subr.bf16.mxu0 %v4119
        %4191 = vmatpush1.bf16.msra.mxu0 %v4118
        %4192 = vmatprep.subr.bf16.mxu0 %v4121
        %4193 = vmatpush1.bf16.msra.mxu0 %v4120
        %4194 = vmatprep.subr.bf16.mxu0 %v4123
        %4195 = vmatpush1.bf16.msra.mxu0 %v4122
        %4196 = vmatprep.subr.bf16.mxu0 %v4125
        %4197 = vmatpush1.bf16.msra.mxu0 %v4124
        %4198 = vmatprep.subr.bf16.mxu0 %v4127
        %4199 = vmatpush1.bf16.msra.mxu0 %v4126
        %4200 = vmatprep.subr.bf16.mxu0 %v4129
        %4201 = vmatpush1.bf16.msra.mxu0 %v4128
        %4202 = vmatprep.mubr.bf16.mxu0 %v725
        %4203 = vmatmul.mubr.bf16.gmra.mrb[0].mxu0 %v724
        %v4204 = vpop.f32.mrb[0].mxu0
        %v4205 = vadd.f32 0.0, %v4204
        %v4206 = vpop.f32.mrb[0].mxu0
        %v4207 = vadd.f32 0.0, %v4206
        %v4208 = vpop.f32.mrb[0].mxu0
        %v4209 = vpop.f32.mrb[0].mxu0
        %4210 = vdwg.mxu0
        %4211 = vmatprep.subr.bf16.mxu0 %v4131
        %4212 = vmatpush1.bf16.msra.mxu0 %v4130
        %4213 = vmatprep.subr.bf16.mxu0 %v4133
        %4214 = vmatpush1.bf16.msra.mxu0 %v4132
        %4215 = vmatprep.subr.bf16.mxu0 0
        %4216 = vmatpush1.bf16.msra.mxu0 0
        %4217 = vmatprep.subr.bf16.mxu0 0
        %4218 = vmatpush1.bf16.msra.mxu0 0
        %4219 = vmatprep.subr.bf16.mxu0 0
        %4220 = vmatpush1.bf16.msra.mxu0 0
        %4221 = vmatprep.subr.bf16.mxu0 0
        %4222 = vmatpush1.bf16.msra.mxu0 0
        %4223 = vmatprep.subr.bf16.mxu0 0
        %4224 = vmatpush1.bf16.msra.mxu0 0
        %4225 = vmatprep.subr.bf16.mxu0 0
        %4226 = vmatpush1.bf16.msra.mxu0 0
        %4227 = vmatprep.subr.bf16.mxu0 0
        %4228 = vmatpush1.bf16.msra.mxu0 0
        %4229 = vmatprep.subr.bf16.mxu0 0
        %4230 = vmatpush1.bf16.msra.mxu0 0
        %4231 = vmatprep.subr.bf16.mxu0 0
        %4232 = vmatpush1.bf16.msra.mxu0 0
        %4233 = vmatprep.subr.bf16.mxu0 0
        %4234 = vmatpush1.bf16.msra.mxu0 0
        %4235 = vmatprep.subr.bf16.mxu0 0
        %4236 = vmatpush1.bf16.msra.mxu0 0
        %4237 = vmatprep.subr.bf16.mxu0 0
        %4238 = vmatpush1.bf16.msra.mxu0 0
        %4239 = vmatprep.subr.bf16.mxu0 0
        %4240 = vmatpush1.bf16.msra.mxu0 0
        %4241 = vmatprep.subr.bf16.mxu0 0
        %4242 = vmatpush1.bf16.msra.mxu0 0
        %4243 = vmatprep.mubr.bf16.mxu0 0
        %4244 = vmatmul.mubr.bf16.gmra.mrb[0].mxu0 %v2246
        %v4245 = vpop.f32.mrb[0].mxu0
        %v4246 = vadd.f32 %v4205, %v4245
        %v4247 = vpop.f32.mrb[0].mxu0
        %v4248 = vadd.f32 %v4207, %v4247
        %v4249 = vpop.f32.mrb[0].mxu0
        %v4250 = vpop.f32.mrb[0].mxu0
        %4251 = vdwg.mxu0
        %v4252 = vadd.f32 %v3951, %v4246
        %v4253 = vadd.f32 %v3952, %v4248
        %v4254 = vmax.f32 %v2751, %v4252
        %v4255 = vmax.f32 %v2752, %v4253
        %4256 = vmatprep.subr.bf16.mxu0 %v2936
        %4257 = vmatpush1.bf16.msra.mxu0 %v2935
        %4258 = vmatprep.subr.bf16.mxu0 %v2938
        %4259 = vmatpush1.bf16.msra.mxu0 %v2937
        %4260 = vmatprep.subr.bf16.mxu0 %v2940
        %4261 = vmatpush1.bf16.msra.mxu0 %v2939
        %4262 = vmatprep.subr.bf16.mxu0 %v2942
        %4263 = vmatpush1.bf16.msra.mxu0 %v2941
        %4264 = vmatprep.subr.bf16.mxu0 %v2944
        %4265 = vmatpush1.bf16.msra.mxu0 %v2943
        %4266 = vmatprep.subr.bf16.mxu0 %v2946
        %4267 = vmatpush1.bf16.msra.mxu0 %v2945
        %4268 = vmatprep.subr.bf16.mxu0 %v2948
        %4269 = vmatpush1.bf16.msra.mxu0 %v2947
        %4270 = vmatprep.subr.bf16.mxu0 %v2950
        %4271 = vmatpush1.bf16.msra.mxu0 %v2949
        %4272 = vmatprep.subr.bf16.mxu0 %v2952
        %4273 = vmatpush1.bf16.msra.mxu0 %v2951
        %4274 = vmatprep.subr.bf16.mxu0 %v2954
        %4275 = vmatpush1.bf16.msra.mxu0 %v2953
        %4276 = vmatprep.subr.bf16.mxu0 %v2956
        %4277 = vmatpush1.bf16.msra.mxu0 %v2955
        %4278 = vmatprep.subr.bf16.mxu0 %v2958
        %4279 = vmatpush1.bf16.msra.mxu0 %v2957
        %4280 = vmatprep.subr.bf16.mxu0 %v2960
        %4281 = vmatpush1.bf16.msra.mxu0 %v2959
        %4282 = vmatprep.subr.bf16.mxu0 %v2962
        %4283 = vmatpush1.bf16.msra.mxu0 %v2961
        %4284 = vmatprep.subr.bf16.mxu0 %v2964
        %4285 = vmatpush1.bf16.msra.mxu0 %v2963
        %4286 = vmatprep.subr.bf16.mxu0 %v2966
        %4287 = vmatpush1.bf16.msra.mxu0 %v2965
        %4288 = vmatprep.mubr.bf16.mxu0 %v547
        %4289 = vmatmul.mubr.bf16.gmra.mrb[0].mxu0 %v546
        %v4290 = vpop.f32.mrb[0].mxu0
        %v4291 = vadd.f32 0.0, %v4290
        %v4292 = vpop.f32.mrb[0].mxu0
        %v4293 = vadd.f32 0.0, %v4292
        %v4294 = vpop.f32.mrb[0].mxu0
        %v4295 = vpop.f32.mrb[0].mxu0
        %4296 = vdwg.mxu0
        %4297 = vmatprep.subr.bf16.mxu0 %v2968
        %4298 = vmatpush1.bf16.msra.mxu0 %v2967
        %4299 = vmatprep.subr.bf16.mxu0 %v2970
        %4300 = vmatpush1.bf16.msra.mxu0 %v2969
        %4301 = vmatprep.subr.bf16.mxu0 0
        %4302 = vmatpush1.bf16.msra.mxu0 0
        %4303 = vmatprep.subr.bf16.mxu0 0
        %4304 = vmatpush1.bf16.msra.mxu0 0
        %4305 = vmatprep.subr.bf16.mxu0 0
        %4306 = vmatpush1.bf16.msra.mxu0 0
        %4307 = vmatprep.subr.bf16.mxu0 0
        %4308 = vmatpush1.bf16.msra.mxu0 0
        %4309 = vmatprep.subr.bf16.mxu0 0
        %4310 = vmatpush1.bf16.msra.mxu0 0
        %4311 = vmatprep.subr.bf16.mxu0 0
        %4312 = vmatpush1.bf16.msra.mxu0 0
        %4313 = vmatprep.subr.bf16.mxu0 0
        %4314 = vmatpush1.bf16.msra.mxu0 0
        %4315 = vmatprep.subr.bf16.mxu0 0
        %4316 = vmatpush1.bf16.msra.mxu0 0
        %4317 = vmatprep.subr.bf16.mxu0 0
        %4318 = vmatpush1.bf16.msra.mxu0 0
        %4319 = vmatprep.subr.bf16.mxu0 0
        %4320 = vmatpush1.bf16.msra.mxu0 0
        %4321 = vmatprep.subr.bf16.mxu0 0
        %4322 = vmatpush1.bf16.msra.mxu0 0
        %4323 = vmatprep.subr.bf16.mxu0 0
        %4324 = vmatpush1.bf16.msra.mxu0 0
        %4325 = vmatprep.subr.bf16.mxu0 0
        %4326 = vmatpush1.bf16.msra.mxu0 0
        %4327 = vmatprep.subr.bf16.mxu0 0
        %4328 = vmatpush1.bf16.msra.mxu0 0
        %4329 = vmatprep.mubr.bf16.mxu0 0
        %4330 = vmatmul.mubr.bf16.gmra.mrb[0].mxu0 %v1638
        %v4331 = vpop.f32.mrb[0].mxu0
        %v4332 = vadd.f32 %v4291, %v4331
        %v4333 = vpop.f32.mrb[0].mxu0
        %v4334 = vadd.f32 %v4293, %v4333
        %v4335 = vpop.f32.mrb[0].mxu0
        %v4336 = vpop.f32.mrb[0].mxu0
        %4337 = vdwg.mxu0
        %4338 = vmatprep.subr.bf16.mxu0 %v3198
        %4339 = vmatpush1.bf16.msra.mxu0 %v3197
        %4340 = vmatprep.subr.bf16.mxu0 %v3200
        %4341 = vmatpush1.bf16.msra.mxu0 %v3199
        %4342 = vmatprep.subr.bf16.mxu0 %v3202
        %4343 = vmatpush1.bf16.msra.mxu0 %v3201
        %4344 = vmatprep.subr.bf16.mxu0 %v3204
        %4345 = vmatpush1.bf16.msra.mxu0 %v3203
        %4346 = vmatprep.subr.bf16.mxu0 %v3206
        %4347 = vmatpush1.bf16.msra.mxu0 %v3205
        %4348 = vmatprep.subr.bf16.mxu0 %v3208
        %4349 = vmatpush1.bf16.msra.mxu0 %v3207
        %4350 = vmatprep.subr.bf16.mxu0 %v3210
        %4351 = vmatpush1.bf16.msra.mxu0 %v3209
        %4352 = vmatprep.subr.bf16.mxu0 %v3212
        %4353 = vmatpush1.bf16.msra.mxu0 %v3211
        %4354 = vmatprep.subr.bf16.mxu0 %v3214
        %4355 = vmatpush1.bf16.msra.mxu0 %v3213
        %4356 = vmatprep.subr.bf16.mxu0 %v3216
        %4357 = vmatpush1.bf16.msra.mxu0 %v3215
        %4358 = vmatprep.subr.bf16.mxu0 %v3218
        %4359 = vmatpush1.bf16.msra.mxu0 %v3217
        %4360 = vmatprep.subr.bf16.mxu0 %v3220
        %4361 = vmatpush1.bf16.msra.mxu0 %v3219
        %4362 = vmatprep.subr.bf16.mxu0 %v3222
        %4363 = vmatpush1.bf16.msra.mxu0 %v3221
        %4364 = vmatprep.subr.bf16.mxu0 %v3224
        %4365 = vmatpush1.bf16.msra.mxu0 %v3223
        %4366 = vmatprep.subr.bf16.mxu0 %v3226
        %4367 = vmatpush1.bf16.msra.mxu0 %v3225
        %4368 = vmatprep.subr.bf16.mxu0 %v3228
        %4369 = vmatpush1.bf16.msra.mxu0 %v3227
        %4370 = vmatprep.mubr.bf16.mxu0 %v458
        %4371 = vmatmul.mubr.bf16.gmra.mrb[0].mxu0 %v457
        %v4372 = vpop.f32.mrb[0].mxu0
        %v4373 = vadd.f32 %v4332, %v4372
        %v4374 = vpop.f32.mrb[0].mxu0
        %v4375 = vadd.f32 %v4334, %v4374
        %v4376 = vpop.f32.mrb[0].mxu0
        %v4377 = vpop.f32.mrb[0].mxu0
        %4378 = vdwg.mxu0
        %4379 = vmatprep.subr.bf16.mxu0 %v3230
        %4380 = vmatpush1.bf16.msra.mxu0 %v3229
        %4381 = vmatprep.subr.bf16.mxu0 %v3232
        %4382 = vmatpush1.bf16.msra.mxu0 %v3231
        %4383 = vmatprep.subr.bf16.mxu0 0
        %4384 = vmatpush1.bf16.msra.mxu0 0
        %4385 = vmatprep.subr.bf16.mxu0 0
        %4386 = vmatpush1.bf16.msra.mxu0 0
        %4387 = vmatprep.subr.bf16.mxu0 0
        %4388 = vmatpush1.bf16.msra.mxu0 0
        %4389 = vmatprep.subr.bf16.mxu0 0
        %4390 = vmatpush1.bf16.msra.mxu0 0
        %4391 = vmatprep.subr.bf16.mxu0 0
        %4392 = vmatpush1.bf16.msra.mxu0 0
        %4393 = vmatprep.subr.bf16.mxu0 0
        %4394 = vmatpush1.bf16.msra.mxu0 0
        %4395 = vmatprep.subr.bf16.mxu0 0
        %4396 = vmatpush1.bf16.msra.mxu0 0
        %4397 = vmatprep.subr.bf16.mxu0 0
        %4398 = vmatpush1.bf16.msra.mxu0 0
        %4399 = vmatprep.subr.bf16.mxu0 0
        %4400 = vmatpush1.bf16.msra.mxu0 0
        %4401 = vmatprep.subr.bf16.mxu0 0
        %4402 = vmatpush1.bf16.msra.mxu0 0
        %4403 = vmatprep.subr.bf16.mxu0 0
        %4404 = vmatpush1.bf16.msra.mxu0 0
        %4405 = vmatprep.subr.bf16.mxu0 0
        %4406 = vmatpush1.bf16.msra.mxu0 0
        %4407 = vmatprep.subr.bf16.mxu0 0
        %4408 = vmatpush1.bf16.msra.mxu0 0
        %4409 = vmatprep.subr.bf16.mxu0 0
        %4410 = vmatpush1.bf16.msra.mxu0 0
        %4411 = vmatprep.mubr.bf16.mxu0 0
        %4412 = vmatmul.mubr.bf16.gmra.mrb[0].mxu0 %v1071
        %v4413 = vpop.f32.mrb[0].mxu0
        %v4414 = vadd.f32 %v4373, %v4413
        %v4415 = vpop.f32.mrb[0].mxu0
        %v4416 = vadd.f32 %v4375, %v4415
        %v4417 = vpop.f32.mrb[0].mxu0
        %v4418 = vpop.f32.mrb[0].mxu0
        %4419 = vdwg.mxu0
        %4420 = vmatprep.subr.bf16.mxu0 %v3497
        %4421 = vmatpush1.bf16.msra.mxu0 %v3496
        %4422 = vmatprep.subr.bf16.mxu0 %v3499
        %4423 = vmatpush1.bf16.msra.mxu0 %v3498
        %4424 = vmatprep.subr.bf16.mxu0 %v3501
        %4425 = vmatpush1.bf16.msra.mxu0 %v3500
        %4426 = vmatprep.subr.bf16.mxu0 %v3503
        %4427 = vmatpush1.bf16.msra.mxu0 %v3502
        %4428 = vmatprep.subr.bf16.mxu0 %v3505
        %4429 = vmatpush1.bf16.msra.mxu0 %v3504
        %4430 = vmatprep.subr.bf16.mxu0 %v3507
        %4431 = vmatpush1.bf16.msra.mxu0 %v3506
        %4432 = vmatprep.subr.bf16.mxu0 %v3509
        %4433 = vmatpush1.bf16.msra.mxu0 %v3508
        %4434 = vmatprep.subr.bf16.mxu0 %v3511
        %4435 = vmatpush1.bf16.msra.mxu0 %v3510
        %4436 = vmatprep.subr.bf16.mxu0 %v3513
        %4437 = vmatpush1.bf16.msra.mxu0 %v3512
        %4438 = vmatprep.subr.bf16.mxu0 %v3515
        %4439 = vmatpush1.bf16.msra.mxu0 %v3514
        %4440 = vmatprep.subr.bf16.mxu0 %v3517
        %4441 = vmatpush1.bf16.msra.mxu0 %v3516
        %4442 = vmatprep.subr.bf16.mxu0 %v3519
        %4443 = vmatpush1.bf16.msra.mxu0 %v3518
        %4444 = vmatprep.subr.bf16.mxu0 %v3521
        %4445 = vmatpush1.bf16.msra.mxu0 %v3520
        %4446 = vmatprep.subr.bf16.mxu0 %v3523
        %4447 = vmatpush1.bf16.msra.mxu0 %v3522
        %4448 = vmatprep.subr.bf16.mxu0 %v3525
        %4449 = vmatpush1.bf16.msra.mxu0 %v3524
        %4450 = vmatprep.subr.bf16.mxu0 %v3527
        %4451 = vmatpush1.bf16.msra.mxu0 %v3526
        %4452 = vmatprep.mubr.bf16.mxu0 %v636
        %4453 = vmatmul.mubr.bf16.gmra.mrb[0].mxu0 %v635
        %v4454 = vpop.f32.mrb[0].mxu0
        %v4455 = vadd.f32 0.0, %v4454
        %v4456 = vpop.f32.mrb[0].mxu0
        %v4457 = vadd.f32 0.0, %v4456
        %v4458 = vpop.f32.mrb[0].mxu0
        %v4459 = vpop.f32.mrb[0].mxu0
        %4460 = vdwg.mxu0
        %4461 = vmatprep.subr.bf16.mxu0 %v3529
        %4462 = vmatpush1.bf16.msra.mxu0 %v3528
        %4463 = vmatprep.subr.bf16.mxu0 %v3531
        %4464 = vmatpush1.bf16.msra.mxu0 %v3530
        %4465 = vmatprep.subr.bf16.mxu0 0
        %4466 = vmatpush1.bf16.msra.mxu0 0
        %4467 = vmatprep.subr.bf16.mxu0 0
        %4468 = vmatpush1.bf16.msra.mxu0 0
        %4469 = vmatprep.subr.bf16.mxu0 0
        %4470 = vmatpush1.bf16.msra.mxu0 0
        %4471 = vmatprep.subr.bf16.mxu0 0
        %4472 = vmatpush1.bf16.msra.mxu0 0
        %4473 = vmatprep.subr.bf16.mxu0 0
        %4474 = vmatpush1.bf16.msra.mxu0 0
        %4475 = vmatprep.subr.bf16.mxu0 0
        %4476 = vmatpush1.bf16.msra.mxu0 0
        %4477 = vmatprep.subr.bf16.mxu0 0
        %4478 = vmatpush1.bf16.msra.mxu0 0
        %4479 = vmatprep.subr.bf16.mxu0 0
        %4480 = vmatpush1.bf16.msra.mxu0 0
        %4481 = vmatprep.subr.bf16.mxu0 0
        %4482 = vmatpush1.bf16.msra.mxu0 0
        %4483 = vmatprep.subr.bf16.mxu0 0
        %4484 = vmatpush1.bf16.msra.mxu0 0
        %4485 = vmatprep.subr.bf16.mxu0 0
        %4486 = vmatpush1.bf16.msra.mxu0 0
        %4487 = vmatprep.subr.bf16.mxu0 0
        %4488 = vmatpush1.bf16.msra.mxu0 0
        %4489 = vmatprep.subr.bf16.mxu0 0
        %4490 = vmatpush1.bf16.msra.mxu0 0
        %4491 = vmatprep.subr.bf16.mxu0 0
        %4492 = vmatpush1.bf16.msra.mxu0 0
        %4493 = vmatprep.mubr.bf16.mxu0 0
        %4494 = vmatmul.mubr.bf16.gmra.mrb[0].mxu0 %v1942
        %v4495 = vpop.f32.mrb[0].mxu0
        %v4496 = vadd.f32 %v4455, %v4495
        %v4497 = vpop.f32.mrb[0].mxu0
        %v4498 = vadd.f32 %v4457, %v4497
        %v4499 = vpop.f32.mrb[0].mxu0
        %v4500 = vpop.f32.mrb[0].mxu0
        %4501 = vdwg.mxu0
        %v4502 = vadd.f32 %v4414, %v4496
        %v4503 = vadd.f32 %v4416, %v4498
        %4504 = vmatprep.subr.bf16.mxu0 %v3798
        %4505 = vmatpush1.bf16.msra.mxu0 %v3797
        %4506 = vmatprep.subr.bf16.mxu0 %v3800
        %4507 = vmatpush1.bf16.msra.mxu0 %v3799
        %4508 = vmatprep.subr.bf16.mxu0 %v3802
        %4509 = vmatpush1.bf16.msra.mxu0 %v3801
        %4510 = vmatprep.subr.bf16.mxu0 %v3804
        %4511 = vmatpush1.bf16.msra.mxu0 %v3803
        %4512 = vmatprep.subr.bf16.mxu0 %v3806
        %4513 = vmatpush1.bf16.msra.mxu0 %v3805
        %4514 = vmatprep.subr.bf16.mxu0 %v3808
        %4515 = vmatpush1.bf16.msra.mxu0 %v3807
        %4516 = vmatprep.subr.bf16.mxu0 %v3810
        %4517 = vmatpush1.bf16.msra.mxu0 %v3809
        %4518 = vmatprep.subr.bf16.mxu0 %v3812
        %4519 = vmatpush1.bf16.msra.mxu0 %v3811
        %4520 = vmatprep.subr.bf16.mxu0 %v3814
        %4521 = vmatpush1.bf16.msra.mxu0 %v3813
        %4522 = vmatprep.subr.bf16.mxu0 %v3816
        %4523 = vmatpush1.bf16.msra.mxu0 %v3815
        %4524 = vmatprep.subr.bf16.mxu0 %v3818
        %4525 = vmatpush1.bf16.msra.mxu0 %v3817
        %4526 = vmatprep.subr.bf16.mxu0 %v3820
        %4527 = vmatpush1.bf16.msra.mxu0 %v3819
        %4528 = vmatprep.subr.bf16.mxu0 %v3822
        %4529 = vmatpush1.bf16.msra.mxu0 %v3821
        %4530 = vmatprep.subr.bf16.mxu0 %v3824
        %4531 = vmatpush1.bf16.msra.mxu0 %v3823
        %4532 = vmatprep.subr.bf16.mxu0 %v3826
        %4533 = vmatpush1.bf16.msra.mxu0 %v3825
        %4534 = vmatprep.subr.bf16.mxu0 %v3828
        %4535 = vmatpush1.bf16.msra.mxu0 %v3827
        %4536 = vmatprep.mubr.bf16.mxu0 %v725
        %4537 = vmatmul.mubr.bf16.gmra.mrb[0].mxu0 %v724
        %v4538 = vpop.f32.mrb[0].mxu0
        %v4539 = vadd.f32 0.0, %v4538
        %v4540 = vpop.f32.mrb[0].mxu0
        %v4541 = vadd.f32 0.0, %v4540
        %v4542 = vpop.f32.mrb[0].mxu0
        %v4543 = vpop.f32.mrb[0].mxu0
        %4544 = vdwg.mxu0
        %4545 = vmatprep.subr.bf16.mxu0 %v3830
        %4546 = vmatpush1.bf16.msra.mxu0 %v3829
        %4547 = vmatprep.subr.bf16.mxu0 %v3832
        %4548 = vmatpush1.bf16.msra.mxu0 %v3831
        %4549 = vmatprep.subr.bf16.mxu0 0
        %4550 = vmatpush1.bf16.msra.mxu0 0
        %4551 = vmatprep.subr.bf16.mxu0 0
        %4552 = vmatpush1.bf16.msra.mxu0 0
        %4553 = vmatprep.subr.bf16.mxu0 0
        %4554 = vmatpush1.bf16.msra.mxu0 0
        %4555 = vmatprep.subr.bf16.mxu0 0
        %4556 = vmatpush1.bf16.msra.mxu0 0
        %4557 = vmatprep.subr.bf16.mxu0 0
        %4558 = vmatpush1.bf16.msra.mxu0 0
        %4559 = vmatprep.subr.bf16.mxu0 0
        %4560 = vmatpush1.bf16.msra.mxu0 0
        %4561 = vmatprep.subr.bf16.mxu0 0
        %4562 = vmatpush1.bf16.msra.mxu0 0
        %4563 = vmatprep.subr.bf16.mxu0 0
        %4564 = vmatpush1.bf16.msra.mxu0 0
        %4565 = vmatprep.subr.bf16.mxu0 0
        %4566 = vmatpush1.bf16.msra.mxu0 0
        %4567 = vmatprep.subr.bf16.mxu0 0
        %4568 = vmatpush1.bf16.msra.mxu0 0
        %4569 = vmatprep.subr.bf16.mxu0 0
        %4570 = vmatpush1.bf16.msra.mxu0 0
        %4571 = vmatprep.subr.bf16.mxu0 0
        %4572 = vmatpush1.bf16.msra.mxu0 0
        %4573 = vmatprep.subr.bf16.mxu0 0
        %4574 = vmatpush1.bf16.msra.mxu0 0
        %4575 = vmatprep.subr.bf16.mxu0 0
        %4576 = vmatpush1.bf16.msra.mxu0 0
        %4577 = vmatprep.mubr.bf16.mxu0 0
        %4578 = vmatmul.mubr.bf16.gmra.mrb[0].mxu0 %v2246
        %v4579 = vpop.f32.mrb[0].mxu0
        %v4580 = vadd.f32 %v4539, %v4579
        %v4581 = vpop.f32.mrb[0].mxu0
        %v4582 = vadd.f32 %v4541, %v4581
        %v4583 = vpop.f32.mrb[0].mxu0
        %v4584 = vpop.f32.mrb[0].mxu0
        %4585 = vdwg.mxu0
        %v4586 = vadd.f32 %v4502, %v4580
        %v4587 = vadd.f32 %v4503, %v4582
        %4588 = vmatprep.subr.bf16.mxu0 %v4099
        %4589 = vmatpush1.bf16.msra.mxu0 %v4098
        %4590 = vmatprep.subr.bf16.mxu0 %v4101
        %4591 = vmatpush1.bf16.msra.mxu0 %v4100
        %4592 = vmatprep.subr.bf16.mxu0 %v4103
        %4593 = vmatpush1.bf16.msra.mxu0 %v4102
        %4594 = vmatprep.subr.bf16.mxu0 %v4105
        %4595 = vmatpush1.bf16.msra.mxu0 %v4104
        %4596 = vmatprep.subr.bf16.mxu0 %v4107
        %4597 = vmatpush1.bf16.msra.mxu0 %v4106
        %4598 = vmatprep.subr.bf16.mxu0 %v4109
        %4599 = vmatpush1.bf16.msra.mxu0 %v4108
        %4600 = vmatprep.subr.bf16.mxu0 %v4111
        %4601 = vmatpush1.bf16.msra.mxu0 %v4110
        %4602 = vmatprep.subr.bf16.mxu0 %v4113
        %4603 = vmatpush1.bf16.msra.mxu0 %v4112
        %4604 = vmatprep.subr.bf16.mxu0 %v4115
        %4605 = vmatpush1.bf16.msra.mxu0 %v4114
        %4606 = vmatprep.subr.bf16.mxu0 %v4117
        %4607 = vmatpush1.bf16.msra.mxu0 %v4116
        %4608 = vmatprep.subr.bf16.mxu0 %v4119
        %4609 = vmatpush1.bf16.msra.mxu0 %v4118
        %4610 = vmatprep.subr.bf16.mxu0 %v4121
        %4611 = vmatpush1.bf16.msra.mxu0 %v4120
        %4612 = vmatprep.subr.bf16.mxu0 %v4123
        %4613 = vmatpush1.bf16.msra.mxu0 %v4122
        %4614 = vmatprep.subr.bf16.mxu0 %v4125
        %4615 = vmatpush1.bf16.msra.mxu0 %v4124
        %4616 = vmatprep.subr.bf16.mxu0 %v4127
        %4617 = vmatpush1.bf16.msra.mxu0 %v4126
        %4618 = vmatprep.subr.bf16.mxu0 %v4129
        %4619 = vmatpush1.bf16.msra.mxu0 %v4128
        %4620 = vmatprep.mubr.bf16.mxu0 %v814
        %4621 = vmatmul.mubr.bf16.gmra.mrb[0].mxu0 %v813
        %v4622 = vpop.f32.mrb[0].mxu0
        %v4623 = vadd.f32 0.0, %v4622
        %v4624 = vpop.f32.mrb[0].mxu0
        %v4625 = vadd.f32 0.0, %v4624
        %v4626 = vpop.f32.mrb[0].mxu0
        %v4627 = vpop.f32.mrb[0].mxu0
        %4628 = vdwg.mxu0
        %4629 = vmatprep.subr.bf16.mxu0 %v4131
        %4630 = vmatpush1.bf16.msra.mxu0 %v4130
        %4631 = vmatprep.subr.bf16.mxu0 %v4133
        %4632 = vmatpush1.bf16.msra.mxu0 %v4132
        %4633 = vmatprep.subr.bf16.mxu0 0
        %4634 = vmatpush1.bf16.msra.mxu0 0
        %4635 = vmatprep.subr.bf16.mxu0 0
        %4636 = vmatpush1.bf16.msra.mxu0 0
        %4637 = vmatprep.subr.bf16.mxu0 0
        %4638 = vmatpush1.bf16.msra.mxu0 0
        %4639 = vmatprep.subr.bf16.mxu0 0
        %4640 = vmatpush1.bf16.msra.mxu0 0
        %4641 = vmatprep.subr.bf16.mxu0 0
        %4642 = vmatpush1.bf16.msra.mxu0 0
        %4643 = vmatprep.subr.bf16.mxu0 0
        %4644 = vmatpush1.bf16.msra.mxu0 0
        %4645 = vmatprep.subr.bf16.mxu0 0
        %4646 = vmatpush1.bf16.msra.mxu0 0
        %4647 = vmatprep.subr.bf16.mxu0 0
        %4648 = vmatpush1.bf16.msra.mxu0 0
        %4649 = vmatprep.subr.bf16.mxu0 0
        %4650 = vmatpush1.bf16.msra.mxu0 0
        %4651 = vmatprep.subr.bf16.mxu0 0
        %4652 = vmatpush1.bf16.msra.mxu0 0
        %4653 = vmatprep.subr.bf16.mxu0 0
        %4654 = vmatpush1.bf16.msra.mxu0 0
        %4655 = vmatprep.subr.bf16.mxu0 0
        %4656 = vmatpush1.bf16.msra.mxu0 0
        %4657 = vmatprep.subr.bf16.mxu0 0
        %4658 = vmatpush1.bf16.msra.mxu0 0
        %4659 = vmatprep.subr.bf16.mxu0 0
        %4660 = vmatpush1.bf16.msra.mxu0 0
        %4661 = vmatprep.mubr.bf16.mxu0 0
        %4662 = vmatmul.mubr.bf16.gmra.mrb[0].mxu0 %v2665
        %v4663 = vpop.f32.mrb[0].mxu0
        %v4664 = vadd.f32 %v4623, %v4663
        %v4665 = vpop.f32.mrb[0].mxu0
        %v4666 = vadd.f32 %v4625, %v4665
        %v4667 = vpop.f32.mrb[0].mxu0
        %v4668 = vpop.f32.mrb[0].mxu0
        %4669 = vdwg.mxu0
        %v4670 = vadd.f32 %v4586, %v4664
        %v4671 = vadd.f32 %v4587, %v4666
        %v4672 = vmax.f32 %v4254, %v4670
        %v4673 = vmax.f32 %v4255, %v4671
        %v4675 = vlaneseq
        %v4676 = vshrl.u32 %v4675, 7
        %v4677 = vsub.s32 0, %v4676
        %v4678 = vrot.slane %v241, %v4677
        %v4679 = vlaneseq
        %v4680 = vshrl.u32 %v4679, 7
        %v4681 = vsub.s32 1, %v4680
        %v4682 = vrot.slane %v241, %v4681
        %v4685 = vadd.f32 %v4672, %v4678
        %v4686 = vadd.f32 %v4673, %v4682
        %v4687 = vmax.f32 %v4685, 0.0
        %v4688 = vmax.f32 %v4686, 0.0
        %v4689 = vpack.c.bf16 %v4687, %v4687
        %v4690 = vpack.c.bf16 %v4688, %v4688
        %v4693 = vunpack.c.l.b16 %v4689
        %v4694 = vunpack.c.l.b16 %v4690
        %v4695 = vpack.c.b16 %v4694, %v4693
        %vm4697 = vcmask 1043456
        %vm4698 = vsmask.f32 3328
        %vm4699 = vmand %vm4697, %vm4698
        %vm4700 = vcmask 785412
        %vm4701 = vsmask.f32 7424
        %vm4702 = vmand %vm4700, %vm4701
        %vm4703 = vmor %vm4702, %vm4699
        %v4704 = vld [vmem:[%s239] sm:$0xff]
        %v4705 = vsel %vm4703, %v4695, %v4704
        %4706 = vst [vmem:[%s239] sm:$0xff] %v4705
        %p4707 = scmp.lt.s32.totalorder %s17, 1
        %s4708 = scalar_select %p4707, %s17, 1
        %s4709 = smul.addr %s4708, 2
        %s4710 = smul.addr %s4709, 4
        %s4711 = scalar_lea.vmem %s4, %s4710
        // Predicated region
        $region49: #{cnn_forward.4} parent=35 // pred_check
          %p4712 = pneg %p124
        $region50: #{cnn_forward.4} parent=35 // pred_check_branch
          %4714 = sbr.rel (%p4712) target = $region52
        $region51: #{cnn_forward.4} parent=35 // pred_region
          _
        $region52: #{cnn_forward.4} parent=35 // pred_fallthru
          _
      $region36: #{cnn_forward.4} parent=5 // pred_fallthru
        _
      %p4715 = scmp.le.s32.totalorder 2, %s12
      // Predicated region
      $region53: #{cnn_forward.4} parent=5 // pred_check
        %p4716 = pneg %p4715
      $region54: #{cnn_forward.4} parent=5 // pred_check_branch
        %4718 = sbr.rel (%p4716) target = $region56
      $region55: #{cnn_forward.4} parent=5 // pred_region
        %s4719 = ssub.s32 %s12, 2
        // Predicated region
        $region57: #{cnn_forward.4} parent=55 // pred_check
          %p4720 = pneg %p130
        $region58: #{cnn_forward.4} parent=55 // pred_check_branch
          %4722 = sbr.rel (%p4720) target = $region60
        $region59: #{cnn_forward.4} parent=55 // pred_region
          %p4723 = scmp.lt.s32.totalorder %s18, 1
          %s4724 = scalar_select %p4723, %s18, 1
          %s4725 = smul.addr %s4724, 2
          %s4726 = smul.addr %s4725, 4
          %s4727 = scalar_lea.vmem %s4, %s4726
        $region60: #{cnn_forward.4} parent=55 // pred_fallthru
          _
      $region56: #{cnn_forward.4} parent=5 // pred_fallthru
        _
    $region6: #{cnn_forward.4} parent=1 // loop_footer
      %s16 = sadd.s32 1, %s12
    $region7: #{cnn_forward.4} parent=1 // loop_footer_branch
      %11 = sbr.rel target = $region3
    $region8: #{cnn_forward.4} parent=1 // loop_exit
      _
    %4728 = vsyncpa [#allocation3], 1
    %s4729 = scalar_lea.sflag [#allocation3], 1
    %4730 = vsyncpa %s4729, 1
    %4731 = vsyncpa [#allocation5], 1

</llo_original>
